<compile_context>
chip_gen: v5e
topology: v5e:2x2
jax: 0.10.0
libtpu: 0.0.40
codegen_flags: <defaults>
</compile_context>

<pallas_src>
import jax
import jax.numpy as jnp
from jax import lax
from jax.experimental import pallas as pl
from jax.experimental.pallas import tpu as pltpu

MXU_DTYPE = jnp.bfloat16   # MXU operand / inter-layer activation dtype


# ---------------------------------------------------------------------------
# small helpers
# ---------------------------------------------------------------------------
def _round_up(x, m):
    return ((x + m - 1) // m) * m


def _vmem_budget_bytes():
    # ~75% of per-core VMEM: ~48 MiB on v7x (64 MiB), ~96 MiB on v5e/v6e (128 MiB).
    try:
        cap = int(pltpu.get_tpu_info().vmem_capacity_bytes)
    except Exception:
        cap = 64 * 1024 * 1024          # conservative fallback = v7x per-core VMEM
    return max(int(cap * 0.75), 24 * 1024 * 1024)


def _pick_batch_tile(B, per_row_bytes, fixed_bytes, budget_bytes, cap=256):
    """Largest batch tile (multiple of 8 when < B) that fits the VMEM budget."""
    def fits(bt):
        return fixed_bytes + bt * per_row_bytes <= budget_bytes

    bt = min(B, cap)
    if bt < B or not fits(bt):
        bt = max(8, (min(bt, cap) // 8) * 8)
        while bt > 8 and not fits(bt):
            bt -= 8
    # v7x has two TensorCores: with the batch axis marked "parallel", make sure
    # the grid has at least two steps whenever the batch allows it.
    if bt >= B and B > 8:
        bt = max(8, _round_up((B + 1) // 2, 8))
        bt = min(bt, B)
    return min(bt, B)


def _full_spec(arr):
    nd = arr.ndim
    return pl.BlockSpec(arr.shape, lambda b, _nd=nd: (0,) * _nd)


def _sig_fast(v):
    # sigmoid(x) = 0.5 * (1 + tanh(x / 2))  -> a single EUP op per call.
    return 0.5 * jnp.tanh(0.5 * v) + 0.5


# ---------------------------------------------------------------------------
# weight packing: per-gate, pre-transposed for right-multiplication
# ---------------------------------------------------------------------------
def _pack_gru_weights(p):
    H = p["whh_f"].shape[0]

    def split_w(w):                           # (X, 3H) -> (3, X, H)   gate order [r, z, n]
        return jnp.stack([w[:, 0:H], w[:, H:2 * H], w[:, 2 * H:3 * H]], axis=0)

    def split_b(b):                           # (1, 3H) -> (3, 1, H)
        return jnp.stack([b[:, 0:H], b[:, H:2 * H], b[:, 2 * H:3 * H]], axis=0)

    wih = jnp.concatenate([split_w(p["wih_f"]), split_w(p["wih_b"])],
                          axis=0).astype(MXU_DTYPE)                  # (6, D, H)
    whh = jnp.concatenate([split_w(p["whh_f"]), split_w(p["whh_b"])],
                          axis=0).astype(MXU_DTYPE)                  # (6, H, H)

    bih_f, bhh_f = split_b(p["bih_f"]), split_b(p["bhh_f"])
    bih_b, bhh_b = split_b(p["bih_b"]), split_b(p["bhh_b"])
    # r/z: both biases fold into the staged projection; n: only b_in folds
    # (b_hn is multiplied by the reset gate and stays in the recurrence).
    bx = jnp.stack([bih_f[0] + bhh_f[0], bih_f[1] + bhh_f[1], bih_f[2],
                    bih_b[0] + bhh_b[0], bih_b[1] + bhh_b[1], bih_b[2]],
                   axis=0).astype(jnp.float32)                       # (6, 1, H)
    bhn = jnp.stack([bhh_f[2], bhh_b[2]], axis=0).astype(jnp.float32)  # (2, 1, H)
    return wih, whh, bx, bhn


# ---------------------------------------------------------------------------
# shared bidirectional GRU recurrence for one batch tile
# ---------------------------------------------------------------------------
def _gru_core(x_ref, wih_ref, whh_ref, bx_ref, bhn_ref, y_ref, gx_ref):
    """x_ref:(T,Bt,D)  wih:(6,D,H)  whh:(6,H,H)  bx:(6,1,H)  bhn:(2,1,H)
    y_ref:(T,Bt,2H) destination (output block or scratch)
    gx_ref:(6*T,Bt,H) bf16 staging of the hoisted input projection."""
    T, Bt, D = x_ref.shape
    H = whh_ref.shape[1]
    mx = wih_ref.dtype

    # Hoisted input projection: one aligned (T*Bt, D) @ (D, H) matmul per gate,
    # biases folded, staged time-major in bf16.
    x2 = x_ref[...].reshape(T * Bt, D).astype(mx)
    for g in range(6):
        gx = jnp.dot(x2, wih_ref[g], preferred_element_type=jnp.float32) + bx_ref[g]
        gx_ref[g * T:(g + 1) * T, :, :] = gx.astype(gx_ref.dtype).reshape(T, Bt, H)

    bhn_f = bhn_ref[0]
    bhn_b = bhn_ref[1]

    def direction(h, w0, t, bhn):
        hm = h.astype(mx)
        gh_r = jnp.dot(hm, whh_ref[w0 + 0], preferred_element_type=jnp.float32)
        gh_z = jnp.dot(hm, whh_ref[w0 + 1], preferred_element_type=jnp.float32)
        gh_n = jnp.dot(hm, whh_ref[w0 + 2], preferred_element_type=jnp.float32) + bhn
        gx_r = gx_ref[(w0 + 0) * T + t].astype(jnp.float32)
        gx_z = gx_ref[(w0 + 1) * T + t].astype(jnp.float32)
        gx_n = gx_ref[(w0 + 2) * T + t].astype(jnp.float32)
        r = _sig_fast(gx_r + gh_r)
        z = _sig_fast(gx_z + gh_z)
        n = jnp.tanh(gx_n + r * gh_n)
        return n + z * (h - n)                       # == (1 - z) * n + z * h

    def step(i, carry):
        h_f, h_b = carry
        tb = T - 1 - i
        h_f = direction(h_f, 0, i, bhn_f)
        h_b = direction(h_b, 3, tb, bhn_b)
        # Write straight into the (T, Bt, 2H) destination: no staging buffers,
        # no trailing concatenate pass.
        y_ref[pl.ds(i, 1), :, 0:H] = h_f[None].astype(y_ref.dtype)
        y_ref[pl.ds(tb, 1), :, H:2 * H] = h_b[None].astype(y_ref.dtype)
        return h_f, h_b

    h0 = jnp.zeros((Bt, H), dtype=jnp.float32)       # torch init_hidden(): zeros
    unroll = True if T <= 16 else 2                  # bounded live ranges + LLO visibility
    lax.fori_loop(0, T, step, (h0, h0), unroll=unroll)


def _gru_layer_kernel(x_ref, wih_ref, whh_ref, bx_ref, bhn_ref, out_ref, gx_ref):
    _gru_core(x_ref, wih_ref, whh_ref, bx_ref, bhn_ref, out_ref, gx_ref)


def _gru_layer_head_kernel(x_ref, wih_ref, whh_ref, bx_ref, bhn_ref,
                           wa1_ref, ba1_ref, wa2_ref, wfc_ref, bfc_ref,
                           out_ref, y_ref, gx_ref):
    # Last GRU layer with the attention / pooling / FC head fused in: the
    # (T, Bt, 2H) activations never round-trip through HBM.
    _gru_core(x_ref, wih_ref, whh_ref, bx_ref, bhn_ref, y_ref, gx_ref)

    T, Bt, H2 = y_ref.shape
    Ha = wa1_ref.shape[1]

    y = y_ref[...]                                   # pre-relu GRU output (f32)
    xr = jnp.maximum(y, 0.0)                         # self.relu(feature_data)
    h1 = (jnp.dot(xr.reshape(T * Bt, H2).astype(wa1_ref.dtype), wa1_ref[...],
                  preferred_element_type=jnp.float32) + ba1_ref[...])
    h1 = jnp.maximum(h1, 0.0).reshape(T, Bt, Ha)

    # Linear(Ha, 1) as VPU multiply + lane reduce (no N=1 MXU matmul).  The
    # +bias is dropped: softmax over the sequence axis is shift-invariant.
    s = jnp.sum(h1 * wa2_ref[...], axis=-1, keepdims=True)       # (T, Bt, 1)
    s = s - jnp.max(s, axis=0, keepdims=True)
    e = jnp.exp(s)
    attn = e / jnp.sum(e, axis=0, keepdims=True)                 # exact divide

    pooled = jnp.sum(y * attn, axis=0)                           # (Bt, 2H), pre-relu y
    logit = jnp.sum(pooled * wfc_ref[...], axis=-1, keepdims=True) + bfc_ref[...]
    out_ref[...] = 1.0 / (1.0 + jnp.exp(-logit))                 # exact sigmoid


# ---------------------------------------------------------------------------
# layer wrapper: batched over VMEM-budget-derived batch tiles
# ---------------------------------------------------------------------------
def _gru_batch_tile(B, T, D, H, Ha, in_itemsize, out_itemsize, fused, budget):
    Dp, Hp, H2p = _round_up(D, 128), _round_up(H, 128), _round_up(2 * H, 128)
    Hap = _round_up(max(Ha, 1), 128)
    per_row = (2 * T * Dp * in_itemsize            # input block, double-buffered
               + 6 * T * Hp * 2                    # bf16 gx staging
               + 16 * Hp * 4)                      # recurrent live values / spills (rough)
    if fused:
        per_row += T * H2p * 4                     # (T, Bt, 2H) f32 staging scratch
        per_row += T * (H2p + Hap) * 4             # relu slab + attention MLP temporaries
        per_row += 2 * 128 * 4                     # (Bt, 1) output block
    else:
        per_row += 2 * T * H2p * out_itemsize      # output block, double-buffered
    fixed = 2 * 2 * (6 * Dp * Hp + 6 * Hp * Hp) + 8 * 8 * Hp * 4
    if fused:
        fixed += 2 * 2 * H2p * Hap + 4 * 8 * (Hap + H2p) * 4
    return _pick_batch_tile(B, per_row, fixed, budget)


def gru_bidir_layer(x, p, head=None, *, out_dtype=jnp.float32):
    """x: (T, B, D) time-major.  Returns (T, B, 2H) if head is None,
    else the fused attention + FC head output (B, 1)."""
    T, B, D = x.shape
    H = p["whh_f"].shape[0]
    wih, whh, bx, bhn = _pack_gru_weights(p)

    fused = head is not None
    Ha = head["wa1"].shape[1] if fused else 0
    budget = _vmem_budget_bytes()
    b_tile = _gru_batch_tile(B, T, D, H, Ha,
                             in_itemsize=jnp.dtype(x.dtype).itemsize,
                             out_itemsize=jnp.dtype(out_dtype).itemsize,
                             fused=fused, budget=budget)
    grid = (pl.cdiv(B, b_tile),)
    cp = pltpu.CompilerParams(dimension_semantics=("parallel",),
                              vmem_limit_bytes=budget)

    in_specs = [
        pl.BlockSpec((T, b_tile, D), lambda b: (0, b, 0)),
        _full_spec(wih), _full_spec(whh), _full_spec(bx), _full_spec(bhn),
    ]
    gx_scratch = pltpu.VMEM((6 * T, b_tile, H), MXU_DTYPE)

    if not fused:
        return pl.pallas_call(
            _gru_layer_kernel,
            out_shape=jax.ShapeDtypeStruct((T, B, 2 * H), out_dtype),
            grid=grid,
            in_specs=in_specs,
            out_specs=pl.BlockSpec((T, b_tile, 2 * H), lambda b: (0, b, 0)),
            scratch_shapes=[gx_scratch],
            compiler_params=cp,
        )(x, wih, whh, bx, bhn)

    in_specs += [_full_spec(head["wa1"]), _full_spec(head["ba1"]),
                 _full_spec(head["wa2"]), _full_spec(head["wfc"]),
                 _full_spec(head["bfc"])]
    return pl.pallas_call(
        _gru_layer_head_kernel,
        out_shape=jax.ShapeDtypeStruct((B, 1), jnp.float32),
        grid=grid,
        in_specs=in_specs,
        out_specs=pl.BlockSpec((b_tile, 1), lambda b: (b, 0)),
        scratch_shapes=[pltpu.VMEM((T, b_tile, 2 * H), jnp.float32), gx_scratch],
        compiler_params=cp,
    )(x, wih, whh, bx, bhn,
      head["wa1"].astype(MXU_DTYPE), head["ba1"], head["wa2"],
      head["wfc"], head["bfc"])


# ---------------------------------------------------------------------------
# Full forward pass (glue in JAX, hot path in Pallas)
# ---------------------------------------------------------------------------
def mortality_pred_gru_forward(params, baseInfo_data, feature_data, max_seq):
    B = baseInfo_data.shape[0]
    emb = jnp.take(params["embedding"], baseInfo_data, axis=0)       # (B, 3, base_dim)
    base = emb.reshape(B, 1, -1)                                     # (B, 1, 3*base_dim)
    base = jnp.broadcast_to(base, (B, max_seq, base.shape[-1]))
    x = jnp.concatenate([base, feature_data.astype(jnp.float32)], axis=-1)
    # time-major (T, B, D): per-step recurrence tiles become dense (Bt, .) slabs
    x = jnp.transpose(x, (1, 0, 2)).astype(MXU_DTYPE)

    layers = params["gru_layers"]
    for lp in layers[:-1]:
        # TODO(synk): inter-layer GRU dropout is train-time only (identity at inference).
        x = gru_bidir_layer(x, lp, out_dtype=MXU_DTYPE)              # (T, B, 2H) bf16
    out = gru_bidir_layer(x, layers[-1], head=params["head"])        # fused head -> (B, 1)
    return out[:, 0]


# ---------------------------------------------------------------------------
# Deterministic parameter init (synthetic; shapes follow the module __init__)
# ---------------------------------------------------------------------------
def init_params(key, *, baseInfo_len, baseInfo_dim, topk, hidden_dim, num_layers):
    def nrm(k, shape, scale=0.1):
        return scale * jax.random.normal(k, shape, dtype=jnp.float32)

    keys = jax.random.split(key, 2 + num_layers)
    params = {"embedding": nrm(keys[0], (baseInfo_len, baseInfo_dim))}

    gru_layers = []
    d_in = topk + 3 * baseInfo_dim
    for l in range(num_layers):
        k = jax.random.split(keys[2 + l], 8)
        gru_layers.append({
            "wih_f": nrm(k[0], (d_in, 3 * hidden_dim)),
            "whh_f": nrm(k[1], (hidden_dim, 3 * hidden_dim)),
            "bih_f": nrm(k[2], (1, 3 * hidden_dim)),
            "bhh_f": nrm(k[3], (1, 3 * hidden_dim)),
            "wih_b": nrm(k[4], (d_in, 3 * hidden_dim)),
            "whh_b": nrm(k[5], (hidden_dim, 3 * hidden_dim)),
            "bih_b": nrm(k[6], (1, 3 * hidden_dim)),
            "bhh_b": nrm(k[7], (1, 3 * hidden_dim)),
        })
        d_in = 2 * hidden_dim
    params["gru_layers"] = gru_layers

    kh = jax.random.split(keys[1], 6)
    params["head"] = {
        "wa1": nrm(kh[0], (2 * hidden_dim, hidden_dim)),   # Linear(2H, H), pre-transposed
        "ba1": nrm(kh[1], (1, hidden_dim)),
        "wa2": nrm(kh[2], (1, hidden_dim)),                # Linear(H, 1) weight (row layout)
        "ba2": nrm(kh[3], (1, 1)),                         # unused in-kernel: softmax shift-invariant
        "wfc": nrm(kh[4], (1, 2 * hidden_dim)),            # Linear(2H, 1) weight (row layout)
        "bfc": nrm(kh[5], (1, 1)),
    }
    return params


if __name__ == "__main__":
    B, topk, max_seq = 2, 8, 8
    baseInfo_len, baseInfo_dim, hidden_dim, num_layers = 10, 4, 16, 2

    key = jax.random.PRNGKey(0)
    kp, kb, kf = jax.random.split(key, 3)
    params = init_params(kp, baseInfo_len=baseInfo_len, baseInfo_dim=baseInfo_dim,
                         topk=topk, hidden_dim=hidden_dim, num_layers=num_layers)

    baseInfo_data = jax.random.randint(kb, (B, 3), 0, baseInfo_len, dtype=jnp.int32)
    feature_data = jax.random.normal(kf, (B, max_seq, topk), dtype=jnp.float32)

    fwd = jax.jit(mortality_pred_gru_forward, static_argnames="max_seq")
    out = fwd(params, baseInfo_data, feature_data, max_seq=max_seq)
    out = jax.block_until_ready(out)
    assert out.shape == (B,)
    assert bool(jnp.all(jnp.isfinite(out)))
    assert bool(jnp.all((out >= 0.0) & (out <= 1.0)))
    print("KERNEL_OK")
</pallas_src>

<mosaic_0001>
module attributes {stable_mosaic.version = 11 : i64} {
  func.func @_gru_layer_kernel(%arg0: i32, %arg1: memref<8x2x20xbf16, #tpu.memory_space<vmem>>, %arg2: memref<6x20x16xbf16, #tpu.memory_space<vmem>>, %arg3: memref<6x16x16xbf16, #tpu.memory_space<vmem>>, %arg4: memref<6x1x16xf32, #tpu.memory_space<vmem>>, %arg5: memref<2x1x16xf32, #tpu.memory_space<vmem>>, %arg6: memref<8x2x32xbf16, #tpu.memory_space<vmem>>, %arg7: memref<48x2x16xbf16, #tpu.memory_space<vmem>>) attributes {dimension_semantics = [#tpu.dimension_semantics<parallel>], iteration_bounds = array<i64: 1>, scalar_prefetch = 0 : i64, scratch_operands = 1 : i64, tpu.core_type = #tpu.core_type<tc>, window_params = [{transform_indices = @transform_0, window_bounds = array<i64: 8, 2, 20>}, {pipeline_mode = #tpu.pipeline_mode<synchronous>, transform_indices = @transform_1, window_bounds = array<i64: 6, 20, 16>}, {pipeline_mode = #tpu.pipeline_mode<synchronous>, transform_indices = @transform_2, window_bounds = array<i64: 6, 16, 16>}, {pipeline_mode = #tpu.pipeline_mode<synchronous>, transform_indices = @transform_3, window_bounds = array<i64: 6, 1, 16>}, {pipeline_mode = #tpu.pipeline_mode<synchronous>, transform_indices = @transform_4, window_bounds = array<i64: 2, 1, 16>}, {transform_indices = @transform_5, window_bounds = array<i64: 8, 2, 32>}]} {
    %c0 = arith.constant 0 : index
    %c0_0 = arith.constant 0 : index
    %c0_1 = arith.constant 0 : index
    %0 = vector.load %arg1[%c0, %c0_0, %c0_1] : memref<8x2x20xbf16, #tpu.memory_space<vmem>>, vector<8x2x20xbf16>
    %1 = vector.shape_cast %0 : vector<8x2x20xbf16> to vector<16x20xbf16>
    %c0_2 = arith.constant 0 : index
    %c0_3 = arith.constant 0 : index
    %c0_4 = arith.constant 0 : index
    %2 = vector.load %arg2[%c0_2, %c0_3, %c0_4] : memref<6x20x16xbf16, #tpu.memory_space<vmem>>, vector<1x20x16xbf16>
    %3 = vector.shape_cast %2 : vector<1x20x16xbf16> to vector<20x16xbf16>
    %cst = arith.constant dense<0.000000e+00> : vector<16x16xf32>
    %4 = tpu.matmul %1, %3, %cst {dimension_numbers = #tpu.dot_dimension_numbers<[1], [0], [0], [1], [0, 0, 1, 1], [], []>} : vector<16x20xbf16>, vector<20x16xbf16>, vector<16x16xf32> -> vector<16x16xf32>
    %c0_5 = arith.constant 0 : index
    %c0_6 = arith.constant 0 : index
    %c0_7 = arith.constant 0 : index
    %5 = vector.load %arg4[%c0_5, %c0_6, %c0_7] : memref<6x1x16xf32, #tpu.memory_space<vmem>>, vector<1x1x16xf32>
    %6 = vector.shape_cast %5 : vector<1x1x16xf32> to vector<1x16xf32>
    %7 = vector.broadcast %6 : vector<1x16xf32> to vector<16x16xf32>
    %8 = arith.addf %4, %7 : vector<16x16xf32>
    %9 = arith.truncf %8 : vector<16x16xf32> to vector<16x16xbf16>
    %10 = vector.shape_cast %9 : vector<16x16xbf16> to vector<8x2x16xbf16>
    %c0_8 = arith.constant 0 : index
    %c0_9 = arith.constant 0 : index
    %c0_10 = arith.constant 0 : index
    %11 = vector.load %arg7[%c0_8, %c0_9, %c0_10] : memref<48x2x16xbf16, #tpu.memory_space<vmem>>, vector<8x2x16xbf16>
    tpu.vector_store %arg7[%c0_8, %c0_9, %c0_10], %10 {strides = array<i32>} : memref<48x2x16xbf16, #tpu.memory_space<vmem>>, vector<8x2x16xbf16>,
    %c1 = arith.constant 1 : index
    %c0_11 = arith.constant 0 : index
    %c0_12 = arith.constant 0 : index
    %12 = vector.load %arg2[%c1, %c0_11, %c0_12] : memref<6x20x16xbf16, #tpu.memory_space<vmem>>, vector<1x20x16xbf16>
    %13 = vector.shape_cast %12 : vector<1x20x16xbf16> to vector<20x16xbf16>
    %cst_13 = arith.constant dense<0.000000e+00> : vector<16x16xf32>
    %14 = tpu.matmul %1, %13, %cst_13 {dimension_numbers = #tpu.dot_dimension_numbers<[1], [0], [0], [1], [0, 0, 1, 1], [], []>} : vector<16x20xbf16>, vector<20x16xbf16>, vector<16x16xf32> -> vector<16x16xf32>
    %c1_14 = arith.constant 1 : index
    %c0_15 = arith.constant 0 : index
    %c0_16 = arith.constant 0 : index
    %15 = vector.load %arg4[%c1_14, %c0_15, %c0_16] : memref<6x1x16xf32, #tpu.memory_space<vmem>>, vector<1x1x16xf32>
    %16 = vector.shape_cast %15 : vector<1x1x16xf32> to vector<1x16xf32>
    %17 = vector.broadcast %16 : vector<1x16xf32> to vector<16x16xf32>
    %18 = arith.addf %14, %17 : vector<16x16xf32>
    %19 = arith.truncf %18 : vector<16x16xf32> to vector<16x16xbf16>
    %20 = vector.shape_cast %19 : vector<16x16xbf16> to vector<8x2x16xbf16>
    %c8 = arith.constant 8 : index
    %c0_17 = arith.constant 0 : index
    %c0_18 = arith.constant 0 : index
    %21 = vector.load %arg7[%c8, %c0_17, %c0_18] : memref<48x2x16xbf16, #tpu.memory_space<vmem>>, vector<8x2x16xbf16>
    tpu.vector_store %arg7[%c8, %c0_17, %c0_18], %20 {strides = array<i32>} : memref<48x2x16xbf16, #tpu.memory_space<vmem>>, vector<8x2x16xbf16>,
    %c2 = arith.constant 2 : index
    %c0_19 = arith.constant 0 : index
    %c0_20 = arith.constant 0 : index
    %22 = vector.load %arg2[%c2, %c0_19, %c0_20] : memref<6x20x16xbf16, #tpu.memory_space<vmem>>, vector<1x20x16xbf16>
    %23 = vector.shape_cast %22 : vector<1x20x16xbf16> to vector<20x16xbf16>
    %cst_21 = arith.constant dense<0.000000e+00> : vector<16x16xf32>
    %24 = tpu.matmul %1, %23, %cst_21 {dimension_numbers = #tpu.dot_dimension_numbers<[1], [0], [0], [1], [0, 0, 1, 1], [], []>} : vector<16x20xbf16>, vector<20x16xbf16>, vector<16x16xf32> -> vector<16x16xf32>
    %c2_22 = arith.constant 2 : index
    %c0_23 = arith.constant 0 : index
    %c0_24 = arith.constant 0 : index
    %25 = vector.load %arg4[%c2_22, %c0_23, %c0_24] : memref<6x1x16xf32, #tpu.memory_space<vmem>>, vector<1x1x16xf32>
    %26 = vector.shape_cast %25 : vector<1x1x16xf32> to vector<1x16xf32>
    %27 = vector.broadcast %26 : vector<1x16xf32> to vector<16x16xf32>
    %28 = arith.addf %24, %27 : vector<16x16xf32>
    %29 = arith.truncf %28 : vector<16x16xf32> to vector<16x16xbf16>
    %30 = vector.shape_cast %29 : vector<16x16xbf16> to vector<8x2x16xbf16>
    %c16 = arith.constant 16 : index
    %c0_25 = arith.constant 0 : index
    %c0_26 = arith.constant 0 : index
    %31 = vector.load %arg7[%c16, %c0_25, %c0_26] : memref<48x2x16xbf16, #tpu.memory_space<vmem>>, vector<8x2x16xbf16>
    tpu.vector_store %arg7[%c16, %c0_25, %c0_26], %30 {strides = array<i32>} : memref<48x2x16xbf16, #tpu.memory_space<vmem>>, vector<8x2x16xbf16>,
    %c3 = arith.constant 3 : index
    %c0_27 = arith.constant 0 : index
    %c0_28 = arith.constant 0 : index
    %32 = vector.load %arg2[%c3, %c0_27, %c0_28] : memref<6x20x16xbf16, #tpu.memory_space<vmem>>, vector<1x20x16xbf16>
    %33 = vector.shape_cast %32 : vector<1x20x16xbf16> to vector<20x16xbf16>
    %cst_29 = arith.constant dense<0.000000e+00> : vector<16x16xf32>
    %34 = tpu.matmul %1, %33, %cst_29 {dimension_numbers = #tpu.dot_dimension_numbers<[1], [0], [0], [1], [0, 0, 1, 1], [], []>} : vector<16x20xbf16>, vector<20x16xbf16>, vector<16x16xf32> -> vector<16x16xf32>
    %c3_30 = arith.constant 3 : index
    %c0_31 = arith.constant 0 : index
    %c0_32 = arith.constant 0 : index
    %35 = vector.load %arg4[%c3_30, %c0_31, %c0_32] : memref<6x1x16xf32, #tpu.memory_space<vmem>>, vector<1x1x16xf32>
    %36 = vector.shape_cast %35 : vector<1x1x16xf32> to vector<1x16xf32>
    %37 = vector.broadcast %36 : vector<1x16xf32> to vector<16x16xf32>
    %38 = arith.addf %34, %37 : vector<16x16xf32>
    %39 = arith.truncf %38 : vector<16x16xf32> to vector<16x16xbf16>
    %40 = vector.shape_cast %39 : vector<16x16xbf16> to vector<8x2x16xbf16>
    %c24 = arith.constant 24 : index
    %c0_33 = arith.constant 0 : index
    %c0_34 = arith.constant 0 : index
    %41 = vector.load %arg7[%c24, %c0_33, %c0_34] : memref<48x2x16xbf16, #tpu.memory_space<vmem>>, vector<8x2x16xbf16>
    tpu.vector_store %arg7[%c24, %c0_33, %c0_34], %40 {strides = array<i32>} : memref<48x2x16xbf16, #tpu.memory_space<vmem>>, vector<8x2x16xbf16>,
    %c4 = arith.constant 4 : index
    %c0_35 = arith.constant 0 : index
    %c0_36 = arith.constant 0 : index
    %42 = vector.load %arg2[%c4, %c0_35, %c0_36] : memref<6x20x16xbf16, #tpu.memory_space<vmem>>, vector<1x20x16xbf16>
    %43 = vector.shape_cast %42 : vector<1x20x16xbf16> to vector<20x16xbf16>
    %cst_37 = arith.constant dense<0.000000e+00> : vector<16x16xf32>
    %44 = tpu.matmul %1, %43, %cst_37 {dimension_numbers = #tpu.dot_dimension_numbers<[1], [0], [0], [1], [0, 0, 1, 1], [], []>} : vector<16x20xbf16>, vector<20x16xbf16>, vector<16x16xf32> -> vector<16x16xf32>
    %c4_38 = arith.constant 4 : index
    %c0_39 = arith.constant 0 : index
    %c0_40 = arith.constant 0 : index
    %45 = vector.load %arg4[%c4_38, %c0_39, %c0_40] : memref<6x1x16xf32, #tpu.memory_space<vmem>>, vector<1x1x16xf32>
    %46 = vector.shape_cast %45 : vector<1x1x16xf32> to vector<1x16xf32>
    %47 = vector.broadcast %46 : vector<1x16xf32> to vector<16x16xf32>
    %48 = arith.addf %44, %47 : vector<16x16xf32>
    %49 = arith.truncf %48 : vector<16x16xf32> to vector<16x16xbf16>
    %50 = vector.shape_cast %49 : vector<16x16xbf16> to vector<8x2x16xbf16>
    %c32 = arith.constant 32 : index
    %c0_41 = arith.constant 0 : index
    %c0_42 = arith.constant 0 : index
    %51 = vector.load %arg7[%c32, %c0_41, %c0_42] : memref<48x2x16xbf16, #tpu.memory_space<vmem>>, vector<8x2x16xbf16>
    tpu.vector_store %arg7[%c32, %c0_41, %c0_42], %50 {strides = array<i32>} : memref<48x2x16xbf16, #tpu.memory_space<vmem>>, vector<8x2x16xbf16>,
    %c5 = arith.constant 5 : index
    %c0_43 = arith.constant 0 : index
    %c0_44 = arith.constant 0 : index
    %52 = vector.load %arg2[%c5, %c0_43, %c0_44] : memref<6x20x16xbf16, #tpu.memory_space<vmem>>, vector<1x20x16xbf16>
    %53 = vector.shape_cast %52 : vector<1x20x16xbf16> to vector<20x16xbf16>
    %cst_45 = arith.constant dense<0.000000e+00> : vector<16x16xf32>
    %54 = tpu.matmul %1, %53, %cst_45 {dimension_numbers = #tpu.dot_dimension_numbers<[1], [0], [0], [1], [0, 0, 1, 1], [], []>} : vector<16x20xbf16>, vector<20x16xbf16>, vector<16x16xf32> -> vector<16x16xf32>
    %c5_46 = arith.constant 5 : index
    %c0_47 = arith.constant 0 : index
    %c0_48 = arith.constant 0 : index
    %55 = vector.load %arg4[%c5_46, %c0_47, %c0_48] : memref<6x1x16xf32, #tpu.memory_space<vmem>>, vector<1x1x16xf32>
    %56 = vector.shape_cast %55 : vector<1x1x16xf32> to vector<1x16xf32>
    %57 = vector.broadcast %56 : vector<1x16xf32> to vector<16x16xf32>
    %58 = arith.addf %54, %57 : vector<16x16xf32>
    %59 = arith.truncf %58 : vector<16x16xf32> to vector<16x16xbf16>
    %60 = vector.shape_cast %59 : vector<16x16xbf16> to vector<8x2x16xbf16>
    %c40 = arith.constant 40 : index
    %c0_49 = arith.constant 0 : index
    %c0_50 = arith.constant 0 : index
    %61 = vector.load %arg7[%c40, %c0_49, %c0_50] : memref<48x2x16xbf16, #tpu.memory_space<vmem>>, vector<8x2x16xbf16>
    tpu.vector_store %arg7[%c40, %c0_49, %c0_50], %60 {strides = array<i32>} : memref<48x2x16xbf16, #tpu.memory_space<vmem>>, vector<8x2x16xbf16>,
    %c0_51 = arith.constant 0 : index
    %c0_52 = arith.constant 0 : index
    %c0_53 = arith.constant 0 : index
    %62 = vector.load %arg5[%c0_51, %c0_52, %c0_53] : memref<2x1x16xf32, #tpu.memory_space<vmem>>, vector<1x1x16xf32>
    %63 = vector.shape_cast %62 : vector<1x1x16xf32> to vector<1x16xf32>
    %c1_54 = arith.constant 1 : index
    %c0_55 = arith.constant 0 : index
    %c0_56 = arith.constant 0 : index
    %64 = vector.load %arg5[%c1_54, %c0_55, %c0_56] : memref<2x1x16xf32, #tpu.memory_space<vmem>>, vector<1x1x16xf32>
    %65 = vector.shape_cast %64 : vector<1x1x16xf32> to vector<1x16xf32>
    %cst_57 = arith.constant 0.000000e+00 : f32
    %66 = vector.broadcast %cst_57 : f32 to vector<2x16xf32>
    %c0_i32 = arith.constant 0 : i32
    %c7_i32 = arith.constant 7 : i32
    %67 = arith.subi %c7_i32, %c0_i32 : i32
    %68 = arith.truncf %66 : vector<2x16xf32> to vector<2x16xbf16>
    %c0_58 = arith.constant 0 : index
    %c0_59 = arith.constant 0 : index
    %c0_60 = arith.constant 0 : index
    %69 = vector.load %arg3[%c0_58, %c0_59, %c0_60] : memref<6x16x16xbf16, #tpu.memory_space<vmem>>, vector<1x16x16xbf16>
    %70 = vector.shape_cast %69 : vector<1x16x16xbf16> to vector<16x16xbf16>
    %cst_61 = arith.constant dense<0.000000e+00> : vector<2x16xf32>
    %71 = tpu.matmul %68, %70, %cst_61 {dimension_numbers = #tpu.dot_dimension_numbers<[1], [0], [0], [1], [0, 0, 1, 1], [], []>} : vector<2x16xbf16>, vector<16x16xbf16>, vector<2x16xf32> -> vector<2x16xf32>
    %c1_62 = arith.constant 1 : index
    %c0_63 = arith.constant 0 : index
    %c0_64 = arith.constant 0 : index
    %72 = vector.load %arg3[%c1_62, %c0_63, %c0_64] : memref<6x16x16xbf16, #tpu.memory_space<vmem>>, vector<1x16x16xbf16>
    %73 = vector.shape_cast %72 : vector<1x16x16xbf16> to vector<16x16xbf16>
    %cst_65 = arith.constant dense<0.000000e+00> : vector<2x16xf32>
    %74 = tpu.matmul %68, %73, %cst_65 {dimension_numbers = #tpu.dot_dimension_numbers<[1], [0], [0], [1], [0, 0, 1, 1], [], []>} : vector<2x16xbf16>, vector<16x16xbf16>, vector<2x16xf32> -> vector<2x16xf32>
    %c2_66 = arith.constant 2 : index
    %c0_67 = arith.constant 0 : index
    %c0_68 = arith.constant 0 : index
    %75 = vector.load %arg3[%c2_66, %c0_67, %c0_68] : memref<6x16x16xbf16, #tpu.memory_space<vmem>>, vector<1x16x16xbf16>
    %76 = vector.shape_cast %75 : vector<1x16x16xbf16> to vector<16x16xbf16>
    %cst_69 = arith.constant dense<0.000000e+00> : vector<2x16xf32>
    %77 = tpu.matmul %68, %76, %cst_69 {dimension_numbers = #tpu.dot_dimension_numbers<[1], [0], [0], [1], [0, 0, 1, 1], [], []>} : vector<2x16xbf16>, vector<16x16xbf16>, vector<2x16xf32> -> vector<2x16xf32>
    %78 = vector.broadcast %63 : vector<1x16xf32> to vector<2x16xf32>
    %79 = arith.addf %77, %78 : vector<2x16xf32>
    %c0_i32_70 = arith.constant 0 : i32
    %80 = arith.addi %c0_i32_70, %c0_i32 : i32
    %81 = arith.index_cast %80 : i32 to index
    %c0_71 = arith.constant 0 : index
    %c0_72 = arith.constant 0 : index
    %82 = vector.load %arg7[%81, %c0_71, %c0_72] : memref<48x2x16xbf16, #tpu.memory_space<vmem>>, vector<1x2x16xbf16>
    %83 = vector.shape_cast %82 : vector<1x2x16xbf16> to vector<2x16xbf16>
    %84 = arith.extf %83 : vector<2x16xbf16> to vector<2x16xf32>
    %c8_i32 = arith.constant 8 : i32
    %85 = arith.addi %c8_i32, %c0_i32 : i32
    %86 = arith.index_cast %85 : i32 to index
    %c0_73 = arith.constant 0 : index
    %c0_74 = arith.constant 0 : index
    %87 = vector.load %arg7[%86, %c0_73, %c0_74] : memref<48x2x16xbf16, #tpu.memory_space<vmem>>, vector<1x2x16xbf16>
    %88 = vector.shape_cast %87 : vector<1x2x16xbf16> to vector<2x16xbf16>
    %89 = arith.extf %88 : vector<2x16xbf16> to vector<2x16xf32>
    %c16_i32 = arith.constant 16 : i32
    %90 = arith.addi %c16_i32, %c0_i32 : i32
    %91 = arith.index_cast %90 : i32 to index
    %c0_75 = arith.constant 0 : index
    %c0_76 = arith.constant 0 : index
    %92 = vector.load %arg7[%91, %c0_75, %c0_76] : memref<48x2x16xbf16, #tpu.memory_space<vmem>>, vector<1x2x16xbf16>
    %93 = vector.shape_cast %92 : vector<1x2x16xbf16> to vector<2x16xbf16>
    %94 = arith.extf %93 : vector<2x16xbf16> to vector<2x16xf32>
    %95 = arith.addf %84, %71 : vector<2x16xf32>
    %cst_77 = arith.constant 5.000000e-01 : f32
    %96 = vector.broadcast %cst_77 : f32 to vector<2x16xf32>
    %97 = arith.mulf %96, %95 : vector<2x16xf32>
    %98 = math.tanh %97 : vector<2x16xf32>
    %cst_78 = arith.constant 5.000000e-01 : f32
    %99 = vector.broadcast %cst_78 : f32 to vector<2x16xf32>
    %100 = arith.mulf %99, %98 : vector<2x16xf32>
    %cst_79 = arith.constant 5.000000e-01 : f32
    %101 = vector.broadcast %cst_79 : f32 to vector<2x16xf32>
    %102 = arith.addf %100, %101 : vector<2x16xf32>
    %103 = arith.addf %89, %74 : vector<2x16xf32>
    %cst_80 = arith.constant 5.000000e-01 : f32
    %104 = vector.broadcast %cst_80 : f32 to vector<2x16xf32>
    %105 = arith.mulf %104, %103 : vector<2x16xf32>
    %106 = math.tanh %105 : vector<2x16xf32>
    %cst_81 = arith.constant 5.000000e-01 : f32
    %107 = vector.broadcast %cst_81 : f32 to vector<2x16xf32>
    %108 = arith.mulf %107, %106 : vector<2x16xf32>
    %cst_82 = arith.constant 5.000000e-01 : f32
    %109 = vector.broadcast %cst_82 : f32 to vector<2x16xf32>
    %110 = arith.addf %108, %109 : vector<2x16xf32>
    %111 = arith.mulf %102, %79 : vector<2x16xf32>
    %112 = arith.addf %94, %111 : vector<2x16xf32>
    %113 = math.tanh %112 : vector<2x16xf32>
    %114 = arith.subf %66, %113 : vector<2x16xf32>
    %115 = arith.mulf %110, %114 : vector<2x16xf32>
    %116 = arith.addf %113, %115 : vector<2x16xf32>
    %117 = arith.truncf %66 : vector<2x16xf32> to vector<2x16xbf16>
    %c3_83 = arith.constant 3 : index
    %c0_84 = arith.constant 0 : index
    %c0_85 = arith.constant 0 : index
    %118 = vector.load %arg3[%c3_83, %c0_84, %c0_85] : memref<6x16x16xbf16, #tpu.memory_space<vmem>>, vector<1x16x16xbf16>
    %119 = vector.shape_cast %118 : vector<1x16x16xbf16> to vector<16x16xbf16>
    %cst_86 = arith.constant dense<0.000000e+00> : vector<2x16xf32>
    %120 = tpu.matmul %117, %119, %cst_86 {dimension_numbers = #tpu.dot_dimension_numbers<[1], [0], [0], [1], [0, 0, 1, 1], [], []>} : vector<2x16xbf16>, vector<16x16xbf16>, vector<2x16xf32> -> vector<2x16xf32>
    %c4_87 = arith.constant 4 : index
    %c0_88 = arith.constant 0 : index
    %c0_89 = arith.constant 0 : index
    %121 = vector.load %arg3[%c4_87, %c0_88, %c0_89] : memref<6x16x16xbf16, #tpu.memory_space<vmem>>, vector<1x16x16xbf16>
    %122 = vector.shape_cast %121 : vector<1x16x16xbf16> to vector<16x16xbf16>
    %cst_90 = arith.constant dense<0.000000e+00> : vector<2x16xf32>
    %123 = tpu.matmul %117, %122, %cst_90 {dimension_numbers = #tpu.dot_dimension_numbers<[1], [0], [0], [1], [0, 0, 1, 1], [], []>} : vector<2x16xbf16>, vector<16x16xbf16>, vector<2x16xf32> -> vector<2x16xf32>
    %c5_91 = arith.constant 5 : index
    %c0_92 = arith.constant 0 : index
    %c0_93 = arith.constant 0 : index
    %124 = vector.load %arg3[%c5_91, %c0_92, %c0_93] : memref<6x16x16xbf16, #tpu.memory_space<vmem>>, vector<1x16x16xbf16>
    %125 = vector.shape_cast %124 : vector<1x16x16xbf16> to vector<16x16xbf16>
    %cst_94 = arith.constant dense<0.000000e+00> : vector<2x16xf32>
    %126 = tpu.matmul %117, %125, %cst_94 {dimension_numbers = #tpu.dot_dimension_numbers<[1], [0], [0], [1], [0, 0, 1, 1], [], []>} : vector<2x16xbf16>, vector<16x16xbf16>, vector<2x16xf32> -> vector<2x16xf32>
    %127 = vector.broadcast %65 : vector<1x16xf32> to vector<2x16xf32>
    %128 = arith.addf %126, %127 : vector<2x16xf32>
    %c24_i32 = arith.constant 24 : i32
    %129 = arith.addi %c24_i32, %67 : i32
    %130 = arith.index_cast %129 : i32 to index
    %c0_95 = arith.constant 0 : index
    %c0_96 = arith.constant 0 : index
    %131 = vector.load %arg7[%130, %c0_95, %c0_96] : memref<48x2x16xbf16, #tpu.memory_space<vmem>>, vector<1x2x16xbf16>
    %132 = vector.shape_cast %131 : vector<1x2x16xbf16> to vector<2x16xbf16>
    %133 = arith.extf %132 : vector<2x16xbf16> to vector<2x16xf32>
    %c32_i32 = arith.constant 32 : i32
    %134 = arith.addi %c32_i32, %67 : i32
    %135 = arith.index_cast %134 : i32 to index
    %c0_97 = arith.constant 0 : index
    %c0_98 = arith.constant 0 : index
    %136 = vector.load %arg7[%135, %c0_97, %c0_98] : memref<48x2x16xbf16, #tpu.memory_space<vmem>>, vector<1x2x16xbf16>
    %137 = vector.shape_cast %136 : vector<1x2x16xbf16> to vector<2x16xbf16>
    %138 = arith.extf %137 : vector<2x16xbf16> to vector<2x16xf32>
    %c40_i32 = arith.constant 40 : i32
    %139 = arith.addi %c40_i32, %67 : i32
    %140 = arith.index_cast %139 : i32 to index
    %c0_99 = arith.constant 0 : index
    %c0_100 = arith.constant 0 : index
    %141 = vector.load %arg7[%140, %c0_99, %c0_100] : memref<48x2x16xbf16, #tpu.memory_space<vmem>>, vector<1x2x16xbf16>
    %142 = vector.shape_cast %141 : vector<1x2x16xbf16> to vector<2x16xbf16>
    %143 = arith.extf %142 : vector<2x16xbf16> to vector<2x16xf32>
    %144 = arith.addf %133, %120 : vector<2x16xf32>
    %cst_101 = arith.constant 5.000000e-01 : f32
    %145 = vector.broadcast %cst_101 : f32 to vector<2x16xf32>
    %146 = arith.mulf %145, %144 : vector<2x16xf32>
    %147 = math.tanh %146 : vector<2x16xf32>
    %cst_102 = arith.constant 5.000000e-01 : f32
    %148 = vector.broadcast %cst_102 : f32 to vector<2x16xf32>
    %149 = arith.mulf %148, %147 : vector<2x16xf32>
    %cst_103 = arith.constant 5.000000e-01 : f32
    %150 = vector.broadcast %cst_103 : f32 to vector<2x16xf32>
    %151 = arith.addf %149, %150 : vector<2x16xf32>
    %152 = arith.addf %138, %123 : vector<2x16xf32>
    %cst_104 = arith.constant 5.000000e-01 : f32
    %153 = vector.broadcast %cst_104 : f32 to vector<2x16xf32>
    %154 = arith.mulf %153, %152 : vector<2x16xf32>
    %155 = math.tanh %154 : vector<2x16xf32>
    %cst_105 = arith.constant 5.000000e-01 : f32
    %156 = vector.broadcast %cst_105 : f32 to vector<2x16xf32>
    %157 = arith.mulf %156, %155 : vector<2x16xf32>
    %cst_106 = arith.constant 5.000000e-01 : f32
    %158 = vector.broadcast %cst_106 : f32 to vector<2x16xf32>
    %159 = arith.addf %157, %158 : vector<2x16xf32>
    %160 = arith.mulf %151, %128 : vector<2x16xf32>
    %161 = arith.addf %143, %160 : vector<2x16xf32>
    %162 = math.tanh %161 : vector<2x16xf32>
    %163 = arith.subf %66, %162 : vector<2x16xf32>
    %164 = arith.mulf %159, %163 : vector<2x16xf32>
    %165 = arith.addf %162, %164 : vector<2x16xf32>
    %166 = vector.shape_cast %116 : vector<2x16xf32> to vector<1x2x16xf32>
    %167 = arith.truncf %166 : vector<1x2x16xf32> to vector<1x2x16xbf16>
    %168 = arith.index_cast %c0_i32 : i32 to index
    %c0_107 = arith.constant 0 : index
    %c0_108 = arith.constant 0 : index
    %169 = vector.load %arg6[%168, %c0_107, %c0_108] : memref<8x2x32xbf16, #tpu.memory_space<vmem>>, vector<1x2x16xbf16>
    tpu.vector_store %arg6[%168, %c0_107, %c0_108], %167 {strides = array<i32>} : memref<8x2x32xbf16, #tpu.memory_space<vmem>>, vector<1x2x16xbf16>,
    %170 = vector.shape_cast %165 : vector<2x16xf32> to vector<1x2x16xf32>
    %171 = arith.truncf %170 : vector<1x2x16xf32> to vector<1x2x16xbf16>
    %172 = arith.index_cast %67 : i32 to index
    %c0_109 = arith.constant 0 : index
    %c16_110 = arith.constant 16 : index
    %173 = vector.load %arg6[%172, %c0_109, %c16_110] : memref<8x2x32xbf16, #tpu.memory_space<vmem>>, vector<1x2x16xbf16>
    tpu.vector_store %arg6[%172, %c0_109, %c16_110], %171 {strides = array<i32>} : memref<8x2x32xbf16, #tpu.memory_space<vmem>>, vector<1x2x16xbf16>,
    %c1_i32 = arith.constant 1 : i32
    %c7_i32_111 = arith.constant 7 : i32
    %174 = arith.subi %c7_i32_111, %c1_i32 : i32
    %175 = arith.truncf %116 : vector<2x16xf32> to vector<2x16xbf16>
    %c0_112 = arith.constant 0 : index
    %c0_113 = arith.constant 0 : index
    %c0_114 = arith.constant 0 : index
    %176 = vector.load %arg3[%c0_112, %c0_113, %c0_114] : memref<6x16x16xbf16, #tpu.memory_space<vmem>>, vector<1x16x16xbf16>
    %177 = vector.shape_cast %176 : vector<1x16x16xbf16> to vector<16x16xbf16>
    %cst_115 = arith.constant dense<0.000000e+00> : vector<2x16xf32>
    %178 = tpu.matmul %175, %177, %cst_115 {dimension_numbers = #tpu.dot_dimension_numbers<[1], [0], [0], [1], [0, 0, 1, 1], [], []>} : vector<2x16xbf16>, vector<16x16xbf16>, vector<2x16xf32> -> vector<2x16xf32>
    %c1_116 = arith.constant 1 : index
    %c0_117 = arith.constant 0 : index
    %c0_118 = arith.constant 0 : index
    %179 = vector.load %arg3[%c1_116, %c0_117, %c0_118] : memref<6x16x16xbf16, #tpu.memory_space<vmem>>, vector<1x16x16xbf16>
    %180 = vector.shape_cast %179 : vector<1x16x16xbf16> to vector<16x16xbf16>
    %cst_119 = arith.constant dense<0.000000e+00> : vector<2x16xf32>
    %181 = tpu.matmul %175, %180, %cst_119 {dimension_numbers = #tpu.dot_dimension_numbers<[1], [0], [0], [1], [0, 0, 1, 1], [], []>} : vector<2x16xbf16>, vector<16x16xbf16>, vector<2x16xf32> -> vector<2x16xf32>
    %c2_120 = arith.constant 2 : index
    %c0_121 = arith.constant 0 : index
    %c0_122 = arith.constant 0 : index
    %182 = vector.load %arg3[%c2_120, %c0_121, %c0_122] : memref<6x16x16xbf16, #tpu.memory_space<vmem>>, vector<1x16x16xbf16>
    %183 = vector.shape_cast %182 : vector<1x16x16xbf16> to vector<16x16xbf16>
    %cst_123 = arith.constant dense<0.000000e+00> : vector<2x16xf32>
    %184 = tpu.matmul %175, %183, %cst_123 {dimension_numbers = #tpu.dot_dimension_numbers<[1], [0], [0], [1], [0, 0, 1, 1], [], []>} : vector<2x16xbf16>, vector<16x16xbf16>, vector<2x16xf32> -> vector<2x16xf32>
    %185 = vector.broadcast %63 : vector<1x16xf32> to vector<2x16xf32>
    %186 = arith.addf %184, %185 : vector<2x16xf32>
    %c0_i32_124 = arith.constant 0 : i32
    %187 = arith.addi %c0_i32_124, %c1_i32 : i32
    %188 = arith.index_cast %187 : i32 to index
    %c0_125 = arith.constant 0 : index
    %c0_126 = arith.constant 0 : index
    %189 = vector.load %arg7[%188, %c0_125, %c0_126] : memref<48x2x16xbf16, #tpu.memory_space<vmem>>, vector<1x2x16xbf16>
    %190 = vector.shape_cast %189 : vector<1x2x16xbf16> to vector<2x16xbf16>
    %191 = arith.extf %190 : vector<2x16xbf16> to vector<2x16xf32>
    %c8_i32_127 = arith.constant 8 : i32
    %192 = arith.addi %c8_i32_127, %c1_i32 : i32
    %193 = arith.index_cast %192 : i32 to index
    %c0_128 = arith.constant 0 : index
    %c0_129 = arith.constant 0 : index
    %194 = vector.load %arg7[%193, %c0_128, %c0_129] : memref<48x2x16xbf16, #tpu.memory_space<vmem>>, vector<1x2x16xbf16>
    %195 = vector.shape_cast %194 : vector<1x2x16xbf16> to vector<2x16xbf16>
    %196 = arith.extf %195 : vector<2x16xbf16> to vector<2x16xf32>
    %c16_i32_130 = arith.constant 16 : i32
    %197 = arith.addi %c16_i32_130, %c1_i32 : i32
    %198 = arith.index_cast %197 : i32 to index
    %c0_131 = arith.constant 0 : index
    %c0_132 = arith.constant 0 : index
    %199 = vector.load %arg7[%198, %c0_131, %c0_132] : memref<48x2x16xbf16, #tpu.memory_space<vmem>>, vector<1x2x16xbf16>
    %200 = vector.shape_cast %199 : vector<1x2x16xbf16> to vector<2x16xbf16>
    %201 = arith.extf %200 : vector<2x16xbf16> to vector<2x16xf32>
    %202 = arith.addf %191, %178 : vector<2x16xf32>
    %cst_133 = arith.constant 5.000000e-01 : f32
    %203 = vector.broadcast %cst_133 : f32 to vector<2x16xf32>
    %204 = arith.mulf %203, %202 : vector<2x16xf32>
    %205 = math.tanh %204 : vector<2x16xf32>
    %cst_134 = arith.constant 5.000000e-01 : f32
    %206 = vector.broadcast %cst_134 : f32 to vector<2x16xf32>
    %207 = arith.mulf %206, %205 : vector<2x16xf32>
    %cst_135 = arith.constant 5.000000e-01 : f32
    %208 = vector.broadcast %cst_135 : f32 to vector<2x16xf32>
    %209 = arith.addf %207, %208 : vector<2x16xf32>
    %210 = arith.addf %196, %181 : vector<2x16xf32>
    %cst_136 = arith.constant 5.000000e-01 : f32
    %211 = vector.broadcast %cst_136 : f32 to vector<2x16xf32>
    %212 = arith.mulf %211, %210 : vector<2x16xf32>
    %213 = math.tanh %212 : vector<2x16xf32>
    %cst_137 = arith.constant 5.000000e-01 : f32
    %214 = vector.broadcast %cst_137 : f32 to vector<2x16xf32>
    %215 = arith.mulf %214, %213 : vector<2x16xf32>
    %cst_138 = arith.constant 5.000000e-01 : f32
    %216 = vector.broadcast %cst_138 : f32 to vector<2x16xf32>
    %217 = arith.addf %215, %216 : vector<2x16xf32>
    %218 = arith.mulf %209, %186 : vector<2x16xf32>
    %219 = arith.addf %201, %218 : vector<2x16xf32>
    %220 = math.tanh %219 : vector<2x16xf32>
    %221 = arith.subf %116, %220 : vector<2x16xf32>
    %222 = arith.mulf %217, %221 : vector<2x16xf32>
    %223 = arith.addf %220, %222 : vector<2x16xf32>
    %224 = arith.truncf %165 : vector<2x16xf32> to vector<2x16xbf16>
    %c3_139 = arith.constant 3 : index
    %c0_140 = arith.constant 0 : index
    %c0_141 = arith.constant 0 : index
    %225 = vector.load %arg3[%c3_139, %c0_140, %c0_141] : memref<6x16x16xbf16, #tpu.memory_space<vmem>>, vector<1x16x16xbf16>
    %226 = vector.shape_cast %225 : vector<1x16x16xbf16> to vector<16x16xbf16>
    %cst_142 = arith.constant dense<0.000000e+00> : vector<2x16xf32>
    %227 = tpu.matmul %224, %226, %cst_142 {dimension_numbers = #tpu.dot_dimension_numbers<[1], [0], [0], [1], [0, 0, 1, 1], [], []>} : vector<2x16xbf16>, vector<16x16xbf16>, vector<2x16xf32> -> vector<2x16xf32>
    %c4_143 = arith.constant 4 : index
    %c0_144 = arith.constant 0 : index
    %c0_145 = arith.constant 0 : index
    %228 = vector.load %arg3[%c4_143, %c0_144, %c0_145] : memref<6x16x16xbf16, #tpu.memory_space<vmem>>, vector<1x16x16xbf16>
    %229 = vector.shape_cast %228 : vector<1x16x16xbf16> to vector<16x16xbf16>
    %cst_146 = arith.constant dense<0.000000e+00> : vector<2x16xf32>
    %230 = tpu.matmul %224, %229, %cst_146 {dimension_numbers = #tpu.dot_dimension_numbers<[1], [0], [0], [1], [0, 0, 1, 1], [], []>} : vector<2x16xbf16>, vector<16x16xbf16>, vector<2x16xf32> -> vector<2x16xf32>
    %c5_147 = arith.constant 5 : index
    %c0_148 = arith.constant 0 : index
    %c0_149 = arith.constant 0 : index
    %231 = vector.load %arg3[%c5_147, %c0_148, %c0_149] : memref<6x16x16xbf16, #tpu.memory_space<vmem>>, vector<1x16x16xbf16>
    %232 = vector.shape_cast %231 : vector<1x16x16xbf16> to vector<16x16xbf16>
    %cst_150 = arith.constant dense<0.000000e+00> : vector<2x16xf32>
    %233 = tpu.matmul %224, %232, %cst_150 {dimension_numbers = #tpu.dot_dimension_numbers<[1], [0], [0], [1], [0, 0, 1, 1], [], []>} : vector<2x16xbf16>, vector<16x16xbf16>, vector<2x16xf32> -> vector<2x16xf32>
    %234 = vector.broadcast %65 : vector<1x16xf32> to vector<2x16xf32>
    %235 = arith.addf %233, %234 : vector<2x16xf32>
    %c24_i32_151 = arith.constant 24 : i32
    %236 = arith.addi %c24_i32_151, %174 : i32
    %237 = arith.index_cast %236 : i32 to index
    %c0_152 = arith.constant 0 : index
    %c0_153 = arith.constant 0 : index
    %238 = vector.load %arg7[%237, %c0_152, %c0_153] : memref<48x2x16xbf16, #tpu.memory_space<vmem>>, vector<1x2x16xbf16>
    %239 = vector.shape_cast %238 : vector<1x2x16xbf16> to vector<2x16xbf16>
    %240 = arith.extf %239 : vector<2x16xbf16> to vector<2x16xf32>
    %c32_i32_154 = arith.constant 32 : i32
    %241 = arith.addi %c32_i32_154, %174 : i32
    %242 = arith.index_cast %241 : i32 to index
    %c0_155 = arith.constant 0 : index
    %c0_156 = arith.constant 0 : index
    %243 = vector.load %arg7[%242, %c0_155, %c0_156] : memref<48x2x16xbf16, #tpu.memory_space<vmem>>, vector<1x2x16xbf16>
    %244 = vector.shape_cast %243 : vector<1x2x16xbf16> to vector<2x16xbf16>
    %245 = arith.extf %244 : vector<2x16xbf16> to vector<2x16xf32>
    %c40_i32_157 = arith.constant 40 : i32
    %246 = arith.addi %c40_i32_157, %174 : i32
    %247 = arith.index_cast %246 : i32 to index
    %c0_158 = arith.constant 0 : index
    %c0_159 = arith.constant 0 : index
    %248 = vector.load %arg7[%247, %c0_158, %c0_159] : memref<48x2x16xbf16, #tpu.memory_space<vmem>>, vector<1x2x16xbf16>
    %249 = vector.shape_cast %248 : vector<1x2x16xbf16> to vector<2x16xbf16>
    %250 = arith.extf %249 : vector<2x16xbf16> to vector<2x16xf32>
    %251 = arith.addf %240, %227 : vector<2x16xf32>
    %cst_160 = arith.constant 5.000000e-01 : f32
    %252 = vector.broadcast %cst_160 : f32 to vector<2x16xf32>
    %253 = arith.mulf %252, %251 : vector<2x16xf32>
    %254 = math.tanh %253 : vector<2x16xf32>
    %cst_161 = arith.constant 5.000000e-01 : f32
    %255 = vector.broadcast %cst_161 : f32 to vector<2x16xf32>
    %256 = arith.mulf %255, %254 : vector<2x16xf32>
    %cst_162 = arith.constant 5.000000e-01 : f32
    %257 = vector.broadcast %cst_162 : f32 to vector<2x16xf32>
    %258 = arith.addf %256, %257 : vector<2x16xf32>
    %259 = arith.addf %245, %230 : vector<2x16xf32>
    %cst_163 = arith.constant 5.000000e-01 : f32
    %260 = vector.broadcast %cst_163 : f32 to vector<2x16xf32>
    %261 = arith.mulf %260, %259 : vector<2x16xf32>
    %262 = math.tanh %261 : vector<2x16xf32>
    %cst_164 = arith.constant 5.000000e-01 : f32
    %263 = vector.broadcast %cst_164 : f32 to vector<2x16xf32>
    %264 = arith.mulf %263, %262 : vector<2x16xf32>
    %cst_165 = arith.constant 5.000000e-01 : f32
    %265 = vector.broadcast %cst_165 : f32 to vector<2x16xf32>
    %266 = arith.addf %264, %265 : vector<2x16xf32>
    %267 = arith.mulf %258, %235 : vector<2x16xf32>
    %268 = arith.addf %250, %267 : vector<2x16xf32>
    %269 = math.tanh %268 : vector<2x16xf32>
    %270 = arith.subf %165, %269 : vector<2x16xf32>
    %271 = arith.mulf %266, %270 : vector<2x16xf32>
    %272 = arith.addf %269, %271 : vector<2x16xf32>
    %273 = vector.shape_cast %223 : vector<2x16xf32> to vector<1x2x16xf32>
    %274 = arith.truncf %273 : vector<1x2x16xf32> to vector<1x2x16xbf16>
    %275 = arith.index_cast %c1_i32 : i32 to index
    %c0_166 = arith.constant 0 : index
    %c0_167 = arith.constant 0 : index
    %276 = vector.load %arg6[%275, %c0_166, %c0_167] : memref<8x2x32xbf16, #tpu.memory_space<vmem>>, vector<1x2x16xbf16>
    tpu.vector_store %arg6[%275, %c0_166, %c0_167], %274 {strides = array<i32>} : memref<8x2x32xbf16, #tpu.memory_space<vmem>>, vector<1x2x16xbf16>,
    %277 = vector.shape_cast %272 : vector<2x16xf32> to vector<1x2x16xf32>
    %278 = arith.truncf %277 : vector<1x2x16xf32> to vector<1x2x16xbf16>
    %279 = arith.index_cast %174 : i32 to index
    %c0_168 = arith.constant 0 : index
    %c16_169 = arith.constant 16 : index
    %280 = vector.load %arg6[%279, %c0_168, %c16_169] : memref<8x2x32xbf16, #tpu.memory_space<vmem>>, vector<1x2x16xbf16>
    tpu.vector_store %arg6[%279, %c0_168, %c16_169], %278 {strides = array<i32>} : memref<8x2x32xbf16, #tpu.memory_space<vmem>>, vector<1x2x16xbf16>,
    %c2_i32 = arith.constant 2 : i32
    %c7_i32_170 = arith.constant 7 : i32
    %281 = arith.subi %c7_i32_170, %c2_i32 : i32
    %282 = arith.truncf %223 : vector<2x16xf32> to vector<2x16xbf16>
    %c0_171 = arith.constant 0 : index
    %c0_172 = arith.constant 0 : index
    %c0_173 = arith.constant 0 : index
    %283 = vector.load %arg3[%c0_171, %c0_172, %c0_173] : memref<6x16x16xbf16, #tpu.memory_space<vmem>>, vector<1x16x16xbf16>
    %284 = vector.shape_cast %283 : vector<1x16x16xbf16> to vector<16x16xbf16>
    %cst_174 = arith.constant dense<0.000000e+00> : vector<2x16xf32>
    %285 = tpu.matmul %282, %284, %cst_174 {dimension_numbers = #tpu.dot_dimension_numbers<[1], [0], [0], [1], [0, 0, 1, 1], [], []>} : vector<2x16xbf16>, vector<16x16xbf16>, vector<2x16xf32> -> vector<2x16xf32>
    %c1_175 = arith.constant 1 : index
    %c0_176 = arith.constant 0 : index
    %c0_177 = arith.constant 0 : index
    %286 = vector.load %arg3[%c1_175, %c0_176, %c0_177] : memref<6x16x16xbf16, #tpu.memory_space<vmem>>, vector<1x16x16xbf16>
    %287 = vector.shape_cast %286 : vector<1x16x16xbf16> to vector<16x16xbf16>
    %cst_178 = arith.constant dense<0.000000e+00> : vector<2x16xf32>
    %288 = tpu.matmul %282, %287, %cst_178 {dimension_numbers = #tpu.dot_dimension_numbers<[1], [0], [0], [1], [0, 0, 1, 1], [], []>} : vector<2x16xbf16>, vector<16x16xbf16>, vector<2x16xf32> -> vector<2x16xf32>
    %c2_179 = arith.constant 2 : index
    %c0_180 = arith.constant 0 : index
    %c0_181 = arith.constant 0 : index
    %289 = vector.load %arg3[%c2_179, %c0_180, %c0_181] : memref<6x16x16xbf16, #tpu.memory_space<vmem>>, vector<1x16x16xbf16>
    %290 = vector.shape_cast %289 : vector<1x16x16xbf16> to vector<16x16xbf16>
    %cst_182 = arith.constant dense<0.000000e+00> : vector<2x16xf32>
    %291 = tpu.matmul %282, %290, %cst_182 {dimension_numbers = #tpu.dot_dimension_numbers<[1], [0], [0], [1], [0, 0, 1, 1], [], []>} : vector<2x16xbf16>, vector<16x16xbf16>, vector<2x16xf32> -> vector<2x16xf32>
    %292 = vector.broadcast %63 : vector<1x16xf32> to vector<2x16xf32>
    %293 = arith.addf %291, %292 : vector<2x16xf32>
    %c0_i32_183 = arith.constant 0 : i32
    %294 = arith.addi %c0_i32_183, %c2_i32 : i32
    %295 = arith.index_cast %294 : i32 to index
    %c0_184 = arith.constant 0 : index
    %c0_185 = arith.constant 0 : index
    %296 = vector.load %arg7[%295, %c0_184, %c0_185] : memref<48x2x16xbf16, #tpu.memory_space<vmem>>, vector<1x2x16xbf16>
    %297 = vector.shape_cast %296 : vector<1x2x16xbf16> to vector<2x16xbf16>
    %298 = arith.extf %297 : vector<2x16xbf16> to vector<2x16xf32>
    %c8_i32_186 = arith.constant 8 : i32
    %299 = arith.addi %c8_i32_186, %c2_i32 : i32
    %300 = arith.index_cast %299 : i32 to index
    %c0_187 = arith.constant 0 : index
    %c0_188 = arith.constant 0 : index
    %301 = vector.load %arg7[%300, %c0_187, %c0_188] : memref<48x2x16xbf16, #tpu.memory_space<vmem>>, vector<1x2x16xbf16>
    %302 = vector.shape_cast %301 : vector<1x2x16xbf16> to vector<2x16xbf16>
    %303 = arith.extf %302 : vector<2x16xbf16> to vector<2x16xf32>
    %c16_i32_189 = arith.constant 16 : i32
    %304 = arith.addi %c16_i32_189, %c2_i32 : i32
    %305 = arith.index_cast %304 : i32 to index
    %c0_190 = arith.constant 0 : index
    %c0_191 = arith.constant 0 : index
    %306 = vector.load %arg7[%305, %c0_190, %c0_191] : memref<48x2x16xbf16, #tpu.memory_space<vmem>>, vector<1x2x16xbf16>
    %307 = vector.shape_cast %306 : vector<1x2x16xbf16> to vector<2x16xbf16>
    %308 = arith.extf %307 : vector<2x16xbf16> to vector<2x16xf32>
    %309 = arith.addf %298, %285 : vector<2x16xf32>
    %cst_192 = arith.constant 5.000000e-01 : f32
    %310 = vector.broadcast %cst_192 : f32 to vector<2x16xf32>
    %311 = arith.mulf %310, %309 : vector<2x16xf32>
    %312 = math.tanh %311 : vector<2x16xf32>
    %cst_193 = arith.constant 5.000000e-01 : f32
    %313 = vector.broadcast %cst_193 : f32 to vector<2x16xf32>
    %314 = arith.mulf %313, %312 : vector<2x16xf32>
    %cst_194 = arith.constant 5.000000e-01 : f32
    %315 = vector.broadcast %cst_194 : f32 to vector<2x16xf32>
    %316 = arith.addf %314, %315 : vector<2x16xf32>
    %317 = arith.addf %303, %288 : vector<2x16xf32>
    %cst_195 = arith.constant 5.000000e-01 : f32
    %318 = vector.broadcast %cst_195 : f32 to vector<2x16xf32>
    %319 = arith.mulf %318, %317 : vector<2x16xf32>
    %320 = math.tanh %319 : vector<2x16xf32>
    %cst_196 = arith.constant 5.000000e-01 : f32
    %321 = vector.broadcast %cst_196 : f32 to vector<2x16xf32>
    %322 = arith.mulf %321, %320 : vector<2x16xf32>
    %cst_197 = arith.constant 5.000000e-01 : f32
    %323 = vector.broadcast %cst_197 : f32 to vector<2x16xf32>
    %324 = arith.addf %322, %323 : vector<2x16xf32>
    %325 = arith.mulf %316, %293 : vector<2x16xf32>
    %326 = arith.addf %308, %325 : vector<2x16xf32>
    %327 = math.tanh %326 : vector<2x16xf32>
    %328 = arith.subf %223, %327 : vector<2x16xf32>
    %329 = arith.mulf %324, %328 : vector<2x16xf32>
    %330 = arith.addf %327, %329 : vector<2x16xf32>
    %331 = arith.truncf %272 : vector<2x16xf32> to vector<2x16xbf16>
    %c3_198 = arith.constant 3 : index
    %c0_199 = arith.constant 0 : index
    %c0_200 = arith.constant 0 : index
    %332 = vector.load %arg3[%c3_198, %c0_199, %c0_200] : memref<6x16x16xbf16, #tpu.memory_space<vmem>>, vector<1x16x16xbf16>
    %333 = vector.shape_cast %332 : vector<1x16x16xbf16> to vector<16x16xbf16>
    %cst_201 = arith.constant dense<0.000000e+00> : vector<2x16xf32>
    %334 = tpu.matmul %331, %333, %cst_201 {dimension_numbers = #tpu.dot_dimension_numbers<[1], [0], [0], [1], [0, 0, 1, 1], [], []>} : vector<2x16xbf16>, vector<16x16xbf16>, vector<2x16xf32> -> vector<2x16xf32>
    %c4_202 = arith.constant 4 : index
    %c0_203 = arith.constant 0 : index
    %c0_204 = arith.constant 0 : index
    %335 = vector.load %arg3[%c4_202, %c0_203, %c0_204] : memref<6x16x16xbf16, #tpu.memory_space<vmem>>, vector<1x16x16xbf16>
    %336 = vector.shape_cast %335 : vector<1x16x16xbf16> to vector<16x16xbf16>
    %cst_205 = arith.constant dense<0.000000e+00> : vector<2x16xf32>
    %337 = tpu.matmul %331, %336, %cst_205 {dimension_numbers = #tpu.dot_dimension_numbers<[1], [0], [0], [1], [0, 0, 1, 1], [], []>} : vector<2x16xbf16>, vector<16x16xbf16>, vector<2x16xf32> -> vector<2x16xf32>
    %c5_206 = arith.constant 5 : index
    %c0_207 = arith.constant 0 : index
    %c0_208 = arith.constant 0 : index
    %338 = vector.load %arg3[%c5_206, %c0_207, %c0_208] : memref<6x16x16xbf16, #tpu.memory_space<vmem>>, vector<1x16x16xbf16>
    %339 = vector.shape_cast %338 : vector<1x16x16xbf16> to vector<16x16xbf16>
    %cst_209 = arith.constant dense<0.000000e+00> : vector<2x16xf32>
    %340 = tpu.matmul %331, %339, %cst_209 {dimension_numbers = #tpu.dot_dimension_numbers<[1], [0], [0], [1], [0, 0, 1, 1], [], []>} : vector<2x16xbf16>, vector<16x16xbf16>, vector<2x16xf32> -> vector<2x16xf32>
    %341 = vector.broadcast %65 : vector<1x16xf32> to vector<2x16xf32>
    %342 = arith.addf %340, %341 : vector<2x16xf32>
    %c24_i32_210 = arith.constant 24 : i32
    %343 = arith.addi %c24_i32_210, %281 : i32
    %344 = arith.index_cast %343 : i32 to index
    %c0_211 = arith.constant 0 : index
    %c0_212 = arith.constant 0 : index
    %345 = vector.load %arg7[%344, %c0_211, %c0_212] : memref<48x2x16xbf16, #tpu.memory_space<vmem>>, vector<1x2x16xbf16>
    %346 = vector.shape_cast %345 : vector<1x2x16xbf16> to vector<2x16xbf16>
    %347 = arith.extf %346 : vector<2x16xbf16> to vector<2x16xf32>
    %c32_i32_213 = arith.constant 32 : i32
    %348 = arith.addi %c32_i32_213, %281 : i32
    %349 = arith.index_cast %348 : i32 to index
    %c0_214 = arith.constant 0 : index
    %c0_215 = arith.constant 0 : index
    %350 = vector.load %arg7[%349, %c0_214, %c0_215] : memref<48x2x16xbf16, #tpu.memory_space<vmem>>, vector<1x2x16xbf16>
    %351 = vector.shape_cast %350 : vector<1x2x16xbf16> to vector<2x16xbf16>
    %352 = arith.extf %351 : vector<2x16xbf16> to vector<2x16xf32>
    %c40_i32_216 = arith.constant 40 : i32
    %353 = arith.addi %c40_i32_216, %281 : i32
    %354 = arith.index_cast %353 : i32 to index
    %c0_217 = arith.constant 0 : index
    %c0_218 = arith.constant 0 : index
    %355 = vector.load %arg7[%354, %c0_217, %c0_218] : memref<48x2x16xbf16, #tpu.memory_space<vmem>>, vector<1x2x16xbf16>
    %356 = vector.shape_cast %355 : vector<1x2x16xbf16> to vector<2x16xbf16>
    %357 = arith.extf %356 : vector<2x16xbf16> to vector<2x16xf32>
    %358 = arith.addf %347, %334 : vector<2x16xf32>
    %cst_219 = arith.constant 5.000000e-01 : f32
    %359 = vector.broadcast %cst_219 : f32 to vector<2x16xf32>
    %360 = arith.mulf %359, %358 : vector<2x16xf32>
    %361 = math.tanh %360 : vector<2x16xf32>
    %cst_220 = arith.constant 5.000000e-01 : f32
    %362 = vector.broadcast %cst_220 : f32 to vector<2x16xf32>
    %363 = arith.mulf %362, %361 : vector<2x16xf32>
    %cst_221 = arith.constant 5.000000e-01 : f32
    %364 = vector.broadcast %cst_221 : f32 to vector<2x16xf32>
    %365 = arith.addf %363, %364 : vector<2x16xf32>
    %366 = arith.addf %352, %337 : vector<2x16xf32>
    %cst_222 = arith.constant 5.000000e-01 : f32
    %367 = vector.broadcast %cst_222 : f32 to vector<2x16xf32>
    %368 = arith.mulf %367, %366 : vector<2x16xf32>
    %369 = math.tanh %368 : vector<2x16xf32>
    %cst_223 = arith.constant 5.000000e-01 : f32
    %370 = vector.broadcast %cst_223 : f32 to vector<2x16xf32>
    %371 = arith.mulf %370, %369 : vector<2x16xf32>
    %cst_224 = arith.constant 5.000000e-01 : f32
    %372 = vector.broadcast %cst_224 : f32 to vector<2x16xf32>
    %373 = arith.addf %371, %372 : vector<2x16xf32>
    %374 = arith.mulf %365, %342 : vector<2x16xf32>
    %375 = arith.addf %357, %374 : vector<2x16xf32>
    %376 = math.tanh %375 : vector<2x16xf32>
    %377 = arith.subf %272, %376 : vector<2x16xf32>
    %378 = arith.mulf %373, %377 : vector<2x16xf32>
    %379 = arith.addf %376, %378 : vector<2x16xf32>
    %380 = vector.shape_cast %330 : vector<2x16xf32> to vector<1x2x16xf32>
    %381 = arith.truncf %380 : vector<1x2x16xf32> to vector<1x2x16xbf16>
    %382 = arith.index_cast %c2_i32 : i32 to index
    %c0_225 = arith.constant 0 : index
    %c0_226 = arith.constant 0 : index
    %383 = vector.load %arg6[%382, %c0_225, %c0_226] : memref<8x2x32xbf16, #tpu.memory_space<vmem>>, vector<1x2x16xbf16>
    tpu.vector_store %arg6[%382, %c0_225, %c0_226], %381 {strides = array<i32>} : memref<8x2x32xbf16, #tpu.memory_space<vmem>>, vector<1x2x16xbf16>,
    %384 = vector.shape_cast %379 : vector<2x16xf32> to vector<1x2x16xf32>
    %385 = arith.truncf %384 : vector<1x2x16xf32> to vector<1x2x16xbf16>
    %386 = arith.index_cast %281 : i32 to index
    %c0_227 = arith.constant 0 : index
    %c16_228 = arith.constant 16 : index
    %387 = vector.load %arg6[%386, %c0_227, %c16_228] : memref<8x2x32xbf16, #tpu.memory_space<vmem>>, vector<1x2x16xbf16>
    tpu.vector_store %arg6[%386, %c0_227, %c16_228], %385 {strides = array<i32>} : memref<8x2x32xbf16, #tpu.memory_space<vmem>>, vector<1x2x16xbf16>,
    %c3_i32 = arith.constant 3 : i32
    %c7_i32_229 = arith.constant 7 : i32
    %388 = arith.subi %c7_i32_229, %c3_i32 : i32
    %389 = arith.truncf %330 : vector<2x16xf32> to vector<2x16xbf16>
    %c0_230 = arith.constant 0 : index
    %c0_231 = arith.constant 0 : index
    %c0_232 = arith.constant 0 : index
    %390 = vector.load %arg3[%c0_230, %c0_231, %c0_232] : memref<6x16x16xbf16, #tpu.memory_space<vmem>>, vector<1x16x16xbf16>
    %391 = vector.shape_cast %390 : vector<1x16x16xbf16> to vector<16x16xbf16>
    %cst_233 = arith.constant dense<0.000000e+00> : vector<2x16xf32>
    %392 = tpu.matmul %389, %391, %cst_233 {dimension_numbers = #tpu.dot_dimension_numbers<[1], [0], [0], [1], [0, 0, 1, 1], [], []>} : vector<2x16xbf16>, vector<16x16xbf16>, vector<2x16xf32> -> vector<2x16xf32>
    %c1_234 = arith.constant 1 : index
    %c0_235 = arith.constant 0 : index
    %c0_236 = arith.constant 0 : index
    %393 = vector.load %arg3[%c1_234, %c0_235, %c0_236] : memref<6x16x16xbf16, #tpu.memory_space<vmem>>, vector<1x16x16xbf16>
    %394 = vector.shape_cast %393 : vector<1x16x16xbf16> to vector<16x16xbf16>
    %cst_237 = arith.constant dense<0.000000e+00> : vector<2x16xf32>
    %395 = tpu.matmul %389, %394, %cst_237 {dimension_numbers = #tpu.dot_dimension_numbers<[1], [0], [0], [1], [0, 0, 1, 1], [], []>} : vector<2x16xbf16>, vector<16x16xbf16>, vector<2x16xf32> -> vector<2x16xf32>
    %c2_238 = arith.constant 2 : index
    %c0_239 = arith.constant 0 : index
    %c0_240 = arith.constant 0 : index
    %396 = vector.load %arg3[%c2_238, %c0_239, %c0_240] : memref<6x16x16xbf16, #tpu.memory_space<vmem>>, vector<1x16x16xbf16>
    %397 = vector.shape_cast %396 : vector<1x16x16xbf16> to vector<16x16xbf16>
    %cst_241 = arith.constant dense<0.000000e+00> : vector<2x16xf32>
    %398 = tpu.matmul %389, %397, %cst_241 {dimension_numbers = #tpu.dot_dimension_numbers<[1], [0], [0], [1], [0, 0, 1, 1], [], []>} : vector<2x16xbf16>, vector<16x16xbf16>, vector<2x16xf32> -> vector<2x16xf32>
    %399 = vector.broadcast %63 : vector<1x16xf32> to vector<2x16xf32>
    %400 = arith.addf %398, %399 : vector<2x16xf32>
    %c0_i32_242 = arith.constant 0 : i32
    %401 = arith.addi %c0_i32_242, %c3_i32 : i32
    %402 = arith.index_cast %401 : i32 to index
    %c0_243 = arith.constant 0 : index
    %c0_244 = arith.constant 0 : index
    %403 = vector.load %arg7[%402, %c0_243, %c0_244] : memref<48x2x16xbf16, #tpu.memory_space<vmem>>, vector<1x2x16xbf16>
    %404 = vector.shape_cast %403 : vector<1x2x16xbf16> to vector<2x16xbf16>
    %405 = arith.extf %404 : vector<2x16xbf16> to vector<2x16xf32>
    %c8_i32_245 = arith.constant 8 : i32
    %406 = arith.addi %c8_i32_245, %c3_i32 : i32
    %407 = arith.index_cast %406 : i32 to index
    %c0_246 = arith.constant 0 : index
    %c0_247 = arith.constant 0 : index
    %408 = vector.load %arg7[%407, %c0_246, %c0_247] : memref<48x2x16xbf16, #tpu.memory_space<vmem>>, vector<1x2x16xbf16>
    %409 = vector.shape_cast %408 : vector<1x2x16xbf16> to vector<2x16xbf16>
    %410 = arith.extf %409 : vector<2x16xbf16> to vector<2x16xf32>
    %c16_i32_248 = arith.constant 16 : i32
    %411 = arith.addi %c16_i32_248, %c3_i32 : i32
    %412 = arith.index_cast %411 : i32 to index
    %c0_249 = arith.constant 0 : index
    %c0_250 = arith.constant 0 : index
    %413 = vector.load %arg7[%412, %c0_249, %c0_250] : memref<48x2x16xbf16, #tpu.memory_space<vmem>>, vector<1x2x16xbf16>
    %414 = vector.shape_cast %413 : vector<1x2x16xbf16> to vector<2x16xbf16>
    %415 = arith.extf %414 : vector<2x16xbf16> to vector<2x16xf32>
    %416 = arith.addf %405, %392 : vector<2x16xf32>
    %cst_251 = arith.constant 5.000000e-01 : f32
    %417 = vector.broadcast %cst_251 : f32 to vector<2x16xf32>
    %418 = arith.mulf %417, %416 : vector<2x16xf32>
    %419 = math.tanh %418 : vector<2x16xf32>
    %cst_252 = arith.constant 5.000000e-01 : f32
    %420 = vector.broadcast %cst_252 : f32 to vector<2x16xf32>
    %421 = arith.mulf %420, %419 : vector<2x16xf32>
    %cst_253 = arith.constant 5.000000e-01 : f32
    %422 = vector.broadcast %cst_253 : f32 to vector<2x16xf32>
    %423 = arith.addf %421, %422 : vector<2x16xf32>
    %424 = arith.addf %410, %395 : vector<2x16xf32>
    %cst_254 = arith.constant 5.000000e-01 : f32
    %425 = vector.broadcast %cst_254 : f32 to vector<2x16xf32>
    %426 = arith.mulf %425, %424 : vector<2x16xf32>
    %427 = math.tanh %426 : vector<2x16xf32>
    %cst_255 = arith.constant 5.000000e-01 : f32
    %428 = vector.broadcast %cst_255 : f32 to vector<2x16xf32>
    %429 = arith.mulf %428, %427 : vector<2x16xf32>
    %cst_256 = arith.constant 5.000000e-01 : f32
    %430 = vector.broadcast %cst_256 : f32 to vector<2x16xf32>
    %431 = arith.addf %429, %430 : vector<2x16xf32>
    %432 = arith.mulf %423, %400 : vector<2x16xf32>
    %433 = arith.addf %415, %432 : vector<2x16xf32>
    %434 = math.tanh %433 : vector<2x16xf32>
    %435 = arith.subf %330, %434 : vector<2x16xf32>
    %436 = arith.mulf %431, %435 : vector<2x16xf32>
    %437 = arith.addf %434, %436 : vector<2x16xf32>
    %438 = arith.truncf %379 : vector<2x16xf32> to vector<2x16xbf16>
    %c3_257 = arith.constant 3 : index
    %c0_258 = arith.constant 0 : index
    %c0_259 = arith.constant 0 : index
    %439 = vector.load %arg3[%c3_257, %c0_258, %c0_259] : memref<6x16x16xbf16, #tpu.memory_space<vmem>>, vector<1x16x16xbf16>
    %440 = vector.shape_cast %439 : vector<1x16x16xbf16> to vector<16x16xbf16>
    %cst_260 = arith.constant dense<0.000000e+00> : vector<2x16xf32>
    %441 = tpu.matmul %438, %440, %cst_260 {dimension_numbers = #tpu.dot_dimension_numbers<[1], [0], [0], [1], [0, 0, 1, 1], [], []>} : vector<2x16xbf16>, vector<16x16xbf16>, vector<2x16xf32> -> vector<2x16xf32>
    %c4_261 = arith.constant 4 : index
    %c0_262 = arith.constant 0 : index
    %c0_263 = arith.constant 0 : index
    %442 = vector.load %arg3[%c4_261, %c0_262, %c0_263] : memref<6x16x16xbf16, #tpu.memory_space<vmem>>, vector<1x16x16xbf16>
    %443 = vector.shape_cast %442 : vector<1x16x16xbf16> to vector<16x16xbf16>
    %cst_264 = arith.constant dense<0.000000e+00> : vector<2x16xf32>
    %444 = tpu.matmul %438, %443, %cst_264 {dimension_numbers = #tpu.dot_dimension_numbers<[1], [0], [0], [1], [0, 0, 1, 1], [], []>} : vector<2x16xbf16>, vector<16x16xbf16>, vector<2x16xf32> -> vector<2x16xf32>
    %c5_265 = arith.constant 5 : index
    %c0_266 = arith.constant 0 : index
    %c0_267 = arith.constant 0 : index
    %445 = vector.load %arg3[%c5_265, %c0_266, %c0_267] : memref<6x16x16xbf16, #tpu.memory_space<vmem>>, vector<1x16x16xbf16>
    %446 = vector.shape_cast %445 : vector<1x16x16xbf16> to vector<16x16xbf16>
    %cst_268 = arith.constant dense<0.000000e+00> : vector<2x16xf32>
    %447 = tpu.matmul %438, %446, %cst_268 {dimension_numbers = #tpu.dot_dimension_numbers<[1], [0], [0], [1], [0, 0, 1, 1], [], []>} : vector<2x16xbf16>, vector<16x16xbf16>, vector<2x16xf32> -> vector<2x16xf32>
    %448 = vector.broadcast %65 : vector<1x16xf32> to vector<2x16xf32>
    %449 = arith.addf %447, %448 : vector<2x16xf32>
    %c24_i32_269 = arith.constant 24 : i32
    %450 = arith.addi %c24_i32_269, %388 : i32
    %451 = arith.index_cast %450 : i32 to index
    %c0_270 = arith.constant 0 : index
    %c0_271 = arith.constant 0 : index
    %452 = vector.load %arg7[%451, %c0_270, %c0_271] : memref<48x2x16xbf16, #tpu.memory_space<vmem>>, vector<1x2x16xbf16>
    %453 = vector.shape_cast %452 : vector<1x2x16xbf16> to vector<2x16xbf16>
    %454 = arith.extf %453 : vector<2x16xbf16> to vector<2x16xf32>
    %c32_i32_272 = arith.constant 32 : i32
    %455 = arith.addi %c32_i32_272, %388 : i32
    %456 = arith.index_cast %455 : i32 to index
    %c0_273 = arith.constant 0 : index
    %c0_274 = arith.constant 0 : index
    %457 = vector.load %arg7[%456, %c0_273, %c0_274] : memref<48x2x16xbf16, #tpu.memory_space<vmem>>, vector<1x2x16xbf16>
    %458 = vector.shape_cast %457 : vector<1x2x16xbf16> to vector<2x16xbf16>
    %459 = arith.extf %458 : vector<2x16xbf16> to vector<2x16xf32>
    %c40_i32_275 = arith.constant 40 : i32
    %460 = arith.addi %c40_i32_275, %388 : i32
    %461 = arith.index_cast %460 : i32 to index
    %c0_276 = arith.constant 0 : index
    %c0_277 = arith.constant 0 : index
    %462 = vector.load %arg7[%461, %c0_276, %c0_277] : memref<48x2x16xbf16, #tpu.memory_space<vmem>>, vector<1x2x16xbf16>
    %463 = vector.shape_cast %462 : vector<1x2x16xbf16> to vector<2x16xbf16>
    %464 = arith.extf %463 : vector<2x16xbf16> to vector<2x16xf32>
    %465 = arith.addf %454, %441 : vector<2x16xf32>
    %cst_278 = arith.constant 5.000000e-01 : f32
    %466 = vector.broadcast %cst_278 : f32 to vector<2x16xf32>
    %467 = arith.mulf %466, %465 : vector<2x16xf32>
    %468 = math.tanh %467 : vector<2x16xf32>
    %cst_279 = arith.constant 5.000000e-01 : f32
    %469 = vector.broadcast %cst_279 : f32 to vector<2x16xf32>
    %470 = arith.mulf %469, %468 : vector<2x16xf32>
    %cst_280 = arith.constant 5.000000e-01 : f32
    %471 = vector.broadcast %cst_280 : f32 to vector<2x16xf32>
    %472 = arith.addf %470, %471 : vector<2x16xf32>
    %473 = arith.addf %459, %444 : vector<2x16xf32>
    %cst_281 = arith.constant 5.000000e-01 : f32
    %474 = vector.broadcast %cst_281 : f32 to vector<2x16xf32>
    %475 = arith.mulf %474, %473 : vector<2x16xf32>
    %476 = math.tanh %475 : vector<2x16xf32>
    %cst_282 = arith.constant 5.000000e-01 : f32
    %477 = vector.broadcast %cst_282 : f32 to vector<2x16xf32>
    %478 = arith.mulf %477, %476 : vector<2x16xf32>
    %cst_283 = arith.constant 5.000000e-01 : f32
    %479 = vector.broadcast %cst_283 : f32 to vector<2x16xf32>
    %480 = arith.addf %478, %479 : vector<2x16xf32>
    %481 = arith.mulf %472, %449 : vector<2x16xf32>
    %482 = arith.addf %464, %481 : vector<2x16xf32>
    %483 = math.tanh %482 : vector<2x16xf32>
    %484 = arith.subf %379, %483 : vector<2x16xf32>
    %485 = arith.mulf %480, %484 : vector<2x16xf32>
    %486 = arith.addf %483, %485 : vector<2x16xf32>
    %487 = vector.shape_cast %437 : vector<2x16xf32> to vector<1x2x16xf32>
    %488 = arith.truncf %487 : vector<1x2x16xf32> to vector<1x2x16xbf16>
    %489 = arith.index_cast %c3_i32 : i32 to index
    %c0_284 = arith.constant 0 : index
    %c0_285 = arith.constant 0 : index
    %490 = vector.load %arg6[%489, %c0_284, %c0_285] : memref<8x2x32xbf16, #tpu.memory_space<vmem>>, vector<1x2x16xbf16>
    tpu.vector_store %arg6[%489, %c0_284, %c0_285], %488 {strides = array<i32>} : memref<8x2x32xbf16, #tpu.memory_space<vmem>>, vector<1x2x16xbf16>,
    %491 = vector.shape_cast %486 : vector<2x16xf32> to vector<1x2x16xf32>
    %492 = arith.truncf %491 : vector<1x2x16xf32> to vector<1x2x16xbf16>
    %493 = arith.index_cast %388 : i32 to index
    %c0_286 = arith.constant 0 : index
    %c16_287 = arith.constant 16 : index
    %494 = vector.load %arg6[%493, %c0_286, %c16_287] : memref<8x2x32xbf16, #tpu.memory_space<vmem>>, vector<1x2x16xbf16>
    tpu.vector_store %arg6[%493, %c0_286, %c16_287], %492 {strides = array<i32>} : memref<8x2x32xbf16, #tpu.memory_space<vmem>>, vector<1x2x16xbf16>,
    %c4_i32 = arith.constant 4 : i32
    %c7_i32_288 = arith.constant 7 : i32
    %495 = arith.subi %c7_i32_288, %c4_i32 : i32
    %496 = arith.truncf %437 : vector<2x16xf32> to vector<2x16xbf16>
    %c0_289 = arith.constant 0 : index
    %c0_290 = arith.constant 0 : index
    %c0_291 = arith.constant 0 : index
    %497 = vector.load %arg3[%c0_289, %c0_290, %c0_291] : memref<6x16x16xbf16, #tpu.memory_space<vmem>>, vector<1x16x16xbf16>
    %498 = vector.shape_cast %497 : vector<1x16x16xbf16> to vector<16x16xbf16>
    %cst_292 = arith.constant dense<0.000000e+00> : vector<2x16xf32>
    %499 = tpu.matmul %496, %498, %cst_292 {dimension_numbers = #tpu.dot_dimension_numbers<[1], [0], [0], [1], [0, 0, 1, 1], [], []>} : vector<2x16xbf16>, vector<16x16xbf16>, vector<2x16xf32> -> vector<2x16xf32>
    %c1_293 = arith.constant 1 : index
    %c0_294 = arith.constant 0 : index
    %c0_295 = arith.constant 0 : index
    %500 = vector.load %arg3[%c1_293, %c0_294, %c0_295] : memref<6x16x16xbf16, #tpu.memory_space<vmem>>, vector<1x16x16xbf16>
    %501 = vector.shape_cast %500 : vector<1x16x16xbf16> to vector<16x16xbf16>
    %cst_296 = arith.constant dense<0.000000e+00> : vector<2x16xf32>
    %502 = tpu.matmul %496, %501, %cst_296 {dimension_numbers = #tpu.dot_dimension_numbers<[1], [0], [0], [1], [0, 0, 1, 1], [], []>} : vector<2x16xbf16>, vector<16x16xbf16>, vector<2x16xf32> -> vector<2x16xf32>
    %c2_297 = arith.constant 2 : index
    %c0_298 = arith.constant 0 : index
    %c0_299 = arith.constant 0 : index
    %503 = vector.load %arg3[%c2_297, %c0_298, %c0_299] : memref<6x16x16xbf16, #tpu.memory_space<vmem>>, vector<1x16x16xbf16>
    %504 = vector.shape_cast %503 : vector<1x16x16xbf16> to vector<16x16xbf16>
    %cst_300 = arith.constant dense<0.000000e+00> : vector<2x16xf32>
    %505 = tpu.matmul %496, %504, %cst_300 {dimension_numbers = #tpu.dot_dimension_numbers<[1], [0], [0], [1], [0, 0, 1, 1], [], []>} : vector<2x16xbf16>, vector<16x16xbf16>, vector<2x16xf32> -> vector<2x16xf32>
    %506 = vector.broadcast %63 : vector<1x16xf32> to vector<2x16xf32>
    %507 = arith.addf %505, %506 : vector<2x16xf32>
    %c0_i32_301 = arith.constant 0 : i32
    %508 = arith.addi %c0_i32_301, %c4_i32 : i32
    %509 = arith.index_cast %508 : i32 to index
    %c0_302 = arith.constant 0 : index
    %c0_303 = arith.constant 0 : index
    %510 = vector.load %arg7[%509, %c0_302, %c0_303] : memref<48x2x16xbf16, #tpu.memory_space<vmem>>, vector<1x2x16xbf16>
    %511 = vector.shape_cast %510 : vector<1x2x16xbf16> to vector<2x16xbf16>
    %512 = arith.extf %511 : vector<2x16xbf16> to vector<2x16xf32>
    %c8_i32_304 = arith.constant 8 : i32
    %513 = arith.addi %c8_i32_304, %c4_i32 : i32
    %514 = arith.index_cast %513 : i32 to index
    %c0_305 = arith.constant 0 : index
    %c0_306 = arith.constant 0 : index
    %515 = vector.load %arg7[%514, %c0_305, %c0_306] : memref<48x2x16xbf16, #tpu.memory_space<vmem>>, vector<1x2x16xbf16>
    %516 = vector.shape_cast %515 : vector<1x2x16xbf16> to vector<2x16xbf16>
    %517 = arith.extf %516 : vector<2x16xbf16> to vector<2x16xf32>
    %c16_i32_307 = arith.constant 16 : i32
    %518 = arith.addi %c16_i32_307, %c4_i32 : i32
    %519 = arith.index_cast %518 : i32 to index
    %c0_308 = arith.constant 0 : index
    %c0_309 = arith.constant 0 : index
    %520 = vector.load %arg7[%519, %c0_308, %c0_309] : memref<48x2x16xbf16, #tpu.memory_space<vmem>>, vector<1x2x16xbf16>
    %521 = vector.shape_cast %520 : vector<1x2x16xbf16> to vector<2x16xbf16>
    %522 = arith.extf %521 : vector<2x16xbf16> to vector<2x16xf32>
    %523 = arith.addf %512, %499 : vector<2x16xf32>
    %cst_310 = arith.constant 5.000000e-01 : f32
    %524 = vector.broadcast %cst_310 : f32 to vector<2x16xf32>
    %525 = arith.mulf %524, %523 : vector<2x16xf32>
    %526 = math.tanh %525 : vector<2x16xf32>
    %cst_311 = arith.constant 5.000000e-01 : f32
    %527 = vector.broadcast %cst_311 : f32 to vector<2x16xf32>
    %528 = arith.mulf %527, %526 : vector<2x16xf32>
    %cst_312 = arith.constant 5.000000e-01 : f32
    %529 = vector.broadcast %cst_312 : f32 to vector<2x16xf32>
    %530 = arith.addf %528, %529 : vector<2x16xf32>
    %531 = arith.addf %517, %502 : vector<2x16xf32>
    %cst_313 = arith.constant 5.000000e-01 : f32
    %532 = vector.broadcast %cst_313 : f32 to vector<2x16xf32>
    %533 = arith.mulf %532, %531 : vector<2x16xf32>
    %534 = math.tanh %533 : vector<2x16xf32>
    %cst_314 = arith.constant 5.000000e-01 : f32
    %535 = vector.broadcast %cst_314 : f32 to vector<2x16xf32>
    %536 = arith.mulf %535, %534 : vector<2x16xf32>
    %cst_315 = arith.constant 5.000000e-01 : f32
    %537 = vector.broadcast %cst_315 : f32 to vector<2x16xf32>
    %538 = arith.addf %536, %537 : vector<2x16xf32>
    %539 = arith.mulf %530, %507 : vector<2x16xf32>
    %540 = arith.addf %522, %539 : vector<2x16xf32>
    %541 = math.tanh %540 : vector<2x16xf32>
    %542 = arith.subf %437, %541 : vector<2x16xf32>
    %543 = arith.mulf %538, %542 : vector<2x16xf32>
    %544 = arith.addf %541, %543 : vector<2x16xf32>
    %545 = arith.truncf %486 : vector<2x16xf32> to vector<2x16xbf16>
    %c3_316 = arith.constant 3 : index
    %c0_317 = arith.constant 0 : index
    %c0_318 = arith.constant 0 : index
    %546 = vector.load %arg3[%c3_316, %c0_317, %c0_318] : memref<6x16x16xbf16, #tpu.memory_space<vmem>>, vector<1x16x16xbf16>
    %547 = vector.shape_cast %546 : vector<1x16x16xbf16> to vector<16x16xbf16>
    %cst_319 = arith.constant dense<0.000000e+00> : vector<2x16xf32>
    %548 = tpu.matmul %545, %547, %cst_319 {dimension_numbers = #tpu.dot_dimension_numbers<[1], [0], [0], [1], [0, 0, 1, 1], [], []>} : vector<2x16xbf16>, vector<16x16xbf16>, vector<2x16xf32> -> vector<2x16xf32>
    %c4_320 = arith.constant 4 : index
    %c0_321 = arith.constant 0 : index
    %c0_322 = arith.constant 0 : index
    %549 = vector.load %arg3[%c4_320, %c0_321, %c0_322] : memref<6x16x16xbf16, #tpu.memory_space<vmem>>, vector<1x16x16xbf16>
    %550 = vector.shape_cast %549 : vector<1x16x16xbf16> to vector<16x16xbf16>
    %cst_323 = arith.constant dense<0.000000e+00> : vector<2x16xf32>
    %551 = tpu.matmul %545, %550, %cst_323 {dimension_numbers = #tpu.dot_dimension_numbers<[1], [0], [0], [1], [0, 0, 1, 1], [], []>} : vector<2x16xbf16>, vector<16x16xbf16>, vector<2x16xf32> -> vector<2x16xf32>
    %c5_324 = arith.constant 5 : index
    %c0_325 = arith.constant 0 : index
    %c0_326 = arith.constant 0 : index
    %552 = vector.load %arg3[%c5_324, %c0_325, %c0_326] : memref<6x16x16xbf16, #tpu.memory_space<vmem>>, vector<1x16x16xbf16>
    %553 = vector.shape_cast %552 : vector<1x16x16xbf16> to vector<16x16xbf16>
    %cst_327 = arith.constant dense<0.000000e+00> : vector<2x16xf32>
    %554 = tpu.matmul %545, %553, %cst_327 {dimension_numbers = #tpu.dot_dimension_numbers<[1], [0], [0], [1], [0, 0, 1, 1], [], []>} : vector<2x16xbf16>, vector<16x16xbf16>, vector<2x16xf32> -> vector<2x16xf32>
    %555 = vector.broadcast %65 : vector<1x16xf32> to vector<2x16xf32>
    %556 = arith.addf %554, %555 : vector<2x16xf32>
    %c24_i32_328 = arith.constant 24 : i32
    %557 = arith.addi %c24_i32_328, %495 : i32
    %558 = arith.index_cast %557 : i32 to index
    %c0_329 = arith.constant 0 : index
    %c0_330 = arith.constant 0 : index
    %559 = vector.load %arg7[%558, %c0_329, %c0_330] : memref<48x2x16xbf16, #tpu.memory_space<vmem>>, vector<1x2x16xbf16>
    %560 = vector.shape_cast %559 : vector<1x2x16xbf16> to vector<2x16xbf16>
    %561 = arith.extf %560 : vector<2x16xbf16> to vector<2x16xf32>
    %c32_i32_331 = arith.constant 32 : i32
    %562 = arith.addi %c32_i32_331, %495 : i32
    %563 = arith.index_cast %562 : i32 to index
    %c0_332 = arith.constant 0 : index
    %c0_333 = arith.constant 0 : index
    %564 = vector.load %arg7[%563, %c0_332, %c0_333] : memref<48x2x16xbf16, #tpu.memory_space<vmem>>, vector<1x2x16xbf16>
    %565 = vector.shape_cast %564 : vector<1x2x16xbf16> to vector<2x16xbf16>
    %566 = arith.extf %565 : vector<2x16xbf16> to vector<2x16xf32>
    %c40_i32_334 = arith.constant 40 : i32
    %567 = arith.addi %c40_i32_334, %495 : i32
    %568 = arith.index_cast %567 : i32 to index
    %c0_335 = arith.constant 0 : index
    %c0_336 = arith.constant 0 : index
    %569 = vector.load %arg7[%568, %c0_335, %c0_336] : memref<48x2x16xbf16, #tpu.memory_space<vmem>>, vector<1x2x16xbf16>
    %570 = vector.shape_cast %569 : vector<1x2x16xbf16> to vector<2x16xbf16>
    %571 = arith.extf %570 : vector<2x16xbf16> to vector<2x16xf32>
    %572 = arith.addf %561, %548 : vector<2x16xf32>
    %cst_337 = arith.constant 5.000000e-01 : f32
    %573 = vector.broadcast %cst_337 : f32 to vector<2x16xf32>
    %574 = arith.mulf %573, %572 : vector<2x16xf32>
    %575 = math.tanh %574 : vector<2x16xf32>
    %cst_338 = arith.constant 5.000000e-01 : f32
    %576 = vector.broadcast %cst_338 : f32 to vector<2x16xf32>
    %577 = arith.mulf %576, %575 : vector<2x16xf32>
    %cst_339 = arith.constant 5.000000e-01 : f32
    %578 = vector.broadcast %cst_339 : f32 to vector<2x16xf32>
    %579 = arith.addf %577, %578 : vector<2x16xf32>
    %580 = arith.addf %566, %551 : vector<2x16xf32>
    %cst_340 = arith.constant 5.000000e-01 : f32
    %581 = vector.broadcast %cst_340 : f32 to vector<2x16xf32>
    %582 = arith.mulf %581, %580 : vector<2x16xf32>
    %583 = math.tanh %582 : vector<2x16xf32>
    %cst_341 = arith.constant 5.000000e-01 : f32
    %584 = vector.broadcast %cst_341 : f32 to vector<2x16xf32>
    %585 = arith.mulf %584, %583 : vector<2x16xf32>
    %cst_342 = arith.constant 5.000000e-01 : f32
    %586 = vector.broadcast %cst_342 : f32 to vector<2x16xf32>
    %587 = arith.addf %585, %586 : vector<2x16xf32>
    %588 = arith.mulf %579, %556 : vector<2x16xf32>
    %589 = arith.addf %571, %588 : vector<2x16xf32>
    %590 = math.tanh %589 : vector<2x16xf32>
    %591 = arith.subf %486, %590 : vector<2x16xf32>
    %592 = arith.mulf %587, %591 : vector<2x16xf32>
    %593 = arith.addf %590, %592 : vector<2x16xf32>
    %594 = vector.shape_cast %544 : vector<2x16xf32> to vector<1x2x16xf32>
    %595 = arith.truncf %594 : vector<1x2x16xf32> to vector<1x2x16xbf16>
    %596 = arith.index_cast %c4_i32 : i32 to index
    %c0_343 = arith.constant 0 : index
    %c0_344 = arith.constant 0 : index
    %597 = vector.load %arg6[%596, %c0_343, %c0_344] : memref<8x2x32xbf16, #tpu.memory_space<vmem>>, vector<1x2x16xbf16>
    tpu.vector_store %arg6[%596, %c0_343, %c0_344], %595 {strides = array<i32>} : memref<8x2x32xbf16, #tpu.memory_space<vmem>>, vector<1x2x16xbf16>,
    %598 = vector.shape_cast %593 : vector<2x16xf32> to vector<1x2x16xf32>
    %599 = arith.truncf %598 : vector<1x2x16xf32> to vector<1x2x16xbf16>
    %600 = arith.index_cast %495 : i32 to index
    %c0_345 = arith.constant 0 : index
    %c16_346 = arith.constant 16 : index
    %601 = vector.load %arg6[%600, %c0_345, %c16_346] : memref<8x2x32xbf16, #tpu.memory_space<vmem>>, vector<1x2x16xbf16>
    tpu.vector_store %arg6[%600, %c0_345, %c16_346], %599 {strides = array<i32>} : memref<8x2x32xbf16, #tpu.memory_space<vmem>>, vector<1x2x16xbf16>,
    %c5_i32 = arith.constant 5 : i32
    %c7_i32_347 = arith.constant 7 : i32
    %602 = arith.subi %c7_i32_347, %c5_i32 : i32
    %603 = arith.truncf %544 : vector<2x16xf32> to vector<2x16xbf16>
    %c0_348 = arith.constant 0 : index
    %c0_349 = arith.constant 0 : index
    %c0_350 = arith.constant 0 : index
    %604 = vector.load %arg3[%c0_348, %c0_349, %c0_350] : memref<6x16x16xbf16, #tpu.memory_space<vmem>>, vector<1x16x16xbf16>
    %605 = vector.shape_cast %604 : vector<1x16x16xbf16> to vector<16x16xbf16>
    %cst_351 = arith.constant dense<0.000000e+00> : vector<2x16xf32>
    %606 = tpu.matmul %603, %605, %cst_351 {dimension_numbers = #tpu.dot_dimension_numbers<[1], [0], [0], [1], [0, 0, 1, 1], [], []>} : vector<2x16xbf16>, vector<16x16xbf16>, vector<2x16xf32> -> vector<2x16xf32>
    %c1_352 = arith.constant 1 : index
    %c0_353 = arith.constant 0 : index
    %c0_354 = arith.constant 0 : index
    %607 = vector.load %arg3[%c1_352, %c0_353, %c0_354] : memref<6x16x16xbf16, #tpu.memory_space<vmem>>, vector<1x16x16xbf16>
    %608 = vector.shape_cast %607 : vector<1x16x16xbf16> to vector<16x16xbf16>
    %cst_355 = arith.constant dense<0.000000e+00> : vector<2x16xf32>
    %609 = tpu.matmul %603, %608, %cst_355 {dimension_numbers = #tpu.dot_dimension_numbers<[1], [0], [0], [1], [0, 0, 1, 1], [], []>} : vector<2x16xbf16>, vector<16x16xbf16>, vector<2x16xf32> -> vector<2x16xf32>
    %c2_356 = arith.constant 2 : index
    %c0_357 = arith.constant 0 : index
    %c0_358 = arith.constant 0 : index
    %610 = vector.load %arg3[%c2_356, %c0_357, %c0_358] : memref<6x16x16xbf16, #tpu.memory_space<vmem>>, vector<1x16x16xbf16>
    %611 = vector.shape_cast %610 : vector<1x16x16xbf16> to vector<16x16xbf16>
    %cst_359 = arith.constant dense<0.000000e+00> : vector<2x16xf32>
    %612 = tpu.matmul %603, %611, %cst_359 {dimension_numbers = #tpu.dot_dimension_numbers<[1], [0], [0], [1], [0, 0, 1, 1], [], []>} : vector<2x16xbf16>, vector<16x16xbf16>, vector<2x16xf32> -> vector<2x16xf32>
    %613 = vector.broadcast %63 : vector<1x16xf32> to vector<2x16xf32>
    %614 = arith.addf %612, %613 : vector<2x16xf32>
    %c0_i32_360 = arith.constant 0 : i32
    %615 = arith.addi %c0_i32_360, %c5_i32 : i32
    %616 = arith.index_cast %615 : i32 to index
    %c0_361 = arith.constant 0 : index
    %c0_362 = arith.constant 0 : index
    %617 = vector.load %arg7[%616, %c0_361, %c0_362] : memref<48x2x16xbf16, #tpu.memory_space<vmem>>, vector<1x2x16xbf16>
    %618 = vector.shape_cast %617 : vector<1x2x16xbf16> to vector<2x16xbf16>
    %619 = arith.extf %618 : vector<2x16xbf16> to vector<2x16xf32>
    %c8_i32_363 = arith.constant 8 : i32
    %620 = arith.addi %c8_i32_363, %c5_i32 : i32
    %621 = arith.index_cast %620 : i32 to index
    %c0_364 = arith.constant 0 : index
    %c0_365 = arith.constant 0 : index
    %622 = vector.load %arg7[%621, %c0_364, %c0_365] : memref<48x2x16xbf16, #tpu.memory_space<vmem>>, vector<1x2x16xbf16>
    %623 = vector.shape_cast %622 : vector<1x2x16xbf16> to vector<2x16xbf16>
    %624 = arith.extf %623 : vector<2x16xbf16> to vector<2x16xf32>
    %c16_i32_366 = arith.constant 16 : i32
    %625 = arith.addi %c16_i32_366, %c5_i32 : i32
    %626 = arith.index_cast %625 : i32 to index
    %c0_367 = arith.constant 0 : index
    %c0_368 = arith.constant 0 : index
    %627 = vector.load %arg7[%626, %c0_367, %c0_368] : memref<48x2x16xbf16, #tpu.memory_space<vmem>>, vector<1x2x16xbf16>
    %628 = vector.shape_cast %627 : vector<1x2x16xbf16> to vector<2x16xbf16>
    %629 = arith.extf %628 : vector<2x16xbf16> to vector<2x16xf32>
    %630 = arith.addf %619, %606 : vector<2x16xf32>
    %cst_369 = arith.constant 5.000000e-01 : f32
    %631 = vector.broadcast %cst_369 : f32 to vector<2x16xf32>
    %632 = arith.mulf %631, %630 : vector<2x16xf32>
    %633 = math.tanh %632 : vector<2x16xf32>
    %cst_370 = arith.constant 5.000000e-01 : f32
    %634 = vector.broadcast %cst_370 : f32 to vector<2x16xf32>
    %635 = arith.mulf %634, %633 : vector<2x16xf32>
    %cst_371 = arith.constant 5.000000e-01 : f32
    %636 = vector.broadcast %cst_371 : f32 to vector<2x16xf32>
    %637 = arith.addf %635, %636 : vector<2x16xf32>
    %638 = arith.addf %624, %609 : vector<2x16xf32>
    %cst_372 = arith.constant 5.000000e-01 : f32
    %639 = vector.broadcast %cst_372 : f32 to vector<2x16xf32>
    %640 = arith.mulf %639, %638 : vector<2x16xf32>
    %641 = math.tanh %640 : vector<2x16xf32>
    %cst_373 = arith.constant 5.000000e-01 : f32
    %642 = vector.broadcast %cst_373 : f32 to vector<2x16xf32>
    %643 = arith.mulf %642, %641 : vector<2x16xf32>
    %cst_374 = arith.constant 5.000000e-01 : f32
    %644 = vector.broadcast %cst_374 : f32 to vector<2x16xf32>
    %645 = arith.addf %643, %644 : vector<2x16xf32>
    %646 = arith.mulf %637, %614 : vector<2x16xf32>
    %647 = arith.addf %629, %646 : vector<2x16xf32>
    %648 = math.tanh %647 : vector<2x16xf32>
    %649 = arith.subf %544, %648 : vector<2x16xf32>
    %650 = arith.mulf %645, %649 : vector<2x16xf32>
    %651 = arith.addf %648, %650 : vector<2x16xf32>
    %652 = arith.truncf %593 : vector<2x16xf32> to vector<2x16xbf16>
    %c3_375 = arith.constant 3 : index
    %c0_376 = arith.constant 0 : index
    %c0_377 = arith.constant 0 : index
    %653 = vector.load %arg3[%c3_375, %c0_376, %c0_377] : memref<6x16x16xbf16, #tpu.memory_space<vmem>>, vector<1x16x16xbf16>
    %654 = vector.shape_cast %653 : vector<1x16x16xbf16> to vector<16x16xbf16>
    %cst_378 = arith.constant dense<0.000000e+00> : vector<2x16xf32>
    %655 = tpu.matmul %652, %654, %cst_378 {dimension_numbers = #tpu.dot_dimension_numbers<[1], [0], [0], [1], [0, 0, 1, 1], [], []>} : vector<2x16xbf16>, vector<16x16xbf16>, vector<2x16xf32> -> vector<2x16xf32>
    %c4_379 = arith.constant 4 : index
    %c0_380 = arith.constant 0 : index
    %c0_381 = arith.constant 0 : index
    %656 = vector.load %arg3[%c4_379, %c0_380, %c0_381] : memref<6x16x16xbf16, #tpu.memory_space<vmem>>, vector<1x16x16xbf16>
    %657 = vector.shape_cast %656 : vector<1x16x16xbf16> to vector<16x16xbf16>
    %cst_382 = arith.constant dense<0.000000e+00> : vector<2x16xf32>
    %658 = tpu.matmul %652, %657, %cst_382 {dimension_numbers = #tpu.dot_dimension_numbers<[1], [0], [0], [1], [0, 0, 1, 1], [], []>} : vector<2x16xbf16>, vector<16x16xbf16>, vector<2x16xf32> -> vector<2x16xf32>
    %c5_383 = arith.constant 5 : index
    %c0_384 = arith.constant 0 : index
    %c0_385 = arith.constant 0 : index
    %659 = vector.load %arg3[%c5_383, %c0_384, %c0_385] : memref<6x16x16xbf16, #tpu.memory_space<vmem>>, vector<1x16x16xbf16>
    %660 = vector.shape_cast %659 : vector<1x16x16xbf16> to vector<16x16xbf16>
    %cst_386 = arith.constant dense<0.000000e+00> : vector<2x16xf32>
    %661 = tpu.matmul %652, %660, %cst_386 {dimension_numbers = #tpu.dot_dimension_numbers<[1], [0], [0], [1], [0, 0, 1, 1], [], []>} : vector<2x16xbf16>, vector<16x16xbf16>, vector<2x16xf32> -> vector<2x16xf32>
    %662 = vector.broadcast %65 : vector<1x16xf32> to vector<2x16xf32>
    %663 = arith.addf %661, %662 : vector<2x16xf32>
    %c24_i32_387 = arith.constant 24 : i32
    %664 = arith.addi %c24_i32_387, %602 : i32
    %665 = arith.index_cast %664 : i32 to index
    %c0_388 = arith.constant 0 : index
    %c0_389 = arith.constant 0 : index
    %666 = vector.load %arg7[%665, %c0_388, %c0_389] : memref<48x2x16xbf16, #tpu.memory_space<vmem>>, vector<1x2x16xbf16>
    %667 = vector.shape_cast %666 : vector<1x2x16xbf16> to vector<2x16xbf16>
    %668 = arith.extf %667 : vector<2x16xbf16> to vector<2x16xf32>
    %c32_i32_390 = arith.constant 32 : i32
    %669 = arith.addi %c32_i32_390, %602 : i32
    %670 = arith.index_cast %669 : i32 to index
    %c0_391 = arith.constant 0 : index
    %c0_392 = arith.constant 0 : index
    %671 = vector.load %arg7[%670, %c0_391, %c0_392] : memref<48x2x16xbf16, #tpu.memory_space<vmem>>, vector<1x2x16xbf16>
    %672 = vector.shape_cast %671 : vector<1x2x16xbf16> to vector<2x16xbf16>
    %673 = arith.extf %672 : vector<2x16xbf16> to vector<2x16xf32>
    %c40_i32_393 = arith.constant 40 : i32
    %674 = arith.addi %c40_i32_393, %602 : i32
    %675 = arith.index_cast %674 : i32 to index
    %c0_394 = arith.constant 0 : index
    %c0_395 = arith.constant 0 : index
    %676 = vector.load %arg7[%675, %c0_394, %c0_395] : memref<48x2x16xbf16, #tpu.memory_space<vmem>>, vector<1x2x16xbf16>
    %677 = vector.shape_cast %676 : vector<1x2x16xbf16> to vector<2x16xbf16>
    %678 = arith.extf %677 : vector<2x16xbf16> to vector<2x16xf32>
    %679 = arith.addf %668, %655 : vector<2x16xf32>
    %cst_396 = arith.constant 5.000000e-01 : f32
    %680 = vector.broadcast %cst_396 : f32 to vector<2x16xf32>
    %681 = arith.mulf %680, %679 : vector<2x16xf32>
    %682 = math.tanh %681 : vector<2x16xf32>
    %cst_397 = arith.constant 5.000000e-01 : f32
    %683 = vector.broadcast %cst_397 : f32 to vector<2x16xf32>
    %684 = arith.mulf %683, %682 : vector<2x16xf32>
    %cst_398 = arith.constant 5.000000e-01 : f32
    %685 = vector.broadcast %cst_398 : f32 to vector<2x16xf32>
    %686 = arith.addf %684, %685 : vector<2x16xf32>
    %687 = arith.addf %673, %658 : vector<2x16xf32>
    %cst_399 = arith.constant 5.000000e-01 : f32
    %688 = vector.broadcast %cst_399 : f32 to vector<2x16xf32>
    %689 = arith.mulf %688, %687 : vector<2x16xf32>
    %690 = math.tanh %689 : vector<2x16xf32>
    %cst_400 = arith.constant 5.000000e-01 : f32
    %691 = vector.broadcast %cst_400 : f32 to vector<2x16xf32>
    %692 = arith.mulf %691, %690 : vector<2x16xf32>
    %cst_401 = arith.constant 5.000000e-01 : f32
    %693 = vector.broadcast %cst_401 : f32 to vector<2x16xf32>
    %694 = arith.addf %692, %693 : vector<2x16xf32>
    %695 = arith.mulf %686, %663 : vector<2x16xf32>
    %696 = arith.addf %678, %695 : vector<2x16xf32>
    %697 = math.tanh %696 : vector<2x16xf32>
    %698 = arith.subf %593, %697 : vector<2x16xf32>
    %699 = arith.mulf %694, %698 : vector<2x16xf32>
    %700 = arith.addf %697, %699 : vector<2x16xf32>
    %701 = vector.shape_cast %651 : vector<2x16xf32> to vector<1x2x16xf32>
    %702 = arith.truncf %701 : vector<1x2x16xf32> to vector<1x2x16xbf16>
    %703 = arith.index_cast %c5_i32 : i32 to index
    %c0_402 = arith.constant 0 : index
    %c0_403 = arith.constant 0 : index
    %704 = vector.load %arg6[%703, %c0_402, %c0_403] : memref<8x2x32xbf16, #tpu.memory_space<vmem>>, vector<1x2x16xbf16>
    tpu.vector_store %arg6[%703, %c0_402, %c0_403], %702 {strides = array<i32>} : memref<8x2x32xbf16, #tpu.memory_space<vmem>>, vector<1x2x16xbf16>,
    %705 = vector.shape_cast %700 : vector<2x16xf32> to vector<1x2x16xf32>
    %706 = arith.truncf %705 : vector<1x2x16xf32> to vector<1x2x16xbf16>
    %707 = arith.index_cast %602 : i32 to index
    %c0_404 = arith.constant 0 : index
    %c16_405 = arith.constant 16 : index
    %708 = vector.load %arg6[%707, %c0_404, %c16_405] : memref<8x2x32xbf16, #tpu.memory_space<vmem>>, vector<1x2x16xbf16>
    tpu.vector_store %arg6[%707, %c0_404, %c16_405], %706 {strides = array<i32>} : memref<8x2x32xbf16, #tpu.memory_space<vmem>>, vector<1x2x16xbf16>,
    %c6_i32 = arith.constant 6 : i32
    %c7_i32_406 = arith.constant 7 : i32
    %709 = arith.subi %c7_i32_406, %c6_i32 : i32
    %710 = arith.truncf %651 : vector<2x16xf32> to vector<2x16xbf16>
    %c0_407 = arith.constant 0 : index
    %c0_408 = arith.constant 0 : index
    %c0_409 = arith.constant 0 : index
    %711 = vector.load %arg3[%c0_407, %c0_408, %c0_409] : memref<6x16x16xbf16, #tpu.memory_space<vmem>>, vector<1x16x16xbf16>
    %712 = vector.shape_cast %711 : vector<1x16x16xbf16> to vector<16x16xbf16>
    %cst_410 = arith.constant dense<0.000000e+00> : vector<2x16xf32>
    %713 = tpu.matmul %710, %712, %cst_410 {dimension_numbers = #tpu.dot_dimension_numbers<[1], [0], [0], [1], [0, 0, 1, 1], [], []>} : vector<2x16xbf16>, vector<16x16xbf16>, vector<2x16xf32> -> vector<2x16xf32>
    %c1_411 = arith.constant 1 : index
    %c0_412 = arith.constant 0 : index
    %c0_413 = arith.constant 0 : index
    %714 = vector.load %arg3[%c1_411, %c0_412, %c0_413] : memref<6x16x16xbf16, #tpu.memory_space<vmem>>, vector<1x16x16xbf16>
    %715 = vector.shape_cast %714 : vector<1x16x16xbf16> to vector<16x16xbf16>
    %cst_414 = arith.constant dense<0.000000e+00> : vector<2x16xf32>
    %716 = tpu.matmul %710, %715, %cst_414 {dimension_numbers = #tpu.dot_dimension_numbers<[1], [0], [0], [1], [0, 0, 1, 1], [], []>} : vector<2x16xbf16>, vector<16x16xbf16>, vector<2x16xf32> -> vector<2x16xf32>
    %c2_415 = arith.constant 2 : index
    %c0_416 = arith.constant 0 : index
    %c0_417 = arith.constant 0 : index
    %717 = vector.load %arg3[%c2_415, %c0_416, %c0_417] : memref<6x16x16xbf16, #tpu.memory_space<vmem>>, vector<1x16x16xbf16>
    %718 = vector.shape_cast %717 : vector<1x16x16xbf16> to vector<16x16xbf16>
    %cst_418 = arith.constant dense<0.000000e+00> : vector<2x16xf32>
    %719 = tpu.matmul %710, %718, %cst_418 {dimension_numbers = #tpu.dot_dimension_numbers<[1], [0], [0], [1], [0, 0, 1, 1], [], []>} : vector<2x16xbf16>, vector<16x16xbf16>, vector<2x16xf32> -> vector<2x16xf32>
    %720 = vector.broadcast %63 : vector<1x16xf32> to vector<2x16xf32>
    %721 = arith.addf %719, %720 : vector<2x16xf32>
    %c0_i32_419 = arith.constant 0 : i32
    %722 = arith.addi %c0_i32_419, %c6_i32 : i32
    %723 = arith.index_cast %722 : i32 to index
    %c0_420 = arith.constant 0 : index
    %c0_421 = arith.constant 0 : index
    %724 = vector.load %arg7[%723, %c0_420, %c0_421] : memref<48x2x16xbf16, #tpu.memory_space<vmem>>, vector<1x2x16xbf16>
    %725 = vector.shape_cast %724 : vector<1x2x16xbf16> to vector<2x16xbf16>
    %726 = arith.extf %725 : vector<2x16xbf16> to vector<2x16xf32>
    %c8_i32_422 = arith.constant 8 : i32
    %727 = arith.addi %c8_i32_422, %c6_i32 : i32
    %728 = arith.index_cast %727 : i32 to index
    %c0_423 = arith.constant 0 : index
    %c0_424 = arith.constant 0 : index
    %729 = vector.load %arg7[%728, %c0_423, %c0_424] : memref<48x2x16xbf16, #tpu.memory_space<vmem>>, vector<1x2x16xbf16>
    %730 = vector.shape_cast %729 : vector<1x2x16xbf16> to vector<2x16xbf16>
    %731 = arith.extf %730 : vector<2x16xbf16> to vector<2x16xf32>
    %c16_i32_425 = arith.constant 16 : i32
    %732 = arith.addi %c16_i32_425, %c6_i32 : i32
    %733 = arith.index_cast %732 : i32 to index
    %c0_426 = arith.constant 0 : index
    %c0_427 = arith.constant 0 : index
    %734 = vector.load %arg7[%733, %c0_426, %c0_427] : memref<48x2x16xbf16, #tpu.memory_space<vmem>>, vector<1x2x16xbf16>
    %735 = vector.shape_cast %734 : vector<1x2x16xbf16> to vector<2x16xbf16>
    %736 = arith.extf %735 : vector<2x16xbf16> to vector<2x16xf32>
    %737 = arith.addf %726, %713 : vector<2x16xf32>
    %cst_428 = arith.constant 5.000000e-01 : f32
    %738 = vector.broadcast %cst_428 : f32 to vector<2x16xf32>
    %739 = arith.mulf %738, %737 : vector<2x16xf32>
    %740 = math.tanh %739 : vector<2x16xf32>
    %cst_429 = arith.constant 5.000000e-01 : f32
    %741 = vector.broadcast %cst_429 : f32 to vector<2x16xf32>
    %742 = arith.mulf %741, %740 : vector<2x16xf32>
    %cst_430 = arith.constant 5.000000e-01 : f32
    %743 = vector.broadcast %cst_430 : f32 to vector<2x16xf32>
    %744 = arith.addf %742, %743 : vector<2x16xf32>
    %745 = arith.addf %731, %716 : vector<2x16xf32>
    %cst_431 = arith.constant 5.000000e-01 : f32
    %746 = vector.broadcast %cst_431 : f32 to vector<2x16xf32>
    %747 = arith.mulf %746, %745 : vector<2x16xf32>
    %748 = math.tanh %747 : vector<2x16xf32>
    %cst_432 = arith.constant 5.000000e-01 : f32
    %749 = vector.broadcast %cst_432 : f32 to vector<2x16xf32>
    %750 = arith.mulf %749, %748 : vector<2x16xf32>
    %cst_433 = arith.constant 5.000000e-01 : f32
    %751 = vector.broadcast %cst_433 : f32 to vector<2x16xf32>
    %752 = arith.addf %750, %751 : vector<2x16xf32>
    %753 = arith.mulf %744, %721 : vector<2x16xf32>
    %754 = arith.addf %736, %753 : vector<2x16xf32>
    %755 = math.tanh %754 : vector<2x16xf32>
    %756 = arith.subf %651, %755 : vector<2x16xf32>
    %757 = arith.mulf %752, %756 : vector<2x16xf32>
    %758 = arith.addf %755, %757 : vector<2x16xf32>
    %759 = arith.truncf %700 : vector<2x16xf32> to vector<2x16xbf16>
    %c3_434 = arith.constant 3 : index
    %c0_435 = arith.constant 0 : index
    %c0_436 = arith.constant 0 : index
    %760 = vector.load %arg3[%c3_434, %c0_435, %c0_436] : memref<6x16x16xbf16, #tpu.memory_space<vmem>>, vector<1x16x16xbf16>
    %761 = vector.shape_cast %760 : vector<1x16x16xbf16> to vector<16x16xbf16>
    %cst_437 = arith.constant dense<0.000000e+00> : vector<2x16xf32>
    %762 = tpu.matmul %759, %761, %cst_437 {dimension_numbers = #tpu.dot_dimension_numbers<[1], [0], [0], [1], [0, 0, 1, 1], [], []>} : vector<2x16xbf16>, vector<16x16xbf16>, vector<2x16xf32> -> vector<2x16xf32>
    %c4_438 = arith.constant 4 : index
    %c0_439 = arith.constant 0 : index
    %c0_440 = arith.constant 0 : index
    %763 = vector.load %arg3[%c4_438, %c0_439, %c0_440] : memref<6x16x16xbf16, #tpu.memory_space<vmem>>, vector<1x16x16xbf16>
    %764 = vector.shape_cast %763 : vector<1x16x16xbf16> to vector<16x16xbf16>
    %cst_441 = arith.constant dense<0.000000e+00> : vector<2x16xf32>
    %765 = tpu.matmul %759, %764, %cst_441 {dimension_numbers = #tpu.dot_dimension_numbers<[1], [0], [0], [1], [0, 0, 1, 1], [], []>} : vector<2x16xbf16>, vector<16x16xbf16>, vector<2x16xf32> -> vector<2x16xf32>
    %c5_442 = arith.constant 5 : index
    %c0_443 = arith.constant 0 : index
    %c0_444 = arith.constant 0 : index
    %766 = vector.load %arg3[%c5_442, %c0_443, %c0_444] : memref<6x16x16xbf16, #tpu.memory_space<vmem>>, vector<1x16x16xbf16>
    %767 = vector.shape_cast %766 : vector<1x16x16xbf16> to vector<16x16xbf16>
    %cst_445 = arith.constant dense<0.000000e+00> : vector<2x16xf32>
    %768 = tpu.matmul %759, %767, %cst_445 {dimension_numbers = #tpu.dot_dimension_numbers<[1], [0], [0], [1], [0, 0, 1, 1], [], []>} : vector<2x16xbf16>, vector<16x16xbf16>, vector<2x16xf32> -> vector<2x16xf32>
    %769 = vector.broadcast %65 : vector<1x16xf32> to vector<2x16xf32>
    %770 = arith.addf %768, %769 : vector<2x16xf32>
    %c24_i32_446 = arith.constant 24 : i32
    %771 = arith.addi %c24_i32_446, %709 : i32
    %772 = arith.index_cast %771 : i32 to index
    %c0_447 = arith.constant 0 : index
    %c0_448 = arith.constant 0 : index
    %773 = vector.load %arg7[%772, %c0_447, %c0_448] : memref<48x2x16xbf16, #tpu.memory_space<vmem>>, vector<1x2x16xbf16>
    %774 = vector.shape_cast %773 : vector<1x2x16xbf16> to vector<2x16xbf16>
    %775 = arith.extf %774 : vector<2x16xbf16> to vector<2x16xf32>
    %c32_i32_449 = arith.constant 32 : i32
    %776 = arith.addi %c32_i32_449, %709 : i32
    %777 = arith.index_cast %776 : i32 to index
    %c0_450 = arith.constant 0 : index
    %c0_451 = arith.constant 0 : index
    %778 = vector.load %arg7[%777, %c0_450, %c0_451] : memref<48x2x16xbf16, #tpu.memory_space<vmem>>, vector<1x2x16xbf16>
    %779 = vector.shape_cast %778 : vector<1x2x16xbf16> to vector<2x16xbf16>
    %780 = arith.extf %779 : vector<2x16xbf16> to vector<2x16xf32>
    %c40_i32_452 = arith.constant 40 : i32
    %781 = arith.addi %c40_i32_452, %709 : i32
    %782 = arith.index_cast %781 : i32 to index
    %c0_453 = arith.constant 0 : index
    %c0_454 = arith.constant 0 : index
    %783 = vector.load %arg7[%782, %c0_453, %c0_454] : memref<48x2x16xbf16, #tpu.memory_space<vmem>>, vector<1x2x16xbf16>
    %784 = vector.shape_cast %783 : vector<1x2x16xbf16> to vector<2x16xbf16>
    %785 = arith.extf %784 : vector<2x16xbf16> to vector<2x16xf32>
    %786 = arith.addf %775, %762 : vector<2x16xf32>
    %cst_455 = arith.constant 5.000000e-01 : f32
    %787 = vector.broadcast %cst_455 : f32 to vector<2x16xf32>
    %788 = arith.mulf %787, %786 : vector<2x16xf32>
    %789 = math.tanh %788 : vector<2x16xf32>
    %cst_456 = arith.constant 5.000000e-01 : f32
    %790 = vector.broadcast %cst_456 : f32 to vector<2x16xf32>
    %791 = arith.mulf %790, %789 : vector<2x16xf32>
    %cst_457 = arith.constant 5.000000e-01 : f32
    %792 = vector.broadcast %cst_457 : f32 to vector<2x16xf32>
    %793 = arith.addf %791, %792 : vector<2x16xf32>
    %794 = arith.addf %780, %765 : vector<2x16xf32>
    %cst_458 = arith.constant 5.000000e-01 : f32
    %795 = vector.broadcast %cst_458 : f32 to vector<2x16xf32>
    %796 = arith.mulf %795, %794 : vector<2x16xf32>
    %797 = math.tanh %796 : vector<2x16xf32>
    %cst_459 = arith.constant 5.000000e-01 : f32
    %798 = vector.broadcast %cst_459 : f32 to vector<2x16xf32>
    %799 = arith.mulf %798, %797 : vector<2x16xf32>
    %cst_460 = arith.constant 5.000000e-01 : f32
    %800 = vector.broadcast %cst_460 : f32 to vector<2x16xf32>
    %801 = arith.addf %799, %800 : vector<2x16xf32>
    %802 = arith.mulf %793, %770 : vector<2x16xf32>
    %803 = arith.addf %785, %802 : vector<2x16xf32>
    %804 = math.tanh %803 : vector<2x16xf32>
    %805 = arith.subf %700, %804 : vector<2x16xf32>
    %806 = arith.mulf %801, %805 : vector<2x16xf32>
    %807 = arith.addf %804, %806 : vector<2x16xf32>
    %808 = vector.shape_cast %758 : vector<2x16xf32> to vector<1x2x16xf32>
    %809 = arith.truncf %808 : vector<1x2x16xf32> to vector<1x2x16xbf16>
    %810 = arith.index_cast %c6_i32 : i32 to index
    %c0_461 = arith.constant 0 : index
    %c0_462 = arith.constant 0 : index
    %811 = vector.load %arg6[%810, %c0_461, %c0_462] : memref<8x2x32xbf16, #tpu.memory_space<vmem>>, vector<1x2x16xbf16>
    tpu.vector_store %arg6[%810, %c0_461, %c0_462], %809 {strides = array<i32>} : memref<8x2x32xbf16, #tpu.memory_space<vmem>>, vector<1x2x16xbf16>,
    %812 = vector.shape_cast %807 : vector<2x16xf32> to vector<1x2x16xf32>
    %813 = arith.truncf %812 : vector<1x2x16xf32> to vector<1x2x16xbf16>
    %814 = arith.index_cast %709 : i32 to index
    %c0_463 = arith.constant 0 : index
    %c16_464 = arith.constant 16 : index
    %815 = vector.load %arg6[%814, %c0_463, %c16_464] : memref<8x2x32xbf16, #tpu.memory_space<vmem>>, vector<1x2x16xbf16>
    tpu.vector_store %arg6[%814, %c0_463, %c16_464], %813 {strides = array<i32>} : memref<8x2x32xbf16, #tpu.memory_space<vmem>>, vector<1x2x16xbf16>,
    %c7_i32_465 = arith.constant 7 : i32
    %c7_i32_466 = arith.constant 7 : i32
    %816 = arith.subi %c7_i32_466, %c7_i32_465 : i32
    %817 = arith.truncf %758 : vector<2x16xf32> to vector<2x16xbf16>
    %c0_467 = arith.constant 0 : index
    %c0_468 = arith.constant 0 : index
    %c0_469 = arith.constant 0 : index
    %818 = vector.load %arg3[%c0_467, %c0_468, %c0_469] : memref<6x16x16xbf16, #tpu.memory_space<vmem>>, vector<1x16x16xbf16>
    %819 = vector.shape_cast %818 : vector<1x16x16xbf16> to vector<16x16xbf16>
    %cst_470 = arith.constant dense<0.000000e+00> : vector<2x16xf32>
    %820 = tpu.matmul %817, %819, %cst_470 {dimension_numbers = #tpu.dot_dimension_numbers<[1], [0], [0], [1], [0, 0, 1, 1], [], []>} : vector<2x16xbf16>, vector<16x16xbf16>, vector<2x16xf32> -> vector<2x16xf32>
    %c1_471 = arith.constant 1 : index
    %c0_472 = arith.constant 0 : index
    %c0_473 = arith.constant 0 : index
    %821 = vector.load %arg3[%c1_471, %c0_472, %c0_473] : memref<6x16x16xbf16, #tpu.memory_space<vmem>>, vector<1x16x16xbf16>
    %822 = vector.shape_cast %821 : vector<1x16x16xbf16> to vector<16x16xbf16>
    %cst_474 = arith.constant dense<0.000000e+00> : vector<2x16xf32>
    %823 = tpu.matmul %817, %822, %cst_474 {dimension_numbers = #tpu.dot_dimension_numbers<[1], [0], [0], [1], [0, 0, 1, 1], [], []>} : vector<2x16xbf16>, vector<16x16xbf16>, vector<2x16xf32> -> vector<2x16xf32>
    %c2_475 = arith.constant 2 : index
    %c0_476 = arith.constant 0 : index
    %c0_477 = arith.constant 0 : index
    %824 = vector.load %arg3[%c2_475, %c0_476, %c0_477] : memref<6x16x16xbf16, #tpu.memory_space<vmem>>, vector<1x16x16xbf16>
    %825 = vector.shape_cast %824 : vector<1x16x16xbf16> to vector<16x16xbf16>
    %cst_478 = arith.constant dense<0.000000e+00> : vector<2x16xf32>
    %826 = tpu.matmul %817, %825, %cst_478 {dimension_numbers = #tpu.dot_dimension_numbers<[1], [0], [0], [1], [0, 0, 1, 1], [], []>} : vector<2x16xbf16>, vector<16x16xbf16>, vector<2x16xf32> -> vector<2x16xf32>
    %827 = vector.broadcast %63 : vector<1x16xf32> to vector<2x16xf32>
    %828 = arith.addf %826, %827 : vector<2x16xf32>
    %c0_i32_479 = arith.constant 0 : i32
    %829 = arith.addi %c0_i32_479, %c7_i32_465 : i32
    %830 = arith.index_cast %829 : i32 to index
    %c0_480 = arith.constant 0 : index
    %c0_481 = arith.constant 0 : index
    %831 = vector.load %arg7[%830, %c0_480, %c0_481] : memref<48x2x16xbf16, #tpu.memory_space<vmem>>, vector<1x2x16xbf16>
    %832 = vector.shape_cast %831 : vector<1x2x16xbf16> to vector<2x16xbf16>
    %833 = arith.extf %832 : vector<2x16xbf16> to vector<2x16xf32>
    %c8_i32_482 = arith.constant 8 : i32
    %834 = arith.addi %c8_i32_482, %c7_i32_465 : i32
    %835 = arith.index_cast %834 : i32 to index
    %c0_483 = arith.constant 0 : index
    %c0_484 = arith.constant 0 : index
    %836 = vector.load %arg7[%835, %c0_483, %c0_484] : memref<48x2x16xbf16, #tpu.memory_space<vmem>>, vector<1x2x16xbf16>
    %837 = vector.shape_cast %836 : vector<1x2x16xbf16> to vector<2x16xbf16>
    %838 = arith.extf %837 : vector<2x16xbf16> to vector<2x16xf32>
    %c16_i32_485 = arith.constant 16 : i32
    %839 = arith.addi %c16_i32_485, %c7_i32_465 : i32
    %840 = arith.index_cast %839 : i32 to index
    %c0_486 = arith.constant 0 : index
    %c0_487 = arith.constant 0 : index
    %841 = vector.load %arg7[%840, %c0_486, %c0_487] : memref<48x2x16xbf16, #tpu.memory_space<vmem>>, vector<1x2x16xbf16>
    %842 = vector.shape_cast %841 : vector<1x2x16xbf16> to vector<2x16xbf16>
    %843 = arith.extf %842 : vector<2x16xbf16> to vector<2x16xf32>
    %844 = arith.addf %833, %820 : vector<2x16xf32>
    %cst_488 = arith.constant 5.000000e-01 : f32
    %845 = vector.broadcast %cst_488 : f32 to vector<2x16xf32>
    %846 = arith.mulf %845, %844 : vector<2x16xf32>
    %847 = math.tanh %846 : vector<2x16xf32>
    %cst_489 = arith.constant 5.000000e-01 : f32
    %848 = vector.broadcast %cst_489 : f32 to vector<2x16xf32>
    %849 = arith.mulf %848, %847 : vector<2x16xf32>
    %cst_490 = arith.constant 5.000000e-01 : f32
    %850 = vector.broadcast %cst_490 : f32 to vector<2x16xf32>
    %851 = arith.addf %849, %850 : vector<2x16xf32>
    %852 = arith.addf %838, %823 : vector<2x16xf32>
    %cst_491 = arith.constant 5.000000e-01 : f32
    %853 = vector.broadcast %cst_491 : f32 to vector<2x16xf32>
    %854 = arith.mulf %853, %852 : vector<2x16xf32>
    %855 = math.tanh %854 : vector<2x16xf32>
    %cst_492 = arith.constant 5.000000e-01 : f32
    %856 = vector.broadcast %cst_492 : f32 to vector<2x16xf32>
    %857 = arith.mulf %856, %855 : vector<2x16xf32>
    %cst_493 = arith.constant 5.000000e-01 : f32
    %858 = vector.broadcast %cst_493 : f32 to vector<2x16xf32>
    %859 = arith.addf %857, %858 : vector<2x16xf32>
    %860 = arith.mulf %851, %828 : vector<2x16xf32>
    %861 = arith.addf %843, %860 : vector<2x16xf32>
    %862 = math.tanh %861 : vector<2x16xf32>
    %863 = arith.subf %758, %862 : vector<2x16xf32>
    %864 = arith.mulf %859, %863 : vector<2x16xf32>
    %865 = arith.addf %862, %864 : vector<2x16xf32>
    %866 = arith.truncf %807 : vector<2x16xf32> to vector<2x16xbf16>
    %c3_494 = arith.constant 3 : index
    %c0_495 = arith.constant 0 : index
    %c0_496 = arith.constant 0 : index
    %867 = vector.load %arg3[%c3_494, %c0_495, %c0_496] : memref<6x16x16xbf16, #tpu.memory_space<vmem>>, vector<1x16x16xbf16>
    %868 = vector.shape_cast %867 : vector<1x16x16xbf16> to vector<16x16xbf16>
    %cst_497 = arith.constant dense<0.000000e+00> : vector<2x16xf32>
    %869 = tpu.matmul %866, %868, %cst_497 {dimension_numbers = #tpu.dot_dimension_numbers<[1], [0], [0], [1], [0, 0, 1, 1], [], []>} : vector<2x16xbf16>, vector<16x16xbf16>, vector<2x16xf32> -> vector<2x16xf32>
    %c4_498 = arith.constant 4 : index
    %c0_499 = arith.constant 0 : index
    %c0_500 = arith.constant 0 : index
    %870 = vector.load %arg3[%c4_498, %c0_499, %c0_500] : memref<6x16x16xbf16, #tpu.memory_space<vmem>>, vector<1x16x16xbf16>
    %871 = vector.shape_cast %870 : vector<1x16x16xbf16> to vector<16x16xbf16>
    %cst_501 = arith.constant dense<0.000000e+00> : vector<2x16xf32>
    %872 = tpu.matmul %866, %871, %cst_501 {dimension_numbers = #tpu.dot_dimension_numbers<[1], [0], [0], [1], [0, 0, 1, 1], [], []>} : vector<2x16xbf16>, vector<16x16xbf16>, vector<2x16xf32> -> vector<2x16xf32>
    %c5_502 = arith.constant 5 : index
    %c0_503 = arith.constant 0 : index
    %c0_504 = arith.constant 0 : index
    %873 = vector.load %arg3[%c5_502, %c0_503, %c0_504] : memref<6x16x16xbf16, #tpu.memory_space<vmem>>, vector<1x16x16xbf16>
    %874 = vector.shape_cast %873 : vector<1x16x16xbf16> to vector<16x16xbf16>
    %cst_505 = arith.constant dense<0.000000e+00> : vector<2x16xf32>
    %875 = tpu.matmul %866, %874, %cst_505 {dimension_numbers = #tpu.dot_dimension_numbers<[1], [0], [0], [1], [0, 0, 1, 1], [], []>} : vector<2x16xbf16>, vector<16x16xbf16>, vector<2x16xf32> -> vector<2x16xf32>
    %876 = vector.broadcast %65 : vector<1x16xf32> to vector<2x16xf32>
    %877 = arith.addf %875, %876 : vector<2x16xf32>
    %c24_i32_506 = arith.constant 24 : i32
    %878 = arith.addi %c24_i32_506, %816 : i32
    %879 = arith.index_cast %878 : i32 to index
    %c0_507 = arith.constant 0 : index
    %c0_508 = arith.constant 0 : index
    %880 = vector.load %arg7[%879, %c0_507, %c0_508] : memref<48x2x16xbf16, #tpu.memory_space<vmem>>, vector<1x2x16xbf16>
    %881 = vector.shape_cast %880 : vector<1x2x16xbf16> to vector<2x16xbf16>
    %882 = arith.extf %881 : vector<2x16xbf16> to vector<2x16xf32>
    %c32_i32_509 = arith.constant 32 : i32
    %883 = arith.addi %c32_i32_509, %816 : i32
    %884 = arith.index_cast %883 : i32 to index
    %c0_510 = arith.constant 0 : index
    %c0_511 = arith.constant 0 : index
    %885 = vector.load %arg7[%884, %c0_510, %c0_511] : memref<48x2x16xbf16, #tpu.memory_space<vmem>>, vector<1x2x16xbf16>
    %886 = vector.shape_cast %885 : vector<1x2x16xbf16> to vector<2x16xbf16>
    %887 = arith.extf %886 : vector<2x16xbf16> to vector<2x16xf32>
    %c40_i32_512 = arith.constant 40 : i32
    %888 = arith.addi %c40_i32_512, %816 : i32
    %889 = arith.index_cast %888 : i32 to index
    %c0_513 = arith.constant 0 : index
    %c0_514 = arith.constant 0 : index
    %890 = vector.load %arg7[%889, %c0_513, %c0_514] : memref<48x2x16xbf16, #tpu.memory_space<vmem>>, vector<1x2x16xbf16>
    %891 = vector.shape_cast %890 : vector<1x2x16xbf16> to vector<2x16xbf16>
    %892 = arith.extf %891 : vector<2x16xbf16> to vector<2x16xf32>
    %893 = arith.addf %882, %869 : vector<2x16xf32>
    %cst_515 = arith.constant 5.000000e-01 : f32
    %894 = vector.broadcast %cst_515 : f32 to vector<2x16xf32>
    %895 = arith.mulf %894, %893 : vector<2x16xf32>
    %896 = math.tanh %895 : vector<2x16xf32>
    %cst_516 = arith.constant 5.000000e-01 : f32
    %897 = vector.broadcast %cst_516 : f32 to vector<2x16xf32>
    %898 = arith.mulf %897, %896 : vector<2x16xf32>
    %cst_517 = arith.constant 5.000000e-01 : f32
    %899 = vector.broadcast %cst_517 : f32 to vector<2x16xf32>
    %900 = arith.addf %898, %899 : vector<2x16xf32>
    %901 = arith.addf %887, %872 : vector<2x16xf32>
    %cst_518 = arith.constant 5.000000e-01 : f32
    %902 = vector.broadcast %cst_518 : f32 to vector<2x16xf32>
    %903 = arith.mulf %902, %901 : vector<2x16xf32>
    %904 = math.tanh %903 : vector<2x16xf32>
    %cst_519 = arith.constant 5.000000e-01 : f32
    %905 = vector.broadcast %cst_519 : f32 to vector<2x16xf32>
    %906 = arith.mulf %905, %904 : vector<2x16xf32>
    %cst_520 = arith.constant 5.000000e-01 : f32
    %907 = vector.broadcast %cst_520 : f32 to vector<2x16xf32>
    %908 = arith.addf %906, %907 : vector<2x16xf32>
    %909 = arith.mulf %900, %877 : vector<2x16xf32>
    %910 = arith.addf %892, %909 : vector<2x16xf32>
    %911 = math.tanh %910 : vector<2x16xf32>
    %912 = arith.subf %807, %911 : vector<2x16xf32>
    %913 = arith.mulf %908, %912 : vector<2x16xf32>
    %914 = arith.addf %911, %913 : vector<2x16xf32>
    %915 = vector.shape_cast %865 : vector<2x16xf32> to vector<1x2x16xf32>
    %916 = arith.truncf %915 : vector<1x2x16xf32> to vector<1x2x16xbf16>
    %917 = arith.index_cast %c7_i32_465 : i32 to index
    %c0_521 = arith.constant 0 : index
    %c0_522 = arith.constant 0 : index
    %918 = vector.load %arg6[%917, %c0_521, %c0_522] : memref<8x2x32xbf16, #tpu.memory_space<vmem>>, vector<1x2x16xbf16>
    tpu.vector_store %arg6[%917, %c0_521, %c0_522], %916 {strides = array<i32>} : memref<8x2x32xbf16, #tpu.memory_space<vmem>>, vector<1x2x16xbf16>,
    %919 = vector.shape_cast %914 : vector<2x16xf32> to vector<1x2x16xf32>
    %920 = arith.truncf %919 : vector<1x2x16xf32> to vector<1x2x16xbf16>
    %921 = arith.index_cast %816 : i32 to index
    %c0_523 = arith.constant 0 : index
    %c16_524 = arith.constant 16 : index
    %922 = vector.load %arg6[%921, %c0_523, %c16_524] : memref<8x2x32xbf16, #tpu.memory_space<vmem>>, vector<1x2x16xbf16>
    tpu.vector_store %arg6[%921, %c0_523, %c16_524], %920 {strides = array<i32>} : memref<8x2x32xbf16, #tpu.memory_space<vmem>>, vector<1x2x16xbf16>,
    %c8_i32_525 = arith.constant 8 : i32
    return
  }
  func.func @transform_0(%arg0: i32) -> (i32, i32, i32) {
    %c0_i32 = arith.constant 0 : i32
    %c0_i32_0 = arith.constant 0 : i32
    %c0_i32_1 = arith.constant 0 : i32
    return %c0_i32, %arg0, %c0_i32_0 : i32, i32, i32
  }
  func.func @transform_1(%arg0: i32) -> (i32, i32, i32) {
    %c0_i32 = arith.constant 0 : i32
    %c0_i32_0 = arith.constant 0 : i32
    %c0_i32_1 = arith.constant 0 : i32
    %c0_i32_2 = arith.constant 0 : i32
    return %c0_i32, %c0_i32_0, %c0_i32_1 : i32, i32, i32
  }
  func.func @transform_2(%arg0: i32) -> (i32, i32, i32) {
    %c0_i32 = arith.constant 0 : i32
    %c0_i32_0 = arith.constant 0 : i32
    %c0_i32_1 = arith.constant 0 : i32
    %c0_i32_2 = arith.constant 0 : i32
    return %c0_i32, %c0_i32_0, %c0_i32_1 : i32, i32, i32
  }
  func.func @transform_3(%arg0: i32) -> (i32, i32, i32) {
    %c0_i32 = arith.constant 0 : i32
    %c0_i32_0 = arith.constant 0 : i32
    %c0_i32_1 = arith.constant 0 : i32
    %c0_i32_2 = arith.constant 0 : i32
    return %c0_i32, %c0_i32_0, %c0_i32_1 : i32, i32, i32
  }
  func.func @transform_4(%arg0: i32) -> (i32, i32, i32) {
    %c0_i32 = arith.constant 0 : i32
    %c0_i32_0 = arith.constant 0 : i32
    %c0_i32_1 = arith.constant 0 : i32
    %c0_i32_2 = arith.constant 0 : i32
    return %c0_i32, %c0_i32_0, %c0_i32_1 : i32, i32, i32
  }
  func.func @transform_5(%arg0: i32) -> (i32, i32, i32) {
    %c0_i32 = arith.constant 0 : i32
    %c0_i32_0 = arith.constant 0 : i32
    %c0_i32_1 = arith.constant 0 : i32
    return %c0_i32, %arg0, %c0_i32_0 : i32, i32, i32
  }
}

module attributes {stable_mosaic.version = 11 : i64} {
  func.func @_gru_layer_head_kernel(%arg0: i32, %arg1: memref<8x2x32xbf16, #tpu.memory_space<vmem>>, %arg2: memref<6x32x16xbf16, #tpu.memory_space<vmem>>, %arg3: memref<6x16x16xbf16, #tpu.memory_space<vmem>>, %arg4: memref<6x1x16xf32, #tpu.memory_space<vmem>>, %arg5: memref<2x1x16xf32, #tpu.memory_space<vmem>>, %arg6: memref<32x16xbf16, #tpu.memory_space<vmem>>, %arg7: memref<1x16xf32, #tpu.memory_space<vmem>>, %arg8: memref<1x16xf32, #tpu.memory_space<vmem>>, %arg9: memref<1x32xf32, #tpu.memory_space<vmem>>, %arg10: memref<1x1xf32, #tpu.memory_space<vmem>>, %arg11: memref<2x1xf32, #tpu.memory_space<vmem>>, %arg12: memref<8x2x32xf32, #tpu.memory_space<vmem>>, %arg13: memref<48x2x16xbf16, #tpu.memory_space<vmem>>) attributes {dimension_semantics = [#tpu.dimension_semantics<parallel>], iteration_bounds = array<i64: 1>, scalar_prefetch = 0 : i64, scratch_operands = 2 : i64, tpu.core_type = #tpu.core_type<tc>, window_params = [{transform_indices = @transform_0, window_bounds = array<i64: 8, 2, 32>}, {pipeline_mode = #tpu.pipeline_mode<synchronous>, transform_indices = @transform_1, window_bounds = array<i64: 6, 32, 16>}, {pipeline_mode = #tpu.pipeline_mode<synchronous>, transform_indices = @transform_2, window_bounds = array<i64: 6, 16, 16>}, {pipeline_mode = #tpu.pipeline_mode<synchronous>, transform_indices = @transform_3, window_bounds = array<i64: 6, 1, 16>}, {pipeline_mode = #tpu.pipeline_mode<synchronous>, transform_indices = @transform_4, window_bounds = array<i64: 2, 1, 16>}, {pipeline_mode = #tpu.pipeline_mode<synchronous>, transform_indices = @transform_5, window_bounds = array<i64: 32, 16>}, {pipeline_mode = #tpu.pipeline_mode<synchronous>, transform_indices = @transform_6, window_bounds = array<i64: 1, 16>}, {pipeline_mode = #tpu.pipeline_mode<synchronous>, transform_indices = @transform_7, window_bounds = array<i64: 1, 16>}, {pipeline_mode = #tpu.pipeline_mode<synchronous>, transform_indices = @transform_8, window_bounds = array<i64: 1, 32>}, {pipeline_mode = #tpu.pipeline_mode<synchronous>, transform_indices = @transform_9, window_bounds = array<i64: 1, 1>}, {transform_indices = @transform_10, window_bounds = array<i64: 2, 1>}]} {
    %c0 = arith.constant 0 : index
    %c0_0 = arith.constant 0 : index
    %c0_1 = arith.constant 0 : index
    %0 = vector.load %arg1[%c0, %c0_0, %c0_1] : memref<8x2x32xbf16, #tpu.memory_space<vmem>>, vector<8x2x32xbf16>
    %1 = vector.shape_cast %0 : vector<8x2x32xbf16> to vector<16x32xbf16>
    %c0_2 = arith.constant 0 : index
    %c0_3 = arith.constant 0 : index
    %c0_4 = arith.constant 0 : index
    %2 = vector.load %arg2[%c0_2, %c0_3, %c0_4] : memref<6x32x16xbf16, #tpu.memory_space<vmem>>, vector<1x32x16xbf16>
    %3 = vector.shape_cast %2 : vector<1x32x16xbf16> to vector<32x16xbf16>
    %cst = arith.constant dense<0.000000e+00> : vector<16x16xf32>
    %4 = tpu.matmul %1, %3, %cst {dimension_numbers = #tpu.dot_dimension_numbers<[1], [0], [0], [1], [0, 0, 1, 1], [], []>} : vector<16x32xbf16>, vector<32x16xbf16>, vector<16x16xf32> -> vector<16x16xf32>
    %c0_5 = arith.constant 0 : index
    %c0_6 = arith.constant 0 : index
    %c0_7 = arith.constant 0 : index
    %5 = vector.load %arg4[%c0_5, %c0_6, %c0_7] : memref<6x1x16xf32, #tpu.memory_space<vmem>>, vector<1x1x16xf32>
    %6 = vector.shape_cast %5 : vector<1x1x16xf32> to vector<1x16xf32>
    %7 = vector.broadcast %6 : vector<1x16xf32> to vector<16x16xf32>
    %8 = arith.addf %4, %7 : vector<16x16xf32>
    %9 = arith.truncf %8 : vector<16x16xf32> to vector<16x16xbf16>
    %10 = vector.shape_cast %9 : vector<16x16xbf16> to vector<8x2x16xbf16>
    %c0_8 = arith.constant 0 : index
    %c0_9 = arith.constant 0 : index
    %c0_10 = arith.constant 0 : index
    %11 = vector.load %arg13[%c0_8, %c0_9, %c0_10] : memref<48x2x16xbf16, #tpu.memory_space<vmem>>, vector<8x2x16xbf16>
    tpu.vector_store %arg13[%c0_8, %c0_9, %c0_10], %10 {strides = array<i32>} : memref<48x2x16xbf16, #tpu.memory_space<vmem>>, vector<8x2x16xbf16>,
    %c1 = arith.constant 1 : index
    %c0_11 = arith.constant 0 : index
    %c0_12 = arith.constant 0 : index
    %12 = vector.load %arg2[%c1, %c0_11, %c0_12] : memref<6x32x16xbf16, #tpu.memory_space<vmem>>, vector<1x32x16xbf16>
    %13 = vector.shape_cast %12 : vector<1x32x16xbf16> to vector<32x16xbf16>
    %cst_13 = arith.constant dense<0.000000e+00> : vector<16x16xf32>
    %14 = tpu.matmul %1, %13, %cst_13 {dimension_numbers = #tpu.dot_dimension_numbers<[1], [0], [0], [1], [0, 0, 1, 1], [], []>} : vector<16x32xbf16>, vector<32x16xbf16>, vector<16x16xf32> -> vector<16x16xf32>
    %c1_14 = arith.constant 1 : index
    %c0_15 = arith.constant 0 : index
    %c0_16 = arith.constant 0 : index
    %15 = vector.load %arg4[%c1_14, %c0_15, %c0_16] : memref<6x1x16xf32, #tpu.memory_space<vmem>>, vector<1x1x16xf32>
    %16 = vector.shape_cast %15 : vector<1x1x16xf32> to vector<1x16xf32>
    %17 = vector.broadcast %16 : vector<1x16xf32> to vector<16x16xf32>
    %18 = arith.addf %14, %17 : vector<16x16xf32>
    %19 = arith.truncf %18 : vector<16x16xf32> to vector<16x16xbf16>
    %20 = vector.shape_cast %19 : vector<16x16xbf16> to vector<8x2x16xbf16>
    %c8 = arith.constant 8 : index
    %c0_17 = arith.constant 0 : index
    %c0_18 = arith.constant 0 : index
    %21 = vector.load %arg13[%c8, %c0_17, %c0_18] : memref<48x2x16xbf16, #tpu.memory_space<vmem>>, vector<8x2x16xbf16>
    tpu.vector_store %arg13[%c8, %c0_17, %c0_18], %20 {strides = array<i32>} : memref<48x2x16xbf16, #tpu.memory_space<vmem>>, vector<8x2x16xbf16>,
    %c2 = arith.constant 2 : index
    %c0_19 = arith.constant 0 : index
    %c0_20 = arith.constant 0 : index
    %22 = vector.load %arg2[%c2, %c0_19, %c0_20] : memref<6x32x16xbf16, #tpu.memory_space<vmem>>, vector<1x32x16xbf16>
    %23 = vector.shape_cast %22 : vector<1x32x16xbf16> to vector<32x16xbf16>
    %cst_21 = arith.constant dense<0.000000e+00> : vector<16x16xf32>
    %24 = tpu.matmul %1, %23, %cst_21 {dimension_numbers = #tpu.dot_dimension_numbers<[1], [0], [0], [1], [0, 0, 1, 1], [], []>} : vector<16x32xbf16>, vector<32x16xbf16>, vector<16x16xf32> -> vector<16x16xf32>
    %c2_22 = arith.constant 2 : index
    %c0_23 = arith.constant 0 : index
    %c0_24 = arith.constant 0 : index
    %25 = vector.load %arg4[%c2_22, %c0_23, %c0_24] : memref<6x1x16xf32, #tpu.memory_space<vmem>>, vector<1x1x16xf32>
    %26 = vector.shape_cast %25 : vector<1x1x16xf32> to vector<1x16xf32>
    %27 = vector.broadcast %26 : vector<1x16xf32> to vector<16x16xf32>
    %28 = arith.addf %24, %27 : vector<16x16xf32>
    %29 = arith.truncf %28 : vector<16x16xf32> to vector<16x16xbf16>
    %30 = vector.shape_cast %29 : vector<16x16xbf16> to vector<8x2x16xbf16>
    %c16 = arith.constant 16 : index
    %c0_25 = arith.constant 0 : index
    %c0_26 = arith.constant 0 : index
    %31 = vector.load %arg13[%c16, %c0_25, %c0_26] : memref<48x2x16xbf16, #tpu.memory_space<vmem>>, vector<8x2x16xbf16>
    tpu.vector_store %arg13[%c16, %c0_25, %c0_26], %30 {strides = array<i32>} : memref<48x2x16xbf16, #tpu.memory_space<vmem>>, vector<8x2x16xbf16>,
    %c3 = arith.constant 3 : index
    %c0_27 = arith.constant 0 : index
    %c0_28 = arith.constant 0 : index
    %32 = vector.load %arg2[%c3, %c0_27, %c0_28] : memref<6x32x16xbf16, #tpu.memory_space<vmem>>, vector<1x32x16xbf16>
    %33 = vector.shape_cast %32 : vector<1x32x16xbf16> to vector<32x16xbf16>
    %cst_29 = arith.constant dense<0.000000e+00> : vector<16x16xf32>
    %34 = tpu.matmul %1, %33, %cst_29 {dimension_numbers = #tpu.dot_dimension_numbers<[1], [0], [0], [1], [0, 0, 1, 1], [], []>} : vector<16x32xbf16>, vector<32x16xbf16>, vector<16x16xf32> -> vector<16x16xf32>
    %c3_30 = arith.constant 3 : index
    %c0_31 = arith.constant 0 : index
    %c0_32 = arith.constant 0 : index
    %35 = vector.load %arg4[%c3_30, %c0_31, %c0_32] : memref<6x1x16xf32, #tpu.memory_space<vmem>>, vector<1x1x16xf32>
    %36 = vector.shape_cast %35 : vector<1x1x16xf32> to vector<1x16xf32>
    %37 = vector.broadcast %36 : vector<1x16xf32> to vector<16x16xf32>
    %38 = arith.addf %34, %37 : vector<16x16xf32>
    %39 = arith.truncf %38 : vector<16x16xf32> to vector<16x16xbf16>
    %40 = vector.shape_cast %39 : vector<16x16xbf16> to vector<8x2x16xbf16>
    %c24 = arith.constant 24 : index
    %c0_33 = arith.constant 0 : index
    %c0_34 = arith.constant 0 : index
    %41 = vector.load %arg13[%c24, %c0_33, %c0_34] : memref<48x2x16xbf16, #tpu.memory_space<vmem>>, vector<8x2x16xbf16>
    tpu.vector_store %arg13[%c24, %c0_33, %c0_34], %40 {strides = array<i32>} : memref<48x2x16xbf16, #tpu.memory_space<vmem>>, vector<8x2x16xbf16>,
    %c4 = arith.constant 4 : index
    %c0_35 = arith.constant 0 : index
    %c0_36 = arith.constant 0 : index
    %42 = vector.load %arg2[%c4, %c0_35, %c0_36] : memref<6x32x16xbf16, #tpu.memory_space<vmem>>, vector<1x32x16xbf16>
    %43 = vector.shape_cast %42 : vector<1x32x16xbf16> to vector<32x16xbf16>
    %cst_37 = arith.constant dense<0.000000e+00> : vector<16x16xf32>
    %44 = tpu.matmul %1, %43, %cst_37 {dimension_numbers = #tpu.dot_dimension_numbers<[1], [0], [0], [1], [0, 0, 1, 1], [], []>} : vector<16x32xbf16>, vector<32x16xbf16>, vector<16x16xf32> -> vector<16x16xf32>
    %c4_38 = arith.constant 4 : index
    %c0_39 = arith.constant 0 : index
    %c0_40 = arith.constant 0 : index
    %45 = vector.load %arg4[%c4_38, %c0_39, %c0_40] : memref<6x1x16xf32, #tpu.memory_space<vmem>>, vector<1x1x16xf32>
    %46 = vector.shape_cast %45 : vector<1x1x16xf32> to vector<1x16xf32>
    %47 = vector.broadcast %46 : vector<1x16xf32> to vector<16x16xf32>
    %48 = arith.addf %44, %47 : vector<16x16xf32>
    %49 = arith.truncf %48 : vector<16x16xf32> to vector<16x16xbf16>
    %50 = vector.shape_cast %49 : vector<16x16xbf16> to vector<8x2x16xbf16>
    %c32 = arith.constant 32 : index
    %c0_41 = arith.constant 0 : index
    %c0_42 = arith.constant 0 : index
    %51 = vector.load %arg13[%c32, %c0_41, %c0_42] : memref<48x2x16xbf16, #tpu.memory_space<vmem>>, vector<8x2x16xbf16>
    tpu.vector_store %arg13[%c32, %c0_41, %c0_42], %50 {strides = array<i32>} : memref<48x2x16xbf16, #tpu.memory_space<vmem>>, vector<8x2x16xbf16>,
    %c5 = arith.constant 5 : index
    %c0_43 = arith.constant 0 : index
    %c0_44 = arith.constant 0 : index
    %52 = vector.load %arg2[%c5, %c0_43, %c0_44] : memref<6x32x16xbf16, #tpu.memory_space<vmem>>, vector<1x32x16xbf16>
    %53 = vector.shape_cast %52 : vector<1x32x16xbf16> to vector<32x16xbf16>
    %cst_45 = arith.constant dense<0.000000e+00> : vector<16x16xf32>
    %54 = tpu.matmul %1, %53, %cst_45 {dimension_numbers = #tpu.dot_dimension_numbers<[1], [0], [0], [1], [0, 0, 1, 1], [], []>} : vector<16x32xbf16>, vector<32x16xbf16>, vector<16x16xf32> -> vector<16x16xf32>
    %c5_46 = arith.constant 5 : index
    %c0_47 = arith.constant 0 : index
    %c0_48 = arith.constant 0 : index
    %55 = vector.load %arg4[%c5_46, %c0_47, %c0_48] : memref<6x1x16xf32, #tpu.memory_space<vmem>>, vector<1x1x16xf32>
    %56 = vector.shape_cast %55 : vector<1x1x16xf32> to vector<1x16xf32>
    %57 = vector.broadcast %56 : vector<1x16xf32> to vector<16x16xf32>
    %58 = arith.addf %54, %57 : vector<16x16xf32>
    %59 = arith.truncf %58 : vector<16x16xf32> to vector<16x16xbf16>
    %60 = vector.shape_cast %59 : vector<16x16xbf16> to vector<8x2x16xbf16>
    %c40 = arith.constant 40 : index
    %c0_49 = arith.constant 0 : index
    %c0_50 = arith.constant 0 : index
    %61 = vector.load %arg13[%c40, %c0_49, %c0_50] : memref<48x2x16xbf16, #tpu.memory_space<vmem>>, vector<8x2x16xbf16>
    tpu.vector_store %arg13[%c40, %c0_49, %c0_50], %60 {strides = array<i32>} : memref<48x2x16xbf16, #tpu.memory_space<vmem>>, vector<8x2x16xbf16>,
    %c0_51 = arith.constant 0 : index
    %c0_52 = arith.constant 0 : index
    %c0_53 = arith.constant 0 : index
    %62 = vector.load %arg5[%c0_51, %c0_52, %c0_53] : memref<2x1x16xf32, #tpu.memory_space<vmem>>, vector<1x1x16xf32>
    %63 = vector.shape_cast %62 : vector<1x1x16xf32> to vector<1x16xf32>
    %c1_54 = arith.constant 1 : index
    %c0_55 = arith.constant 0 : index
    %c0_56 = arith.constant 0 : index
    %64 = vector.load %arg5[%c1_54, %c0_55, %c0_56] : memref<2x1x16xf32, #tpu.memory_space<vmem>>, vector<1x1x16xf32>
    %65 = vector.shape_cast %64 : vector<1x1x16xf32> to vector<1x16xf32>
    %cst_57 = arith.constant 0.000000e+00 : f32
    %66 = vector.broadcast %cst_57 : f32 to vector<2x16xf32>
    %c0_i32 = arith.constant 0 : i32
    %c7_i32 = arith.constant 7 : i32
    %67 = arith.subi %c7_i32, %c0_i32 : i32
    %68 = arith.truncf %66 : vector<2x16xf32> to vector<2x16xbf16>
    %c0_58 = arith.constant 0 : index
    %c0_59 = arith.constant 0 : index
    %c0_60 = arith.constant 0 : index
    %69 = vector.load %arg3[%c0_58, %c0_59, %c0_60] : memref<6x16x16xbf16, #tpu.memory_space<vmem>>, vector<1x16x16xbf16>
    %70 = vector.shape_cast %69 : vector<1x16x16xbf16> to vector<16x16xbf16>
    %cst_61 = arith.constant dense<0.000000e+00> : vector<2x16xf32>
    %71 = tpu.matmul %68, %70, %cst_61 {dimension_numbers = #tpu.dot_dimension_numbers<[1], [0], [0], [1], [0, 0, 1, 1], [], []>} : vector<2x16xbf16>, vector<16x16xbf16>, vector<2x16xf32> -> vector<2x16xf32>
    %c1_62 = arith.constant 1 : index
    %c0_63 = arith.constant 0 : index
    %c0_64 = arith.constant 0 : index
    %72 = vector.load %arg3[%c1_62, %c0_63, %c0_64] : memref<6x16x16xbf16, #tpu.memory_space<vmem>>, vector<1x16x16xbf16>
    %73 = vector.shape_cast %72 : vector<1x16x16xbf16> to vector<16x16xbf16>
    %cst_65 = arith.constant dense<0.000000e+00> : vector<2x16xf32>
    %74 = tpu.matmul %68, %73, %cst_65 {dimension_numbers = #tpu.dot_dimension_numbers<[1], [0], [0], [1], [0, 0, 1, 1], [], []>} : vector<2x16xbf16>, vector<16x16xbf16>, vector<2x16xf32> -> vector<2x16xf32>
    %c2_66 = arith.constant 2 : index
    %c0_67 = arith.constant 0 : index
    %c0_68 = arith.constant 0 : index
    %75 = vector.load %arg3[%c2_66, %c0_67, %c0_68] : memref<6x16x16xbf16, #tpu.memory_space<vmem>>, vector<1x16x16xbf16>
    %76 = vector.shape_cast %75 : vector<1x16x16xbf16> to vector<16x16xbf16>
    %cst_69 = arith.constant dense<0.000000e+00> : vector<2x16xf32>
    %77 = tpu.matmul %68, %76, %cst_69 {dimension_numbers = #tpu.dot_dimension_numbers<[1], [0], [0], [1], [0, 0, 1, 1], [], []>} : vector<2x16xbf16>, vector<16x16xbf16>, vector<2x16xf32> -> vector<2x16xf32>
    %78 = vector.broadcast %63 : vector<1x16xf32> to vector<2x16xf32>
    %79 = arith.addf %77, %78 : vector<2x16xf32>
    %c0_i32_70 = arith.constant 0 : i32
    %80 = arith.addi %c0_i32_70, %c0_i32 : i32
    %81 = arith.index_cast %80 : i32 to index
    %c0_71 = arith.constant 0 : index
    %c0_72 = arith.constant 0 : index
    %82 = vector.load %arg13[%81, %c0_71, %c0_72] : memref<48x2x16xbf16, #tpu.memory_space<vmem>>, vector<1x2x16xbf16>
    %83 = vector.shape_cast %82 : vector<1x2x16xbf16> to vector<2x16xbf16>
    %84 = arith.extf %83 : vector<2x16xbf16> to vector<2x16xf32>
    %c8_i32 = arith.constant 8 : i32
    %85 = arith.addi %c8_i32, %c0_i32 : i32
    %86 = arith.index_cast %85 : i32 to index
    %c0_73 = arith.constant 0 : index
    %c0_74 = arith.constant 0 : index
    %87 = vector.load %arg13[%86, %c0_73, %c0_74] : memref<48x2x16xbf16, #tpu.memory_space<vmem>>, vector<1x2x16xbf16>
    %88 = vector.shape_cast %87 : vector<1x2x16xbf16> to vector<2x16xbf16>
    %89 = arith.extf %88 : vector<2x16xbf16> to vector<2x16xf32>
    %c16_i32 = arith.constant 16 : i32
    %90 = arith.addi %c16_i32, %c0_i32 : i32
    %91 = arith.index_cast %90 : i32 to index
    %c0_75 = arith.constant 0 : index
    %c0_76 = arith.constant 0 : index
    %92 = vector.load %arg13[%91, %c0_75, %c0_76] : memref<48x2x16xbf16, #tpu.memory_space<vmem>>, vector<1x2x16xbf16>
    %93 = vector.shape_cast %92 : vector<1x2x16xbf16> to vector<2x16xbf16>
    %94 = arith.extf %93 : vector<2x16xbf16> to vector<2x16xf32>
    %95 = arith.addf %84, %71 : vector<2x16xf32>
    %cst_77 = arith.constant 5.000000e-01 : f32
    %96 = vector.broadcast %cst_77 : f32 to vector<2x16xf32>
    %97 = arith.mulf %96, %95 : vector<2x16xf32>
    %98 = math.tanh %97 : vector<2x16xf32>
    %cst_78 = arith.constant 5.000000e-01 : f32
    %99 = vector.broadcast %cst_78 : f32 to vector<2x16xf32>
    %100 = arith.mulf %99, %98 : vector<2x16xf32>
    %cst_79 = arith.constant 5.000000e-01 : f32
    %101 = vector.broadcast %cst_79 : f32 to vector<2x16xf32>
    %102 = arith.addf %100, %101 : vector<2x16xf32>
    %103 = arith.addf %89, %74 : vector<2x16xf32>
    %cst_80 = arith.constant 5.000000e-01 : f32
    %104 = vector.broadcast %cst_80 : f32 to vector<2x16xf32>
    %105 = arith.mulf %104, %103 : vector<2x16xf32>
    %106 = math.tanh %105 : vector<2x16xf32>
    %cst_81 = arith.constant 5.000000e-01 : f32
    %107 = vector.broadcast %cst_81 : f32 to vector<2x16xf32>
    %108 = arith.mulf %107, %106 : vector<2x16xf32>
    %cst_82 = arith.constant 5.000000e-01 : f32
    %109 = vector.broadcast %cst_82 : f32 to vector<2x16xf32>
    %110 = arith.addf %108, %109 : vector<2x16xf32>
    %111 = arith.mulf %102, %79 : vector<2x16xf32>
    %112 = arith.addf %94, %111 : vector<2x16xf32>
    %113 = math.tanh %112 : vector<2x16xf32>
    %114 = arith.subf %66, %113 : vector<2x16xf32>
    %115 = arith.mulf %110, %114 : vector<2x16xf32>
    %116 = arith.addf %113, %115 : vector<2x16xf32>
    %117 = arith.truncf %66 : vector<2x16xf32> to vector<2x16xbf16>
    %c3_83 = arith.constant 3 : index
    %c0_84 = arith.constant 0 : index
    %c0_85 = arith.constant 0 : index
    %118 = vector.load %arg3[%c3_83, %c0_84, %c0_85] : memref<6x16x16xbf16, #tpu.memory_space<vmem>>, vector<1x16x16xbf16>
    %119 = vector.shape_cast %118 : vector<1x16x16xbf16> to vector<16x16xbf16>
    %cst_86 = arith.constant dense<0.000000e+00> : vector<2x16xf32>
    %120 = tpu.matmul %117, %119, %cst_86 {dimension_numbers = #tpu.dot_dimension_numbers<[1], [0], [0], [1], [0, 0, 1, 1], [], []>} : vector<2x16xbf16>, vector<16x16xbf16>, vector<2x16xf32> -> vector<2x16xf32>
    %c4_87 = arith.constant 4 : index
    %c0_88 = arith.constant 0 : index
    %c0_89 = arith.constant 0 : index
    %121 = vector.load %arg3[%c4_87, %c0_88, %c0_89] : memref<6x16x16xbf16, #tpu.memory_space<vmem>>, vector<1x16x16xbf16>
    %122 = vector.shape_cast %121 : vector<1x16x16xbf16> to vector<16x16xbf16>
    %cst_90 = arith.constant dense<0.000000e+00> : vector<2x16xf32>
    %123 = tpu.matmul %117, %122, %cst_90 {dimension_numbers = #tpu.dot_dimension_numbers<[1], [0], [0], [1], [0, 0, 1, 1], [], []>} : vector<2x16xbf16>, vector<16x16xbf16>, vector<2x16xf32> -> vector<2x16xf32>
    %c5_91 = arith.constant 5 : index
    %c0_92 = arith.constant 0 : index
    %c0_93 = arith.constant 0 : index
    %124 = vector.load %arg3[%c5_91, %c0_92, %c0_93] : memref<6x16x16xbf16, #tpu.memory_space<vmem>>, vector<1x16x16xbf16>
    %125 = vector.shape_cast %124 : vector<1x16x16xbf16> to vector<16x16xbf16>
    %cst_94 = arith.constant dense<0.000000e+00> : vector<2x16xf32>
    %126 = tpu.matmul %117, %125, %cst_94 {dimension_numbers = #tpu.dot_dimension_numbers<[1], [0], [0], [1], [0, 0, 1, 1], [], []>} : vector<2x16xbf16>, vector<16x16xbf16>, vector<2x16xf32> -> vector<2x16xf32>
    %127 = vector.broadcast %65 : vector<1x16xf32> to vector<2x16xf32>
    %128 = arith.addf %126, %127 : vector<2x16xf32>
    %c24_i32 = arith.constant 24 : i32
    %129 = arith.addi %c24_i32, %67 : i32
    %130 = arith.index_cast %129 : i32 to index
    %c0_95 = arith.constant 0 : index
    %c0_96 = arith.constant 0 : index
    %131 = vector.load %arg13[%130, %c0_95, %c0_96] : memref<48x2x16xbf16, #tpu.memory_space<vmem>>, vector<1x2x16xbf16>
    %132 = vector.shape_cast %131 : vector<1x2x16xbf16> to vector<2x16xbf16>
    %133 = arith.extf %132 : vector<2x16xbf16> to vector<2x16xf32>
    %c32_i32 = arith.constant 32 : i32
    %134 = arith.addi %c32_i32, %67 : i32
    %135 = arith.index_cast %134 : i32 to index
    %c0_97 = arith.constant 0 : index
    %c0_98 = arith.constant 0 : index
    %136 = vector.load %arg13[%135, %c0_97, %c0_98] : memref<48x2x16xbf16, #tpu.memory_space<vmem>>, vector<1x2x16xbf16>
    %137 = vector.shape_cast %136 : vector<1x2x16xbf16> to vector<2x16xbf16>
    %138 = arith.extf %137 : vector<2x16xbf16> to vector<2x16xf32>
    %c40_i32 = arith.constant 40 : i32
    %139 = arith.addi %c40_i32, %67 : i32
    %140 = arith.index_cast %139 : i32 to index
    %c0_99 = arith.constant 0 : index
    %c0_100 = arith.constant 0 : index
    %141 = vector.load %arg13[%140, %c0_99, %c0_100] : memref<48x2x16xbf16, #tpu.memory_space<vmem>>, vector<1x2x16xbf16>
    %142 = vector.shape_cast %141 : vector<1x2x16xbf16> to vector<2x16xbf16>
    %143 = arith.extf %142 : vector<2x16xbf16> to vector<2x16xf32>
    %144 = arith.addf %133, %120 : vector<2x16xf32>
    %cst_101 = arith.constant 5.000000e-01 : f32
    %145 = vector.broadcast %cst_101 : f32 to vector<2x16xf32>
    %146 = arith.mulf %145, %144 : vector<2x16xf32>
    %147 = math.tanh %146 : vector<2x16xf32>
    %cst_102 = arith.constant 5.000000e-01 : f32
    %148 = vector.broadcast %cst_102 : f32 to vector<2x16xf32>
    %149 = arith.mulf %148, %147 : vector<2x16xf32>
    %cst_103 = arith.constant 5.000000e-01 : f32
    %150 = vector.broadcast %cst_103 : f32 to vector<2x16xf32>
    %151 = arith.addf %149, %150 : vector<2x16xf32>
    %152 = arith.addf %138, %123 : vector<2x16xf32>
    %cst_104 = arith.constant 5.000000e-01 : f32
    %153 = vector.broadcast %cst_104 : f32 to vector<2x16xf32>
    %154 = arith.mulf %153, %152 : vector<2x16xf32>
    %155 = math.tanh %154 : vector<2x16xf32>
    %cst_105 = arith.constant 5.000000e-01 : f32
    %156 = vector.broadcast %cst_105 : f32 to vector<2x16xf32>
    %157 = arith.mulf %156, %155 : vector<2x16xf32>
    %cst_106 = arith.constant 5.000000e-01 : f32
    %158 = vector.broadcast %cst_106 : f32 to vector<2x16xf32>
    %159 = arith.addf %157, %158 : vector<2x16xf32>
    %160 = arith.mulf %151, %128 : vector<2x16xf32>
    %161 = arith.addf %143, %160 : vector<2x16xf32>
    %162 = math.tanh %161 : vector<2x16xf32>
    %163 = arith.subf %66, %162 : vector<2x16xf32>
    %164 = arith.mulf %159, %163 : vector<2x16xf32>
    %165 = arith.addf %162, %164 : vector<2x16xf32>
    %166 = vector.shape_cast %116 : vector<2x16xf32> to vector<1x2x16xf32>
    %167 = arith.index_cast %c0_i32 : i32 to index
    %c0_107 = arith.constant 0 : index
    %c0_108 = arith.constant 0 : index
    %168 = vector.load %arg12[%167, %c0_107, %c0_108] : memref<8x2x32xf32, #tpu.memory_space<vmem>>, vector<1x2x16xf32>
    tpu.vector_store %arg12[%167, %c0_107, %c0_108], %166 {strides = array<i32>} : memref<8x2x32xf32, #tpu.memory_space<vmem>>, vector<1x2x16xf32>,
    %169 = vector.shape_cast %165 : vector<2x16xf32> to vector<1x2x16xf32>
    %170 = arith.index_cast %67 : i32 to index
    %c0_109 = arith.constant 0 : index
    %c16_110 = arith.constant 16 : index
    %171 = vector.load %arg12[%170, %c0_109, %c16_110] : memref<8x2x32xf32, #tpu.memory_space<vmem>>, vector<1x2x16xf32>
    tpu.vector_store %arg12[%170, %c0_109, %c16_110], %169 {strides = array<i32>} : memref<8x2x32xf32, #tpu.memory_space<vmem>>, vector<1x2x16xf32>,
    %c1_i32 = arith.constant 1 : i32
    %c7_i32_111 = arith.constant 7 : i32
    %172 = arith.subi %c7_i32_111, %c1_i32 : i32
    %173 = arith.truncf %116 : vector<2x16xf32> to vector<2x16xbf16>
    %c0_112 = arith.constant 0 : index
    %c0_113 = arith.constant 0 : index
    %c0_114 = arith.constant 0 : index
    %174 = vector.load %arg3[%c0_112, %c0_113, %c0_114] : memref<6x16x16xbf16, #tpu.memory_space<vmem>>, vector<1x16x16xbf16>
    %175 = vector.shape_cast %174 : vector<1x16x16xbf16> to vector<16x16xbf16>
    %cst_115 = arith.constant dense<0.000000e+00> : vector<2x16xf32>
    %176 = tpu.matmul %173, %175, %cst_115 {dimension_numbers = #tpu.dot_dimension_numbers<[1], [0], [0], [1], [0, 0, 1, 1], [], []>} : vector<2x16xbf16>, vector<16x16xbf16>, vector<2x16xf32> -> vector<2x16xf32>
    %c1_116 = arith.constant 1 : index
    %c0_117 = arith.constant 0 : index
    %c0_118 = arith.constant 0 : index
    %177 = vector.load %arg3[%c1_116, %c0_117, %c0_118] : memref<6x16x16xbf16, #tpu.memory_space<vmem>>, vector<1x16x16xbf16>
    %178 = vector.shape_cast %177 : vector<1x16x16xbf16> to vector<16x16xbf16>
    %cst_119 = arith.constant dense<0.000000e+00> : vector<2x16xf32>
    %179 = tpu.matmul %173, %178, %cst_119 {dimension_numbers = #tpu.dot_dimension_numbers<[1], [0], [0], [1], [0, 0, 1, 1], [], []>} : vector<2x16xbf16>, vector<16x16xbf16>, vector<2x16xf32> -> vector<2x16xf32>
    %c2_120 = arith.constant 2 : index
    %c0_121 = arith.constant 0 : index
    %c0_122 = arith.constant 0 : index
    %180 = vector.load %arg3[%c2_120, %c0_121, %c0_122] : memref<6x16x16xbf16, #tpu.memory_space<vmem>>, vector<1x16x16xbf16>
    %181 = vector.shape_cast %180 : vector<1x16x16xbf16> to vector<16x16xbf16>
    %cst_123 = arith.constant dense<0.000000e+00> : vector<2x16xf32>
    %182 = tpu.matmul %173, %181, %cst_123 {dimension_numbers = #tpu.dot_dimension_numbers<[1], [0], [0], [1], [0, 0, 1, 1], [], []>} : vector<2x16xbf16>, vector<16x16xbf16>, vector<2x16xf32> -> vector<2x16xf32>
    %183 = vector.broadcast %63 : vector<1x16xf32> to vector<2x16xf32>
    %184 = arith.addf %182, %183 : vector<2x16xf32>
    %c0_i32_124 = arith.constant 0 : i32
    %185 = arith.addi %c0_i32_124, %c1_i32 : i32
    %186 = arith.index_cast %185 : i32 to index
    %c0_125 = arith.constant 0 : index
    %c0_126 = arith.constant 0 : index
    %187 = vector.load %arg13[%186, %c0_125, %c0_126] : memref<48x2x16xbf16, #tpu.memory_space<vmem>>, vector<1x2x16xbf16>
    %188 = vector.shape_cast %187 : vector<1x2x16xbf16> to vector<2x16xbf16>
    %189 = arith.extf %188 : vector<2x16xbf16> to vector<2x16xf32>
    %c8_i32_127 = arith.constant 8 : i32
    %190 = arith.addi %c8_i32_127, %c1_i32 : i32
    %191 = arith.index_cast %190 : i32 to index
    %c0_128 = arith.constant 0 : index
    %c0_129 = arith.constant 0 : index
    %192 = vector.load %arg13[%191, %c0_128, %c0_129] : memref<48x2x16xbf16, #tpu.memory_space<vmem>>, vector<1x2x16xbf16>
    %193 = vector.shape_cast %192 : vector<1x2x16xbf16> to vector<2x16xbf16>
    %194 = arith.extf %193 : vector<2x16xbf16> to vector<2x16xf32>
    %c16_i32_130 = arith.constant 16 : i32
    %195 = arith.addi %c16_i32_130, %c1_i32 : i32
    %196 = arith.index_cast %195 : i32 to index
    %c0_131 = arith.constant 0 : index
    %c0_132 = arith.constant 0 : index
    %197 = vector.load %arg13[%196, %c0_131, %c0_132] : memref<48x2x16xbf16, #tpu.memory_space<vmem>>, vector<1x2x16xbf16>
    %198 = vector.shape_cast %197 : vector<1x2x16xbf16> to vector<2x16xbf16>
    %199 = arith.extf %198 : vector<2x16xbf16> to vector<2x16xf32>
    %200 = arith.addf %189, %176 : vector<2x16xf32>
    %cst_133 = arith.constant 5.000000e-01 : f32
    %201 = vector.broadcast %cst_133 : f32 to vector<2x16xf32>
    %202 = arith.mulf %201, %200 : vector<2x16xf32>
    %203 = math.tanh %202 : vector<2x16xf32>
    %cst_134 = arith.constant 5.000000e-01 : f32
    %204 = vector.broadcast %cst_134 : f32 to vector<2x16xf32>
    %205 = arith.mulf %204, %203 : vector<2x16xf32>
    %cst_135 = arith.constant 5.000000e-01 : f32
    %206 = vector.broadcast %cst_135 : f32 to vector<2x16xf32>
    %207 = arith.addf %205, %206 : vector<2x16xf32>
    %208 = arith.addf %194, %179 : vector<2x16xf32>
    %cst_136 = arith.constant 5.000000e-01 : f32
    %209 = vector.broadcast %cst_136 : f32 to vector<2x16xf32>
    %210 = arith.mulf %209, %208 : vector<2x16xf32>
    %211 = math.tanh %210 : vector<2x16xf32>
    %cst_137 = arith.constant 5.000000e-01 : f32
    %212 = vector.broadcast %cst_137 : f32 to vector<2x16xf32>
    %213 = arith.mulf %212, %211 : vector<2x16xf32>
    %cst_138 = arith.constant 5.000000e-01 : f32
    %214 = vector.broadcast %cst_138 : f32 to vector<2x16xf32>
    %215 = arith.addf %213, %214 : vector<2x16xf32>
    %216 = arith.mulf %207, %184 : vector<2x16xf32>
    %217 = arith.addf %199, %216 : vector<2x16xf32>
    %218 = math.tanh %217 : vector<2x16xf32>
    %219 = arith.subf %116, %218 : vector<2x16xf32>
    %220 = arith.mulf %215, %219 : vector<2x16xf32>
    %221 = arith.addf %218, %220 : vector<2x16xf32>
    %222 = arith.truncf %165 : vector<2x16xf32> to vector<2x16xbf16>
    %c3_139 = arith.constant 3 : index
    %c0_140 = arith.constant 0 : index
    %c0_141 = arith.constant 0 : index
    %223 = vector.load %arg3[%c3_139, %c0_140, %c0_141] : memref<6x16x16xbf16, #tpu.memory_space<vmem>>, vector<1x16x16xbf16>
    %224 = vector.shape_cast %223 : vector<1x16x16xbf16> to vector<16x16xbf16>
    %cst_142 = arith.constant dense<0.000000e+00> : vector<2x16xf32>
    %225 = tpu.matmul %222, %224, %cst_142 {dimension_numbers = #tpu.dot_dimension_numbers<[1], [0], [0], [1], [0, 0, 1, 1], [], []>} : vector<2x16xbf16>, vector<16x16xbf16>, vector<2x16xf32> -> vector<2x16xf32>
    %c4_143 = arith.constant 4 : index
    %c0_144 = arith.constant 0 : index
    %c0_145 = arith.constant 0 : index
    %226 = vector.load %arg3[%c4_143, %c0_144, %c0_145] : memref<6x16x16xbf16, #tpu.memory_space<vmem>>, vector<1x16x16xbf16>
    %227 = vector.shape_cast %226 : vector<1x16x16xbf16> to vector<16x16xbf16>
    %cst_146 = arith.constant dense<0.000000e+00> : vector<2x16xf32>
    %228 = tpu.matmul %222, %227, %cst_146 {dimension_numbers = #tpu.dot_dimension_numbers<[1], [0], [0], [1], [0, 0, 1, 1], [], []>} : vector<2x16xbf16>, vector<16x16xbf16>, vector<2x16xf32> -> vector<2x16xf32>
    %c5_147 = arith.constant 5 : index
    %c0_148 = arith.constant 0 : index
    %c0_149 = arith.constant 0 : index
    %229 = vector.load %arg3[%c5_147, %c0_148, %c0_149] : memref<6x16x16xbf16, #tpu.memory_space<vmem>>, vector<1x16x16xbf16>
    %230 = vector.shape_cast %229 : vector<1x16x16xbf16> to vector<16x16xbf16>
    %cst_150 = arith.constant dense<0.000000e+00> : vector<2x16xf32>
    %231 = tpu.matmul %222, %230, %cst_150 {dimension_numbers = #tpu.dot_dimension_numbers<[1], [0], [0], [1], [0, 0, 1, 1], [], []>} : vector<2x16xbf16>, vector<16x16xbf16>, vector<2x16xf32> -> vector<2x16xf32>
    %232 = vector.broadcast %65 : vector<1x16xf32> to vector<2x16xf32>
    %233 = arith.addf %231, %232 : vector<2x16xf32>
    %c24_i32_151 = arith.constant 24 : i32
    %234 = arith.addi %c24_i32_151, %172 : i32
    %235 = arith.index_cast %234 : i32 to index
    %c0_152 = arith.constant 0 : index
    %c0_153 = arith.constant 0 : index
    %236 = vector.load %arg13[%235, %c0_152, %c0_153] : memref<48x2x16xbf16, #tpu.memory_space<vmem>>, vector<1x2x16xbf16>
    %237 = vector.shape_cast %236 : vector<1x2x16xbf16> to vector<2x16xbf16>
    %238 = arith.extf %237 : vector<2x16xbf16> to vector<2x16xf32>
    %c32_i32_154 = arith.constant 32 : i32
    %239 = arith.addi %c32_i32_154, %172 : i32
    %240 = arith.index_cast %239 : i32 to index
    %c0_155 = arith.constant 0 : index
    %c0_156 = arith.constant 0 : index
    %241 = vector.load %arg13[%240, %c0_155, %c0_156] : memref<48x2x16xbf16, #tpu.memory_space<vmem>>, vector<1x2x16xbf16>
    %242 = vector.shape_cast %241 : vector<1x2x16xbf16> to vector<2x16xbf16>
    %243 = arith.extf %242 : vector<2x16xbf16> to vector<2x16xf32>
    %c40_i32_157 = arith.constant 40 : i32
    %244 = arith.addi %c40_i32_157, %172 : i32
    %245 = arith.index_cast %244 : i32 to index
    %c0_158 = arith.constant 0 : index
    %c0_159 = arith.constant 0 : index
    %246 = vector.load %arg13[%245, %c0_158, %c0_159] : memref<48x2x16xbf16, #tpu.memory_space<vmem>>, vector<1x2x16xbf16>
    %247 = vector.shape_cast %246 : vector<1x2x16xbf16> to vector<2x16xbf16>
    %248 = arith.extf %247 : vector<2x16xbf16> to vector<2x16xf32>
    %249 = arith.addf %238, %225 : vector<2x16xf32>
    %cst_160 = arith.constant 5.000000e-01 : f32
    %250 = vector.broadcast %cst_160 : f32 to vector<2x16xf32>
    %251 = arith.mulf %250, %249 : vector<2x16xf32>
    %252 = math.tanh %251 : vector<2x16xf32>
    %cst_161 = arith.constant 5.000000e-01 : f32
    %253 = vector.broadcast %cst_161 : f32 to vector<2x16xf32>
    %254 = arith.mulf %253, %252 : vector<2x16xf32>
    %cst_162 = arith.constant 5.000000e-01 : f32
    %255 = vector.broadcast %cst_162 : f32 to vector<2x16xf32>
    %256 = arith.addf %254, %255 : vector<2x16xf32>
    %257 = arith.addf %243, %228 : vector<2x16xf32>
    %cst_163 = arith.constant 5.000000e-01 : f32
    %258 = vector.broadcast %cst_163 : f32 to vector<2x16xf32>
    %259 = arith.mulf %258, %257 : vector<2x16xf32>
    %260 = math.tanh %259 : vector<2x16xf32>
    %cst_164 = arith.constant 5.000000e-01 : f32
    %261 = vector.broadcast %cst_164 : f32 to vector<2x16xf32>
    %262 = arith.mulf %261, %260 : vector<2x16xf32>
    %cst_165 = arith.constant 5.000000e-01 : f32
    %263 = vector.broadcast %cst_165 : f32 to vector<2x16xf32>
    %264 = arith.addf %262, %263 : vector<2x16xf32>
    %265 = arith.mulf %256, %233 : vector<2x16xf32>
    %266 = arith.addf %248, %265 : vector<2x16xf32>
    %267 = math.tanh %266 : vector<2x16xf32>
    %268 = arith.subf %165, %267 : vector<2x16xf32>
    %269 = arith.mulf %264, %268 : vector<2x16xf32>
    %270 = arith.addf %267, %269 : vector<2x16xf32>
    %271 = vector.shape_cast %221 : vector<2x16xf32> to vector<1x2x16xf32>
    %272 = arith.index_cast %c1_i32 : i32 to index
    %c0_166 = arith.constant 0 : index
    %c0_167 = arith.constant 0 : index
    %273 = vector.load %arg12[%272, %c0_166, %c0_167] : memref<8x2x32xf32, #tpu.memory_space<vmem>>, vector<1x2x16xf32>
    tpu.vector_store %arg12[%272, %c0_166, %c0_167], %271 {strides = array<i32>} : memref<8x2x32xf32, #tpu.memory_space<vmem>>, vector<1x2x16xf32>,
    %274 = vector.shape_cast %270 : vector<2x16xf32> to vector<1x2x16xf32>
    %275 = arith.index_cast %172 : i32 to index
    %c0_168 = arith.constant 0 : index
    %c16_169 = arith.constant 16 : index
    %276 = vector.load %arg12[%275, %c0_168, %c16_169] : memref<8x2x32xf32, #tpu.memory_space<vmem>>, vector<1x2x16xf32>
    tpu.vector_store %arg12[%275, %c0_168, %c16_169], %274 {strides = array<i32>} : memref<8x2x32xf32, #tpu.memory_space<vmem>>, vector<1x2x16xf32>,
    %c2_i32 = arith.constant 2 : i32
    %c7_i32_170 = arith.constant 7 : i32
    %277 = arith.subi %c7_i32_170, %c2_i32 : i32
    %278 = arith.truncf %221 : vector<2x16xf32> to vector<2x16xbf16>
    %c0_171 = arith.constant 0 : index
    %c0_172 = arith.constant 0 : index
    %c0_173 = arith.constant 0 : index
    %279 = vector.load %arg3[%c0_171, %c0_172, %c0_173] : memref<6x16x16xbf16, #tpu.memory_space<vmem>>, vector<1x16x16xbf16>
    %280 = vector.shape_cast %279 : vector<1x16x16xbf16> to vector<16x16xbf16>
    %cst_174 = arith.constant dense<0.000000e+00> : vector<2x16xf32>
    %281 = tpu.matmul %278, %280, %cst_174 {dimension_numbers = #tpu.dot_dimension_numbers<[1], [0], [0], [1], [0, 0, 1, 1], [], []>} : vector<2x16xbf16>, vector<16x16xbf16>, vector<2x16xf32> -> vector<2x16xf32>
    %c1_175 = arith.constant 1 : index
    %c0_176 = arith.constant 0 : index
    %c0_177 = arith.constant 0 : index
    %282 = vector.load %arg3[%c1_175, %c0_176, %c0_177] : memref<6x16x16xbf16, #tpu.memory_space<vmem>>, vector<1x16x16xbf16>
    %283 = vector.shape_cast %282 : vector<1x16x16xbf16> to vector<16x16xbf16>
    %cst_178 = arith.constant dense<0.000000e+00> : vector<2x16xf32>
    %284 = tpu.matmul %278, %283, %cst_178 {dimension_numbers = #tpu.dot_dimension_numbers<[1], [0], [0], [1], [0, 0, 1, 1], [], []>} : vector<2x16xbf16>, vector<16x16xbf16>, vector<2x16xf32> -> vector<2x16xf32>
    %c2_179 = arith.constant 2 : index
    %c0_180 = arith.constant 0 : index
    %c0_181 = arith.constant 0 : index
    %285 = vector.load %arg3[%c2_179, %c0_180, %c0_181] : memref<6x16x16xbf16, #tpu.memory_space<vmem>>, vector<1x16x16xbf16>
    %286 = vector.shape_cast %285 : vector<1x16x16xbf16> to vector<16x16xbf16>
    %cst_182 = arith.constant dense<0.000000e+00> : vector<2x16xf32>
    %287 = tpu.matmul %278, %286, %cst_182 {dimension_numbers = #tpu.dot_dimension_numbers<[1], [0], [0], [1], [0, 0, 1, 1], [], []>} : vector<2x16xbf16>, vector<16x16xbf16>, vector<2x16xf32> -> vector<2x16xf32>
    %288 = vector.broadcast %63 : vector<1x16xf32> to vector<2x16xf32>
    %289 = arith.addf %287, %288 : vector<2x16xf32>
    %c0_i32_183 = arith.constant 0 : i32
    %290 = arith.addi %c0_i32_183, %c2_i32 : i32
    %291 = arith.index_cast %290 : i32 to index
    %c0_184 = arith.constant 0 : index
    %c0_185 = arith.constant 0 : index
    %292 = vector.load %arg13[%291, %c0_184, %c0_185] : memref<48x2x16xbf16, #tpu.memory_space<vmem>>, vector<1x2x16xbf16>
    %293 = vector.shape_cast %292 : vector<1x2x16xbf16> to vector<2x16xbf16>
    %294 = arith.extf %293 : vector<2x16xbf16> to vector<2x16xf32>
    %c8_i32_186 = arith.constant 8 : i32
    %295 = arith.addi %c8_i32_186, %c2_i32 : i32
    %296 = arith.index_cast %295 : i32 to index
    %c0_187 = arith.constant 0 : index
    %c0_188 = arith.constant 0 : index
    %297 = vector.load %arg13[%296, %c0_187, %c0_188] : memref<48x2x16xbf16, #tpu.memory_space<vmem>>, vector<1x2x16xbf16>
    %298 = vector.shape_cast %297 : vector<1x2x16xbf16> to vector<2x16xbf16>
    %299 = arith.extf %298 : vector<2x16xbf16> to vector<2x16xf32>
    %c16_i32_189 = arith.constant 16 : i32
    %300 = arith.addi %c16_i32_189, %c2_i32 : i32
    %301 = arith.index_cast %300 : i32 to index
    %c0_190 = arith.constant 0 : index
    %c0_191 = arith.constant 0 : index
    %302 = vector.load %arg13[%301, %c0_190, %c0_191] : memref<48x2x16xbf16, #tpu.memory_space<vmem>>, vector<1x2x16xbf16>
    %303 = vector.shape_cast %302 : vector<1x2x16xbf16> to vector<2x16xbf16>
    %304 = arith.extf %303 : vector<2x16xbf16> to vector<2x16xf32>
    %305 = arith.addf %294, %281 : vector<2x16xf32>
    %cst_192 = arith.constant 5.000000e-01 : f32
    %306 = vector.broadcast %cst_192 : f32 to vector<2x16xf32>
    %307 = arith.mulf %306, %305 : vector<2x16xf32>
    %308 = math.tanh %307 : vector<2x16xf32>
    %cst_193 = arith.constant 5.000000e-01 : f32
    %309 = vector.broadcast %cst_193 : f32 to vector<2x16xf32>
    %310 = arith.mulf %309, %308 : vector<2x16xf32>
    %cst_194 = arith.constant 5.000000e-01 : f32
    %311 = vector.broadcast %cst_194 : f32 to vector<2x16xf32>
    %312 = arith.addf %310, %311 : vector<2x16xf32>
    %313 = arith.addf %299, %284 : vector<2x16xf32>
    %cst_195 = arith.constant 5.000000e-01 : f32
    %314 = vector.broadcast %cst_195 : f32 to vector<2x16xf32>
    %315 = arith.mulf %314, %313 : vector<2x16xf32>
    %316 = math.tanh %315 : vector<2x16xf32>
    %cst_196 = arith.constant 5.000000e-01 : f32
    %317 = vector.broadcast %cst_196 : f32 to vector<2x16xf32>
    %318 = arith.mulf %317, %316 : vector<2x16xf32>
    %cst_197 = arith.constant 5.000000e-01 : f32
    %319 = vector.broadcast %cst_197 : f32 to vector<2x16xf32>
    %320 = arith.addf %318, %319 : vector<2x16xf32>
    %321 = arith.mulf %312, %289 : vector<2x16xf32>
    %322 = arith.addf %304, %321 : vector<2x16xf32>
    %323 = math.tanh %322 : vector<2x16xf32>
    %324 = arith.subf %221, %323 : vector<2x16xf32>
    %325 = arith.mulf %320, %324 : vector<2x16xf32>
    %326 = arith.addf %323, %325 : vector<2x16xf32>
    %327 = arith.truncf %270 : vector<2x16xf32> to vector<2x16xbf16>
    %c3_198 = arith.constant 3 : index
    %c0_199 = arith.constant 0 : index
    %c0_200 = arith.constant 0 : index
    %328 = vector.load %arg3[%c3_198, %c0_199, %c0_200] : memref<6x16x16xbf16, #tpu.memory_space<vmem>>, vector<1x16x16xbf16>
    %329 = vector.shape_cast %328 : vector<1x16x16xbf16> to vector<16x16xbf16>
    %cst_201 = arith.constant dense<0.000000e+00> : vector<2x16xf32>
    %330 = tpu.matmul %327, %329, %cst_201 {dimension_numbers = #tpu.dot_dimension_numbers<[1], [0], [0], [1], [0, 0, 1, 1], [], []>} : vector<2x16xbf16>, vector<16x16xbf16>, vector<2x16xf32> -> vector<2x16xf32>
    %c4_202 = arith.constant 4 : index
    %c0_203 = arith.constant 0 : index
    %c0_204 = arith.constant 0 : index
    %331 = vector.load %arg3[%c4_202, %c0_203, %c0_204] : memref<6x16x16xbf16, #tpu.memory_space<vmem>>, vector<1x16x16xbf16>
    %332 = vector.shape_cast %331 : vector<1x16x16xbf16> to vector<16x16xbf16>
    %cst_205 = arith.constant dense<0.000000e+00> : vector<2x16xf32>
    %333 = tpu.matmul %327, %332, %cst_205 {dimension_numbers = #tpu.dot_dimension_numbers<[1], [0], [0], [1], [0, 0, 1, 1], [], []>} : vector<2x16xbf16>, vector<16x16xbf16>, vector<2x16xf32> -> vector<2x16xf32>
    %c5_206 = arith.constant 5 : index
    %c0_207 = arith.constant 0 : index
    %c0_208 = arith.constant 0 : index
    %334 = vector.load %arg3[%c5_206, %c0_207, %c0_208] : memref<6x16x16xbf16, #tpu.memory_space<vmem>>, vector<1x16x16xbf16>
    %335 = vector.shape_cast %334 : vector<1x16x16xbf16> to vector<16x16xbf16>
    %cst_209 = arith.constant dense<0.000000e+00> : vector<2x16xf32>
    %336 = tpu.matmul %327, %335, %cst_209 {dimension_numbers = #tpu.dot_dimension_numbers<[1], [0], [0], [1], [0, 0, 1, 1], [], []>} : vector<2x16xbf16>, vector<16x16xbf16>, vector<2x16xf32> -> vector<2x16xf32>
    %337 = vector.broadcast %65 : vector<1x16xf32> to vector<2x16xf32>
    %338 = arith.addf %336, %337 : vector<2x16xf32>
    %c24_i32_210 = arith.constant 24 : i32
    %339 = arith.addi %c24_i32_210, %277 : i32
    %340 = arith.index_cast %339 : i32 to index
    %c0_211 = arith.constant 0 : index
    %c0_212 = arith.constant 0 : index
    %341 = vector.load %arg13[%340, %c0_211, %c0_212] : memref<48x2x16xbf16, #tpu.memory_space<vmem>>, vector<1x2x16xbf16>
    %342 = vector.shape_cast %341 : vector<1x2x16xbf16> to vector<2x16xbf16>
    %343 = arith.extf %342 : vector<2x16xbf16> to vector<2x16xf32>
    %c32_i32_213 = arith.constant 32 : i32
    %344 = arith.addi %c32_i32_213, %277 : i32
    %345 = arith.index_cast %344 : i32 to index
    %c0_214 = arith.constant 0 : index
    %c0_215 = arith.constant 0 : index
    %346 = vector.load %arg13[%345, %c0_214, %c0_215] : memref<48x2x16xbf16, #tpu.memory_space<vmem>>, vector<1x2x16xbf16>
    %347 = vector.shape_cast %346 : vector<1x2x16xbf16> to vector<2x16xbf16>
    %348 = arith.extf %347 : vector<2x16xbf16> to vector<2x16xf32>
    %c40_i32_216 = arith.constant 40 : i32
    %349 = arith.addi %c40_i32_216, %277 : i32
    %350 = arith.index_cast %349 : i32 to index
    %c0_217 = arith.constant 0 : index
    %c0_218 = arith.constant 0 : index
    %351 = vector.load %arg13[%350, %c0_217, %c0_218] : memref<48x2x16xbf16, #tpu.memory_space<vmem>>, vector<1x2x16xbf16>
    %352 = vector.shape_cast %351 : vector<1x2x16xbf16> to vector<2x16xbf16>
    %353 = arith.extf %352 : vector<2x16xbf16> to vector<2x16xf32>
    %354 = arith.addf %343, %330 : vector<2x16xf32>
    %cst_219 = arith.constant 5.000000e-01 : f32
    %355 = vector.broadcast %cst_219 : f32 to vector<2x16xf32>
    %356 = arith.mulf %355, %354 : vector<2x16xf32>
    %357 = math.tanh %356 : vector<2x16xf32>
    %cst_220 = arith.constant 5.000000e-01 : f32
    %358 = vector.broadcast %cst_220 : f32 to vector<2x16xf32>
    %359 = arith.mulf %358, %357 : vector<2x16xf32>
    %cst_221 = arith.constant 5.000000e-01 : f32
    %360 = vector.broadcast %cst_221 : f32 to vector<2x16xf32>
    %361 = arith.addf %359, %360 : vector<2x16xf32>
    %362 = arith.addf %348, %333 : vector<2x16xf32>
    %cst_222 = arith.constant 5.000000e-01 : f32
    %363 = vector.broadcast %cst_222 : f32 to vector<2x16xf32>
    %364 = arith.mulf %363, %362 : vector<2x16xf32>
    %365 = math.tanh %364 : vector<2x16xf32>
    %cst_223 = arith.constant 5.000000e-01 : f32
    %366 = vector.broadcast %cst_223 : f32 to vector<2x16xf32>
    %367 = arith.mulf %366, %365 : vector<2x16xf32>
    %cst_224 = arith.constant 5.000000e-01 : f32
    %368 = vector.broadcast %cst_224 : f32 to vector<2x16xf32>
    %369 = arith.addf %367, %368 : vector<2x16xf32>
    %370 = arith.mulf %361, %338 : vector<2x16xf32>
    %371 = arith.addf %353, %370 : vector<2x16xf32>
    %372 = math.tanh %371 : vector<2x16xf32>
    %373 = arith.subf %270, %372 : vector<2x16xf32>
    %374 = arith.mulf %369, %373 : vector<2x16xf32>
    %375 = arith.addf %372, %374 : vector<2x16xf32>
    %376 = vector.shape_cast %326 : vector<2x16xf32> to vector<1x2x16xf32>
    %377 = arith.index_cast %c2_i32 : i32 to index
    %c0_225 = arith.constant 0 : index
    %c0_226 = arith.constant 0 : index
    %378 = vector.load %arg12[%377, %c0_225, %c0_226] : memref<8x2x32xf32, #tpu.memory_space<vmem>>, vector<1x2x16xf32>
    tpu.vector_store %arg12[%377, %c0_225, %c0_226], %376 {strides = array<i32>} : memref<8x2x32xf32, #tpu.memory_space<vmem>>, vector<1x2x16xf32>,
    %379 = vector.shape_cast %375 : vector<2x16xf32> to vector<1x2x16xf32>
    %380 = arith.index_cast %277 : i32 to index
    %c0_227 = arith.constant 0 : index
    %c16_228 = arith.constant 16 : index
    %381 = vector.load %arg12[%380, %c0_227, %c16_228] : memref<8x2x32xf32, #tpu.memory_space<vmem>>, vector<1x2x16xf32>
    tpu.vector_store %arg12[%380, %c0_227, %c16_228], %379 {strides = array<i32>} : memref<8x2x32xf32, #tpu.memory_space<vmem>>, vector<1x2x16xf32>,
    %c3_i32 = arith.constant 3 : i32
    %c7_i32_229 = arith.constant 7 : i32
    %382 = arith.subi %c7_i32_229, %c3_i32 : i32
    %383 = arith.truncf %326 : vector<2x16xf32> to vector<2x16xbf16>
    %c0_230 = arith.constant 0 : index
    %c0_231 = arith.constant 0 : index
    %c0_232 = arith.constant 0 : index
    %384 = vector.load %arg3[%c0_230, %c0_231, %c0_232] : memref<6x16x16xbf16, #tpu.memory_space<vmem>>, vector<1x16x16xbf16>
    %385 = vector.shape_cast %384 : vector<1x16x16xbf16> to vector<16x16xbf16>
    %cst_233 = arith.constant dense<0.000000e+00> : vector<2x16xf32>
    %386 = tpu.matmul %383, %385, %cst_233 {dimension_numbers = #tpu.dot_dimension_numbers<[1], [0], [0], [1], [0, 0, 1, 1], [], []>} : vector<2x16xbf16>, vector<16x16xbf16>, vector<2x16xf32> -> vector<2x16xf32>
    %c1_234 = arith.constant 1 : index
    %c0_235 = arith.constant 0 : index
    %c0_236 = arith.constant 0 : index
    %387 = vector.load %arg3[%c1_234, %c0_235, %c0_236] : memref<6x16x16xbf16, #tpu.memory_space<vmem>>, vector<1x16x16xbf16>
    %388 = vector.shape_cast %387 : vector<1x16x16xbf16> to vector<16x16xbf16>
    %cst_237 = arith.constant dense<0.000000e+00> : vector<2x16xf32>
    %389 = tpu.matmul %383, %388, %cst_237 {dimension_numbers = #tpu.dot_dimension_numbers<[1], [0], [0], [1], [0, 0, 1, 1], [], []>} : vector<2x16xbf16>, vector<16x16xbf16>, vector<2x16xf32> -> vector<2x16xf32>
    %c2_238 = arith.constant 2 : index
    %c0_239 = arith.constant 0 : index
    %c0_240 = arith.constant 0 : index
    %390 = vector.load %arg3[%c2_238, %c0_239, %c0_240] : memref<6x16x16xbf16, #tpu.memory_space<vmem>>, vector<1x16x16xbf16>
    %391 = vector.shape_cast %390 : vector<1x16x16xbf16> to vector<16x16xbf16>
    %cst_241 = arith.constant dense<0.000000e+00> : vector<2x16xf32>
    %392 = tpu.matmul %383, %391, %cst_241 {dimension_numbers = #tpu.dot_dimension_numbers<[1], [0], [0], [1], [0, 0, 1, 1], [], []>} : vector<2x16xbf16>, vector<16x16xbf16>, vector<2x16xf32> -> vector<2x16xf32>
    %393 = vector.broadcast %63 : vector<1x16xf32> to vector<2x16xf32>
    %394 = arith.addf %392, %393 : vector<2x16xf32>
    %c0_i32_242 = arith.constant 0 : i32
    %395 = arith.addi %c0_i32_242, %c3_i32 : i32
    %396 = arith.index_cast %395 : i32 to index
    %c0_243 = arith.constant 0 : index
    %c0_244 = arith.constant 0 : index
    %397 = vector.load %arg13[%396, %c0_243, %c0_244] : memref<48x2x16xbf16, #tpu.memory_space<vmem>>, vector<1x2x16xbf16>
    %398 = vector.shape_cast %397 : vector<1x2x16xbf16> to vector<2x16xbf16>
    %399 = arith.extf %398 : vector<2x16xbf16> to vector<2x16xf32>
    %c8_i32_245 = arith.constant 8 : i32
    %400 = arith.addi %c8_i32_245, %c3_i32 : i32
    %401 = arith.index_cast %400 : i32 to index
    %c0_246 = arith.constant 0 : index
    %c0_247 = arith.constant 0 : index
    %402 = vector.load %arg13[%401, %c0_246, %c0_247] : memref<48x2x16xbf16, #tpu.memory_space<vmem>>, vector<1x2x16xbf16>
    %403 = vector.shape_cast %402 : vector<1x2x16xbf16> to vector<2x16xbf16>
    %404 = arith.extf %403 : vector<2x16xbf16> to vector<2x16xf32>
    %c16_i32_248 = arith.constant 16 : i32
    %405 = arith.addi %c16_i32_248, %c3_i32 : i32
    %406 = arith.index_cast %405 : i32 to index
    %c0_249 = arith.constant 0 : index
    %c0_250 = arith.constant 0 : index
    %407 = vector.load %arg13[%406, %c0_249, %c0_250] : memref<48x2x16xbf16, #tpu.memory_space<vmem>>, vector<1x2x16xbf16>
    %408 = vector.shape_cast %407 : vector<1x2x16xbf16> to vector<2x16xbf16>
    %409 = arith.extf %408 : vector<2x16xbf16> to vector<2x16xf32>
    %410 = arith.addf %399, %386 : vector<2x16xf32>
    %cst_251 = arith.constant 5.000000e-01 : f32
    %411 = vector.broadcast %cst_251 : f32 to vector<2x16xf32>
    %412 = arith.mulf %411, %410 : vector<2x16xf32>
    %413 = math.tanh %412 : vector<2x16xf32>
    %cst_252 = arith.constant 5.000000e-01 : f32
    %414 = vector.broadcast %cst_252 : f32 to vector<2x16xf32>
    %415 = arith.mulf %414, %413 : vector<2x16xf32>
    %cst_253 = arith.constant 5.000000e-01 : f32
    %416 = vector.broadcast %cst_253 : f32 to vector<2x16xf32>
    %417 = arith.addf %415, %416 : vector<2x16xf32>
    %418 = arith.addf %404, %389 : vector<2x16xf32>
    %cst_254 = arith.constant 5.000000e-01 : f32
    %419 = vector.broadcast %cst_254 : f32 to vector<2x16xf32>
    %420 = arith.mulf %419, %418 : vector<2x16xf32>
    %421 = math.tanh %420 : vector<2x16xf32>
    %cst_255 = arith.constant 5.000000e-01 : f32
    %422 = vector.broadcast %cst_255 : f32 to vector<2x16xf32>
    %423 = arith.mulf %422, %421 : vector<2x16xf32>
    %cst_256 = arith.constant 5.000000e-01 : f32
    %424 = vector.broadcast %cst_256 : f32 to vector<2x16xf32>
    %425 = arith.addf %423, %424 : vector<2x16xf32>
    %426 = arith.mulf %417, %394 : vector<2x16xf32>
    %427 = arith.addf %409, %426 : vector<2x16xf32>
    %428 = math.tanh %427 : vector<2x16xf32>
    %429 = arith.subf %326, %428 : vector<2x16xf32>
    %430 = arith.mulf %425, %429 : vector<2x16xf32>
    %431 = arith.addf %428, %430 : vector<2x16xf32>
    %432 = arith.truncf %375 : vector<2x16xf32> to vector<2x16xbf16>
    %c3_257 = arith.constant 3 : index
    %c0_258 = arith.constant 0 : index
    %c0_259 = arith.constant 0 : index
    %433 = vector.load %arg3[%c3_257, %c0_258, %c0_259] : memref<6x16x16xbf16, #tpu.memory_space<vmem>>, vector<1x16x16xbf16>
    %434 = vector.shape_cast %433 : vector<1x16x16xbf16> to vector<16x16xbf16>
    %cst_260 = arith.constant dense<0.000000e+00> : vector<2x16xf32>
    %435 = tpu.matmul %432, %434, %cst_260 {dimension_numbers = #tpu.dot_dimension_numbers<[1], [0], [0], [1], [0, 0, 1, 1], [], []>} : vector<2x16xbf16>, vector<16x16xbf16>, vector<2x16xf32> -> vector<2x16xf32>
    %c4_261 = arith.constant 4 : index
    %c0_262 = arith.constant 0 : index
    %c0_263 = arith.constant 0 : index
    %436 = vector.load %arg3[%c4_261, %c0_262, %c0_263] : memref<6x16x16xbf16, #tpu.memory_space<vmem>>, vector<1x16x16xbf16>
    %437 = vector.shape_cast %436 : vector<1x16x16xbf16> to vector<16x16xbf16>
    %cst_264 = arith.constant dense<0.000000e+00> : vector<2x16xf32>
    %438 = tpu.matmul %432, %437, %cst_264 {dimension_numbers = #tpu.dot_dimension_numbers<[1], [0], [0], [1], [0, 0, 1, 1], [], []>} : vector<2x16xbf16>, vector<16x16xbf16>, vector<2x16xf32> -> vector<2x16xf32>
    %c5_265 = arith.constant 5 : index
    %c0_266 = arith.constant 0 : index
    %c0_267 = arith.constant 0 : index
    %439 = vector.load %arg3[%c5_265, %c0_266, %c0_267] : memref<6x16x16xbf16, #tpu.memory_space<vmem>>, vector<1x16x16xbf16>
    %440 = vector.shape_cast %439 : vector<1x16x16xbf16> to vector<16x16xbf16>
    %cst_268 = arith.constant dense<0.000000e+00> : vector<2x16xf32>
    %441 = tpu.matmul %432, %440, %cst_268 {dimension_numbers = #tpu.dot_dimension_numbers<[1], [0], [0], [1], [0, 0, 1, 1], [], []>} : vector<2x16xbf16>, vector<16x16xbf16>, vector<2x16xf32> -> vector<2x16xf32>
    %442 = vector.broadcast %65 : vector<1x16xf32> to vector<2x16xf32>
    %443 = arith.addf %441, %442 : vector<2x16xf32>
    %c24_i32_269 = arith.constant 24 : i32
    %444 = arith.addi %c24_i32_269, %382 : i32
    %445 = arith.index_cast %444 : i32 to index
    %c0_270 = arith.constant 0 : index
    %c0_271 = arith.constant 0 : index
    %446 = vector.load %arg13[%445, %c0_270, %c0_271] : memref<48x2x16xbf16, #tpu.memory_space<vmem>>, vector<1x2x16xbf16>
    %447 = vector.shape_cast %446 : vector<1x2x16xbf16> to vector<2x16xbf16>
    %448 = arith.extf %447 : vector<2x16xbf16> to vector<2x16xf32>
    %c32_i32_272 = arith.constant 32 : i32
    %449 = arith.addi %c32_i32_272, %382 : i32
    %450 = arith.index_cast %449 : i32 to index
    %c0_273 = arith.constant 0 : index
    %c0_274 = arith.constant 0 : index
    %451 = vector.load %arg13[%450, %c0_273, %c0_274] : memref<48x2x16xbf16, #tpu.memory_space<vmem>>, vector<1x2x16xbf16>
    %452 = vector.shape_cast %451 : vector<1x2x16xbf16> to vector<2x16xbf16>
    %453 = arith.extf %452 : vector<2x16xbf16> to vector<2x16xf32>
    %c40_i32_275 = arith.constant 40 : i32
    %454 = arith.addi %c40_i32_275, %382 : i32
    %455 = arith.index_cast %454 : i32 to index
    %c0_276 = arith.constant 0 : index
    %c0_277 = arith.constant 0 : index
    %456 = vector.load %arg13[%455, %c0_276, %c0_277] : memref<48x2x16xbf16, #tpu.memory_space<vmem>>, vector<1x2x16xbf16>
    %457 = vector.shape_cast %456 : vector<1x2x16xbf16> to vector<2x16xbf16>
    %458 = arith.extf %457 : vector<2x16xbf16> to vector<2x16xf32>
    %459 = arith.addf %448, %435 : vector<2x16xf32>
    %cst_278 = arith.constant 5.000000e-01 : f32
    %460 = vector.broadcast %cst_278 : f32 to vector<2x16xf32>
    %461 = arith.mulf %460, %459 : vector<2x16xf32>
    %462 = math.tanh %461 : vector<2x16xf32>
    %cst_279 = arith.constant 5.000000e-01 : f32
    %463 = vector.broadcast %cst_279 : f32 to vector<2x16xf32>
    %464 = arith.mulf %463, %462 : vector<2x16xf32>
    %cst_280 = arith.constant 5.000000e-01 : f32
    %465 = vector.broadcast %cst_280 : f32 to vector<2x16xf32>
    %466 = arith.addf %464, %465 : vector<2x16xf32>
    %467 = arith.addf %453, %438 : vector<2x16xf32>
    %cst_281 = arith.constant 5.000000e-01 : f32
    %468 = vector.broadcast %cst_281 : f32 to vector<2x16xf32>
    %469 = arith.mulf %468, %467 : vector<2x16xf32>
    %470 = math.tanh %469 : vector<2x16xf32>
    %cst_282 = arith.constant 5.000000e-01 : f32
    %471 = vector.broadcast %cst_282 : f32 to vector<2x16xf32>
    %472 = arith.mulf %471, %470 : vector<2x16xf32>
    %cst_283 = arith.constant 5.000000e-01 : f32
    %473 = vector.broadcast %cst_283 : f32 to vector<2x16xf32>
    %474 = arith.addf %472, %473 : vector<2x16xf32>
    %475 = arith.mulf %466, %443 : vector<2x16xf32>
    %476 = arith.addf %458, %475 : vector<2x16xf32>
    %477 = math.tanh %476 : vector<2x16xf32>
    %478 = arith.subf %375, %477 : vector<2x16xf32>
    %479 = arith.mulf %474, %478 : vector<2x16xf32>
    %480 = arith.addf %477, %479 : vector<2x16xf32>
    %481 = vector.shape_cast %431 : vector<2x16xf32> to vector<1x2x16xf32>
    %482 = arith.index_cast %c3_i32 : i32 to index
    %c0_284 = arith.constant 0 : index
    %c0_285 = arith.constant 0 : index
    %483 = vector.load %arg12[%482, %c0_284, %c0_285] : memref<8x2x32xf32, #tpu.memory_space<vmem>>, vector<1x2x16xf32>
    tpu.vector_store %arg12[%482, %c0_284, %c0_285], %481 {strides = array<i32>} : memref<8x2x32xf32, #tpu.memory_space<vmem>>, vector<1x2x16xf32>,
    %484 = vector.shape_cast %480 : vector<2x16xf32> to vector<1x2x16xf32>
    %485 = arith.index_cast %382 : i32 to index
    %c0_286 = arith.constant 0 : index
    %c16_287 = arith.constant 16 : index
    %486 = vector.load %arg12[%485, %c0_286, %c16_287] : memref<8x2x32xf32, #tpu.memory_space<vmem>>, vector<1x2x16xf32>
    tpu.vector_store %arg12[%485, %c0_286, %c16_287], %484 {strides = array<i32>} : memref<8x2x32xf32, #tpu.memory_space<vmem>>, vector<1x2x16xf32>,
    %c4_i32 = arith.constant 4 : i32
    %c7_i32_288 = arith.constant 7 : i32
    %487 = arith.subi %c7_i32_288, %c4_i32 : i32
    %488 = arith.truncf %431 : vector<2x16xf32> to vector<2x16xbf16>
    %c0_289 = arith.constant 0 : index
    %c0_290 = arith.constant 0 : index
    %c0_291 = arith.constant 0 : index
    %489 = vector.load %arg3[%c0_289, %c0_290, %c0_291] : memref<6x16x16xbf16, #tpu.memory_space<vmem>>, vector<1x16x16xbf16>
    %490 = vector.shape_cast %489 : vector<1x16x16xbf16> to vector<16x16xbf16>
    %cst_292 = arith.constant dense<0.000000e+00> : vector<2x16xf32>
    %491 = tpu.matmul %488, %490, %cst_292 {dimension_numbers = #tpu.dot_dimension_numbers<[1], [0], [0], [1], [0, 0, 1, 1], [], []>} : vector<2x16xbf16>, vector<16x16xbf16>, vector<2x16xf32> -> vector<2x16xf32>
    %c1_293 = arith.constant 1 : index
    %c0_294 = arith.constant 0 : index
    %c0_295 = arith.constant 0 : index
    %492 = vector.load %arg3[%c1_293, %c0_294, %c0_295] : memref<6x16x16xbf16, #tpu.memory_space<vmem>>, vector<1x16x16xbf16>
    %493 = vector.shape_cast %492 : vector<1x16x16xbf16> to vector<16x16xbf16>
    %cst_296 = arith.constant dense<0.000000e+00> : vector<2x16xf32>
    %494 = tpu.matmul %488, %493, %cst_296 {dimension_numbers = #tpu.dot_dimension_numbers<[1], [0], [0], [1], [0, 0, 1, 1], [], []>} : vector<2x16xbf16>, vector<16x16xbf16>, vector<2x16xf32> -> vector<2x16xf32>
    %c2_297 = arith.constant 2 : index
    %c0_298 = arith.constant 0 : index
    %c0_299 = arith.constant 0 : index
    %495 = vector.load %arg3[%c2_297, %c0_298, %c0_299] : memref<6x16x16xbf16, #tpu.memory_space<vmem>>, vector<1x16x16xbf16>
    %496 = vector.shape_cast %495 : vector<1x16x16xbf16> to vector<16x16xbf16>
    %cst_300 = arith.constant dense<0.000000e+00> : vector<2x16xf32>
    %497 = tpu.matmul %488, %496, %cst_300 {dimension_numbers = #tpu.dot_dimension_numbers<[1], [0], [0], [1], [0, 0, 1, 1], [], []>} : vector<2x16xbf16>, vector<16x16xbf16>, vector<2x16xf32> -> vector<2x16xf32>
    %498 = vector.broadcast %63 : vector<1x16xf32> to vector<2x16xf32>
    %499 = arith.addf %497, %498 : vector<2x16xf32>
    %c0_i32_301 = arith.constant 0 : i32
    %500 = arith.addi %c0_i32_301, %c4_i32 : i32
    %501 = arith.index_cast %500 : i32 to index
    %c0_302 = arith.constant 0 : index
    %c0_303 = arith.constant 0 : index
    %502 = vector.load %arg13[%501, %c0_302, %c0_303] : memref<48x2x16xbf16, #tpu.memory_space<vmem>>, vector<1x2x16xbf16>
    %503 = vector.shape_cast %502 : vector<1x2x16xbf16> to vector<2x16xbf16>
    %504 = arith.extf %503 : vector<2x16xbf16> to vector<2x16xf32>
    %c8_i32_304 = arith.constant 8 : i32
    %505 = arith.addi %c8_i32_304, %c4_i32 : i32
    %506 = arith.index_cast %505 : i32 to index
    %c0_305 = arith.constant 0 : index
    %c0_306 = arith.constant 0 : index
    %507 = vector.load %arg13[%506, %c0_305, %c0_306] : memref<48x2x16xbf16, #tpu.memory_space<vmem>>, vector<1x2x16xbf16>
    %508 = vector.shape_cast %507 : vector<1x2x16xbf16> to vector<2x16xbf16>
    %509 = arith.extf %508 : vector<2x16xbf16> to vector<2x16xf32>
    %c16_i32_307 = arith.constant 16 : i32
    %510 = arith.addi %c16_i32_307, %c4_i32 : i32
    %511 = arith.index_cast %510 : i32 to index
    %c0_308 = arith.constant 0 : index
    %c0_309 = arith.constant 0 : index
    %512 = vector.load %arg13[%511, %c0_308, %c0_309] : memref<48x2x16xbf16, #tpu.memory_space<vmem>>, vector<1x2x16xbf16>
    %513 = vector.shape_cast %512 : vector<1x2x16xbf16> to vector<2x16xbf16>
    %514 = arith.extf %513 : vector<2x16xbf16> to vector<2x16xf32>
    %515 = arith.addf %504, %491 : vector<2x16xf32>
    %cst_310 = arith.constant 5.000000e-01 : f32
    %516 = vector.broadcast %cst_310 : f32 to vector<2x16xf32>
    %517 = arith.mulf %516, %515 : vector<2x16xf32>
    %518 = math.tanh %517 : vector<2x16xf32>
    %cst_311 = arith.constant 5.000000e-01 : f32
    %519 = vector.broadcast %cst_311 : f32 to vector<2x16xf32>
    %520 = arith.mulf %519, %518 : vector<2x16xf32>
    %cst_312 = arith.constant 5.000000e-01 : f32
    %521 = vector.broadcast %cst_312 : f32 to vector<2x16xf32>
    %522 = arith.addf %520, %521 : vector<2x16xf32>
    %523 = arith.addf %509, %494 : vector<2x16xf32>
    %cst_313 = arith.constant 5.000000e-01 : f32
    %524 = vector.broadcast %cst_313 : f32 to vector<2x16xf32>
    %525 = arith.mulf %524, %523 : vector<2x16xf32>
    %526 = math.tanh %525 : vector<2x16xf32>
    %cst_314 = arith.constant 5.000000e-01 : f32
    %527 = vector.broadcast %cst_314 : f32 to vector<2x16xf32>
    %528 = arith.mulf %527, %526 : vector<2x16xf32>
    %cst_315 = arith.constant 5.000000e-01 : f32
    %529 = vector.broadcast %cst_315 : f32 to vector<2x16xf32>
    %530 = arith.addf %528, %529 : vector<2x16xf32>
    %531 = arith.mulf %522, %499 : vector<2x16xf32>
    %532 = arith.addf %514, %531 : vector<2x16xf32>
    %533 = math.tanh %532 : vector<2x16xf32>
    %534 = arith.subf %431, %533 : vector<2x16xf32>
    %535 = arith.mulf %530, %534 : vector<2x16xf32>
    %536 = arith.addf %533, %535 : vector<2x16xf32>
    %537 = arith.truncf %480 : vector<2x16xf32> to vector<2x16xbf16>
    %c3_316 = arith.constant 3 : index
    %c0_317 = arith.constant 0 : index
    %c0_318 = arith.constant 0 : index
    %538 = vector.load %arg3[%c3_316, %c0_317, %c0_318] : memref<6x16x16xbf16, #tpu.memory_space<vmem>>, vector<1x16x16xbf16>
    %539 = vector.shape_cast %538 : vector<1x16x16xbf16> to vector<16x16xbf16>
    %cst_319 = arith.constant dense<0.000000e+00> : vector<2x16xf32>
    %540 = tpu.matmul %537, %539, %cst_319 {dimension_numbers = #tpu.dot_dimension_numbers<[1], [0], [0], [1], [0, 0, 1, 1], [], []>} : vector<2x16xbf16>, vector<16x16xbf16>, vector<2x16xf32> -> vector<2x16xf32>
    %c4_320 = arith.constant 4 : index
    %c0_321 = arith.constant 0 : index
    %c0_322 = arith.constant 0 : index
    %541 = vector.load %arg3[%c4_320, %c0_321, %c0_322] : memref<6x16x16xbf16, #tpu.memory_space<vmem>>, vector<1x16x16xbf16>
    %542 = vector.shape_cast %541 : vector<1x16x16xbf16> to vector<16x16xbf16>
    %cst_323 = arith.constant dense<0.000000e+00> : vector<2x16xf32>
    %543 = tpu.matmul %537, %542, %cst_323 {dimension_numbers = #tpu.dot_dimension_numbers<[1], [0], [0], [1], [0, 0, 1, 1], [], []>} : vector<2x16xbf16>, vector<16x16xbf16>, vector<2x16xf32> -> vector<2x16xf32>
    %c5_324 = arith.constant 5 : index
    %c0_325 = arith.constant 0 : index
    %c0_326 = arith.constant 0 : index
    %544 = vector.load %arg3[%c5_324, %c0_325, %c0_326] : memref<6x16x16xbf16, #tpu.memory_space<vmem>>, vector<1x16x16xbf16>
    %545 = vector.shape_cast %544 : vector<1x16x16xbf16> to vector<16x16xbf16>
    %cst_327 = arith.constant dense<0.000000e+00> : vector<2x16xf32>
    %546 = tpu.matmul %537, %545, %cst_327 {dimension_numbers = #tpu.dot_dimension_numbers<[1], [0], [0], [1], [0, 0, 1, 1], [], []>} : vector<2x16xbf16>, vector<16x16xbf16>, vector<2x16xf32> -> vector<2x16xf32>
    %547 = vector.broadcast %65 : vector<1x16xf32> to vector<2x16xf32>
    %548 = arith.addf %546, %547 : vector<2x16xf32>
    %c24_i32_328 = arith.constant 24 : i32
    %549 = arith.addi %c24_i32_328, %487 : i32
    %550 = arith.index_cast %549 : i32 to index
    %c0_329 = arith.constant 0 : index
    %c0_330 = arith.constant 0 : index
    %551 = vector.load %arg13[%550, %c0_329, %c0_330] : memref<48x2x16xbf16, #tpu.memory_space<vmem>>, vector<1x2x16xbf16>
    %552 = vector.shape_cast %551 : vector<1x2x16xbf16> to vector<2x16xbf16>
    %553 = arith.extf %552 : vector<2x16xbf16> to vector<2x16xf32>
    %c32_i32_331 = arith.constant 32 : i32
    %554 = arith.addi %c32_i32_331, %487 : i32
    %555 = arith.index_cast %554 : i32 to index
    %c0_332 = arith.constant 0 : index
    %c0_333 = arith.constant 0 : index
    %556 = vector.load %arg13[%555, %c0_332, %c0_333] : memref<48x2x16xbf16, #tpu.memory_space<vmem>>, vector<1x2x16xbf16>
    %557 = vector.shape_cast %556 : vector<1x2x16xbf16> to vector<2x16xbf16>
    %558 = arith.extf %557 : vector<2x16xbf16> to vector<2x16xf32>
    %c40_i32_334 = arith.constant 40 : i32
    %559 = arith.addi %c40_i32_334, %487 : i32
    %560 = arith.index_cast %559 : i32 to index
    %c0_335 = arith.constant 0 : index
    %c0_336 = arith.constant 0 : index
    %561 = vector.load %arg13[%560, %c0_335, %c0_336] : memref<48x2x16xbf16, #tpu.memory_space<vmem>>, vector<1x2x16xbf16>
    %562 = vector.shape_cast %561 : vector<1x2x16xbf16> to vector<2x16xbf16>
    %563 = arith.extf %562 : vector<2x16xbf16> to vector<2x16xf32>
    %564 = arith.addf %553, %540 : vector<2x16xf32>
    %cst_337 = arith.constant 5.000000e-01 : f32
    %565 = vector.broadcast %cst_337 : f32 to vector<2x16xf32>
    %566 = arith.mulf %565, %564 : vector<2x16xf32>
    %567 = math.tanh %566 : vector<2x16xf32>
    %cst_338 = arith.constant 5.000000e-01 : f32
    %568 = vector.broadcast %cst_338 : f32 to vector<2x16xf32>
    %569 = arith.mulf %568, %567 : vector<2x16xf32>
    %cst_339 = arith.constant 5.000000e-01 : f32
    %570 = vector.broadcast %cst_339 : f32 to vector<2x16xf32>
    %571 = arith.addf %569, %570 : vector<2x16xf32>
    %572 = arith.addf %558, %543 : vector<2x16xf32>
    %cst_340 = arith.constant 5.000000e-01 : f32
    %573 = vector.broadcast %cst_340 : f32 to vector<2x16xf32>
    %574 = arith.mulf %573, %572 : vector<2x16xf32>
    %575 = math.tanh %574 : vector<2x16xf32>
    %cst_341 = arith.constant 5.000000e-01 : f32
    %576 = vector.broadcast %cst_341 : f32 to vector<2x16xf32>
    %577 = arith.mulf %576, %575 : vector<2x16xf32>
    %cst_342 = arith.constant 5.000000e-01 : f32
    %578 = vector.broadcast %cst_342 : f32 to vector<2x16xf32>
    %579 = arith.addf %577, %578 : vector<2x16xf32>
    %580 = arith.mulf %571, %548 : vector<2x16xf32>
    %581 = arith.addf %563, %580 : vector<2x16xf32>
    %582 = math.tanh %581 : vector<2x16xf32>
    %583 = arith.subf %480, %582 : vector<2x16xf32>
    %584 = arith.mulf %579, %583 : vector<2x16xf32>
    %585 = arith.addf %582, %584 : vector<2x16xf32>
    %586 = vector.shape_cast %536 : vector<2x16xf32> to vector<1x2x16xf32>
    %587 = arith.index_cast %c4_i32 : i32 to index
    %c0_343 = arith.constant 0 : index
    %c0_344 = arith.constant 0 : index
    %588 = vector.load %arg12[%587, %c0_343, %c0_344] : memref<8x2x32xf32, #tpu.memory_space<vmem>>, vector<1x2x16xf32>
    tpu.vector_store %arg12[%587, %c0_343, %c0_344], %586 {strides = array<i32>} : memref<8x2x32xf32, #tpu.memory_space<vmem>>, vector<1x2x16xf32>,
    %589 = vector.shape_cast %585 : vector<2x16xf32> to vector<1x2x16xf32>
    %590 = arith.index_cast %487 : i32 to index
    %c0_345 = arith.constant 0 : index
    %c16_346 = arith.constant 16 : index
    %591 = vector.load %arg12[%590, %c0_345, %c16_346] : memref<8x2x32xf32, #tpu.memory_space<vmem>>, vector<1x2x16xf32>
    tpu.vector_store %arg12[%590, %c0_345, %c16_346], %589 {strides = array<i32>} : memref<8x2x32xf32, #tpu.memory_space<vmem>>, vector<1x2x16xf32>,
    %c5_i32 = arith.constant 5 : i32
    %c7_i32_347 = arith.constant 7 : i32
    %592 = arith.subi %c7_i32_347, %c5_i32 : i32
    %593 = arith.truncf %536 : vector<2x16xf32> to vector<2x16xbf16>
    %c0_348 = arith.constant 0 : index
    %c0_349 = arith.constant 0 : index
    %c0_350 = arith.constant 0 : index
    %594 = vector.load %arg3[%c0_348, %c0_349, %c0_350] : memref<6x16x16xbf16, #tpu.memory_space<vmem>>, vector<1x16x16xbf16>
    %595 = vector.shape_cast %594 : vector<1x16x16xbf16> to vector<16x16xbf16>
    %cst_351 = arith.constant dense<0.000000e+00> : vector<2x16xf32>
    %596 = tpu.matmul %593, %595, %cst_351 {dimension_numbers = #tpu.dot_dimension_numbers<[1], [0], [0], [1], [0, 0, 1, 1], [], []>} : vector<2x16xbf16>, vector<16x16xbf16>, vector<2x16xf32> -> vector<2x16xf32>
    %c1_352 = arith.constant 1 : index
    %c0_353 = arith.constant 0 : index
    %c0_354 = arith.constant 0 : index
    %597 = vector.load %arg3[%c1_352, %c0_353, %c0_354] : memref<6x16x16xbf16, #tpu.memory_space<vmem>>, vector<1x16x16xbf16>
    %598 = vector.shape_cast %597 : vector<1x16x16xbf16> to vector<16x16xbf16>
    %cst_355 = arith.constant dense<0.000000e+00> : vector<2x16xf32>
    %599 = tpu.matmul %593, %598, %cst_355 {dimension_numbers = #tpu.dot_dimension_numbers<[1], [0], [0], [1], [0, 0, 1, 1], [], []>} : vector<2x16xbf16>, vector<16x16xbf16>, vector<2x16xf32> -> vector<2x16xf32>
    %c2_356 = arith.constant 2 : index
    %c0_357 = arith.constant 0 : index
    %c0_358 = arith.constant 0 : index
    %600 = vector.load %arg3[%c2_356, %c0_357, %c0_358] : memref<6x16x16xbf16, #tpu.memory_space<vmem>>, vector<1x16x16xbf16>
    %601 = vector.shape_cast %600 : vector<1x16x16xbf16> to vector<16x16xbf16>
    %cst_359 = arith.constant dense<0.000000e+00> : vector<2x16xf32>
    %602 = tpu.matmul %593, %601, %cst_359 {dimension_numbers = #tpu.dot_dimension_numbers<[1], [0], [0], [1], [0, 0, 1, 1], [], []>} : vector<2x16xbf16>, vector<16x16xbf16>, vector<2x16xf32> -> vector<2x16xf32>
    %603 = vector.broadcast %63 : vector<1x16xf32> to vector<2x16xf32>
    %604 = arith.addf %602, %603 : vector<2x16xf32>
    %c0_i32_360 = arith.constant 0 : i32
    %605 = arith.addi %c0_i32_360, %c5_i32 : i32
    %606 = arith.index_cast %605 : i32 to index
    %c0_361 = arith.constant 0 : index
    %c0_362 = arith.constant 0 : index
    %607 = vector.load %arg13[%606, %c0_361, %c0_362] : memref<48x2x16xbf16, #tpu.memory_space<vmem>>, vector<1x2x16xbf16>
    %608 = vector.shape_cast %607 : vector<1x2x16xbf16> to vector<2x16xbf16>
    %609 = arith.extf %608 : vector<2x16xbf16> to vector<2x16xf32>
    %c8_i32_363 = arith.constant 8 : i32
    %610 = arith.addi %c8_i32_363, %c5_i32 : i32
    %611 = arith.index_cast %610 : i32 to index
    %c0_364 = arith.constant 0 : index
    %c0_365 = arith.constant 0 : index
    %612 = vector.load %arg13[%611, %c0_364, %c0_365] : memref<48x2x16xbf16, #tpu.memory_space<vmem>>, vector<1x2x16xbf16>
    %613 = vector.shape_cast %612 : vector<1x2x16xbf16> to vector<2x16xbf16>
    %614 = arith.extf %613 : vector<2x16xbf16> to vector<2x16xf32>
    %c16_i32_366 = arith.constant 16 : i32
    %615 = arith.addi %c16_i32_366, %c5_i32 : i32
    %616 = arith.index_cast %615 : i32 to index
    %c0_367 = arith.constant 0 : index
    %c0_368 = arith.constant 0 : index
    %617 = vector.load %arg13[%616, %c0_367, %c0_368] : memref<48x2x16xbf16, #tpu.memory_space<vmem>>, vector<1x2x16xbf16>
    %618 = vector.shape_cast %617 : vector<1x2x16xbf16> to vector<2x16xbf16>
    %619 = arith.extf %618 : vector<2x16xbf16> to vector<2x16xf32>
    %620 = arith.addf %609, %596 : vector<2x16xf32>
    %cst_369 = arith.constant 5.000000e-01 : f32
    %621 = vector.broadcast %cst_369 : f32 to vector<2x16xf32>
    %622 = arith.mulf %621, %620 : vector<2x16xf32>
    %623 = math.tanh %622 : vector<2x16xf32>
    %cst_370 = arith.constant 5.000000e-01 : f32
    %624 = vector.broadcast %cst_370 : f32 to vector<2x16xf32>
    %625 = arith.mulf %624, %623 : vector<2x16xf32>
    %cst_371 = arith.constant 5.000000e-01 : f32
    %626 = vector.broadcast %cst_371 : f32 to vector<2x16xf32>
    %627 = arith.addf %625, %626 : vector<2x16xf32>
    %628 = arith.addf %614, %599 : vector<2x16xf32>
    %cst_372 = arith.constant 5.000000e-01 : f32
    %629 = vector.broadcast %cst_372 : f32 to vector<2x16xf32>
    %630 = arith.mulf %629, %628 : vector<2x16xf32>
    %631 = math.tanh %630 : vector<2x16xf32>
    %cst_373 = arith.constant 5.000000e-01 : f32
    %632 = vector.broadcast %cst_373 : f32 to vector<2x16xf32>
    %633 = arith.mulf %632, %631 : vector<2x16xf32>
    %cst_374 = arith.constant 5.000000e-01 : f32
    %634 = vector.broadcast %cst_374 : f32 to vector<2x16xf32>
    %635 = arith.addf %633, %634 : vector<2x16xf32>
    %636 = arith.mulf %627, %604 : vector<2x16xf32>
    %637 = arith.addf %619, %636 : vector<2x16xf32>
    %638 = math.tanh %637 : vector<2x16xf32>
    %639 = arith.subf %536, %638 : vector<2x16xf32>
    %640 = arith.mulf %635, %639 : vector<2x16xf32>
    %641 = arith.addf %638, %640 : vector<2x16xf32>
    %642 = arith.truncf %585 : vector<2x16xf32> to vector<2x16xbf16>
    %c3_375 = arith.constant 3 : index
    %c0_376 = arith.constant 0 : index
    %c0_377 = arith.constant 0 : index
    %643 = vector.load %arg3[%c3_375, %c0_376, %c0_377] : memref<6x16x16xbf16, #tpu.memory_space<vmem>>, vector<1x16x16xbf16>
    %644 = vector.shape_cast %643 : vector<1x16x16xbf16> to vector<16x16xbf16>
    %cst_378 = arith.constant dense<0.000000e+00> : vector<2x16xf32>
    %645 = tpu.matmul %642, %644, %cst_378 {dimension_numbers = #tpu.dot_dimension_numbers<[1], [0], [0], [1], [0, 0, 1, 1], [], []>} : vector<2x16xbf16>, vector<16x16xbf16>, vector<2x16xf32> -> vector<2x16xf32>
    %c4_379 = arith.constant 4 : index
    %c0_380 = arith.constant 0 : index
    %c0_381 = arith.constant 0 : index
    %646 = vector.load %arg3[%c4_379, %c0_380, %c0_381] : memref<6x16x16xbf16, #tpu.memory_space<vmem>>, vector<1x16x16xbf16>
    %647 = vector.shape_cast %646 : vector<1x16x16xbf16> to vector<16x16xbf16>
    %cst_382 = arith.constant dense<0.000000e+00> : vector<2x16xf32>
    %648 = tpu.matmul %642, %647, %cst_382 {dimension_numbers = #tpu.dot_dimension_numbers<[1], [0], [0], [1], [0, 0, 1, 1], [], []>} : vector<2x16xbf16>, vector<16x16xbf16>, vector<2x16xf32> -> vector<2x16xf32>
    %c5_383 = arith.constant 5 : index
    %c0_384 = arith.constant 0 : index
    %c0_385 = arith.constant 0 : index
    %649 = vector.load %arg3[%c5_383, %c0_384, %c0_385] : memref<6x16x16xbf16, #tpu.memory_space<vmem>>, vector<1x16x16xbf16>
    %650 = vector.shape_cast %649 : vector<1x16x16xbf16> to vector<16x16xbf16>
    %cst_386 = arith.constant dense<0.000000e+00> : vector<2x16xf32>
    %651 = tpu.matmul %642, %650, %cst_386 {dimension_numbers = #tpu.dot_dimension_numbers<[1], [0], [0], [1], [0, 0, 1, 1], [], []>} : vector<2x16xbf16>, vector<16x16xbf16>, vector<2x16xf32> -> vector<2x16xf32>
    %652 = vector.broadcast %65 : vector<1x16xf32> to vector<2x16xf32>
    %653 = arith.addf %651, %652 : vector<2x16xf32>
    %c24_i32_387 = arith.constant 24 : i32
    %654 = arith.addi %c24_i32_387, %592 : i32
    %655 = arith.index_cast %654 : i32 to index
    %c0_388 = arith.constant 0 : index
    %c0_389 = arith.constant 0 : index
    %656 = vector.load %arg13[%655, %c0_388, %c0_389] : memref<48x2x16xbf16, #tpu.memory_space<vmem>>, vector<1x2x16xbf16>
    %657 = vector.shape_cast %656 : vector<1x2x16xbf16> to vector<2x16xbf16>
    %658 = arith.extf %657 : vector<2x16xbf16> to vector<2x16xf32>
    %c32_i32_390 = arith.constant 32 : i32
    %659 = arith.addi %c32_i32_390, %592 : i32
    %660 = arith.index_cast %659 : i32 to index
    %c0_391 = arith.constant 0 : index
    %c0_392 = arith.constant 0 : index
    %661 = vector.load %arg13[%660, %c0_391, %c0_392] : memref<48x2x16xbf16, #tpu.memory_space<vmem>>, vector<1x2x16xbf16>
    %662 = vector.shape_cast %661 : vector<1x2x16xbf16> to vector<2x16xbf16>
    %663 = arith.extf %662 : vector<2x16xbf16> to vector<2x16xf32>
    %c40_i32_393 = arith.constant 40 : i32
    %664 = arith.addi %c40_i32_393, %592 : i32
    %665 = arith.index_cast %664 : i32 to index
    %c0_394 = arith.constant 0 : index
    %c0_395 = arith.constant 0 : index
    %666 = vector.load %arg13[%665, %c0_394, %c0_395] : memref<48x2x16xbf16, #tpu.memory_space<vmem>>, vector<1x2x16xbf16>
    %667 = vector.shape_cast %666 : vector<1x2x16xbf16> to vector<2x16xbf16>
    %668 = arith.extf %667 : vector<2x16xbf16> to vector<2x16xf32>
    %669 = arith.addf %658, %645 : vector<2x16xf32>
    %cst_396 = arith.constant 5.000000e-01 : f32
    %670 = vector.broadcast %cst_396 : f32 to vector<2x16xf32>
    %671 = arith.mulf %670, %669 : vector<2x16xf32>
    %672 = math.tanh %671 : vector<2x16xf32>
    %cst_397 = arith.constant 5.000000e-01 : f32
    %673 = vector.broadcast %cst_397 : f32 to vector<2x16xf32>
    %674 = arith.mulf %673, %672 : vector<2x16xf32>
    %cst_398 = arith.constant 5.000000e-01 : f32
    %675 = vector.broadcast %cst_398 : f32 to vector<2x16xf32>
    %676 = arith.addf %674, %675 : vector<2x16xf32>
    %677 = arith.addf %663, %648 : vector<2x16xf32>
    %cst_399 = arith.constant 5.000000e-01 : f32
    %678 = vector.broadcast %cst_399 : f32 to vector<2x16xf32>
    %679 = arith.mulf %678, %677 : vector<2x16xf32>
    %680 = math.tanh %679 : vector<2x16xf32>
    %cst_400 = arith.constant 5.000000e-01 : f32
    %681 = vector.broadcast %cst_400 : f32 to vector<2x16xf32>
    %682 = arith.mulf %681, %680 : vector<2x16xf32>
    %cst_401 = arith.constant 5.000000e-01 : f32
    %683 = vector.broadcast %cst_401 : f32 to vector<2x16xf32>
    %684 = arith.addf %682, %683 : vector<2x16xf32>
    %685 = arith.mulf %676, %653 : vector<2x16xf32>
    %686 = arith.addf %668, %685 : vector<2x16xf32>
    %687 = math.tanh %686 : vector<2x16xf32>
    %688 = arith.subf %585, %687 : vector<2x16xf32>
    %689 = arith.mulf %684, %688 : vector<2x16xf32>
    %690 = arith.addf %687, %689 : vector<2x16xf32>
    %691 = vector.shape_cast %641 : vector<2x16xf32> to vector<1x2x16xf32>
    %692 = arith.index_cast %c5_i32 : i32 to index
    %c0_402 = arith.constant 0 : index
    %c0_403 = arith.constant 0 : index
    %693 = vector.load %arg12[%692, %c0_402, %c0_403] : memref<8x2x32xf32, #tpu.memory_space<vmem>>, vector<1x2x16xf32>
    tpu.vector_store %arg12[%692, %c0_402, %c0_403], %691 {strides = array<i32>} : memref<8x2x32xf32, #tpu.memory_space<vmem>>, vector<1x2x16xf32>,
    %694 = vector.shape_cast %690 : vector<2x16xf32> to vector<1x2x16xf32>
    %695 = arith.index_cast %592 : i32 to index
    %c0_404 = arith.constant 0 : index
    %c16_405 = arith.constant 16 : index
    %696 = vector.load %arg12[%695, %c0_404, %c16_405] : memref<8x2x32xf32, #tpu.memory_space<vmem>>, vector<1x2x16xf32>
    tpu.vector_store %arg12[%695, %c0_404, %c16_405], %694 {strides = array<i32>} : memref<8x2x32xf32, #tpu.memory_space<vmem>>, vector<1x2x16xf32>,
    %c6_i32 = arith.constant 6 : i32
    %c7_i32_406 = arith.constant 7 : i32
    %697 = arith.subi %c7_i32_406, %c6_i32 : i32
    %698 = arith.truncf %641 : vector<2x16xf32> to vector<2x16xbf16>
    %c0_407 = arith.constant 0 : index
    %c0_408 = arith.constant 0 : index
    %c0_409 = arith.constant 0 : index
    %699 = vector.load %arg3[%c0_407, %c0_408, %c0_409] : memref<6x16x16xbf16, #tpu.memory_space<vmem>>, vector<1x16x16xbf16>
    %700 = vector.shape_cast %699 : vector<1x16x16xbf16> to vector<16x16xbf16>
    %cst_410 = arith.constant dense<0.000000e+00> : vector<2x16xf32>
    %701 = tpu.matmul %698, %700, %cst_410 {dimension_numbers = #tpu.dot_dimension_numbers<[1], [0], [0], [1], [0, 0, 1, 1], [], []>} : vector<2x16xbf16>, vector<16x16xbf16>, vector<2x16xf32> -> vector<2x16xf32>
    %c1_411 = arith.constant 1 : index
    %c0_412 = arith.constant 0 : index
    %c0_413 = arith.constant 0 : index
    %702 = vector.load %arg3[%c1_411, %c0_412, %c0_413] : memref<6x16x16xbf16, #tpu.memory_space<vmem>>, vector<1x16x16xbf16>
    %703 = vector.shape_cast %702 : vector<1x16x16xbf16> to vector<16x16xbf16>
    %cst_414 = arith.constant dense<0.000000e+00> : vector<2x16xf32>
    %704 = tpu.matmul %698, %703, %cst_414 {dimension_numbers = #tpu.dot_dimension_numbers<[1], [0], [0], [1], [0, 0, 1, 1], [], []>} : vector<2x16xbf16>, vector<16x16xbf16>, vector<2x16xf32> -> vector<2x16xf32>
    %c2_415 = arith.constant 2 : index
    %c0_416 = arith.constant 0 : index
    %c0_417 = arith.constant 0 : index
    %705 = vector.load %arg3[%c2_415, %c0_416, %c0_417] : memref<6x16x16xbf16, #tpu.memory_space<vmem>>, vector<1x16x16xbf16>
    %706 = vector.shape_cast %705 : vector<1x16x16xbf16> to vector<16x16xbf16>
    %cst_418 = arith.constant dense<0.000000e+00> : vector<2x16xf32>
    %707 = tpu.matmul %698, %706, %cst_418 {dimension_numbers = #tpu.dot_dimension_numbers<[1], [0], [0], [1], [0, 0, 1, 1], [], []>} : vector<2x16xbf16>, vector<16x16xbf16>, vector<2x16xf32> -> vector<2x16xf32>
    %708 = vector.broadcast %63 : vector<1x16xf32> to vector<2x16xf32>
    %709 = arith.addf %707, %708 : vector<2x16xf32>
    %c0_i32_419 = arith.constant 0 : i32
    %710 = arith.addi %c0_i32_419, %c6_i32 : i32
    %711 = arith.index_cast %710 : i32 to index
    %c0_420 = arith.constant 0 : index
    %c0_421 = arith.constant 0 : index
    %712 = vector.load %arg13[%711, %c0_420, %c0_421] : memref<48x2x16xbf16, #tpu.memory_space<vmem>>, vector<1x2x16xbf16>
    %713 = vector.shape_cast %712 : vector<1x2x16xbf16> to vector<2x16xbf16>
    %714 = arith.extf %713 : vector<2x16xbf16> to vector<2x16xf32>
    %c8_i32_422 = arith.constant 8 : i32
    %715 = arith.addi %c8_i32_422, %c6_i32 : i32
    %716 = arith.index_cast %715 : i32 to index
    %c0_423 = arith.constant 0 : index
    %c0_424 = arith.constant 0 : index
    %717 = vector.load %arg13[%716, %c0_423, %c0_424] : memref<48x2x16xbf16, #tpu.memory_space<vmem>>, vector<1x2x16xbf16>
    %718 = vector.shape_cast %717 : vector<1x2x16xbf16> to vector<2x16xbf16>
    %719 = arith.extf %718 : vector<2x16xbf16> to vector<2x16xf32>
    %c16_i32_425 = arith.constant 16 : i32
    %720 = arith.addi %c16_i32_425, %c6_i32 : i32
    %721 = arith.index_cast %720 : i32 to index
    %c0_426 = arith.constant 0 : index
    %c0_427 = arith.constant 0 : index
    %722 = vector.load %arg13[%721, %c0_426, %c0_427] : memref<48x2x16xbf16, #tpu.memory_space<vmem>>, vector<1x2x16xbf16>
    %723 = vector.shape_cast %722 : vector<1x2x16xbf16> to vector<2x16xbf16>
    %724 = arith.extf %723 : vector<2x16xbf16> to vector<2x16xf32>
    %725 = arith.addf %714, %701 : vector<2x16xf32>
    %cst_428 = arith.constant 5.000000e-01 : f32
    %726 = vector.broadcast %cst_428 : f32 to vector<2x16xf32>
    %727 = arith.mulf %726, %725 : vector<2x16xf32>
    %728 = math.tanh %727 : vector<2x16xf32>
    %cst_429 = arith.constant 5.000000e-01 : f32
    %729 = vector.broadcast %cst_429 : f32 to vector<2x16xf32>
    %730 = arith.mulf %729, %728 : vector<2x16xf32>
    %cst_430 = arith.constant 5.000000e-01 : f32
    %731 = vector.broadcast %cst_430 : f32 to vector<2x16xf32>
    %732 = arith.addf %730, %731 : vector<2x16xf32>
    %733 = arith.addf %719, %704 : vector<2x16xf32>
    %cst_431 = arith.constant 5.000000e-01 : f32
    %734 = vector.broadcast %cst_431 : f32 to vector<2x16xf32>
    %735 = arith.mulf %734, %733 : vector<2x16xf32>
    %736 = math.tanh %735 : vector<2x16xf32>
    %cst_432 = arith.constant 5.000000e-01 : f32
    %737 = vector.broadcast %cst_432 : f32 to vector<2x16xf32>
    %738 = arith.mulf %737, %736 : vector<2x16xf32>
    %cst_433 = arith.constant 5.000000e-01 : f32
    %739 = vector.broadcast %cst_433 : f32 to vector<2x16xf32>
    %740 = arith.addf %738, %739 : vector<2x16xf32>
    %741 = arith.mulf %732, %709 : vector<2x16xf32>
    %742 = arith.addf %724, %741 : vector<2x16xf32>
    %743 = math.tanh %742 : vector<2x16xf32>
    %744 = arith.subf %641, %743 : vector<2x16xf32>
    %745 = arith.mulf %740, %744 : vector<2x16xf32>
    %746 = arith.addf %743, %745 : vector<2x16xf32>
    %747 = arith.truncf %690 : vector<2x16xf32> to vector<2x16xbf16>
    %c3_434 = arith.constant 3 : index
    %c0_435 = arith.constant 0 : index
    %c0_436 = arith.constant 0 : index
    %748 = vector.load %arg3[%c3_434, %c0_435, %c0_436] : memref<6x16x16xbf16, #tpu.memory_space<vmem>>, vector<1x16x16xbf16>
    %749 = vector.shape_cast %748 : vector<1x16x16xbf16> to vector<16x16xbf16>
    %cst_437 = arith.constant dense<0.000000e+00> : vector<2x16xf32>
    %750 = tpu.matmul %747, %749, %cst_437 {dimension_numbers = #tpu.dot_dimension_numbers<[1], [0], [0], [1], [0, 0, 1, 1], [], []>} : vector<2x16xbf16>, vector<16x16xbf16>, vector<2x16xf32> -> vector<2x16xf32>
    %c4_438 = arith.constant 4 : index
    %c0_439 = arith.constant 0 : index
    %c0_440 = arith.constant 0 : index
    %751 = vector.load %arg3[%c4_438, %c0_439, %c0_440] : memref<6x16x16xbf16, #tpu.memory_space<vmem>>, vector<1x16x16xbf16>
    %752 = vector.shape_cast %751 : vector<1x16x16xbf16> to vector<16x16xbf16>
    %cst_441 = arith.constant dense<0.000000e+00> : vector<2x16xf32>
    %753 = tpu.matmul %747, %752, %cst_441 {dimension_numbers = #tpu.dot_dimension_numbers<[1], [0], [0], [1], [0, 0, 1, 1], [], []>} : vector<2x16xbf16>, vector<16x16xbf16>, vector<2x16xf32> -> vector<2x16xf32>
    %c5_442 = arith.constant 5 : index
    %c0_443 = arith.constant 0 : index
    %c0_444 = arith.constant 0 : index
    %754 = vector.load %arg3[%c5_442, %c0_443, %c0_444] : memref<6x16x16xbf16, #tpu.memory_space<vmem>>, vector<1x16x16xbf16>
    %755 = vector.shape_cast %754 : vector<1x16x16xbf16> to vector<16x16xbf16>
    %cst_445 = arith.constant dense<0.000000e+00> : vector<2x16xf32>
    %756 = tpu.matmul %747, %755, %cst_445 {dimension_numbers = #tpu.dot_dimension_numbers<[1], [0], [0], [1], [0, 0, 1, 1], [], []>} : vector<2x16xbf16>, vector<16x16xbf16>, vector<2x16xf32> -> vector<2x16xf32>
    %757 = vector.broadcast %65 : vector<1x16xf32> to vector<2x16xf32>
    %758 = arith.addf %756, %757 : vector<2x16xf32>
    %c24_i32_446 = arith.constant 24 : i32
    %759 = arith.addi %c24_i32_446, %697 : i32
    %760 = arith.index_cast %759 : i32 to index
    %c0_447 = arith.constant 0 : index
    %c0_448 = arith.constant 0 : index
    %761 = vector.load %arg13[%760, %c0_447, %c0_448] : memref<48x2x16xbf16, #tpu.memory_space<vmem>>, vector<1x2x16xbf16>
    %762 = vector.shape_cast %761 : vector<1x2x16xbf16> to vector<2x16xbf16>
    %763 = arith.extf %762 : vector<2x16xbf16> to vector<2x16xf32>
    %c32_i32_449 = arith.constant 32 : i32
    %764 = arith.addi %c32_i32_449, %697 : i32
    %765 = arith.index_cast %764 : i32 to index
    %c0_450 = arith.constant 0 : index
    %c0_451 = arith.constant 0 : index
    %766 = vector.load %arg13[%765, %c0_450, %c0_451] : memref<48x2x16xbf16, #tpu.memory_space<vmem>>, vector<1x2x16xbf16>
    %767 = vector.shape_cast %766 : vector<1x2x16xbf16> to vector<2x16xbf16>
    %768 = arith.extf %767 : vector<2x16xbf16> to vector<2x16xf32>
    %c40_i32_452 = arith.constant 40 : i32
    %769 = arith.addi %c40_i32_452, %697 : i32
    %770 = arith.index_cast %769 : i32 to index
    %c0_453 = arith.constant 0 : index
    %c0_454 = arith.constant 0 : index
    %771 = vector.load %arg13[%770, %c0_453, %c0_454] : memref<48x2x16xbf16, #tpu.memory_space<vmem>>, vector<1x2x16xbf16>
    %772 = vector.shape_cast %771 : vector<1x2x16xbf16> to vector<2x16xbf16>
    %773 = arith.extf %772 : vector<2x16xbf16> to vector<2x16xf32>
    %774 = arith.addf %763, %750 : vector<2x16xf32>
    %cst_455 = arith.constant 5.000000e-01 : f32
    %775 = vector.broadcast %cst_455 : f32 to vector<2x16xf32>
    %776 = arith.mulf %775, %774 : vector<2x16xf32>
    %777 = math.tanh %776 : vector<2x16xf32>
    %cst_456 = arith.constant 5.000000e-01 : f32
    %778 = vector.broadcast %cst_456 : f32 to vector<2x16xf32>
    %779 = arith.mulf %778, %777 : vector<2x16xf32>
    %cst_457 = arith.constant 5.000000e-01 : f32
    %780 = vector.broadcast %cst_457 : f32 to vector<2x16xf32>
    %781 = arith.addf %779, %780 : vector<2x16xf32>
    %782 = arith.addf %768, %753 : vector<2x16xf32>
    %cst_458 = arith.constant 5.000000e-01 : f32
    %783 = vector.broadcast %cst_458 : f32 to vector<2x16xf32>
    %784 = arith.mulf %783, %782 : vector<2x16xf32>
    %785 = math.tanh %784 : vector<2x16xf32>
    %cst_459 = arith.constant 5.000000e-01 : f32
    %786 = vector.broadcast %cst_459 : f32 to vector<2x16xf32>
    %787 = arith.mulf %786, %785 : vector<2x16xf32>
    %cst_460 = arith.constant 5.000000e-01 : f32
    %788 = vector.broadcast %cst_460 : f32 to vector<2x16xf32>
    %789 = arith.addf %787, %788 : vector<2x16xf32>
    %790 = arith.mulf %781, %758 : vector<2x16xf32>
    %791 = arith.addf %773, %790 : vector<2x16xf32>
    %792 = math.tanh %791 : vector<2x16xf32>
    %793 = arith.subf %690, %792 : vector<2x16xf32>
    %794 = arith.mulf %789, %793 : vector<2x16xf32>
    %795 = arith.addf %792, %794 : vector<2x16xf32>
    %796 = vector.shape_cast %746 : vector<2x16xf32> to vector<1x2x16xf32>
    %797 = arith.index_cast %c6_i32 : i32 to index
    %c0_461 = arith.constant 0 : index
    %c0_462 = arith.constant 0 : index
    %798 = vector.load %arg12[%797, %c0_461, %c0_462] : memref<8x2x32xf32, #tpu.memory_space<vmem>>, vector<1x2x16xf32>
    tpu.vector_store %arg12[%797, %c0_461, %c0_462], %796 {strides = array<i32>} : memref<8x2x32xf32, #tpu.memory_space<vmem>>, vector<1x2x16xf32>,
    %799 = vector.shape_cast %795 : vector<2x16xf32> to vector<1x2x16xf32>
    %800 = arith.index_cast %697 : i32 to index
    %c0_463 = arith.constant 0 : index
    %c16_464 = arith.constant 16 : index
    %801 = vector.load %arg12[%800, %c0_463, %c16_464] : memref<8x2x32xf32, #tpu.memory_space<vmem>>, vector<1x2x16xf32>
    tpu.vector_store %arg12[%800, %c0_463, %c16_464], %799 {strides = array<i32>} : memref<8x2x32xf32, #tpu.memory_space<vmem>>, vector<1x2x16xf32>,
    %c7_i32_465 = arith.constant 7 : i32
    %c7_i32_466 = arith.constant 7 : i32
    %802 = arith.subi %c7_i32_466, %c7_i32_465 : i32
    %803 = arith.truncf %746 : vector<2x16xf32> to vector<2x16xbf16>
    %c0_467 = arith.constant 0 : index
    %c0_468 = arith.constant 0 : index
    %c0_469 = arith.constant 0 : index
    %804 = vector.load %arg3[%c0_467, %c0_468, %c0_469] : memref<6x16x16xbf16, #tpu.memory_space<vmem>>, vector<1x16x16xbf16>
    %805 = vector.shape_cast %804 : vector<1x16x16xbf16> to vector<16x16xbf16>
    %cst_470 = arith.constant dense<0.000000e+00> : vector<2x16xf32>
    %806 = tpu.matmul %803, %805, %cst_470 {dimension_numbers = #tpu.dot_dimension_numbers<[1], [0], [0], [1], [0, 0, 1, 1], [], []>} : vector<2x16xbf16>, vector<16x16xbf16>, vector<2x16xf32> -> vector<2x16xf32>
    %c1_471 = arith.constant 1 : index
    %c0_472 = arith.constant 0 : index
    %c0_473 = arith.constant 0 : index
    %807 = vector.load %arg3[%c1_471, %c0_472, %c0_473] : memref<6x16x16xbf16, #tpu.memory_space<vmem>>, vector<1x16x16xbf16>
    %808 = vector.shape_cast %807 : vector<1x16x16xbf16> to vector<16x16xbf16>
    %cst_474 = arith.constant dense<0.000000e+00> : vector<2x16xf32>
    %809 = tpu.matmul %803, %808, %cst_474 {dimension_numbers = #tpu.dot_dimension_numbers<[1], [0], [0], [1], [0, 0, 1, 1], [], []>} : vector<2x16xbf16>, vector<16x16xbf16>, vector<2x16xf32> -> vector<2x16xf32>
    %c2_475 = arith.constant 2 : index
    %c0_476 = arith.constant 0 : index
    %c0_477 = arith.constant 0 : index
    %810 = vector.load %arg3[%c2_475, %c0_476, %c0_477] : memref<6x16x16xbf16, #tpu.memory_space<vmem>>, vector<1x16x16xbf16>
    %811 = vector.shape_cast %810 : vector<1x16x16xbf16> to vector<16x16xbf16>
    %cst_478 = arith.constant dense<0.000000e+00> : vector<2x16xf32>
    %812 = tpu.matmul %803, %811, %cst_478 {dimension_numbers = #tpu.dot_dimension_numbers<[1], [0], [0], [1], [0, 0, 1, 1], [], []>} : vector<2x16xbf16>, vector<16x16xbf16>, vector<2x16xf32> -> vector<2x16xf32>
    %813 = vector.broadcast %63 : vector<1x16xf32> to vector<2x16xf32>
    %814 = arith.addf %812, %813 : vector<2x16xf32>
    %c0_i32_479 = arith.constant 0 : i32
    %815 = arith.addi %c0_i32_479, %c7_i32_465 : i32
    %816 = arith.index_cast %815 : i32 to index
    %c0_480 = arith.constant 0 : index
    %c0_481 = arith.constant 0 : index
    %817 = vector.load %arg13[%816, %c0_480, %c0_481] : memref<48x2x16xbf16, #tpu.memory_space<vmem>>, vector<1x2x16xbf16>
    %818 = vector.shape_cast %817 : vector<1x2x16xbf16> to vector<2x16xbf16>
    %819 = arith.extf %818 : vector<2x16xbf16> to vector<2x16xf32>
    %c8_i32_482 = arith.constant 8 : i32
    %820 = arith.addi %c8_i32_482, %c7_i32_465 : i32
    %821 = arith.index_cast %820 : i32 to index
    %c0_483 = arith.constant 0 : index
    %c0_484 = arith.constant 0 : index
    %822 = vector.load %arg13[%821, %c0_483, %c0_484] : memref<48x2x16xbf16, #tpu.memory_space<vmem>>, vector<1x2x16xbf16>
    %823 = vector.shape_cast %822 : vector<1x2x16xbf16> to vector<2x16xbf16>
    %824 = arith.extf %823 : vector<2x16xbf16> to vector<2x16xf32>
    %c16_i32_485 = arith.constant 16 : i32
    %825 = arith.addi %c16_i32_485, %c7_i32_465 : i32
    %826 = arith.index_cast %825 : i32 to index
    %c0_486 = arith.constant 0 : index
    %c0_487 = arith.constant 0 : index
    %827 = vector.load %arg13[%826, %c0_486, %c0_487] : memref<48x2x16xbf16, #tpu.memory_space<vmem>>, vector<1x2x16xbf16>
    %828 = vector.shape_cast %827 : vector<1x2x16xbf16> to vector<2x16xbf16>
    %829 = arith.extf %828 : vector<2x16xbf16> to vector<2x16xf32>
    %830 = arith.addf %819, %806 : vector<2x16xf32>
    %cst_488 = arith.constant 5.000000e-01 : f32
    %831 = vector.broadcast %cst_488 : f32 to vector<2x16xf32>
    %832 = arith.mulf %831, %830 : vector<2x16xf32>
    %833 = math.tanh %832 : vector<2x16xf32>
    %cst_489 = arith.constant 5.000000e-01 : f32
    %834 = vector.broadcast %cst_489 : f32 to vector<2x16xf32>
    %835 = arith.mulf %834, %833 : vector<2x16xf32>
    %cst_490 = arith.constant 5.000000e-01 : f32
    %836 = vector.broadcast %cst_490 : f32 to vector<2x16xf32>
    %837 = arith.addf %835, %836 : vector<2x16xf32>
    %838 = arith.addf %824, %809 : vector<2x16xf32>
    %cst_491 = arith.constant 5.000000e-01 : f32
    %839 = vector.broadcast %cst_491 : f32 to vector<2x16xf32>
    %840 = arith.mulf %839, %838 : vector<2x16xf32>
    %841 = math.tanh %840 : vector<2x16xf32>
    %cst_492 = arith.constant 5.000000e-01 : f32
    %842 = vector.broadcast %cst_492 : f32 to vector<2x16xf32>
    %843 = arith.mulf %842, %841 : vector<2x16xf32>
    %cst_493 = arith.constant 5.000000e-01 : f32
    %844 = vector.broadcast %cst_493 : f32 to vector<2x16xf32>
    %845 = arith.addf %843, %844 : vector<2x16xf32>
    %846 = arith.mulf %837, %814 : vector<2x16xf32>
    %847 = arith.addf %829, %846 : vector<2x16xf32>
    %848 = math.tanh %847 : vector<2x16xf32>
    %849 = arith.subf %746, %848 : vector<2x16xf32>
    %850 = arith.mulf %845, %849 : vector<2x16xf32>
    %851 = arith.addf %848, %850 : vector<2x16xf32>
    %852 = arith.truncf %795 : vector<2x16xf32> to vector<2x16xbf16>
    %c3_494 = arith.constant 3 : index
    %c0_495 = arith.constant 0 : index
    %c0_496 = arith.constant 0 : index
    %853 = vector.load %arg3[%c3_494, %c0_495, %c0_496] : memref<6x16x16xbf16, #tpu.memory_space<vmem>>, vector<1x16x16xbf16>
    %854 = vector.shape_cast %853 : vector<1x16x16xbf16> to vector<16x16xbf16>
    %cst_497 = arith.constant dense<0.000000e+00> : vector<2x16xf32>
    %855 = tpu.matmul %852, %854, %cst_497 {dimension_numbers = #tpu.dot_dimension_numbers<[1], [0], [0], [1], [0, 0, 1, 1], [], []>} : vector<2x16xbf16>, vector<16x16xbf16>, vector<2x16xf32> -> vector<2x16xf32>
    %c4_498 = arith.constant 4 : index
    %c0_499 = arith.constant 0 : index
    %c0_500 = arith.constant 0 : index
    %856 = vector.load %arg3[%c4_498, %c0_499, %c0_500] : memref<6x16x16xbf16, #tpu.memory_space<vmem>>, vector<1x16x16xbf16>
    %857 = vector.shape_cast %856 : vector<1x16x16xbf16> to vector<16x16xbf16>
    %cst_501 = arith.constant dense<0.000000e+00> : vector<2x16xf32>
    %858 = tpu.matmul %852, %857, %cst_501 {dimension_numbers = #tpu.dot_dimension_numbers<[1], [0], [0], [1], [0, 0, 1, 1], [], []>} : vector<2x16xbf16>, vector<16x16xbf16>, vector<2x16xf32> -> vector<2x16xf32>
    %c5_502 = arith.constant 5 : index
    %c0_503 = arith.constant 0 : index
    %c0_504 = arith.constant 0 : index
    %859 = vector.load %arg3[%c5_502, %c0_503, %c0_504] : memref<6x16x16xbf16, #tpu.memory_space<vmem>>, vector<1x16x16xbf16>
    %860 = vector.shape_cast %859 : vector<1x16x16xbf16> to vector<16x16xbf16>
    %cst_505 = arith.constant dense<0.000000e+00> : vector<2x16xf32>
    %861 = tpu.matmul %852, %860, %cst_505 {dimension_numbers = #tpu.dot_dimension_numbers<[1], [0], [0], [1], [0, 0, 1, 1], [], []>} : vector<2x16xbf16>, vector<16x16xbf16>, vector<2x16xf32> -> vector<2x16xf32>
    %862 = vector.broadcast %65 : vector<1x16xf32> to vector<2x16xf32>
    %863 = arith.addf %861, %862 : vector<2x16xf32>
    %c24_i32_506 = arith.constant 24 : i32
    %864 = arith.addi %c24_i32_506, %802 : i32
    %865 = arith.index_cast %864 : i32 to index
    %c0_507 = arith.constant 0 : index
    %c0_508 = arith.constant 0 : index
    %866 = vector.load %arg13[%865, %c0_507, %c0_508] : memref<48x2x16xbf16, #tpu.memory_space<vmem>>, vector<1x2x16xbf16>
    %867 = vector.shape_cast %866 : vector<1x2x16xbf16> to vector<2x16xbf16>
    %868 = arith.extf %867 : vector<2x16xbf16> to vector<2x16xf32>
    %c32_i32_509 = arith.constant 32 : i32
    %869 = arith.addi %c32_i32_509, %802 : i32
    %870 = arith.index_cast %869 : i32 to index
    %c0_510 = arith.constant 0 : index
    %c0_511 = arith.constant 0 : index
    %871 = vector.load %arg13[%870, %c0_510, %c0_511] : memref<48x2x16xbf16, #tpu.memory_space<vmem>>, vector<1x2x16xbf16>
    %872 = vector.shape_cast %871 : vector<1x2x16xbf16> to vector<2x16xbf16>
    %873 = arith.extf %872 : vector<2x16xbf16> to vector<2x16xf32>
    %c40_i32_512 = arith.constant 40 : i32
    %874 = arith.addi %c40_i32_512, %802 : i32
    %875 = arith.index_cast %874 : i32 to index
    %c0_513 = arith.constant 0 : index
    %c0_514 = arith.constant 0 : index
    %876 = vector.load %arg13[%875, %c0_513, %c0_514] : memref<48x2x16xbf16, #tpu.memory_space<vmem>>, vector<1x2x16xbf16>
    %877 = vector.shape_cast %876 : vector<1x2x16xbf16> to vector<2x16xbf16>
    %878 = arith.extf %877 : vector<2x16xbf16> to vector<2x16xf32>
    %879 = arith.addf %868, %855 : vector<2x16xf32>
    %cst_515 = arith.constant 5.000000e-01 : f32
    %880 = vector.broadcast %cst_515 : f32 to vector<2x16xf32>
    %881 = arith.mulf %880, %879 : vector<2x16xf32>
    %882 = math.tanh %881 : vector<2x16xf32>
    %cst_516 = arith.constant 5.000000e-01 : f32
    %883 = vector.broadcast %cst_516 : f32 to vector<2x16xf32>
    %884 = arith.mulf %883, %882 : vector<2x16xf32>
    %cst_517 = arith.constant 5.000000e-01 : f32
    %885 = vector.broadcast %cst_517 : f32 to vector<2x16xf32>
    %886 = arith.addf %884, %885 : vector<2x16xf32>
    %887 = arith.addf %873, %858 : vector<2x16xf32>
    %cst_518 = arith.constant 5.000000e-01 : f32
    %888 = vector.broadcast %cst_518 : f32 to vector<2x16xf32>
    %889 = arith.mulf %888, %887 : vector<2x16xf32>
    %890 = math.tanh %889 : vector<2x16xf32>
    %cst_519 = arith.constant 5.000000e-01 : f32
    %891 = vector.broadcast %cst_519 : f32 to vector<2x16xf32>
    %892 = arith.mulf %891, %890 : vector<2x16xf32>
    %cst_520 = arith.constant 5.000000e-01 : f32
    %893 = vector.broadcast %cst_520 : f32 to vector<2x16xf32>
    %894 = arith.addf %892, %893 : vector<2x16xf32>
    %895 = arith.mulf %886, %863 : vector<2x16xf32>
    %896 = arith.addf %878, %895 : vector<2x16xf32>
    %897 = math.tanh %896 : vector<2x16xf32>
    %898 = arith.subf %795, %897 : vector<2x16xf32>
    %899 = arith.mulf %894, %898 : vector<2x16xf32>
    %900 = arith.addf %897, %899 : vector<2x16xf32>
    %901 = vector.shape_cast %851 : vector<2x16xf32> to vector<1x2x16xf32>
    %902 = arith.index_cast %c7_i32_465 : i32 to index
    %c0_521 = arith.constant 0 : index
    %c0_522 = arith.constant 0 : index
    %903 = vector.load %arg12[%902, %c0_521, %c0_522] : memref<8x2x32xf32, #tpu.memory_space<vmem>>, vector<1x2x16xf32>
    tpu.vector_store %arg12[%902, %c0_521, %c0_522], %901 {strides = array<i32>} : memref<8x2x32xf32, #tpu.memory_space<vmem>>, vector<1x2x16xf32>,
    %904 = vector.shape_cast %900 : vector<2x16xf32> to vector<1x2x16xf32>
    %905 = arith.index_cast %802 : i32 to index
    %c0_523 = arith.constant 0 : index
    %c16_524 = arith.constant 16 : index
    %906 = vector.load %arg12[%905, %c0_523, %c16_524] : memref<8x2x32xf32, #tpu.memory_space<vmem>>, vector<1x2x16xf32>
    tpu.vector_store %arg12[%905, %c0_523, %c16_524], %904 {strides = array<i32>} : memref<8x2x32xf32, #tpu.memory_space<vmem>>, vector<1x2x16xf32>,
    %c8_i32_525 = arith.constant 8 : i32
    %c0_526 = arith.constant 0 : index
    %c0_527 = arith.constant 0 : index
    %c0_528 = arith.constant 0 : index
    %907 = vector.load %arg12[%c0_526, %c0_527, %c0_528] : memref<8x2x32xf32, #tpu.memory_space<vmem>>, vector<8x2x32xf32>
    %cst_529 = arith.constant 0.000000e+00 : f32
    %908 = vector.broadcast %cst_529 : f32 to vector<8x2x32xf32>
    %909 = arith.maximumf %907, %908 : vector<8x2x32xf32>
    %910 = vector.shape_cast %909 : vector<8x2x32xf32> to vector<16x32xf32>
    %911 = arith.truncf %910 : vector<16x32xf32> to vector<16x32xbf16>
    %c0_530 = arith.constant 0 : index
    %c0_531 = arith.constant 0 : index
    %912 = vector.load %arg6[%c0_530, %c0_531] : memref<32x16xbf16, #tpu.memory_space<vmem>>, vector<32x16xbf16>
    %cst_532 = arith.constant dense<0.000000e+00> : vector<16x16xf32>
    %913 = tpu.matmul %911, %912, %cst_532 {dimension_numbers = #tpu.dot_dimension_numbers<[1], [0], [0], [1], [0, 0, 1, 1], [], []>} : vector<16x32xbf16>, vector<32x16xbf16>, vector<16x16xf32> -> vector<16x16xf32>
    %c0_533 = arith.constant 0 : index
    %c0_534 = arith.constant 0 : index
    %914 = vector.load %arg7[%c0_533, %c0_534] : memref<1x16xf32, #tpu.memory_space<vmem>>, vector<1x16xf32>
    %915 = vector.broadcast %914 : vector<1x16xf32> to vector<16x16xf32>
    %916 = arith.addf %913, %915 : vector<16x16xf32>
    %cst_535 = arith.constant 0.000000e+00 : f32
    %917 = vector.broadcast %cst_535 : f32 to vector<16x16xf32>
    %918 = arith.maximumf %916, %917 : vector<16x16xf32>
    %919 = vector.shape_cast %918 : vector<16x16xf32> to vector<8x2x16xf32>
    %c0_536 = arith.constant 0 : index
    %c0_537 = arith.constant 0 : index
    %920 = vector.load %arg8[%c0_536, %c0_537] : memref<1x16xf32, #tpu.memory_space<vmem>>, vector<1x16xf32>
    %921 = vector.shape_cast %920 : vector<1x16xf32> to vector<1x1x16xf32>
    %922 = vector.broadcast %921 : vector<1x1x16xf32> to vector<8x2x16xf32>
    %923 = arith.mulf %919, %922 : vector<8x2x16xf32>
    %cst_538 = arith.constant dense<0.000000e+00> : vector<8x2xf32>
    %924 = vector.multi_reduction <add>, %923, %cst_538 [2] : vector<8x2x16xf32> to vector<8x2xf32>
    %925 = vector.shape_cast %924 : vector<8x2xf32> to vector<8x2x1xf32>
    %cst_539 = arith.constant dense<0xFF800000> : vector<2x1xf32>
    %926 = vector.multi_reduction <maximumf>, %925, %cst_539 [0] : vector<8x2x1xf32> to vector<2x1xf32>
    %927 = vector.shape_cast %926 : vector<2x1xf32> to vector<1x2x1xf32>
    %928 = vector.broadcast %927 : vector<1x2x1xf32> to vector<8x2x1xf32>
    %929 = arith.subf %925, %928 : vector<8x2x1xf32>
    %930 = math.exp %929 : vector<8x2x1xf32>
    %cst_540 = arith.constant dense<0.000000e+00> : vector<2x1xf32>
    %931 = vector.multi_reduction <add>, %930, %cst_540 [0] : vector<8x2x1xf32> to vector<2x1xf32>
    %932 = vector.shape_cast %931 : vector<2x1xf32> to vector<1x2x1xf32>
    %933 = vector.broadcast %932 : vector<1x2x1xf32> to vector<8x2x1xf32>
    %934 = arith.divf %930, %933 : vector<8x2x1xf32>
    %935 = vector.broadcast %934 : vector<8x2x1xf32> to vector<8x2x32xf32>
    %936 = arith.mulf %907, %935 : vector<8x2x32xf32>
    %cst_541 = arith.constant dense<0.000000e+00> : vector<2x32xf32>
    %937 = vector.multi_reduction <add>, %936, %cst_541 [0] : vector<8x2x32xf32> to vector<2x32xf32>
    %c0_542 = arith.constant 0 : index
    %c0_543 = arith.constant 0 : index
    %938 = vector.load %arg9[%c0_542, %c0_543] : memref<1x32xf32, #tpu.memory_space<vmem>>, vector<1x32xf32>
    %939 = vector.broadcast %938 : vector<1x32xf32> to vector<2x32xf32>
    %940 = arith.mulf %937, %939 : vector<2x32xf32>
    %cst_544 = arith.constant dense<0.000000e+00> : vector<2xf32>
    %941 = vector.multi_reduction <add>, %940, %cst_544 [1] : vector<2x32xf32> to vector<2xf32>
    %942 = vector.shape_cast %941 : vector<2xf32> to vector<2x1xf32>
    %c0_545 = arith.constant 0 : index
    %c0_546 = arith.constant 0 : index
    %943 = vector.load %arg10[%c0_545, %c0_546] : memref<1x1xf32, #tpu.memory_space<vmem>>, vector<1x1xf32>
    %944 = vector.broadcast %943 : vector<1x1xf32> to vector<2x1xf32>
    %945 = arith.addf %942, %944 : vector<2x1xf32>
    %cst_547 = arith.constant 0.000000e+00 : f32
    %946 = vector.broadcast %cst_547 : f32 to vector<2x1xf32>
    %947 = arith.subf %946, %945 : vector<2x1xf32>
    %948 = math.exp %947 : vector<2x1xf32>
    %cst_548 = arith.constant 1.000000e+00 : f32
    %949 = vector.broadcast %cst_548 : f32 to vector<2x1xf32>
    %950 = arith.addf %949, %948 : vector<2x1xf32>
    %cst_549 = arith.constant 1.000000e+00 : f32
    %951 = vector.broadcast %cst_549 : f32 to vector<2x1xf32>
    %952 = arith.divf %951, %950 : vector<2x1xf32>
    %c0_550 = arith.constant 0 : index
    %c0_551 = arith.constant 0 : index
    %953 = vector.load %arg11[%c0_550, %c0_551] : memref<2x1xf32, #tpu.memory_space<vmem>>, vector<2x1xf32>
    tpu.vector_store %arg11[%c0_550, %c0_551], %952 {strides = array<i32>} : memref<2x1xf32, #tpu.memory_space<vmem>>, vector<2x1xf32>,
    return
  }
  func.func @transform_0(%arg0: i32) -> (i32, i32, i32) {
    %c0_i32 = arith.constant 0 : i32
    %c0_i32_0 = arith.constant 0 : i32
    %c0_i32_1 = arith.constant 0 : i32
    return %c0_i32, %arg0, %c0_i32_0 : i32, i32, i32
  }
  func.func @transform_1(%arg0: i32) -> (i32, i32, i32) {
    %c0_i32 = arith.constant 0 : i32
    %c0_i32_0 = arith.constant 0 : i32
    %c0_i32_1 = arith.constant 0 : i32
    %c0_i32_2 = arith.constant 0 : i32
    return %c0_i32, %c0_i32_0, %c0_i32_1 : i32, i32, i32
  }
  func.func @transform_2(%arg0: i32) -> (i32, i32, i32) {
    %c0_i32 = arith.constant 0 : i32
    %c0_i32_0 = arith.constant 0 : i32
    %c0_i32_1 = arith.constant 0 : i32
    %c0_i32_2 = arith.constant 0 : i32
    return %c0_i32, %c0_i32_0, %c0_i32_1 : i32, i32, i32
  }
  func.func @transform_3(%arg0: i32) -> (i32, i32, i32) {
    %c0_i32 = arith.constant 0 : i32
    %c0_i32_0 = arith.constant 0 : i32
    %c0_i32_1 = arith.constant 0 : i32
    %c0_i32_2 = arith.constant 0 : i32
    return %c0_i32, %c0_i32_0, %c0_i32_1 : i32, i32, i32
  }
  func.func @transform_4(%arg0: i32) -> (i32, i32, i32) {
    %c0_i32 = arith.constant 0 : i32
    %c0_i32_0 = arith.constant 0 : i32
    %c0_i32_1 = arith.constant 0 : i32
    %c0_i32_2 = arith.constant 0 : i32
    return %c0_i32, %c0_i32_0, %c0_i32_1 : i32, i32, i32
  }
  func.func @transform_5(%arg0: i32) -> (i32, i32) {
    %c0_i32 = arith.constant 0 : i32
    %c0_i32_0 = arith.constant 0 : i32
    %c0_i32_1 = arith.constant 0 : i32
    return %c0_i32, %c0_i32_0 : i32, i32
  }
  func.func @transform_6(%arg0: i32) -> (i32, i32) {
    %c0_i32 = arith.constant 0 : i32
    %c0_i32_0 = arith.constant 0 : i32
    %c0_i32_1 = arith.constant 0 : i32
    return %c0_i32, %c0_i32_0 : i32, i32
  }
  func.func @transform_7(%arg0: i32) -> (i32, i32) {
    %c0_i32 = arith.constant 0 : i32
    %c0_i32_0 = arith.constant 0 : i32
    %c0_i32_1 = arith.constant 0 : i32
    return %c0_i32, %c0_i32_0 : i32, i32
  }
  func.func @transform_8(%arg0: i32) -> (i32, i32) {
    %c0_i32 = arith.constant 0 : i32
    %c0_i32_0 = arith.constant 0 : i32
    %c0_i32_1 = arith.constant 0 : i32
    return %c0_i32, %c0_i32_0 : i32, i32
  }
  func.func @transform_9(%arg0: i32) -> (i32, i32) {
    %c0_i32 = arith.constant 0 : i32
    %c0_i32_0 = arith.constant 0 : i32
    %c0_i32_1 = arith.constant 0 : i32
    return %c0_i32, %c0_i32_0 : i32, i32
  }
  func.func @transform_10(%arg0: i32) -> (i32, i32) {
    %c0_i32 = arith.constant 0 : i32
    %c0_i32_0 = arith.constant 0 : i32
    return %arg0, %c0_i32 : i32, i32
  }
}

</mosaic_0001>

<llo_original>
// kernel: mortality_pred_gru_forward.2
$region0: #{mortality_pred_gru_forward.2}
  #allocation0 [shape = 'u32[]', space=smem, size = 0x4, offset = 0x4, fixed_abs, tag = 'smem constant byte address 0x4 - core index']
  #allocation1 [shape = 'u32[72,128]{1,0:T(1,128)}', space=vmem, size = 0x9000, scoped, tag = 'internal scratch']
  #allocation2 [shape = 'bf16[48,2,16]{2,1,0:T(2,128)(2,1)}', space=vmem, size = 0x6000, scoped, tag = 'scratch operand']
  %s0 = inlined_call_operand.vmem [shape: bf16[8,2,20], index: 0, kind: input, shape index: {}]
  %s1 = inlined_call_operand.vmem [shape: bf16[6,20,16], index: 1, kind: input, shape index: {}]
  %s2 = inlined_call_operand.vmem [shape: bf16[6,16,16], index: 2, kind: input, shape index: {}]
  %s3 = inlined_call_operand.vmem [shape: f32[6,1,16], index: 3, kind: input, shape index: {}]
  %s4 = inlined_call_operand.vmem [shape: f32[2,1,16], index: 4, kind: input, shape index: {}]
  %s5 = inlined_call_operand.vmem [shape: bf16[8,2,32], index: 5, kind: output, shape index: {}]
  %s6 = sld [smem:[#allocation0]]
  $region30: #{mortality_pred_gru_forward.2} parent=0
    _
  %s8 = ssub.s32 1, %s6
  %s9 = scalar_select 0, %s8, %s6
  // Predicated region
  $region2: #{mortality_pred_gru_forward.2} parent=0 // pred_check
    _
  $region3: #{mortality_pred_gru_forward.2} parent=0 // pred_check_branch
    %11 = sbr.rel (0) target = $region5
  $region4: #{mortality_pred_gru_forward.2} parent=0 // pred_region
    _
  $region5: #{mortality_pred_gru_forward.2} parent=0 // pred_fallthru
    _
  // Predicated region
  $region6: #{mortality_pred_gru_forward.2} parent=0 // pred_check
    _
  $region7: #{mortality_pred_gru_forward.2} parent=0 // pred_check_branch
    %13 = sbr.rel (0) target = $region9
  $region8: #{mortality_pred_gru_forward.2} parent=0 // pred_region
    _
  $region9: #{mortality_pred_gru_forward.2} parent=0 // pred_fallthru
    _
  // Predicated region
  $region10: #{mortality_pred_gru_forward.2} parent=0 // pred_check
    _
  $region11: #{mortality_pred_gru_forward.2} parent=0 // pred_check_branch
    %15 = sbr.rel (0) target = $region13
  $region12: #{mortality_pred_gru_forward.2} parent=0 // pred_region
    _
  $region13: #{mortality_pred_gru_forward.2} parent=0 // pred_fallthru
    _
  // Predicated region
  $region14: #{mortality_pred_gru_forward.2} parent=0 // pred_check
    _
  $region15: #{mortality_pred_gru_forward.2} parent=0 // pred_check_branch
    %17 = sbr.rel (0) target = $region17
  $region16: #{mortality_pred_gru_forward.2} parent=0 // pred_region
    _
  $region17: #{mortality_pred_gru_forward.2} parent=0 // pred_fallthru
    _
  // Predicated region
  $region18: #{mortality_pred_gru_forward.2} parent=0 // pred_check
    _
  $region19: #{mortality_pred_gru_forward.2} parent=0 // pred_check_branch
    %19 = sbr.rel (0) target = $region21
  $region20: #{mortality_pred_gru_forward.2} parent=0 // pred_region
    _
  $region21: #{mortality_pred_gru_forward.2} parent=0 // pred_fallthru
    _
  %v21 = vld [vmem:[%s0] sm:$0x1]
  %v22 = vld [vmem:[%s0 + $0x1] sm:$0x1]
  %v23 = vld [vmem:[%s0 + $0x2] sm:$0x1]
  %v24 = vld [vmem:[%s0 + $0x3] sm:$0x1]
  %v25 = vld [vmem:[%s0 + $0x4] sm:$0x1]
  %v26 = vld [vmem:[%s0 + $0x5] sm:$0x1]
  %v27 = vld [vmem:[%s0 + $0x6] sm:$0x1]
  %v28 = vld [vmem:[%s0 + $0x7] sm:$0x1]
  %v29 = vld [vmem:[%s1] sm:$0xf]
  %v30 = vld [vmem:[%s1 + $0x4] sm:$0xf]
  %v31 = vld [vmem:[%s1 + $0x8] sm:$0x3]
  %v32 = vld [vmem:[%s3] sm:$0x1]
  %v34 = vperm.slane %v32, 0
  %37 = vst [vmem:[#allocation1] ss:$9 sm:$0xff] %v21
  %s39 = scalar_lea.vmem [#allocation1], 1
  %40 = vst [vmem:[%s39] ss:$9 sm:$0xff] %v22
  %s42 = scalar_lea.vmem [#allocation1], 2
  %43 = vst [vmem:[%s42] ss:$9 sm:$0xff] %v23
  %s45 = scalar_lea.vmem [#allocation1], 3
  %46 = vst [vmem:[%s45] ss:$9 sm:$0xff] %v24
  %s48 = scalar_lea.vmem [#allocation1], 4
  %49 = vst [vmem:[%s48] ss:$9 sm:$0xff] %v25
  %s51 = scalar_lea.vmem [#allocation1], 5
  %52 = vst [vmem:[%s51] ss:$9 sm:$0xff] %v26
  %s54 = scalar_lea.vmem [#allocation1], 6
  %55 = vst [vmem:[%s54] ss:$9 sm:$0xff] %v27
  %s57 = scalar_lea.vmem [#allocation1], 7
  %58 = vst [vmem:[%s57] ss:$9 sm:$0xff] %v28
  %v59 = vld [vmem:[#allocation1] sm:$0xff]
  %v63 = vunpack.c.l.b16 %v29
  %v64 = vunpack.c.l.b16 %v30
  %v65 = vunpack.c.l.b16 %v31
  %v66 = vpack.c.b16 %v64, %v63
  %v67 = vpack.c.b16 %v65, %v65
  %vm69 = vcmask 162816
  %v70 = vsel %vm69, %v59, 0
  %vm72 = vcmask 1041408
  %v74 = vsel %vm72, %v67, 0
  %76 = vmatpush.bf16.msra.mxu0 0
  %77 = vmatpush.bf16.msra.mxu0 0
  %78 = vmatpush.bf16.msra.mxu0 0
  %79 = vmatpush.bf16.msra.mxu0 0
  %80 = vmatpush.bf16.msra.mxu0 0
  %81 = vmatpush.bf16.msra.mxu0 0
  %82 = vmatpush.bf16.msra.mxu0 %v74
  %83 = vmatpush.bf16.msra.mxu0 %v66
  %84 = vmatmul.bf16.gmra.mxu0 %v70
  %v85 = vpop.f32.mrf.mxu0
  %v86 = vadd.f32 %v34, %v85
  %v87 = vpop.f32.mrf.mxu0
  %v88 = vadd.f32 %v34, %v87
  %89 = vdwg.mxu0
  %v90 = vpack.c.bf16 %v86, %v86
  %v91 = vpack.c.bf16 %v88, %v88
  %v94 = vrot.slane %v90, 3
  %v95 = vrot.slane %v91, 3
  %vm96 = vcmask 1040384
  %v99 = vsel %vm96, %v90, %v94
  %vm100 = vcmask 1041409
  %v101 = vsel %vm100, %v90, %v94
  %v103 = vrot.slane %v101, 1
  %vm104 = vcmask 1042434
  %v105 = vsel %vm104, %v90, %v94
  %v107 = vrot.slane %v105, 2
  %vm108 = vcmask 1043459
  %v109 = vsel %vm108, %v90, %v94
  %v111 = vrot.slane %v109, 3
  %v114 = vsel %vm96, %v91, %v95
  %v115 = vsel %vm100, %v91, %v95
  %v117 = vrot.slane %v115, 1
  %v118 = vsel %vm104, %v91, %v95
  %v120 = vrot.slane %v118, 2
  %v121 = vsel %vm108, %v91, %v95
  %v123 = vrot.slane %v121, 3
  %vm132 = vcmask 122880
  %133 = vst.msk [vmem:[#allocation2] sm:$0x1] %vm132, %v99
  %134 = vst.msk [vmem:[#allocation2 + $0x1] sm:$0x1] %vm132, %v103
  %135 = vst.msk [vmem:[#allocation2 + $0x2] sm:$0x1] %vm132, %v107
  %136 = vst.msk [vmem:[#allocation2 + $0x3] sm:$0x1] %vm132, %v111
  %137 = vst.msk [vmem:[#allocation2 + $0x4] sm:$0x1] %vm132, %v114
  %138 = vst.msk [vmem:[#allocation2 + $0x5] sm:$0x1] %vm132, %v117
  %139 = vst.msk [vmem:[#allocation2 + $0x6] sm:$0x1] %vm132, %v120
  %140 = vst.msk [vmem:[#allocation2 + $0x7] sm:$0x1] %vm132, %v123
  %s141 = scalar_lea.vmem %s1, 12
  %v142 = vld [vmem:[%s141] sm:$0xf]
  %v143 = vld [vmem:[%s141 + $0x4] sm:$0xf]
  %v144 = vld [vmem:[%s141 + $0x8] sm:$0x3]
  %s145 = scalar_lea.vmem %s3, 1
  %v146 = vld [vmem:[%s145] sm:$0x1]
  %v148 = vperm.slane %v146, 0
  %150 = vst [vmem:[#allocation1] ss:$9 sm:$0xff] %v21
  %s151 = scalar_lea.vmem [#allocation1], 1
  %152 = vst [vmem:[%s151] ss:$9 sm:$0xff] %v22
  %s153 = scalar_lea.vmem [#allocation1], 2
  %154 = vst [vmem:[%s153] ss:$9 sm:$0xff] %v23
  %s155 = scalar_lea.vmem [#allocation1], 3
  %156 = vst [vmem:[%s155] ss:$9 sm:$0xff] %v24
  %s157 = scalar_lea.vmem [#allocation1], 4
  %158 = vst [vmem:[%s157] ss:$9 sm:$0xff] %v25
  %s159 = scalar_lea.vmem [#allocation1], 5
  %160 = vst [vmem:[%s159] ss:$9 sm:$0xff] %v26
  %s161 = scalar_lea.vmem [#allocation1], 6
  %162 = vst [vmem:[%s161] ss:$9 sm:$0xff] %v27
  %s163 = scalar_lea.vmem [#allocation1], 7
  %164 = vst [vmem:[%s163] ss:$9 sm:$0xff] %v28
  %v165 = vld [vmem:[#allocation1] sm:$0xff]
  %v169 = vunpack.c.l.b16 %v142
  %v170 = vunpack.c.l.b16 %v143
  %v171 = vunpack.c.l.b16 %v144
  %v172 = vpack.c.b16 %v170, %v169
  %v173 = vpack.c.b16 %v171, %v171
  %v175 = vsel %vm69, %v165, 0
  %v178 = vsel %vm72, %v173, 0
  %180 = vmatpush.bf16.msra.mxu0 0
  %181 = vmatpush.bf16.msra.mxu0 0
  %182 = vmatpush.bf16.msra.mxu0 0
  %183 = vmatpush.bf16.msra.mxu0 0
  %184 = vmatpush.bf16.msra.mxu0 0
  %185 = vmatpush.bf16.msra.mxu0 0
  %186 = vmatpush.bf16.msra.mxu0 %v178
  %187 = vmatpush.bf16.msra.mxu0 %v172
  %188 = vmatmul.bf16.gmra.mxu0 %v175
  %v189 = vpop.f32.mrf.mxu0
  %v190 = vadd.f32 %v148, %v189
  %v191 = vpop.f32.mrf.mxu0
  %v192 = vadd.f32 %v148, %v191
  %193 = vdwg.mxu0
  %v194 = vpack.c.bf16 %v190, %v190
  %v195 = vpack.c.bf16 %v192, %v192
  %v198 = vrot.slane %v194, 3
  %v199 = vrot.slane %v195, 3
  %v202 = vsel %vm96, %v194, %v198
  %v203 = vsel %vm100, %v194, %v198
  %v205 = vrot.slane %v203, 1
  %v206 = vsel %vm104, %v194, %v198
  %v208 = vrot.slane %v206, 2
  %v209 = vsel %vm108, %v194, %v198
  %v211 = vrot.slane %v209, 3
  %v214 = vsel %vm96, %v195, %v199
  %v215 = vsel %vm100, %v195, %v199
  %v217 = vrot.slane %v215, 1
  %v218 = vsel %vm104, %v195, %v199
  %v220 = vrot.slane %v218, 2
  %v221 = vsel %vm108, %v195, %v199
  %v223 = vrot.slane %v221, 3
  %s232 = scalar_lea.vmem [#allocation2], 8
  %233 = vst.msk [vmem:[%s232] sm:$0x1] %vm132, %v202
  %234 = vst.msk [vmem:[%s232 + $0x1] sm:$0x1] %vm132, %v205
  %235 = vst.msk [vmem:[%s232 + $0x2] sm:$0x1] %vm132, %v208
  %236 = vst.msk [vmem:[%s232 + $0x3] sm:$0x1] %vm132, %v211
  %237 = vst.msk [vmem:[%s232 + $0x4] sm:$0x1] %vm132, %v214
  %238 = vst.msk [vmem:[%s232 + $0x5] sm:$0x1] %vm132, %v217
  %239 = vst.msk [vmem:[%s232 + $0x6] sm:$0x1] %vm132, %v220
  %240 = vst.msk [vmem:[%s232 + $0x7] sm:$0x1] %vm132, %v223
  %s241 = scalar_lea.vmem %s1, 24
  %v242 = vld [vmem:[%s241] sm:$0xf]
  %v243 = vld [vmem:[%s241 + $0x4] sm:$0xf]
  %v244 = vld [vmem:[%s241 + $0x8] sm:$0x3]
  %s245 = scalar_lea.vmem %s3, 2
  %v246 = vld [vmem:[%s245] sm:$0x1]
  %v248 = vperm.slane %v246, 0
  %250 = vst [vmem:[#allocation1] ss:$9 sm:$0xff] %v21
  %s251 = scalar_lea.vmem [#allocation1], 1
  %252 = vst [vmem:[%s251] ss:$9 sm:$0xff] %v22
  %s253 = scalar_lea.vmem [#allocation1], 2
  %254 = vst [vmem:[%s253] ss:$9 sm:$0xff] %v23
  %s255 = scalar_lea.vmem [#allocation1], 3
  %256 = vst [vmem:[%s255] ss:$9 sm:$0xff] %v24
  %s257 = scalar_lea.vmem [#allocation1], 4
  %258 = vst [vmem:[%s257] ss:$9 sm:$0xff] %v25
  %s259 = scalar_lea.vmem [#allocation1], 5
  %260 = vst [vmem:[%s259] ss:$9 sm:$0xff] %v26
  %s261 = scalar_lea.vmem [#allocation1], 6
  %262 = vst [vmem:[%s261] ss:$9 sm:$0xff] %v27
  %s263 = scalar_lea.vmem [#allocation1], 7
  %264 = vst [vmem:[%s263] ss:$9 sm:$0xff] %v28
  %v265 = vld [vmem:[#allocation1] sm:$0xff]
  %v269 = vunpack.c.l.b16 %v242
  %v270 = vunpack.c.l.b16 %v243
  %v271 = vunpack.c.l.b16 %v244
  %v272 = vpack.c.b16 %v270, %v269
  %v273 = vpack.c.b16 %v271, %v271
  %v275 = vsel %vm69, %v265, 0
  %v278 = vsel %vm72, %v273, 0
  %280 = vmatpush.bf16.msra.mxu0 0
  %281 = vmatpush.bf16.msra.mxu0 0
  %282 = vmatpush.bf16.msra.mxu0 0
  %283 = vmatpush.bf16.msra.mxu0 0
  %284 = vmatpush.bf16.msra.mxu0 0
  %285 = vmatpush.bf16.msra.mxu0 0
  %286 = vmatpush.bf16.msra.mxu0 %v278
  %287 = vmatpush.bf16.msra.mxu0 %v272
  %288 = vmatmul.bf16.gmra.mxu0 %v275
  %v289 = vpop.f32.mrf.mxu0
  %v290 = vadd.f32 %v248, %v289
  %v291 = vpop.f32.mrf.mxu0
  %v292 = vadd.f32 %v248, %v291
  %293 = vdwg.mxu0
  %v294 = vpack.c.bf16 %v290, %v290
  %v295 = vpack.c.bf16 %v292, %v292
  %v298 = vrot.slane %v294, 3
  %v299 = vrot.slane %v295, 3
  %v302 = vsel %vm96, %v294, %v298
  %v303 = vsel %vm100, %v294, %v298
  %v305 = vrot.slane %v303, 1
  %v306 = vsel %vm104, %v294, %v298
  %v308 = vrot.slane %v306, 2
  %v309 = vsel %vm108, %v294, %v298
  %v311 = vrot.slane %v309, 3
  %v314 = vsel %vm96, %v295, %v299
  %v315 = vsel %vm100, %v295, %v299
  %v317 = vrot.slane %v315, 1
  %v318 = vsel %vm104, %v295, %v299
  %v320 = vrot.slane %v318, 2
  %v321 = vsel %vm108, %v295, %v299
  %v323 = vrot.slane %v321, 3
  %s332 = scalar_lea.vmem [#allocation2], 16
  %333 = vst.msk [vmem:[%s332] sm:$0x1] %vm132, %v302
  %334 = vst.msk [vmem:[%s332 + $0x1] sm:$0x1] %vm132, %v305
  %335 = vst.msk [vmem:[%s332 + $0x2] sm:$0x1] %vm132, %v308
  %336 = vst.msk [vmem:[%s332 + $0x3] sm:$0x1] %vm132, %v311
  %337 = vst.msk [vmem:[%s332 + $0x4] sm:$0x1] %vm132, %v314
  %338 = vst.msk [vmem:[%s332 + $0x5] sm:$0x1] %vm132, %v317
  %339 = vst.msk [vmem:[%s332 + $0x6] sm:$0x1] %vm132, %v320
  %340 = vst.msk [vmem:[%s332 + $0x7] sm:$0x1] %vm132, %v323
  %s341 = scalar_lea.vmem %s1, 36
  %v342 = vld [vmem:[%s341] sm:$0xf]
  %v343 = vld [vmem:[%s341 + $0x4] sm:$0xf]
  %v344 = vld [vmem:[%s341 + $0x8] sm:$0x3]
  %s345 = scalar_lea.vmem %s3, 3
  %v346 = vld [vmem:[%s345] sm:$0x1]
  %v348 = vperm.slane %v346, 0
  %350 = vst [vmem:[#allocation1] ss:$9 sm:$0xff] %v21
  %s351 = scalar_lea.vmem [#allocation1], 1
  %352 = vst [vmem:[%s351] ss:$9 sm:$0xff] %v22
  %s353 = scalar_lea.vmem [#allocation1], 2
  %354 = vst [vmem:[%s353] ss:$9 sm:$0xff] %v23
  %s355 = scalar_lea.vmem [#allocation1], 3
  %356 = vst [vmem:[%s355] ss:$9 sm:$0xff] %v24
  %s357 = scalar_lea.vmem [#allocation1], 4
  %358 = vst [vmem:[%s357] ss:$9 sm:$0xff] %v25
  %s359 = scalar_lea.vmem [#allocation1], 5
  %360 = vst [vmem:[%s359] ss:$9 sm:$0xff] %v26
  %s361 = scalar_lea.vmem [#allocation1], 6
  %362 = vst [vmem:[%s361] ss:$9 sm:$0xff] %v27
  %s363 = scalar_lea.vmem [#allocation1], 7
  %364 = vst [vmem:[%s363] ss:$9 sm:$0xff] %v28
  %v365 = vld [vmem:[#allocation1] sm:$0xff]
  %v369 = vunpack.c.l.b16 %v342
  %v370 = vunpack.c.l.b16 %v343
  %v371 = vunpack.c.l.b16 %v344
  %v372 = vpack.c.b16 %v370, %v369
  %v373 = vpack.c.b16 %v371, %v371
  %v375 = vsel %vm69, %v365, 0
  %v378 = vsel %vm72, %v373, 0
  %380 = vmatpush.bf16.msra.mxu0 0
  %381 = vmatpush.bf16.msra.mxu0 0
  %382 = vmatpush.bf16.msra.mxu0 0
  %383 = vmatpush.bf16.msra.mxu0 0
  %384 = vmatpush.bf16.msra.mxu0 0
  %385 = vmatpush.bf16.msra.mxu0 0
  %386 = vmatpush.bf16.msra.mxu0 %v378
  %387 = vmatpush.bf16.msra.mxu0 %v372
  %388 = vmatmul.bf16.gmra.mxu0 %v375
  %v389 = vpop.f32.mrf.mxu0
  %v390 = vadd.f32 %v348, %v389
  %v391 = vpop.f32.mrf.mxu0
  %v392 = vadd.f32 %v348, %v391
  %393 = vdwg.mxu0
  %v394 = vpack.c.bf16 %v390, %v390
  %v395 = vpack.c.bf16 %v392, %v392
  %v398 = vrot.slane %v394, 3
  %v399 = vrot.slane %v395, 3
  %v402 = vsel %vm96, %v394, %v398
  %v403 = vsel %vm100, %v394, %v398
  %v405 = vrot.slane %v403, 1
  %v406 = vsel %vm104, %v394, %v398
  %v408 = vrot.slane %v406, 2
  %v409 = vsel %vm108, %v394, %v398
  %v411 = vrot.slane %v409, 3
  %v414 = vsel %vm96, %v395, %v399
  %v415 = vsel %vm100, %v395, %v399
  %v417 = vrot.slane %v415, 1
  %v418 = vsel %vm104, %v395, %v399
  %v420 = vrot.slane %v418, 2
  %v421 = vsel %vm108, %v395, %v399
  %v423 = vrot.slane %v421, 3
  %s432 = scalar_lea.vmem [#allocation2], 24
  %433 = vst.msk [vmem:[%s432] sm:$0x1] %vm132, %v402
  %434 = vst.msk [vmem:[%s432 + $0x1] sm:$0x1] %vm132, %v405
  %435 = vst.msk [vmem:[%s432 + $0x2] sm:$0x1] %vm132, %v408
  %436 = vst.msk [vmem:[%s432 + $0x3] sm:$0x1] %vm132, %v411
  %437 = vst.msk [vmem:[%s432 + $0x4] sm:$0x1] %vm132, %v414
  %438 = vst.msk [vmem:[%s432 + $0x5] sm:$0x1] %vm132, %v417
  %439 = vst.msk [vmem:[%s432 + $0x6] sm:$0x1] %vm132, %v420
  %440 = vst.msk [vmem:[%s432 + $0x7] sm:$0x1] %vm132, %v423
  %s441 = scalar_lea.vmem %s1, 48
  %v442 = vld [vmem:[%s441] sm:$0xf]
  %v443 = vld [vmem:[%s441 + $0x4] sm:$0xf]
  %v444 = vld [vmem:[%s441 + $0x8] sm:$0x3]
  %s445 = scalar_lea.vmem %s3, 4
  %v446 = vld [vmem:[%s445] sm:$0x1]
  %v448 = vperm.slane %v446, 0
  %450 = vst [vmem:[#allocation1] ss:$9 sm:$0xff] %v21
  %s451 = scalar_lea.vmem [#allocation1], 1
  %452 = vst [vmem:[%s451] ss:$9 sm:$0xff] %v22
  %s453 = scalar_lea.vmem [#allocation1], 2
  %454 = vst [vmem:[%s453] ss:$9 sm:$0xff] %v23
  %s455 = scalar_lea.vmem [#allocation1], 3
  %456 = vst [vmem:[%s455] ss:$9 sm:$0xff] %v24
  %s457 = scalar_lea.vmem [#allocation1], 4
  %458 = vst [vmem:[%s457] ss:$9 sm:$0xff] %v25
  %s459 = scalar_lea.vmem [#allocation1], 5
  %460 = vst [vmem:[%s459] ss:$9 sm:$0xff] %v26
  %s461 = scalar_lea.vmem [#allocation1], 6
  %462 = vst [vmem:[%s461] ss:$9 sm:$0xff] %v27
  %s463 = scalar_lea.vmem [#allocation1], 7
  %464 = vst [vmem:[%s463] ss:$9 sm:$0xff] %v28
  %v465 = vld [vmem:[#allocation1] sm:$0xff]
  %v469 = vunpack.c.l.b16 %v442
  %v470 = vunpack.c.l.b16 %v443
  %v471 = vunpack.c.l.b16 %v444
  %v472 = vpack.c.b16 %v470, %v469
  %v473 = vpack.c.b16 %v471, %v471
  %v475 = vsel %vm69, %v465, 0
  %v478 = vsel %vm72, %v473, 0
  %480 = vmatpush.bf16.msra.mxu0 0
  %481 = vmatpush.bf16.msra.mxu0 0
  %482 = vmatpush.bf16.msra.mxu0 0
  %483 = vmatpush.bf16.msra.mxu0 0
  %484 = vmatpush.bf16.msra.mxu0 0
  %485 = vmatpush.bf16.msra.mxu0 0
  %486 = vmatpush.bf16.msra.mxu0 %v478
  %487 = vmatpush.bf16.msra.mxu0 %v472
  %488 = vmatmul.bf16.gmra.mxu0 %v475
  %v489 = vpop.f32.mrf.mxu0
  %v490 = vadd.f32 %v448, %v489
  %v491 = vpop.f32.mrf.mxu0
  %v492 = vadd.f32 %v448, %v491
  %493 = vdwg.mxu0
  %v494 = vpack.c.bf16 %v490, %v490
  %v495 = vpack.c.bf16 %v492, %v492
  %v498 = vrot.slane %v494, 3
  %v499 = vrot.slane %v495, 3
  %v502 = vsel %vm96, %v494, %v498
  %v503 = vsel %vm100, %v494, %v498
  %v505 = vrot.slane %v503, 1
  %v506 = vsel %vm104, %v494, %v498
  %v508 = vrot.slane %v506, 2
  %v509 = vsel %vm108, %v494, %v498
  %v511 = vrot.slane %v509, 3
  %v514 = vsel %vm96, %v495, %v499
  %v515 = vsel %vm100, %v495, %v499
  %v517 = vrot.slane %v515, 1
  %v518 = vsel %vm104, %v495, %v499
  %v520 = vrot.slane %v518, 2
  %v521 = vsel %vm108, %v495, %v499
  %v523 = vrot.slane %v521, 3
  %s532 = scalar_lea.vmem [#allocation2], 32
  %533 = vst.msk [vmem:[%s532] sm:$0x1] %vm132, %v502
  %534 = vst.msk [vmem:[%s532 + $0x1] sm:$0x1] %vm132, %v505
  %535 = vst.msk [vmem:[%s532 + $0x2] sm:$0x1] %vm132, %v508
  %536 = vst.msk [vmem:[%s532 + $0x3] sm:$0x1] %vm132, %v511
  %537 = vst.msk [vmem:[%s532 + $0x4] sm:$0x1] %vm132, %v514
  %538 = vst.msk [vmem:[%s532 + $0x5] sm:$0x1] %vm132, %v517
  %539 = vst.msk [vmem:[%s532 + $0x6] sm:$0x1] %vm132, %v520
  %540 = vst.msk [vmem:[%s532 + $0x7] sm:$0x1] %vm132, %v523
  %s541 = scalar_lea.vmem %s1, 60
  %v542 = vld [vmem:[%s541] sm:$0xf]
  %v543 = vld [vmem:[%s541 + $0x4] sm:$0xf]
  %v544 = vld [vmem:[%s541 + $0x8] sm:$0x3]
  %s545 = scalar_lea.vmem %s3, 5
  %v546 = vld [vmem:[%s545] sm:$0x1]
  %v548 = vperm.slane %v546, 0
  %550 = vst [vmem:[#allocation1] ss:$9 sm:$0xff] %v21
  %s551 = scalar_lea.vmem [#allocation1], 1
  %552 = vst [vmem:[%s551] ss:$9 sm:$0xff] %v22
  %s553 = scalar_lea.vmem [#allocation1], 2
  %554 = vst [vmem:[%s553] ss:$9 sm:$0xff] %v23
  %s555 = scalar_lea.vmem [#allocation1], 3
  %556 = vst [vmem:[%s555] ss:$9 sm:$0xff] %v24
  %s557 = scalar_lea.vmem [#allocation1], 4
  %558 = vst [vmem:[%s557] ss:$9 sm:$0xff] %v25
  %s559 = scalar_lea.vmem [#allocation1], 5
  %560 = vst [vmem:[%s559] ss:$9 sm:$0xff] %v26
  %s561 = scalar_lea.vmem [#allocation1], 6
  %562 = vst [vmem:[%s561] ss:$9 sm:$0xff] %v27
  %s563 = scalar_lea.vmem [#allocation1], 7
  %564 = vst [vmem:[%s563] ss:$9 sm:$0xff] %v28
  %v565 = vld [vmem:[#allocation1] sm:$0xff]
  %v569 = vunpack.c.l.b16 %v542
  %v570 = vunpack.c.l.b16 %v543
  %v571 = vunpack.c.l.b16 %v544
  %v572 = vpack.c.b16 %v570, %v569
  %v573 = vpack.c.b16 %v571, %v571
  %v575 = vsel %vm69, %v565, 0
  %v578 = vsel %vm72, %v573, 0
  %580 = vmatpush.bf16.msra.mxu0 0
  %581 = vmatpush.bf16.msra.mxu0 0
  %582 = vmatpush.bf16.msra.mxu0 0
  %583 = vmatpush.bf16.msra.mxu0 0
  %584 = vmatpush.bf16.msra.mxu0 0
  %585 = vmatpush.bf16.msra.mxu0 0
  %586 = vmatpush.bf16.msra.mxu0 %v578
  %587 = vmatpush.bf16.msra.mxu0 %v572
  %588 = vmatmul.bf16.gmra.mxu0 %v575
  %v589 = vpop.f32.mrf.mxu0
  %v590 = vadd.f32 %v548, %v589
  %v591 = vpop.f32.mrf.mxu0
  %v592 = vadd.f32 %v548, %v591
  %593 = vdwg.mxu0
  %v594 = vpack.c.bf16 %v590, %v590
  %v595 = vpack.c.bf16 %v592, %v592
  %v598 = vrot.slane %v594, 3
  %v599 = vrot.slane %v595, 3
  %v602 = vsel %vm96, %v594, %v598
  %v603 = vsel %vm100, %v594, %v598
  %v605 = vrot.slane %v603, 1
  %v606 = vsel %vm104, %v594, %v598
  %v608 = vrot.slane %v606, 2
  %v609 = vsel %vm108, %v594, %v598
  %v611 = vrot.slane %v609, 3
  %v614 = vsel %vm96, %v595, %v599
  %v615 = vsel %vm100, %v595, %v599
  %v617 = vrot.slane %v615, 1
  %v618 = vsel %vm104, %v595, %v599
  %v620 = vrot.slane %v618, 2
  %v621 = vsel %vm108, %v595, %v599
  %v623 = vrot.slane %v621, 3
  %s632 = scalar_lea.vmem [#allocation2], 40
  %633 = vst.msk [vmem:[%s632] sm:$0x1] %vm132, %v602
  %634 = vst.msk [vmem:[%s632 + $0x1] sm:$0x1] %vm132, %v605
  %635 = vst.msk [vmem:[%s632 + $0x2] sm:$0x1] %vm132, %v608
  %636 = vst.msk [vmem:[%s632 + $0x3] sm:$0x1] %vm132, %v611
  %637 = vst.msk [vmem:[%s632 + $0x4] sm:$0x1] %vm132, %v614
  %638 = vst.msk [vmem:[%s632 + $0x5] sm:$0x1] %vm132, %v617
  %639 = vst.msk [vmem:[%s632 + $0x6] sm:$0x1] %vm132, %v620
  %640 = vst.msk [vmem:[%s632 + $0x7] sm:$0x1] %vm132, %v623
  %v641 = vld [vmem:[%s4] sm:$0x1]
  %s642 = scalar_lea.vmem %s4, 1
  %v643 = vld [vmem:[%s642] sm:$0x1]
  %v644 = vld [vmem:[%s2] sm:$0xf]
  %v645 = vld [vmem:[%s2 + $0x4] sm:$0xf]
  %v648 = vunpack.c.l.b16 %v644
  %v649 = vunpack.c.l.b16 %v645
  %v650 = vpack.c.b16 %v649, %v648
  %vm652 = vcmask 130048
  %v654 = vsel %vm652, 0, 0
  %656 = vmatpush.bf16.msra.mxu0 0
  %657 = vmatpush.bf16.msra.mxu0 0
  %658 = vmatpush.bf16.msra.mxu0 0
  %659 = vmatpush.bf16.msra.mxu0 0
  %660 = vmatpush.bf16.msra.mxu0 0
  %661 = vmatpush.bf16.msra.mxu0 0
  %662 = vmatpush.bf16.msra.mxu0 0
  %663 = vmatpush.bf16.msra.mxu0 %v650
  %664 = vmatmul.bf16.gmra.mxu0 %v654
  %v665 = vpop.f32.mrf.mxu0
  %v666 = vadd.f32 0.0, %v665
  %v667 = vpop.f32.mrf.mxu0
  %668 = vdwg.mxu0
  %s669 = scalar_lea.vmem %s2, 8
  %v670 = vld [vmem:[%s669] sm:$0xf]
  %v671 = vld [vmem:[%s669 + $0x4] sm:$0xf]
  %v674 = vunpack.c.l.b16 %v670
  %v675 = vunpack.c.l.b16 %v671
  %v676 = vpack.c.b16 %v675, %v674
  %678 = vmatpush.bf16.msra.mxu0 0
  %679 = vmatpush.bf16.msra.mxu0 0
  %680 = vmatpush.bf16.msra.mxu0 0
  %681 = vmatpush.bf16.msra.mxu0 0
  %682 = vmatpush.bf16.msra.mxu0 0
  %683 = vmatpush.bf16.msra.mxu0 0
  %684 = vmatpush.bf16.msra.mxu0 0
  %685 = vmatpush.bf16.msra.mxu0 %v676
  %686 = vmatmul.bf16.gmra.mxu0 %v654
  %v687 = vpop.f32.mrf.mxu0
  %v688 = vadd.f32 0.0, %v687
  %v689 = vpop.f32.mrf.mxu0
  %690 = vdwg.mxu0
  %s691 = scalar_lea.vmem %s2, 16
  %v692 = vld [vmem:[%s691] sm:$0xf]
  %v693 = vld [vmem:[%s691 + $0x4] sm:$0xf]
  %v695 = vperm.slane %v641, 0
  %v699 = vunpack.c.l.b16 %v692
  %v700 = vunpack.c.l.b16 %v693
  %v701 = vpack.c.b16 %v700, %v699
  %703 = vmatpush.bf16.msra.mxu0 0
  %704 = vmatpush.bf16.msra.mxu0 0
  %705 = vmatpush.bf16.msra.mxu0 0
  %706 = vmatpush.bf16.msra.mxu0 0
  %707 = vmatpush.bf16.msra.mxu0 0
  %708 = vmatpush.bf16.msra.mxu0 0
  %709 = vmatpush.bf16.msra.mxu0 0
  %710 = vmatpush.bf16.msra.mxu0 %v701
  %711 = vmatmul.bf16.gmra.mxu0 %v654
  %v712 = vpop.f32.mrf.mxu0
  %v713 = vadd.f32 %v695, %v712
  %v714 = vpop.f32.mrf.mxu0
  %715 = vdwg.mxu0
  %v716 = vld [vmem:[#allocation2] sm:$0x1]
  %v717 = vunpack.c.l.bf16 %v716
  %v718 = vld [vmem:[%s232] sm:$0x1]
  %v719 = vunpack.c.l.bf16 %v718
  %v720 = vld [vmem:[%s332] sm:$0x1]
  %v721 = vunpack.c.l.bf16 %v720
  %v722 = vadd.f32 %v717, %v666
  %v723 = vmul.f32 %v722, 0.5
  %v724 = vtanh.pop %v723
  %v725 = vmul.f32 %v724, 0.5
  %v726 = vadd.f32 %v725, 0.5
  %v727 = vadd.f32 %v719, %v688
  %v728 = vmul.f32 %v727, 0.5
  %v729 = vtanh.pop %v728
  %v730 = vmul.f32 %v729, 0.5
  %v731 = vadd.f32 %v730, 0.5
  %v732 = vmul.f32 %v726, %v713
  %v733 = vadd.f32 %v721, %v732
  %v734 = vtanh.pop %v733
  %v735 = vsub.f32 0.0, %v734
  %v736 = vmul.f32 %v731, %v735
  %v737 = vadd.f32 %v734, %v736
  %s738 = scalar_lea.vmem %s2, 24
  %v739 = vld [vmem:[%s738] sm:$0xf]
  %v740 = vld [vmem:[%s738 + $0x4] sm:$0xf]
  %v743 = vunpack.c.l.b16 %v739
  %v744 = vunpack.c.l.b16 %v740
  %v745 = vpack.c.b16 %v744, %v743
  %747 = vmatpush.bf16.msra.mxu0 0
  %748 = vmatpush.bf16.msra.mxu0 0
  %749 = vmatpush.bf16.msra.mxu0 0
  %750 = vmatpush.bf16.msra.mxu0 0
  %751 = vmatpush.bf16.msra.mxu0 0
  %752 = vmatpush.bf16.msra.mxu0 0
  %753 = vmatpush.bf16.msra.mxu0 0
  %754 = vmatpush.bf16.msra.mxu0 %v745
  %755 = vmatmul.bf16.gmra.mxu0 %v654
  %v756 = vpop.f32.mrf.mxu0
  %v757 = vadd.f32 0.0, %v756
  %v758 = vpop.f32.mrf.mxu0
  %759 = vdwg.mxu0
  %s760 = scalar_lea.vmem %s2, 32
  %v761 = vld [vmem:[%s760] sm:$0xf]
  %v762 = vld [vmem:[%s760 + $0x4] sm:$0xf]
  %v765 = vunpack.c.l.b16 %v761
  %v766 = vunpack.c.l.b16 %v762
  %v767 = vpack.c.b16 %v766, %v765
  %769 = vmatpush.bf16.msra.mxu0 0
  %770 = vmatpush.bf16.msra.mxu0 0
  %771 = vmatpush.bf16.msra.mxu0 0
  %772 = vmatpush.bf16.msra.mxu0 0
  %773 = vmatpush.bf16.msra.mxu0 0
  %774 = vmatpush.bf16.msra.mxu0 0
  %775 = vmatpush.bf16.msra.mxu0 0
  %776 = vmatpush.bf16.msra.mxu0 %v767
  %777 = vmatmul.bf16.gmra.mxu0 %v654
  %v778 = vpop.f32.mrf.mxu0
  %v779 = vadd.f32 0.0, %v778
  %v780 = vpop.f32.mrf.mxu0
  %781 = vdwg.mxu0
  %s782 = scalar_lea.vmem %s2, 40
  %v783 = vld [vmem:[%s782] sm:$0xf]
  %v784 = vld [vmem:[%s782 + $0x4] sm:$0xf]
  %v786 = vperm.slane %v643, 0
  %v790 = vunpack.c.l.b16 %v783
  %v791 = vunpack.c.l.b16 %v784
  %v792 = vpack.c.b16 %v791, %v790
  %794 = vmatpush.bf16.msra.mxu0 0
  %795 = vmatpush.bf16.msra.mxu0 0
  %796 = vmatpush.bf16.msra.mxu0 0
  %797 = vmatpush.bf16.msra.mxu0 0
  %798 = vmatpush.bf16.msra.mxu0 0
  %799 = vmatpush.bf16.msra.mxu0 0
  %800 = vmatpush.bf16.msra.mxu0 0
  %801 = vmatpush.bf16.msra.mxu0 %v792
  %802 = vmatmul.bf16.gmra.mxu0 %v654
  %v803 = vpop.f32.mrf.mxu0
  %v804 = vadd.f32 %v786, %v803
  %v805 = vpop.f32.mrf.mxu0
  %806 = vdwg.mxu0
  %s807 = scalar_lea.vmem [#allocation2], 31
  %v808 = vld [vmem:[%s807] sm:$0x1]
  %v809 = vunpack.c.l.bf16 %v808
  %s810 = scalar_lea.vmem [#allocation2], 39
  %v811 = vld [vmem:[%s810] sm:$0x1]
  %v812 = vunpack.c.l.bf16 %v811
  %s813 = scalar_lea.vmem [#allocation2], 47
  %v814 = vld [vmem:[%s813] sm:$0x1]
  %v815 = vunpack.c.l.bf16 %v814
  %v816 = vadd.f32 %v809, %v757
  %v817 = vmul.f32 %v816, 0.5
  %v818 = vtanh.pop %v817
  %v819 = vmul.f32 %v818, 0.5
  %v820 = vadd.f32 %v819, 0.5
  %v821 = vadd.f32 %v812, %v779
  %v822 = vmul.f32 %v821, 0.5
  %v823 = vtanh.pop %v822
  %v824 = vmul.f32 %v823, 0.5
  %v825 = vadd.f32 %v824, 0.5
  %v826 = vmul.f32 %v820, %v804
  %v827 = vadd.f32 %v815, %v826
  %v828 = vtanh.pop %v827
  %v829 = vsub.f32 0.0, %v828
  %v830 = vmul.f32 %v825, %v829
  %v831 = vadd.f32 %v828, %v830
  %v832 = vpack.c.bf16 %v737, %v737
  %833 = vst.msk [vmem:[%s5] sm:$0x1] %vm132, %v832
  %v834 = vpack.c.bf16 %v831, %v831
  %v836 = vrot.slane %v834, 3
  %v839 = vsel %vm96, %v834, %v836
  %841 = vrot.lane.b32.xlu0 %v839, 16
  %v842 = vpop.permute.xlu0 %841
  %s844 = scalar_lea.vmem %s5, 7
  %vm845 = vcmask 254080
  %846 = vst.msk [vmem:[%s844] sm:$0x1] %vm845, %v842
  %v847 = vld [vmem:[%s2] sm:$0xf]
  %v848 = vld [vmem:[%s2 + $0x4] sm:$0xf]
  %v851 = vunpack.c.l.b16 %v847
  %v852 = vunpack.c.l.b16 %v848
  %v853 = vpack.c.b16 %v852, %v851
  %v856 = vsel %vm652, %v832, 0
  %858 = vmatpush.bf16.msra.mxu0 0
  %859 = vmatpush.bf16.msra.mxu0 0
  %860 = vmatpush.bf16.msra.mxu0 0
  %861 = vmatpush.bf16.msra.mxu0 0
  %862 = vmatpush.bf16.msra.mxu0 0
  %863 = vmatpush.bf16.msra.mxu0 0
  %864 = vmatpush.bf16.msra.mxu0 0
  %865 = vmatpush.bf16.msra.mxu0 %v853
  %866 = vmatmul.bf16.gmra.mxu0 %v856
  %v867 = vpop.f32.mrf.mxu0
  %v868 = vadd.f32 0.0, %v867
  %v869 = vpop.f32.mrf.mxu0
  %870 = vdwg.mxu0
  %v871 = vld [vmem:[%s669] sm:$0xf]
  %v872 = vld [vmem:[%s669 + $0x4] sm:$0xf]
  %v875 = vunpack.c.l.b16 %v871
  %v876 = vunpack.c.l.b16 %v872
  %v877 = vpack.c.b16 %v876, %v875
  %879 = vmatpush.bf16.msra.mxu0 0
  %880 = vmatpush.bf16.msra.mxu0 0
  %881 = vmatpush.bf16.msra.mxu0 0
  %882 = vmatpush.bf16.msra.mxu0 0
  %883 = vmatpush.bf16.msra.mxu0 0
  %884 = vmatpush.bf16.msra.mxu0 0
  %885 = vmatpush.bf16.msra.mxu0 0
  %886 = vmatpush.bf16.msra.mxu0 %v877
  %887 = vmatmul.bf16.gmra.mxu0 %v856
  %v888 = vpop.f32.mrf.mxu0
  %v889 = vadd.f32 0.0, %v888
  %v890 = vpop.f32.mrf.mxu0
  %891 = vdwg.mxu0
  %v892 = vld [vmem:[%s691] sm:$0xf]
  %v893 = vld [vmem:[%s691 + $0x4] sm:$0xf]
  %v896 = vunpack.c.l.b16 %v892
  %v897 = vunpack.c.l.b16 %v893
  %v898 = vpack.c.b16 %v897, %v896
  %900 = vmatpush.bf16.msra.mxu0 0
  %901 = vmatpush.bf16.msra.mxu0 0
  %902 = vmatpush.bf16.msra.mxu0 0
  %903 = vmatpush.bf16.msra.mxu0 0
  %904 = vmatpush.bf16.msra.mxu0 0
  %905 = vmatpush.bf16.msra.mxu0 0
  %906 = vmatpush.bf16.msra.mxu0 0
  %907 = vmatpush.bf16.msra.mxu0 %v898
  %908 = vmatmul.bf16.gmra.mxu0 %v856
  %v909 = vpop.f32.mrf.mxu0
  %v910 = vadd.f32 %v695, %v909
  %v911 = vpop.f32.mrf.mxu0
  %912 = vdwg.mxu0
  %s913 = scalar_lea.vmem [#allocation2], 1
  %v914 = vld [vmem:[%s913] sm:$0x1]
  %v915 = vunpack.c.l.bf16 %v914
  %s916 = scalar_lea.vmem [#allocation2], 9
  %v917 = vld [vmem:[%s916] sm:$0x1]
  %v918 = vunpack.c.l.bf16 %v917
  %s919 = scalar_lea.vmem [#allocation2], 17
  %v920 = vld [vmem:[%s919] sm:$0x1]
  %v921 = vunpack.c.l.bf16 %v920
  %v922 = vadd.f32 %v915, %v868
  %v923 = vmul.f32 %v922, 0.5
  %v924 = vtanh.pop %v923
  %v925 = vmul.f32 %v924, 0.5
  %v926 = vadd.f32 %v925, 0.5
  %v927 = vadd.f32 %v918, %v889
  %v928 = vmul.f32 %v927, 0.5
  %v929 = vtanh.pop %v928
  %v930 = vmul.f32 %v929, 0.5
  %v931 = vadd.f32 %v930, 0.5
  %v932 = vmul.f32 %v926, %v910
  %v933 = vadd.f32 %v921, %v932
  %v934 = vtanh.pop %v933
  %v935 = vsub.f32 %v737, %v934
  %v936 = vmul.f32 %v931, %v935
  %v937 = vadd.f32 %v934, %v936
  %v938 = vld [vmem:[%s738] sm:$0xf]
  %v939 = vld [vmem:[%s738 + $0x4] sm:$0xf]
  %v942 = vunpack.c.l.b16 %v938
  %v943 = vunpack.c.l.b16 %v939
  %v944 = vpack.c.b16 %v943, %v942
  %v946 = vsel %vm652, %v834, 0
  %948 = vmatpush.bf16.msra.mxu0 0
  %949 = vmatpush.bf16.msra.mxu0 0
  %950 = vmatpush.bf16.msra.mxu0 0
  %951 = vmatpush.bf16.msra.mxu0 0
  %952 = vmatpush.bf16.msra.mxu0 0
  %953 = vmatpush.bf16.msra.mxu0 0
  %954 = vmatpush.bf16.msra.mxu0 0
  %955 = vmatpush.bf16.msra.mxu0 %v944
  %956 = vmatmul.bf16.gmra.mxu0 %v946
  %v957 = vpop.f32.mrf.mxu0
  %v958 = vadd.f32 0.0, %v957
  %v959 = vpop.f32.mrf.mxu0
  %960 = vdwg.mxu0
  %v961 = vld [vmem:[%s760] sm:$0xf]
  %v962 = vld [vmem:[%s760 + $0x4] sm:$0xf]
  %v965 = vunpack.c.l.b16 %v961
  %v966 = vunpack.c.l.b16 %v962
  %v967 = vpack.c.b16 %v966, %v965
  %969 = vmatpush.bf16.msra.mxu0 0
  %970 = vmatpush.bf16.msra.mxu0 0
  %971 = vmatpush.bf16.msra.mxu0 0
  %972 = vmatpush.bf16.msra.mxu0 0
  %973 = vmatpush.bf16.msra.mxu0 0
  %974 = vmatpush.bf16.msra.mxu0 0
  %975 = vmatpush.bf16.msra.mxu0 0
  %976 = vmatpush.bf16.msra.mxu0 %v967
  %977 = vmatmul.bf16.gmra.mxu0 %v946
  %v978 = vpop.f32.mrf.mxu0
  %v979 = vadd.f32 0.0, %v978
  %v980 = vpop.f32.mrf.mxu0
  %981 = vdwg.mxu0
  %v982 = vld [vmem:[%s782] sm:$0xf]
  %v983 = vld [vmem:[%s782 + $0x4] sm:$0xf]
  %v986 = vunpack.c.l.b16 %v982
  %v987 = vunpack.c.l.b16 %v983
  %v988 = vpack.c.b16 %v987, %v986
  %990 = vmatpush.bf16.msra.mxu0 0
  %991 = vmatpush.bf16.msra.mxu0 0
  %992 = vmatpush.bf16.msra.mxu0 0
  %993 = vmatpush.bf16.msra.mxu0 0
  %994 = vmatpush.bf16.msra.mxu0 0
  %995 = vmatpush.bf16.msra.mxu0 0
  %996 = vmatpush.bf16.msra.mxu0 0
  %997 = vmatpush.bf16.msra.mxu0 %v988
  %998 = vmatmul.bf16.gmra.mxu0 %v946
  %v999 = vpop.f32.mrf.mxu0
  %v1000 = vadd.f32 %v786, %v999
  %v1001 = vpop.f32.mrf.mxu0
  %1002 = vdwg.mxu0
  %s1003 = scalar_lea.vmem [#allocation2], 30
  %v1004 = vld [vmem:[%s1003] sm:$0x1]
  %v1005 = vunpack.c.l.bf16 %v1004
  %s1006 = scalar_lea.vmem [#allocation2], 38
  %v1007 = vld [vmem:[%s1006] sm:$0x1]
  %v1008 = vunpack.c.l.bf16 %v1007
  %s1009 = scalar_lea.vmem [#allocation2], 46
  %v1010 = vld [vmem:[%s1009] sm:$0x1]
  %v1011 = vunpack.c.l.bf16 %v1010
  %v1012 = vadd.f32 %v1005, %v958
  %v1013 = vmul.f32 %v1012, 0.5
  %v1014 = vtanh.pop %v1013
  %v1015 = vmul.f32 %v1014, 0.5
  %v1016 = vadd.f32 %v1015, 0.5
  %v1017 = vadd.f32 %v1008, %v979
  %v1018 = vmul.f32 %v1017, 0.5
  %v1019 = vtanh.pop %v1018
  %v1020 = vmul.f32 %v1019, 0.5
  %v1021 = vadd.f32 %v1020, 0.5
  %v1022 = vmul.f32 %v1016, %v1000
  %v1023 = vadd.f32 %v1011, %v1022
  %v1024 = vtanh.pop %v1023
  %v1025 = vsub.f32 %v831, %v1024
  %v1026 = vmul.f32 %v1021, %v1025
  %v1027 = vadd.f32 %v1024, %v1026
  %v1028 = vpack.c.bf16 %v937, %v937
  %s1029 = scalar_lea.vmem %s5, 1
  %1030 = vst.msk [vmem:[%s1029] sm:$0x1] %vm132, %v1028
  %v1031 = vpack.c.bf16 %v1027, %v1027
  %v1033 = vrot.slane %v1031, 3
  %v1036 = vsel %vm96, %v1031, %v1033
  %1038 = vrot.lane.b32.xlu0 %v1036, 16
  %v1039 = vpop.permute.xlu0 %1038
  %s1041 = scalar_lea.vmem %s5, 6
  %1042 = vst.msk [vmem:[%s1041] sm:$0x1] %vm845, %v1039
  %v1043 = vld [vmem:[%s2] sm:$0xf]
  %v1044 = vld [vmem:[%s2 + $0x4] sm:$0xf]
  %v1047 = vunpack.c.l.b16 %v1043
  %v1048 = vunpack.c.l.b16 %v1044
  %v1049 = vpack.c.b16 %v1048, %v1047
  %v1052 = vsel %vm652, %v1028, 0
  %1054 = vmatpush.bf16.msra.mxu0 0
  %1055 = vmatpush.bf16.msra.mxu0 0
  %1056 = vmatpush.bf16.msra.mxu0 0
  %1057 = vmatpush.bf16.msra.mxu0 0
  %1058 = vmatpush.bf16.msra.mxu0 0
  %1059 = vmatpush.bf16.msra.mxu0 0
  %1060 = vmatpush.bf16.msra.mxu0 0
  %1061 = vmatpush.bf16.msra.mxu0 %v1049
  %1062 = vmatmul.bf16.gmra.mxu0 %v1052
  %v1063 = vpop.f32.mrf.mxu0
  %v1064 = vadd.f32 0.0, %v1063
  %v1065 = vpop.f32.mrf.mxu0
  %1066 = vdwg.mxu0
  %v1067 = vld [vmem:[%s669] sm:$0xf]
  %v1068 = vld [vmem:[%s669 + $0x4] sm:$0xf]
  %v1071 = vunpack.c.l.b16 %v1067
  %v1072 = vunpack.c.l.b16 %v1068
  %v1073 = vpack.c.b16 %v1072, %v1071
  %1075 = vmatpush.bf16.msra.mxu0 0
  %1076 = vmatpush.bf16.msra.mxu0 0
  %1077 = vmatpush.bf16.msra.mxu0 0
  %1078 = vmatpush.bf16.msra.mxu0 0
  %1079 = vmatpush.bf16.msra.mxu0 0
  %1080 = vmatpush.bf16.msra.mxu0 0
  %1081 = vmatpush.bf16.msra.mxu0 0
  %1082 = vmatpush.bf16.msra.mxu0 %v1073
  %1083 = vmatmul.bf16.gmra.mxu0 %v1052
  %v1084 = vpop.f32.mrf.mxu0
  %v1085 = vadd.f32 0.0, %v1084
  %v1086 = vpop.f32.mrf.mxu0
  %1087 = vdwg.mxu0
  %v1088 = vld [vmem:[%s691] sm:$0xf]
  %v1089 = vld [vmem:[%s691 + $0x4] sm:$0xf]
  %v1092 = vunpack.c.l.b16 %v1088
  %v1093 = vunpack.c.l.b16 %v1089
  %v1094 = vpack.c.b16 %v1093, %v1092
  %1096 = vmatpush.bf16.msra.mxu0 0
  %1097 = vmatpush.bf16.msra.mxu0 0
  %1098 = vmatpush.bf16.msra.mxu0 0
  %1099 = vmatpush.bf16.msra.mxu0 0
  %1100 = vmatpush.bf16.msra.mxu0 0
  %1101 = vmatpush.bf16.msra.mxu0 0
  %1102 = vmatpush.bf16.msra.mxu0 0
  %1103 = vmatpush.bf16.msra.mxu0 %v1094
  %1104 = vmatmul.bf16.gmra.mxu0 %v1052
  %v1105 = vpop.f32.mrf.mxu0
  %v1106 = vadd.f32 %v695, %v1105
  %v1107 = vpop.f32.mrf.mxu0
  %1108 = vdwg.mxu0
  %s1109 = scalar_lea.vmem [#allocation2], 2
  %v1110 = vld [vmem:[%s1109] sm:$0x1]
  %v1111 = vunpack.c.l.bf16 %v1110
  %s1112 = scalar_lea.vmem [#allocation2], 10
  %v1113 = vld [vmem:[%s1112] sm:$0x1]
  %v1114 = vunpack.c.l.bf16 %v1113
  %s1115 = scalar_lea.vmem [#allocation2], 18
  %v1116 = vld [vmem:[%s1115] sm:$0x1]
  %v1117 = vunpack.c.l.bf16 %v1116
  %v1118 = vadd.f32 %v1111, %v1064
  %v1119 = vmul.f32 %v1118, 0.5
  %v1120 = vtanh.pop %v1119
  %v1121 = vmul.f32 %v1120, 0.5
  %v1122 = vadd.f32 %v1121, 0.5
  %v1123 = vadd.f32 %v1114, %v1085
  %v1124 = vmul.f32 %v1123, 0.5
  %v1125 = vtanh.pop %v1124
  %v1126 = vmul.f32 %v1125, 0.5
  %v1127 = vadd.f32 %v1126, 0.5
  %v1128 = vmul.f32 %v1122, %v1106
  %v1129 = vadd.f32 %v1117, %v1128
  %v1130 = vtanh.pop %v1129
  %v1131 = vsub.f32 %v937, %v1130
  %v1132 = vmul.f32 %v1127, %v1131
  %v1133 = vadd.f32 %v1130, %v1132
  %v1134 = vld [vmem:[%s738] sm:$0xf]
  %v1135 = vld [vmem:[%s738 + $0x4] sm:$0xf]
  %v1138 = vunpack.c.l.b16 %v1134
  %v1139 = vunpack.c.l.b16 %v1135
  %v1140 = vpack.c.b16 %v1139, %v1138
  %v1142 = vsel %vm652, %v1031, 0
  %1144 = vmatpush.bf16.msra.mxu0 0
  %1145 = vmatpush.bf16.msra.mxu0 0
  %1146 = vmatpush.bf16.msra.mxu0 0
  %1147 = vmatpush.bf16.msra.mxu0 0
  %1148 = vmatpush.bf16.msra.mxu0 0
  %1149 = vmatpush.bf16.msra.mxu0 0
  %1150 = vmatpush.bf16.msra.mxu0 0
  %1151 = vmatpush.bf16.msra.mxu0 %v1140
  %1152 = vmatmul.bf16.gmra.mxu0 %v1142
  %v1153 = vpop.f32.mrf.mxu0
  %v1154 = vadd.f32 0.0, %v1153
  %v1155 = vpop.f32.mrf.mxu0
  %1156 = vdwg.mxu0
  %v1157 = vld [vmem:[%s760] sm:$0xf]
  %v1158 = vld [vmem:[%s760 + $0x4] sm:$0xf]
  %v1161 = vunpack.c.l.b16 %v1157
  %v1162 = vunpack.c.l.b16 %v1158
  %v1163 = vpack.c.b16 %v1162, %v1161
  %1165 = vmatpush.bf16.msra.mxu0 0
  %1166 = vmatpush.bf16.msra.mxu0 0
  %1167 = vmatpush.bf16.msra.mxu0 0
  %1168 = vmatpush.bf16.msra.mxu0 0
  %1169 = vmatpush.bf16.msra.mxu0 0
  %1170 = vmatpush.bf16.msra.mxu0 0
  %1171 = vmatpush.bf16.msra.mxu0 0
  %1172 = vmatpush.bf16.msra.mxu0 %v1163
  %1173 = vmatmul.bf16.gmra.mxu0 %v1142
  %v1174 = vpop.f32.mrf.mxu0
  %v1175 = vadd.f32 0.0, %v1174
  %v1176 = vpop.f32.mrf.mxu0
  %1177 = vdwg.mxu0
  %v1178 = vld [vmem:[%s782] sm:$0xf]
  %v1179 = vld [vmem:[%s782 + $0x4] sm:$0xf]
  %v1182 = vunpack.c.l.b16 %v1178
  %v1183 = vunpack.c.l.b16 %v1179
  %v1184 = vpack.c.b16 %v1183, %v1182
  %1186 = vmatpush.bf16.msra.mxu0 0
  %1187 = vmatpush.bf16.msra.mxu0 0
  %1188 = vmatpush.bf16.msra.mxu0 0
  %1189 = vmatpush.bf16.msra.mxu0 0
  %1190 = vmatpush.bf16.msra.mxu0 0
  %1191 = vmatpush.bf16.msra.mxu0 0
  %1192 = vmatpush.bf16.msra.mxu0 0
  %1193 = vmatpush.bf16.msra.mxu0 %v1184
  %1194 = vmatmul.bf16.gmra.mxu0 %v1142
  %v1195 = vpop.f32.mrf.mxu0
  %v1196 = vadd.f32 %v786, %v1195
  %v1197 = vpop.f32.mrf.mxu0
  %1198 = vdwg.mxu0
  %s1199 = scalar_lea.vmem [#allocation2], 29
  %v1200 = vld [vmem:[%s1199] sm:$0x1]
  %v1201 = vunpack.c.l.bf16 %v1200
  %s1202 = scalar_lea.vmem [#allocation2], 37
  %v1203 = vld [vmem:[%s1202] sm:$0x1]
  %v1204 = vunpack.c.l.bf16 %v1203
  %s1205 = scalar_lea.vmem [#allocation2], 45
  %v1206 = vld [vmem:[%s1205] sm:$0x1]
  %v1207 = vunpack.c.l.bf16 %v1206
  %v1208 = vadd.f32 %v1201, %v1154
  %v1209 = vmul.f32 %v1208, 0.5
  %v1210 = vtanh.pop %v1209
  %v1211 = vmul.f32 %v1210, 0.5
  %v1212 = vadd.f32 %v1211, 0.5
  %v1213 = vadd.f32 %v1204, %v1175
  %v1214 = vmul.f32 %v1213, 0.5
  %v1215 = vtanh.pop %v1214
  %v1216 = vmul.f32 %v1215, 0.5
  %v1217 = vadd.f32 %v1216, 0.5
  %v1218 = vmul.f32 %v1212, %v1196
  %v1219 = vadd.f32 %v1207, %v1218
  %v1220 = vtanh.pop %v1219
  %v1221 = vsub.f32 %v1027, %v1220
  %v1222 = vmul.f32 %v1217, %v1221
  %v1223 = vadd.f32 %v1220, %v1222
  %v1224 = vpack.c.bf16 %v1133, %v1133
  %s1225 = scalar_lea.vmem %s5, 2
  %1226 = vst.msk [vmem:[%s1225] sm:$0x1] %vm132, %v1224
  %v1227 = vpack.c.bf16 %v1223, %v1223
  %v1229 = vrot.slane %v1227, 3
  %v1232 = vsel %vm96, %v1227, %v1229
  %1234 = vrot.lane.b32.xlu0 %v1232, 16
  %v1235 = vpop.permute.xlu0 %1234
  %s1237 = scalar_lea.vmem %s5, 5
  %1238 = vst.msk [vmem:[%s1237] sm:$0x1] %vm845, %v1235
  %v1239 = vld [vmem:[%s2] sm:$0xf]
  %v1240 = vld [vmem:[%s2 + $0x4] sm:$0xf]
  %v1243 = vunpack.c.l.b16 %v1239
  %v1244 = vunpack.c.l.b16 %v1240
  %v1245 = vpack.c.b16 %v1244, %v1243
  %v1248 = vsel %vm652, %v1224, 0
  %1250 = vmatpush.bf16.msra.mxu0 0
  %1251 = vmatpush.bf16.msra.mxu0 0
  %1252 = vmatpush.bf16.msra.mxu0 0
  %1253 = vmatpush.bf16.msra.mxu0 0
  %1254 = vmatpush.bf16.msra.mxu0 0
  %1255 = vmatpush.bf16.msra.mxu0 0
  %1256 = vmatpush.bf16.msra.mxu0 0
  %1257 = vmatpush.bf16.msra.mxu0 %v1245
  %1258 = vmatmul.bf16.gmra.mxu0 %v1248
  %v1259 = vpop.f32.mrf.mxu0
  %v1260 = vadd.f32 0.0, %v1259
  %v1261 = vpop.f32.mrf.mxu0
  %1262 = vdwg.mxu0
  %v1263 = vld [vmem:[%s669] sm:$0xf]
  %v1264 = vld [vmem:[%s669 + $0x4] sm:$0xf]
  %v1267 = vunpack.c.l.b16 %v1263
  %v1268 = vunpack.c.l.b16 %v1264
  %v1269 = vpack.c.b16 %v1268, %v1267
  %1271 = vmatpush.bf16.msra.mxu0 0
  %1272 = vmatpush.bf16.msra.mxu0 0
  %1273 = vmatpush.bf16.msra.mxu0 0
  %1274 = vmatpush.bf16.msra.mxu0 0
  %1275 = vmatpush.bf16.msra.mxu0 0
  %1276 = vmatpush.bf16.msra.mxu0 0
  %1277 = vmatpush.bf16.msra.mxu0 0
  %1278 = vmatpush.bf16.msra.mxu0 %v1269
  %1279 = vmatmul.bf16.gmra.mxu0 %v1248
  %v1280 = vpop.f32.mrf.mxu0
  %v1281 = vadd.f32 0.0, %v1280
  %v1282 = vpop.f32.mrf.mxu0
  %1283 = vdwg.mxu0
  %v1284 = vld [vmem:[%s691] sm:$0xf]
  %v1285 = vld [vmem:[%s691 + $0x4] sm:$0xf]
  %v1288 = vunpack.c.l.b16 %v1284
  %v1289 = vunpack.c.l.b16 %v1285
  %v1290 = vpack.c.b16 %v1289, %v1288
  %1292 = vmatpush.bf16.msra.mxu0 0
  %1293 = vmatpush.bf16.msra.mxu0 0
  %1294 = vmatpush.bf16.msra.mxu0 0
  %1295 = vmatpush.bf16.msra.mxu0 0
  %1296 = vmatpush.bf16.msra.mxu0 0
  %1297 = vmatpush.bf16.msra.mxu0 0
  %1298 = vmatpush.bf16.msra.mxu0 0
  %1299 = vmatpush.bf16.msra.mxu0 %v1290
  %1300 = vmatmul.bf16.gmra.mxu0 %v1248
  %v1301 = vpop.f32.mrf.mxu0
  %v1302 = vadd.f32 %v695, %v1301
  %v1303 = vpop.f32.mrf.mxu0
  %1304 = vdwg.mxu0
  %s1305 = scalar_lea.vmem [#allocation2], 3
  %v1306 = vld [vmem:[%s1305] sm:$0x1]
  %v1307 = vunpack.c.l.bf16 %v1306
  %s1308 = scalar_lea.vmem [#allocation2], 11
  %v1309 = vld [vmem:[%s1308] sm:$0x1]
  %v1310 = vunpack.c.l.bf16 %v1309
  %s1311 = scalar_lea.vmem [#allocation2], 19
  %v1312 = vld [vmem:[%s1311] sm:$0x1]
  %v1313 = vunpack.c.l.bf16 %v1312
  %v1314 = vadd.f32 %v1307, %v1260
  %v1315 = vmul.f32 %v1314, 0.5
  %v1316 = vtanh.pop %v1315
  %v1317 = vmul.f32 %v1316, 0.5
  %v1318 = vadd.f32 %v1317, 0.5
  %v1319 = vadd.f32 %v1310, %v1281
  %v1320 = vmul.f32 %v1319, 0.5
  %v1321 = vtanh.pop %v1320
  %v1322 = vmul.f32 %v1321, 0.5
  %v1323 = vadd.f32 %v1322, 0.5
  %v1324 = vmul.f32 %v1318, %v1302
  %v1325 = vadd.f32 %v1313, %v1324
  %v1326 = vtanh.pop %v1325
  %v1327 = vsub.f32 %v1133, %v1326
  %v1328 = vmul.f32 %v1323, %v1327
  %v1329 = vadd.f32 %v1326, %v1328
  %v1330 = vld [vmem:[%s738] sm:$0xf]
  %v1331 = vld [vmem:[%s738 + $0x4] sm:$0xf]
  %v1334 = vunpack.c.l.b16 %v1330
  %v1335 = vunpack.c.l.b16 %v1331
  %v1336 = vpack.c.b16 %v1335, %v1334
  %v1338 = vsel %vm652, %v1227, 0
  %1340 = vmatpush.bf16.msra.mxu0 0
  %1341 = vmatpush.bf16.msra.mxu0 0
  %1342 = vmatpush.bf16.msra.mxu0 0
  %1343 = vmatpush.bf16.msra.mxu0 0
  %1344 = vmatpush.bf16.msra.mxu0 0
  %1345 = vmatpush.bf16.msra.mxu0 0
  %1346 = vmatpush.bf16.msra.mxu0 0
  %1347 = vmatpush.bf16.msra.mxu0 %v1336
  %1348 = vmatmul.bf16.gmra.mxu0 %v1338
  %v1349 = vpop.f32.mrf.mxu0
  %v1350 = vadd.f32 0.0, %v1349
  %v1351 = vpop.f32.mrf.mxu0
  %1352 = vdwg.mxu0
  %v1353 = vld [vmem:[%s760] sm:$0xf]
  %v1354 = vld [vmem:[%s760 + $0x4] sm:$0xf]
  %v1357 = vunpack.c.l.b16 %v1353
  %v1358 = vunpack.c.l.b16 %v1354
  %v1359 = vpack.c.b16 %v1358, %v1357
  %1361 = vmatpush.bf16.msra.mxu0 0
  %1362 = vmatpush.bf16.msra.mxu0 0
  %1363 = vmatpush.bf16.msra.mxu0 0
  %1364 = vmatpush.bf16.msra.mxu0 0
  %1365 = vmatpush.bf16.msra.mxu0 0
  %1366 = vmatpush.bf16.msra.mxu0 0
  %1367 = vmatpush.bf16.msra.mxu0 0
  %1368 = vmatpush.bf16.msra.mxu0 %v1359
  %1369 = vmatmul.bf16.gmra.mxu0 %v1338
  %v1370 = vpop.f32.mrf.mxu0
  %v1371 = vadd.f32 0.0, %v1370
  %v1372 = vpop.f32.mrf.mxu0
  %1373 = vdwg.mxu0
  %v1374 = vld [vmem:[%s782] sm:$0xf]
  %v1375 = vld [vmem:[%s782 + $0x4] sm:$0xf]
  %v1378 = vunpack.c.l.b16 %v1374
  %v1379 = vunpack.c.l.b16 %v1375
  %v1380 = vpack.c.b16 %v1379, %v1378
  %1382 = vmatpush.bf16.msra.mxu0 0
  %1383 = vmatpush.bf16.msra.mxu0 0
  %1384 = vmatpush.bf16.msra.mxu0 0
  %1385 = vmatpush.bf16.msra.mxu0 0
  %1386 = vmatpush.bf16.msra.mxu0 0
  %1387 = vmatpush.bf16.msra.mxu0 0
  %1388 = vmatpush.bf16.msra.mxu0 0
  %1389 = vmatpush.bf16.msra.mxu0 %v1380
  %1390 = vmatmul.bf16.gmra.mxu0 %v1338
  %v1391 = vpop.f32.mrf.mxu0
  %v1392 = vadd.f32 %v786, %v1391
  %v1393 = vpop.f32.mrf.mxu0
  %1394 = vdwg.mxu0
  %s1395 = scalar_lea.vmem [#allocation2], 28
  %v1396 = vld [vmem:[%s1395] sm:$0x1]
  %v1397 = vunpack.c.l.bf16 %v1396
  %s1398 = scalar_lea.vmem [#allocation2], 36
  %v1399 = vld [vmem:[%s1398] sm:$0x1]
  %v1400 = vunpack.c.l.bf16 %v1399
  %s1401 = scalar_lea.vmem [#allocation2], 44
  %v1402 = vld [vmem:[%s1401] sm:$0x1]
  %v1403 = vunpack.c.l.bf16 %v1402
  %v1404 = vadd.f32 %v1397, %v1350
  %v1405 = vmul.f32 %v1404, 0.5
  %v1406 = vtanh.pop %v1405
  %v1407 = vmul.f32 %v1406, 0.5
  %v1408 = vadd.f32 %v1407, 0.5
  %v1409 = vadd.f32 %v1400, %v1371
  %v1410 = vmul.f32 %v1409, 0.5
  %v1411 = vtanh.pop %v1410
  %v1412 = vmul.f32 %v1411, 0.5
  %v1413 = vadd.f32 %v1412, 0.5
  %v1414 = vmul.f32 %v1408, %v1392
  %v1415 = vadd.f32 %v1403, %v1414
  %v1416 = vtanh.pop %v1415
  %v1417 = vsub.f32 %v1223, %v1416
  %v1418 = vmul.f32 %v1413, %v1417
  %v1419 = vadd.f32 %v1416, %v1418
  %v1420 = vpack.c.bf16 %v1329, %v1329
  %s1421 = scalar_lea.vmem %s5, 3
  %1422 = vst.msk [vmem:[%s1421] sm:$0x1] %vm132, %v1420
  %v1423 = vpack.c.bf16 %v1419, %v1419
  %v1425 = vrot.slane %v1423, 3
  %v1428 = vsel %vm96, %v1423, %v1425
  %1430 = vrot.lane.b32.xlu0 %v1428, 16
  %v1431 = vpop.permute.xlu0 %1430
  %s1433 = scalar_lea.vmem %s5, 4
  %1434 = vst.msk [vmem:[%s1433] sm:$0x1] %vm845, %v1431
  %v1435 = vld [vmem:[%s2] sm:$0xf]
  %v1436 = vld [vmem:[%s2 + $0x4] sm:$0xf]
  %v1439 = vunpack.c.l.b16 %v1435
  %v1440 = vunpack.c.l.b16 %v1436
  %v1441 = vpack.c.b16 %v1440, %v1439
  %v1444 = vsel %vm652, %v1420, 0
  %1446 = vmatpush.bf16.msra.mxu0 0
  %1447 = vmatpush.bf16.msra.mxu0 0
  %1448 = vmatpush.bf16.msra.mxu0 0
  %1449 = vmatpush.bf16.msra.mxu0 0
  %1450 = vmatpush.bf16.msra.mxu0 0
  %1451 = vmatpush.bf16.msra.mxu0 0
  %1452 = vmatpush.bf16.msra.mxu0 0
  %1453 = vmatpush.bf16.msra.mxu0 %v1441
  %1454 = vmatmul.bf16.gmra.mxu0 %v1444
  %v1455 = vpop.f32.mrf.mxu0
  %v1456 = vadd.f32 0.0, %v1455
  %v1457 = vpop.f32.mrf.mxu0
  %1458 = vdwg.mxu0
  %v1459 = vld [vmem:[%s669] sm:$0xf]
  %v1460 = vld [vmem:[%s669 + $0x4] sm:$0xf]
  %v1463 = vunpack.c.l.b16 %v1459
  %v1464 = vunpack.c.l.b16 %v1460
  %v1465 = vpack.c.b16 %v1464, %v1463
  %1467 = vmatpush.bf16.msra.mxu0 0
  %1468 = vmatpush.bf16.msra.mxu0 0
  %1469 = vmatpush.bf16.msra.mxu0 0
  %1470 = vmatpush.bf16.msra.mxu0 0
  %1471 = vmatpush.bf16.msra.mxu0 0
  %1472 = vmatpush.bf16.msra.mxu0 0
  %1473 = vmatpush.bf16.msra.mxu0 0
  %1474 = vmatpush.bf16.msra.mxu0 %v1465
  %1475 = vmatmul.bf16.gmra.mxu0 %v1444
  %v1476 = vpop.f32.mrf.mxu0
  %v1477 = vadd.f32 0.0, %v1476
  %v1478 = vpop.f32.mrf.mxu0
  %1479 = vdwg.mxu0
  %v1480 = vld [vmem:[%s691] sm:$0xf]
  %v1481 = vld [vmem:[%s691 + $0x4] sm:$0xf]
  %v1484 = vunpack.c.l.b16 %v1480
  %v1485 = vunpack.c.l.b16 %v1481
  %v1486 = vpack.c.b16 %v1485, %v1484
  %1488 = vmatpush.bf16.msra.mxu0 0
  %1489 = vmatpush.bf16.msra.mxu0 0
  %1490 = vmatpush.bf16.msra.mxu0 0
  %1491 = vmatpush.bf16.msra.mxu0 0
  %1492 = vmatpush.bf16.msra.mxu0 0
  %1493 = vmatpush.bf16.msra.mxu0 0
  %1494 = vmatpush.bf16.msra.mxu0 0
  %1495 = vmatpush.bf16.msra.mxu0 %v1486
  %1496 = vmatmul.bf16.gmra.mxu0 %v1444
  %v1497 = vpop.f32.mrf.mxu0
  %v1498 = vadd.f32 %v695, %v1497
  %v1499 = vpop.f32.mrf.mxu0
  %1500 = vdwg.mxu0
  %s1501 = scalar_lea.vmem [#allocation2], 4
  %v1502 = vld [vmem:[%s1501] sm:$0x1]
  %v1503 = vunpack.c.l.bf16 %v1502
  %s1504 = scalar_lea.vmem [#allocation2], 12
  %v1505 = vld [vmem:[%s1504] sm:$0x1]
  %v1506 = vunpack.c.l.bf16 %v1505
  %s1507 = scalar_lea.vmem [#allocation2], 20
  %v1508 = vld [vmem:[%s1507] sm:$0x1]
  %v1509 = vunpack.c.l.bf16 %v1508
  %v1510 = vadd.f32 %v1503, %v1456
  %v1511 = vmul.f32 %v1510, 0.5
  %v1512 = vtanh.pop %v1511
  %v1513 = vmul.f32 %v1512, 0.5
  %v1514 = vadd.f32 %v1513, 0.5
  %v1515 = vadd.f32 %v1506, %v1477
  %v1516 = vmul.f32 %v1515, 0.5
  %v1517 = vtanh.pop %v1516
  %v1518 = vmul.f32 %v1517, 0.5
  %v1519 = vadd.f32 %v1518, 0.5
  %v1520 = vmul.f32 %v1514, %v1498
  %v1521 = vadd.f32 %v1509, %v1520
  %v1522 = vtanh.pop %v1521
  %v1523 = vsub.f32 %v1329, %v1522
  %v1524 = vmul.f32 %v1519, %v1523
  %v1525 = vadd.f32 %v1522, %v1524
  %v1526 = vld [vmem:[%s738] sm:$0xf]
  %v1527 = vld [vmem:[%s738 + $0x4] sm:$0xf]
  %v1530 = vunpack.c.l.b16 %v1526
  %v1531 = vunpack.c.l.b16 %v1527
  %v1532 = vpack.c.b16 %v1531, %v1530
  %v1534 = vsel %vm652, %v1423, 0
  %1536 = vmatpush.bf16.msra.mxu0 0
  %1537 = vmatpush.bf16.msra.mxu0 0
  %1538 = vmatpush.bf16.msra.mxu0 0
  %1539 = vmatpush.bf16.msra.mxu0 0
  %1540 = vmatpush.bf16.msra.mxu0 0
  %1541 = vmatpush.bf16.msra.mxu0 0
  %1542 = vmatpush.bf16.msra.mxu0 0
  %1543 = vmatpush.bf16.msra.mxu0 %v1532
  %1544 = vmatmul.bf16.gmra.mxu0 %v1534
  %v1545 = vpop.f32.mrf.mxu0
  %v1546 = vadd.f32 0.0, %v1545
  %v1547 = vpop.f32.mrf.mxu0
  %1548 = vdwg.mxu0
  %v1549 = vld [vmem:[%s760] sm:$0xf]
  %v1550 = vld [vmem:[%s760 + $0x4] sm:$0xf]
  %v1553 = vunpack.c.l.b16 %v1549
  %v1554 = vunpack.c.l.b16 %v1550
  %v1555 = vpack.c.b16 %v1554, %v1553
  %1557 = vmatpush.bf16.msra.mxu0 0
  %1558 = vmatpush.bf16.msra.mxu0 0
  %1559 = vmatpush.bf16.msra.mxu0 0
  %1560 = vmatpush.bf16.msra.mxu0 0
  %1561 = vmatpush.bf16.msra.mxu0 0
  %1562 = vmatpush.bf16.msra.mxu0 0
  %1563 = vmatpush.bf16.msra.mxu0 0
  %1564 = vmatpush.bf16.msra.mxu0 %v1555
  %1565 = vmatmul.bf16.gmra.mxu0 %v1534
  %v1566 = vpop.f32.mrf.mxu0
  %v1567 = vadd.f32 0.0, %v1566
  %v1568 = vpop.f32.mrf.mxu0
  %1569 = vdwg.mxu0
  %v1570 = vld [vmem:[%s782] sm:$0xf]
  %v1571 = vld [vmem:[%s782 + $0x4] sm:$0xf]
  %v1574 = vunpack.c.l.b16 %v1570
  %v1575 = vunpack.c.l.b16 %v1571
  %v1576 = vpack.c.b16 %v1575, %v1574
  %1578 = vmatpush.bf16.msra.mxu0 0
  %1579 = vmatpush.bf16.msra.mxu0 0
  %1580 = vmatpush.bf16.msra.mxu0 0
  %1581 = vmatpush.bf16.msra.mxu0 0
  %1582 = vmatpush.bf16.msra.mxu0 0
  %1583 = vmatpush.bf16.msra.mxu0 0
  %1584 = vmatpush.bf16.msra.mxu0 0
  %1585 = vmatpush.bf16.msra.mxu0 %v1576
  %1586 = vmatmul.bf16.gmra.mxu0 %v1534
  %v1587 = vpop.f32.mrf.mxu0
  %v1588 = vadd.f32 %v786, %v1587
  %v1589 = vpop.f32.mrf.mxu0
  %1590 = vdwg.mxu0
  %s1591 = scalar_lea.vmem [#allocation2], 27
  %v1592 = vld [vmem:[%s1591] sm:$0x1]
  %v1593 = vunpack.c.l.bf16 %v1592
  %s1594 = scalar_lea.vmem [#allocation2], 35
  %v1595 = vld [vmem:[%s1594] sm:$0x1]
  %v1596 = vunpack.c.l.bf16 %v1595
  %s1597 = scalar_lea.vmem [#allocation2], 43
  %v1598 = vld [vmem:[%s1597] sm:$0x1]
  %v1599 = vunpack.c.l.bf16 %v1598
  %v1600 = vadd.f32 %v1593, %v1546
  %v1601 = vmul.f32 %v1600, 0.5
  %v1602 = vtanh.pop %v1601
  %v1603 = vmul.f32 %v1602, 0.5
  %v1604 = vadd.f32 %v1603, 0.5
  %v1605 = vadd.f32 %v1596, %v1567
  %v1606 = vmul.f32 %v1605, 0.5
  %v1607 = vtanh.pop %v1606
  %v1608 = vmul.f32 %v1607, 0.5
  %v1609 = vadd.f32 %v1608, 0.5
  %v1610 = vmul.f32 %v1604, %v1588
  %v1611 = vadd.f32 %v1599, %v1610
  %v1612 = vtanh.pop %v1611
  %v1613 = vsub.f32 %v1419, %v1612
  %v1614 = vmul.f32 %v1609, %v1613
  %v1615 = vadd.f32 %v1612, %v1614
  %v1616 = vpack.c.bf16 %v1525, %v1525
  %1617 = vst.msk [vmem:[%s1433] sm:$0x1] %vm132, %v1616
  %v1618 = vpack.c.bf16 %v1615, %v1615
  %v1620 = vrot.slane %v1618, 3
  %v1623 = vsel %vm96, %v1618, %v1620
  %1625 = vrot.lane.b32.xlu0 %v1623, 16
  %v1626 = vpop.permute.xlu0 %1625
  %1628 = vst.msk [vmem:[%s1421] sm:$0x1] %vm845, %v1626
  %v1629 = vld [vmem:[%s2] sm:$0xf]
  %v1630 = vld [vmem:[%s2 + $0x4] sm:$0xf]
  %v1633 = vunpack.c.l.b16 %v1629
  %v1634 = vunpack.c.l.b16 %v1630
  %v1635 = vpack.c.b16 %v1634, %v1633
  %v1638 = vsel %vm652, %v1616, 0
  %1640 = vmatpush.bf16.msra.mxu0 0
  %1641 = vmatpush.bf16.msra.mxu0 0
  %1642 = vmatpush.bf16.msra.mxu0 0
  %1643 = vmatpush.bf16.msra.mxu0 0
  %1644 = vmatpush.bf16.msra.mxu0 0
  %1645 = vmatpush.bf16.msra.mxu0 0
  %1646 = vmatpush.bf16.msra.mxu0 0
  %1647 = vmatpush.bf16.msra.mxu0 %v1635
  %1648 = vmatmul.bf16.gmra.mxu0 %v1638
  %v1649 = vpop.f32.mrf.mxu0
  %v1650 = vadd.f32 0.0, %v1649
  %v1651 = vpop.f32.mrf.mxu0
  %1652 = vdwg.mxu0
  %v1653 = vld [vmem:[%s669] sm:$0xf]
  %v1654 = vld [vmem:[%s669 + $0x4] sm:$0xf]
  %v1657 = vunpack.c.l.b16 %v1653
  %v1658 = vunpack.c.l.b16 %v1654
  %v1659 = vpack.c.b16 %v1658, %v1657
  %1661 = vmatpush.bf16.msra.mxu0 0
  %1662 = vmatpush.bf16.msra.mxu0 0
  %1663 = vmatpush.bf16.msra.mxu0 0
  %1664 = vmatpush.bf16.msra.mxu0 0
  %1665 = vmatpush.bf16.msra.mxu0 0
  %1666 = vmatpush.bf16.msra.mxu0 0
  %1667 = vmatpush.bf16.msra.mxu0 0
  %1668 = vmatpush.bf16.msra.mxu0 %v1659
  %1669 = vmatmul.bf16.gmra.mxu0 %v1638
  %v1670 = vpop.f32.mrf.mxu0
  %v1671 = vadd.f32 0.0, %v1670
  %v1672 = vpop.f32.mrf.mxu0
  %1673 = vdwg.mxu0
  %v1674 = vld [vmem:[%s691] sm:$0xf]
  %v1675 = vld [vmem:[%s691 + $0x4] sm:$0xf]
  %v1678 = vunpack.c.l.b16 %v1674
  %v1679 = vunpack.c.l.b16 %v1675
  %v1680 = vpack.c.b16 %v1679, %v1678
  %1682 = vmatpush.bf16.msra.mxu0 0
  %1683 = vmatpush.bf16.msra.mxu0 0
  %1684 = vmatpush.bf16.msra.mxu0 0
  %1685 = vmatpush.bf16.msra.mxu0 0
  %1686 = vmatpush.bf16.msra.mxu0 0
  %1687 = vmatpush.bf16.msra.mxu0 0
  %1688 = vmatpush.bf16.msra.mxu0 0
  %1689 = vmatpush.bf16.msra.mxu0 %v1680
  %1690 = vmatmul.bf16.gmra.mxu0 %v1638
  %v1691 = vpop.f32.mrf.mxu0
  %v1692 = vadd.f32 %v695, %v1691
  %v1693 = vpop.f32.mrf.mxu0
  %1694 = vdwg.mxu0
  %s1695 = scalar_lea.vmem [#allocation2], 5
  %v1696 = vld [vmem:[%s1695] sm:$0x1]
  %v1697 = vunpack.c.l.bf16 %v1696
  %s1698 = scalar_lea.vmem [#allocation2], 13
  %v1699 = vld [vmem:[%s1698] sm:$0x1]
  %v1700 = vunpack.c.l.bf16 %v1699
  %s1701 = scalar_lea.vmem [#allocation2], 21
  %v1702 = vld [vmem:[%s1701] sm:$0x1]
  %v1703 = vunpack.c.l.bf16 %v1702
  %v1704 = vadd.f32 %v1697, %v1650
  %v1705 = vmul.f32 %v1704, 0.5
  %v1706 = vtanh.pop %v1705
  %v1707 = vmul.f32 %v1706, 0.5
  %v1708 = vadd.f32 %v1707, 0.5
  %v1709 = vadd.f32 %v1700, %v1671
  %v1710 = vmul.f32 %v1709, 0.5
  %v1711 = vtanh.pop %v1710
  %v1712 = vmul.f32 %v1711, 0.5
  %v1713 = vadd.f32 %v1712, 0.5
  %v1714 = vmul.f32 %v1708, %v1692
  %v1715 = vadd.f32 %v1703, %v1714
  %v1716 = vtanh.pop %v1715
  %v1717 = vsub.f32 %v1525, %v1716
  %v1718 = vmul.f32 %v1713, %v1717
  %v1719 = vadd.f32 %v1716, %v1718
  %v1720 = vld [vmem:[%s738] sm:$0xf]
  %v1721 = vld [vmem:[%s738 + $0x4] sm:$0xf]
  %v1724 = vunpack.c.l.b16 %v1720
  %v1725 = vunpack.c.l.b16 %v1721
  %v1726 = vpack.c.b16 %v1725, %v1724
  %v1728 = vsel %vm652, %v1618, 0
  %1730 = vmatpush.bf16.msra.mxu0 0
  %1731 = vmatpush.bf16.msra.mxu0 0
  %1732 = vmatpush.bf16.msra.mxu0 0
  %1733 = vmatpush.bf16.msra.mxu0 0
  %1734 = vmatpush.bf16.msra.mxu0 0
  %1735 = vmatpush.bf16.msra.mxu0 0
  %1736 = vmatpush.bf16.msra.mxu0 0
  %1737 = vmatpush.bf16.msra.mxu0 %v1726
  %1738 = vmatmul.bf16.gmra.mxu0 %v1728
  %v1739 = vpop.f32.mrf.mxu0
  %v1740 = vadd.f32 0.0, %v1739
  %v1741 = vpop.f32.mrf.mxu0
  %1742 = vdwg.mxu0
  %v1743 = vld [vmem:[%s760] sm:$0xf]
  %v1744 = vld [vmem:[%s760 + $0x4] sm:$0xf]
  %v1747 = vunpack.c.l.b16 %v1743
  %v1748 = vunpack.c.l.b16 %v1744
  %v1749 = vpack.c.b16 %v1748, %v1747
  %1751 = vmatpush.bf16.msra.mxu0 0
  %1752 = vmatpush.bf16.msra.mxu0 0
  %1753 = vmatpush.bf16.msra.mxu0 0
  %1754 = vmatpush.bf16.msra.mxu0 0
  %1755 = vmatpush.bf16.msra.mxu0 0
  %1756 = vmatpush.bf16.msra.mxu0 0
  %1757 = vmatpush.bf16.msra.mxu0 0
  %1758 = vmatpush.bf16.msra.mxu0 %v1749
  %1759 = vmatmul.bf16.gmra.mxu0 %v1728
  %v1760 = vpop.f32.mrf.mxu0
  %v1761 = vadd.f32 0.0, %v1760
  %v1762 = vpop.f32.mrf.mxu0
  %1763 = vdwg.mxu0
  %v1764 = vld [vmem:[%s782] sm:$0xf]
  %v1765 = vld [vmem:[%s782 + $0x4] sm:$0xf]
  %v1768 = vunpack.c.l.b16 %v1764
  %v1769 = vunpack.c.l.b16 %v1765
  %v1770 = vpack.c.b16 %v1769, %v1768
  %1772 = vmatpush.bf16.msra.mxu0 0
  %1773 = vmatpush.bf16.msra.mxu0 0
  %1774 = vmatpush.bf16.msra.mxu0 0
  %1775 = vmatpush.bf16.msra.mxu0 0
  %1776 = vmatpush.bf16.msra.mxu0 0
  %1777 = vmatpush.bf16.msra.mxu0 0
  %1778 = vmatpush.bf16.msra.mxu0 0
  %1779 = vmatpush.bf16.msra.mxu0 %v1770
  %1780 = vmatmul.bf16.gmra.mxu0 %v1728
  %v1781 = vpop.f32.mrf.mxu0
  %v1782 = vadd.f32 %v786, %v1781
  %v1783 = vpop.f32.mrf.mxu0
  %1784 = vdwg.mxu0
  %s1785 = scalar_lea.vmem [#allocation2], 26
  %v1786 = vld [vmem:[%s1785] sm:$0x1]
  %v1787 = vunpack.c.l.bf16 %v1786
  %s1788 = scalar_lea.vmem [#allocation2], 34
  %v1789 = vld [vmem:[%s1788] sm:$0x1]
  %v1790 = vunpack.c.l.bf16 %v1789
  %s1791 = scalar_lea.vmem [#allocation2], 42
  %v1792 = vld [vmem:[%s1791] sm:$0x1]
  %v1793 = vunpack.c.l.bf16 %v1792
  %v1794 = vadd.f32 %v1787, %v1740
  %v1795 = vmul.f32 %v1794, 0.5
  %v1796 = vtanh.pop %v1795
  %v1797 = vmul.f32 %v1796, 0.5
  %v1798 = vadd.f32 %v1797, 0.5
  %v1799 = vadd.f32 %v1790, %v1761
  %v1800 = vmul.f32 %v1799, 0.5
  %v1801 = vtanh.pop %v1800
  %v1802 = vmul.f32 %v1801, 0.5
  %v1803 = vadd.f32 %v1802, 0.5
  %v1804 = vmul.f32 %v1798, %v1782
  %v1805 = vadd.f32 %v1793, %v1804
  %v1806 = vtanh.pop %v1805
  %v1807 = vsub.f32 %v1615, %v1806
  %v1808 = vmul.f32 %v1803, %v1807
  %v1809 = vadd.f32 %v1806, %v1808
  %v1810 = vpack.c.bf16 %v1719, %v1719
  %1811 = vst.msk [vmem:[%s1237] sm:$0x1] %vm132, %v1810
  %v1812 = vpack.c.bf16 %v1809, %v1809
  %v1814 = vrot.slane %v1812, 3
  %v1817 = vsel %vm96, %v1812, %v1814
  %1819 = vrot.lane.b32.xlu0 %v1817, 16
  %v1820 = vpop.permute.xlu0 %1819
  %1822 = vst.msk [vmem:[%s1225] sm:$0x1] %vm845, %v1820
  %v1823 = vld [vmem:[%s2] sm:$0xf]
  %v1824 = vld [vmem:[%s2 + $0x4] sm:$0xf]
  %v1827 = vunpack.c.l.b16 %v1823
  %v1828 = vunpack.c.l.b16 %v1824
  %v1829 = vpack.c.b16 %v1828, %v1827
  %v1832 = vsel %vm652, %v1810, 0
  %1834 = vmatpush.bf16.msra.mxu0 0
  %1835 = vmatpush.bf16.msra.mxu0 0
  %1836 = vmatpush.bf16.msra.mxu0 0
  %1837 = vmatpush.bf16.msra.mxu0 0
  %1838 = vmatpush.bf16.msra.mxu0 0
  %1839 = vmatpush.bf16.msra.mxu0 0
  %1840 = vmatpush.bf16.msra.mxu0 0
  %1841 = vmatpush.bf16.msra.mxu0 %v1829
  %1842 = vmatmul.bf16.gmra.mxu0 %v1832
  %v1843 = vpop.f32.mrf.mxu0
  %v1844 = vadd.f32 0.0, %v1843
  %v1845 = vpop.f32.mrf.mxu0
  %1846 = vdwg.mxu0
  %v1847 = vld [vmem:[%s669] sm:$0xf]
  %v1848 = vld [vmem:[%s669 + $0x4] sm:$0xf]
  %v1851 = vunpack.c.l.b16 %v1847
  %v1852 = vunpack.c.l.b16 %v1848
  %v1853 = vpack.c.b16 %v1852, %v1851
  %1855 = vmatpush.bf16.msra.mxu0 0
  %1856 = vmatpush.bf16.msra.mxu0 0
  %1857 = vmatpush.bf16.msra.mxu0 0
  %1858 = vmatpush.bf16.msra.mxu0 0
  %1859 = vmatpush.bf16.msra.mxu0 0
  %1860 = vmatpush.bf16.msra.mxu0 0
  %1861 = vmatpush.bf16.msra.mxu0 0
  %1862 = vmatpush.bf16.msra.mxu0 %v1853
  %1863 = vmatmul.bf16.gmra.mxu0 %v1832
  %v1864 = vpop.f32.mrf.mxu0
  %v1865 = vadd.f32 0.0, %v1864
  %v1866 = vpop.f32.mrf.mxu0
  %1867 = vdwg.mxu0
  %v1868 = vld [vmem:[%s691] sm:$0xf]
  %v1869 = vld [vmem:[%s691 + $0x4] sm:$0xf]
  %v1872 = vunpack.c.l.b16 %v1868
  %v1873 = vunpack.c.l.b16 %v1869
  %v1874 = vpack.c.b16 %v1873, %v1872
  %1876 = vmatpush.bf16.msra.mxu0 0
  %1877 = vmatpush.bf16.msra.mxu0 0
  %1878 = vmatpush.bf16.msra.mxu0 0
  %1879 = vmatpush.bf16.msra.mxu0 0
  %1880 = vmatpush.bf16.msra.mxu0 0
  %1881 = vmatpush.bf16.msra.mxu0 0
  %1882 = vmatpush.bf16.msra.mxu0 0
  %1883 = vmatpush.bf16.msra.mxu0 %v1874
  %1884 = vmatmul.bf16.gmra.mxu0 %v1832
  %v1885 = vpop.f32.mrf.mxu0
  %v1886 = vadd.f32 %v695, %v1885
  %v1887 = vpop.f32.mrf.mxu0
  %1888 = vdwg.mxu0
  %s1889 = scalar_lea.vmem [#allocation2], 6
  %v1890 = vld [vmem:[%s1889] sm:$0x1]
  %v1891 = vunpack.c.l.bf16 %v1890
  %s1892 = scalar_lea.vmem [#allocation2], 14
  %v1893 = vld [vmem:[%s1892] sm:$0x1]
  %v1894 = vunpack.c.l.bf16 %v1893
  %s1895 = scalar_lea.vmem [#allocation2], 22
  %v1896 = vld [vmem:[%s1895] sm:$0x1]
  %v1897 = vunpack.c.l.bf16 %v1896
  %v1898 = vadd.f32 %v1891, %v1844
  %v1899 = vmul.f32 %v1898, 0.5
  %v1900 = vtanh.pop %v1899
  %v1901 = vmul.f32 %v1900, 0.5
  %v1902 = vadd.f32 %v1901, 0.5
  %v1903 = vadd.f32 %v1894, %v1865
  %v1904 = vmul.f32 %v1903, 0.5
  %v1905 = vtanh.pop %v1904
  %v1906 = vmul.f32 %v1905, 0.5
  %v1907 = vadd.f32 %v1906, 0.5
  %v1908 = vmul.f32 %v1902, %v1886
  %v1909 = vadd.f32 %v1897, %v1908
  %v1910 = vtanh.pop %v1909
  %v1911 = vsub.f32 %v1719, %v1910
  %v1912 = vmul.f32 %v1907, %v1911
  %v1913 = vadd.f32 %v1910, %v1912
  %v1914 = vld [vmem:[%s738] sm:$0xf]
  %v1915 = vld [vmem:[%s738 + $0x4] sm:$0xf]
  %v1918 = vunpack.c.l.b16 %v1914
  %v1919 = vunpack.c.l.b16 %v1915
  %v1920 = vpack.c.b16 %v1919, %v1918
  %v1922 = vsel %vm652, %v1812, 0
  %1924 = vmatpush.bf16.msra.mxu0 0
  %1925 = vmatpush.bf16.msra.mxu0 0
  %1926 = vmatpush.bf16.msra.mxu0 0
  %1927 = vmatpush.bf16.msra.mxu0 0
  %1928 = vmatpush.bf16.msra.mxu0 0
  %1929 = vmatpush.bf16.msra.mxu0 0
  %1930 = vmatpush.bf16.msra.mxu0 0
  %1931 = vmatpush.bf16.msra.mxu0 %v1920
  %1932 = vmatmul.bf16.gmra.mxu0 %v1922
  %v1933 = vpop.f32.mrf.mxu0
  %v1934 = vadd.f32 0.0, %v1933
  %v1935 = vpop.f32.mrf.mxu0
  %1936 = vdwg.mxu0
  %v1937 = vld [vmem:[%s760] sm:$0xf]
  %v1938 = vld [vmem:[%s760 + $0x4] sm:$0xf]
  %v1941 = vunpack.c.l.b16 %v1937
  %v1942 = vunpack.c.l.b16 %v1938
  %v1943 = vpack.c.b16 %v1942, %v1941
  %1945 = vmatpush.bf16.msra.mxu0 0
  %1946 = vmatpush.bf16.msra.mxu0 0
  %1947 = vmatpush.bf16.msra.mxu0 0
  %1948 = vmatpush.bf16.msra.mxu0 0
  %1949 = vmatpush.bf16.msra.mxu0 0
  %1950 = vmatpush.bf16.msra.mxu0 0
  %1951 = vmatpush.bf16.msra.mxu0 0
  %1952 = vmatpush.bf16.msra.mxu0 %v1943
  %1953 = vmatmul.bf16.gmra.mxu0 %v1922
  %v1954 = vpop.f32.mrf.mxu0
  %v1955 = vadd.f32 0.0, %v1954
  %v1956 = vpop.f32.mrf.mxu0
  %1957 = vdwg.mxu0
  %v1958 = vld [vmem:[%s782] sm:$0xf]
  %v1959 = vld [vmem:[%s782 + $0x4] sm:$0xf]
  %v1962 = vunpack.c.l.b16 %v1958
  %v1963 = vunpack.c.l.b16 %v1959
  %v1964 = vpack.c.b16 %v1963, %v1962
  %1966 = vmatpush.bf16.msra.mxu0 0
  %1967 = vmatpush.bf16.msra.mxu0 0
  %1968 = vmatpush.bf16.msra.mxu0 0
  %1969 = vmatpush.bf16.msra.mxu0 0
  %1970 = vmatpush.bf16.msra.mxu0 0
  %1971 = vmatpush.bf16.msra.mxu0 0
  %1972 = vmatpush.bf16.msra.mxu0 0
  %1973 = vmatpush.bf16.msra.mxu0 %v1964
  %1974 = vmatmul.bf16.gmra.mxu0 %v1922
  %v1975 = vpop.f32.mrf.mxu0
  %v1976 = vadd.f32 %v786, %v1975
  %v1977 = vpop.f32.mrf.mxu0
  %1978 = vdwg.mxu0
  %s1979 = scalar_lea.vmem [#allocation2], 25
  %v1980 = vld [vmem:[%s1979] sm:$0x1]
  %v1981 = vunpack.c.l.bf16 %v1980
  %s1982 = scalar_lea.vmem [#allocation2], 33
  %v1983 = vld [vmem:[%s1982] sm:$0x1]
  %v1984 = vunpack.c.l.bf16 %v1983
  %s1985 = scalar_lea.vmem [#allocation2], 41
  %v1986 = vld [vmem:[%s1985] sm:$0x1]
  %v1987 = vunpack.c.l.bf16 %v1986
  %v1988 = vadd.f32 %v1981, %v1934
  %v1989 = vmul.f32 %v1988, 0.5
  %v1990 = vtanh.pop %v1989
  %v1991 = vmul.f32 %v1990, 0.5
  %v1992 = vadd.f32 %v1991, 0.5
  %v1993 = vadd.f32 %v1984, %v1955
  %v1994 = vmul.f32 %v1993, 0.5
  %v1995 = vtanh.pop %v1994
  %v1996 = vmul.f32 %v1995, 0.5
  %v1997 = vadd.f32 %v1996, 0.5
  %v1998 = vmul.f32 %v1992, %v1976
  %v1999 = vadd.f32 %v1987, %v1998
  %v2000 = vtanh.pop %v1999
  %v2001 = vsub.f32 %v1809, %v2000
  %v2002 = vmul.f32 %v1997, %v2001
  %v2003 = vadd.f32 %v2000, %v2002
  %v2004 = vpack.c.bf16 %v1913, %v1913
  %2005 = vst.msk [vmem:[%s1041] sm:$0x1] %vm132, %v2004
  %v2006 = vpack.c.bf16 %v2003, %v2003
  %v2008 = vrot.slane %v2006, 3
  %v2011 = vsel %vm96, %v2006, %v2008
  %2013 = vrot.lane.b32.xlu0 %v2011, 16
  %v2014 = vpop.permute.xlu0 %2013
  %2016 = vst.msk [vmem:[%s1029] sm:$0x1] %vm845, %v2014
  %v2017 = vld [vmem:[%s2] sm:$0xf]
  %v2018 = vld [vmem:[%s2 + $0x4] sm:$0xf]
  %v2021 = vunpack.c.l.b16 %v2017
  %v2022 = vunpack.c.l.b16 %v2018
  %v2023 = vpack.c.b16 %v2022, %v2021
  %v2026 = vsel %vm652, %v2004, 0
  %2028 = vmatpush.bf16.msra.mxu0 0
  %2029 = vmatpush.bf16.msra.mxu0 0
  %2030 = vmatpush.bf16.msra.mxu0 0
  %2031 = vmatpush.bf16.msra.mxu0 0
  %2032 = vmatpush.bf16.msra.mxu0 0
  %2033 = vmatpush.bf16.msra.mxu0 0
  %2034 = vmatpush.bf16.msra.mxu0 0
  %2035 = vmatpush.bf16.msra.mxu0 %v2023
  %2036 = vmatmul.bf16.gmra.mxu0 %v2026
  %v2037 = vpop.f32.mrf.mxu0
  %v2038 = vadd.f32 0.0, %v2037
  %v2039 = vpop.f32.mrf.mxu0
  %2040 = vdwg.mxu0
  %v2041 = vld [vmem:[%s669] sm:$0xf]
  %v2042 = vld [vmem:[%s669 + $0x4] sm:$0xf]
  %v2045 = vunpack.c.l.b16 %v2041
  %v2046 = vunpack.c.l.b16 %v2042
  %v2047 = vpack.c.b16 %v2046, %v2045
  %2049 = vmatpush.bf16.msra.mxu0 0
  %2050 = vmatpush.bf16.msra.mxu0 0
  %2051 = vmatpush.bf16.msra.mxu0 0
  %2052 = vmatpush.bf16.msra.mxu0 0
  %2053 = vmatpush.bf16.msra.mxu0 0
  %2054 = vmatpush.bf16.msra.mxu0 0
  %2055 = vmatpush.bf16.msra.mxu0 0
  %2056 = vmatpush.bf16.msra.mxu0 %v2047
  %2057 = vmatmul.bf16.gmra.mxu0 %v2026
  %v2058 = vpop.f32.mrf.mxu0
  %v2059 = vadd.f32 0.0, %v2058
  %v2060 = vpop.f32.mrf.mxu0
  %2061 = vdwg.mxu0
  %v2062 = vld [vmem:[%s691] sm:$0xf]
  %v2063 = vld [vmem:[%s691 + $0x4] sm:$0xf]
  %v2066 = vunpack.c.l.b16 %v2062
  %v2067 = vunpack.c.l.b16 %v2063
  %v2068 = vpack.c.b16 %v2067, %v2066
  %2070 = vmatpush.bf16.msra.mxu0 0
  %2071 = vmatpush.bf16.msra.mxu0 0
  %2072 = vmatpush.bf16.msra.mxu0 0
  %2073 = vmatpush.bf16.msra.mxu0 0
  %2074 = vmatpush.bf16.msra.mxu0 0
  %2075 = vmatpush.bf16.msra.mxu0 0
  %2076 = vmatpush.bf16.msra.mxu0 0
  %2077 = vmatpush.bf16.msra.mxu0 %v2068
  %2078 = vmatmul.bf16.gmra.mxu0 %v2026
  %v2079 = vpop.f32.mrf.mxu0
  %v2080 = vadd.f32 %v695, %v2079
  %v2081 = vpop.f32.mrf.mxu0
  %2082 = vdwg.mxu0
  %s2083 = scalar_lea.vmem [#allocation2], 7
  %v2084 = vld [vmem:[%s2083] sm:$0x1]
  %v2085 = vunpack.c.l.bf16 %v2084
  %s2086 = scalar_lea.vmem [#allocation2], 15
  %v2087 = vld [vmem:[%s2086] sm:$0x1]
  %v2088 = vunpack.c.l.bf16 %v2087
  %s2089 = scalar_lea.vmem [#allocation2], 23
  %v2090 = vld [vmem:[%s2089] sm:$0x1]
  %v2091 = vunpack.c.l.bf16 %v2090
  %v2092 = vadd.f32 %v2085, %v2038
  %v2093 = vmul.f32 %v2092, 0.5
  %v2094 = vtanh.pop %v2093
  %v2095 = vmul.f32 %v2094, 0.5
  %v2096 = vadd.f32 %v2095, 0.5
  %v2097 = vadd.f32 %v2088, %v2059
  %v2098 = vmul.f32 %v2097, 0.5
  %v2099 = vtanh.pop %v2098
  %v2100 = vmul.f32 %v2099, 0.5
  %v2101 = vadd.f32 %v2100, 0.5
  %v2102 = vmul.f32 %v2096, %v2080
  %v2103 = vadd.f32 %v2091, %v2102
  %v2104 = vtanh.pop %v2103
  %v2105 = vsub.f32 %v1913, %v2104
  %v2106 = vmul.f32 %v2101, %v2105
  %v2107 = vadd.f32 %v2104, %v2106
  %v2108 = vld [vmem:[%s738] sm:$0xf]
  %v2109 = vld [vmem:[%s738 + $0x4] sm:$0xf]
  %v2112 = vunpack.c.l.b16 %v2108
  %v2113 = vunpack.c.l.b16 %v2109
  %v2114 = vpack.c.b16 %v2113, %v2112
  %v2116 = vsel %vm652, %v2006, 0
  %2118 = vmatpush.bf16.msra.mxu0 0
  %2119 = vmatpush.bf16.msra.mxu0 0
  %2120 = vmatpush.bf16.msra.mxu0 0
  %2121 = vmatpush.bf16.msra.mxu0 0
  %2122 = vmatpush.bf16.msra.mxu0 0
  %2123 = vmatpush.bf16.msra.mxu0 0
  %2124 = vmatpush.bf16.msra.mxu0 0
  %2125 = vmatpush.bf16.msra.mxu0 %v2114
  %2126 = vmatmul.bf16.gmra.mxu0 %v2116
  %v2127 = vpop.f32.mrf.mxu0
  %v2128 = vadd.f32 0.0, %v2127
  %v2129 = vpop.f32.mrf.mxu0
  %2130 = vdwg.mxu0
  %v2131 = vld [vmem:[%s760] sm:$0xf]
  %v2132 = vld [vmem:[%s760 + $0x4] sm:$0xf]
  %v2135 = vunpack.c.l.b16 %v2131
  %v2136 = vunpack.c.l.b16 %v2132
  %v2137 = vpack.c.b16 %v2136, %v2135
  %2139 = vmatpush.bf16.msra.mxu0 0
  %2140 = vmatpush.bf16.msra.mxu0 0
  %2141 = vmatpush.bf16.msra.mxu0 0
  %2142 = vmatpush.bf16.msra.mxu0 0
  %2143 = vmatpush.bf16.msra.mxu0 0
  %2144 = vmatpush.bf16.msra.mxu0 0
  %2145 = vmatpush.bf16.msra.mxu0 0
  %2146 = vmatpush.bf16.msra.mxu0 %v2137
  %2147 = vmatmul.bf16.gmra.mxu0 %v2116
  %v2148 = vpop.f32.mrf.mxu0
  %v2149 = vadd.f32 0.0, %v2148
  %v2150 = vpop.f32.mrf.mxu0
  %2151 = vdwg.mxu0
  %v2152 = vld [vmem:[%s782] sm:$0xf]
  %v2153 = vld [vmem:[%s782 + $0x4] sm:$0xf]
  %v2156 = vunpack.c.l.b16 %v2152
  %v2157 = vunpack.c.l.b16 %v2153
  %v2158 = vpack.c.b16 %v2157, %v2156
  %2160 = vmatpush.bf16.msra.mxu0 0
  %2161 = vmatpush.bf16.msra.mxu0 0
  %2162 = vmatpush.bf16.msra.mxu0 0
  %2163 = vmatpush.bf16.msra.mxu0 0
  %2164 = vmatpush.bf16.msra.mxu0 0
  %2165 = vmatpush.bf16.msra.mxu0 0
  %2166 = vmatpush.bf16.msra.mxu0 0
  %2167 = vmatpush.bf16.msra.mxu0 %v2158
  %2168 = vmatmul.bf16.gmra.mxu0 %v2116
  %v2169 = vpop.f32.mrf.mxu0
  %v2170 = vadd.f32 %v786, %v2169
  %v2171 = vpop.f32.mrf.mxu0
  %2172 = vdwg.mxu0
  %v2173 = vld [vmem:[%s432] sm:$0x1]
  %v2174 = vunpack.c.l.bf16 %v2173
  %v2175 = vld [vmem:[%s532] sm:$0x1]
  %v2176 = vunpack.c.l.bf16 %v2175
  %v2177 = vld [vmem:[%s632] sm:$0x1]
  %v2178 = vunpack.c.l.bf16 %v2177
  %v2179 = vadd.f32 %v2174, %v2128
  %v2180 = vmul.f32 %v2179, 0.5
  %v2181 = vtanh.pop %v2180
  %v2182 = vmul.f32 %v2181, 0.5
  %v2183 = vadd.f32 %v2182, 0.5
  %v2184 = vadd.f32 %v2176, %v2149
  %v2185 = vmul.f32 %v2184, 0.5
  %v2186 = vtanh.pop %v2185
  %v2187 = vmul.f32 %v2186, 0.5
  %v2188 = vadd.f32 %v2187, 0.5
  %v2189 = vmul.f32 %v2183, %v2170
  %v2190 = vadd.f32 %v2178, %v2189
  %v2191 = vtanh.pop %v2190
  %v2192 = vsub.f32 %v2003, %v2191
  %v2193 = vmul.f32 %v2188, %v2192
  %v2194 = vadd.f32 %v2191, %v2193
  %v2195 = vpack.c.bf16 %v2107, %v2107
  %2196 = vst.msk [vmem:[%s844] sm:$0x1] %vm132, %v2195
  %v2197 = vpack.c.bf16 %v2194, %v2194
  %v2199 = vrot.slane %v2197, 3
  %v2202 = vsel %vm96, %v2197, %v2199
  %2204 = vrot.lane.b32.xlu0 %v2202, 16
  %v2205 = vpop.permute.xlu0 %2204
  %2207 = vst.msk [vmem:[%s5] sm:$0x1] %vm845, %v2205
  // Predicated region
  $region22: #{mortality_pred_gru_forward.2} parent=0 // pred_check
    _
  $region23: #{mortality_pred_gru_forward.2} parent=0 // pred_check_branch
    %2209 = sbr.rel (0) target = $region25
  $region24: #{mortality_pred_gru_forward.2} parent=0 // pred_region
    _
  $region25: #{mortality_pred_gru_forward.2} parent=0 // pred_fallthru
    _
  // Predicated region
  $region26: #{mortality_pred_gru_forward.2} parent=0 // pred_check
    _
  $region27: #{mortality_pred_gru_forward.2} parent=0 // pred_check_branch
    %2211 = sbr.rel (0) target = $region29
  $region28: #{mortality_pred_gru_forward.2} parent=0 // pred_region
    _
  $region29: #{mortality_pred_gru_forward.2} parent=0 // pred_fallthru
    _

// kernel: mortality_pred_gru_forward.3
$region0: #{mortality_pred_gru_forward.3}
  #allocation0 [shape = 'u32[]', space=smem, size = 0x4, offset = 0x4, fixed_abs, tag = 'smem constant byte address 0x4 - core index']
  #allocation1 [shape = 'u32[72,128]{1,0:T(1,128)}', space=vmem, size = 0x9000, scoped, tag = 'internal scratch']
  #allocation2 [shape = 'f32[8,2,32]{2,1,0:T(2,128)}', space=vmem, size = 0x2000, scoped, tag = 'scratch operand']
  #allocation3 [shape = 'bf16[48,2,16]{2,1,0:T(2,128)(2,1)}', space=vmem, size = 0x6000, scoped, tag = 'scratch operand']
  #allocation4 [shape = 'f32[1,1]{1,0:T(1,128)S(1)}', space=vmem, size = 0x200, scoped, tag = 'scoped memory for mortality_pred_gru_forward.3']
  %s0 = inlined_call_operand.vmem [shape: bf16[8,2,32], index: 0, kind: input, shape index: {}]
  %s1 = inlined_call_operand.vmem [shape: bf16[6,32,16], index: 1, kind: input, shape index: {}]
  %s2 = inlined_call_operand.vmem [shape: bf16[6,16,16], index: 2, kind: input, shape index: {}]
  %s3 = inlined_call_operand.vmem [shape: f32[6,1,16], index: 3, kind: input, shape index: {}]
  %s4 = inlined_call_operand.vmem [shape: f32[2,1,16], index: 4, kind: input, shape index: {}]
  %s5 = inlined_call_operand.vmem [shape: bf16[32,16], index: 5, kind: input, shape index: {}]
  %s6 = inlined_call_operand.vmem [shape: f32[1,16], index: 6, kind: input, shape index: {}]
  %s7 = inlined_call_operand.vmem [shape: f32[1,16], index: 7, kind: input, shape index: {}]
  %s8 = inlined_call_operand.vmem [shape: f32[1,32], index: 8, kind: input, shape index: {}]
  %s9 = inlined_call_operand.<no memory space> [shape: f32[1,1], index: 9, kind: input, shape index: {}]
  %s10 = inlined_call_operand.vmem [shape: f32[2,1], index: 10, kind: output, shape index: {}]
  %s11 = sld [smem:[#allocation0]]
  $region50: #{mortality_pred_gru_forward.3} parent=0
    _
  %s13 = ssub.s32 1, %s11
  %s14 = scalar_select 0, %s13, %s11
  %v15 = vstv %s9
  %16 = vst [vmem:[#allocation4] sm:$0x1] %v15
  // Predicated region
  $region2: #{mortality_pred_gru_forward.3} parent=0 // pred_check
    _
  $region3: #{mortality_pred_gru_forward.3} parent=0 // pred_check_branch
    %18 = sbr.rel (0) target = $region5
  $region4: #{mortality_pred_gru_forward.3} parent=0 // pred_region
    _
  $region5: #{mortality_pred_gru_forward.3} parent=0 // pred_fallthru
    _
  // Predicated region
  $region6: #{mortality_pred_gru_forward.3} parent=0 // pred_check
    _
  $region7: #{mortality_pred_gru_forward.3} parent=0 // pred_check_branch
    %20 = sbr.rel (0) target = $region9
  $region8: #{mortality_pred_gru_forward.3} parent=0 // pred_region
    _
  $region9: #{mortality_pred_gru_forward.3} parent=0 // pred_fallthru
    _
  // Predicated region
  $region10: #{mortality_pred_gru_forward.3} parent=0 // pred_check
    _
  $region11: #{mortality_pred_gru_forward.3} parent=0 // pred_check_branch
    %22 = sbr.rel (0) target = $region13
  $region12: #{mortality_pred_gru_forward.3} parent=0 // pred_region
    _
  $region13: #{mortality_pred_gru_forward.3} parent=0 // pred_fallthru
    _
  // Predicated region
  $region14: #{mortality_pred_gru_forward.3} parent=0 // pred_check
    _
  $region15: #{mortality_pred_gru_forward.3} parent=0 // pred_check_branch
    %24 = sbr.rel (0) target = $region17
  $region16: #{mortality_pred_gru_forward.3} parent=0 // pred_region
    _
  $region17: #{mortality_pred_gru_forward.3} parent=0 // pred_fallthru
    _
  // Predicated region
  $region18: #{mortality_pred_gru_forward.3} parent=0 // pred_check
    _
  $region19: #{mortality_pred_gru_forward.3} parent=0 // pred_check_branch
    %26 = sbr.rel (0) target = $region21
  $region20: #{mortality_pred_gru_forward.3} parent=0 // pred_region
    _
  $region21: #{mortality_pred_gru_forward.3} parent=0 // pred_fallthru
    _
  // Predicated region
  $region22: #{mortality_pred_gru_forward.3} parent=0 // pred_check
    _
  $region23: #{mortality_pred_gru_forward.3} parent=0 // pred_check_branch
    %28 = sbr.rel (0) target = $region25
  $region24: #{mortality_pred_gru_forward.3} parent=0 // pred_region
    _
  $region25: #{mortality_pred_gru_forward.3} parent=0 // pred_fallthru
    _
  // Predicated region
  $region26: #{mortality_pred_gru_forward.3} parent=0 // pred_check
    _
  $region27: #{mortality_pred_gru_forward.3} parent=0 // pred_check_branch
    %30 = sbr.rel (0) target = $region29
  $region28: #{mortality_pred_gru_forward.3} parent=0 // pred_region
    _
  $region29: #{mortality_pred_gru_forward.3} parent=0 // pred_fallthru
    _
  // Predicated region
  $region30: #{mortality_pred_gru_forward.3} parent=0 // pred_check
    _
  $region31: #{mortality_pred_gru_forward.3} parent=0 // pred_check_branch
    %32 = sbr.rel (0) target = $region33
  $region32: #{mortality_pred_gru_forward.3} parent=0 // pred_region
    _
  $region33: #{mortality_pred_gru_forward.3} parent=0 // pred_fallthru
    _
  // Predicated region
  $region34: #{mortality_pred_gru_forward.3} parent=0 // pred_check
    _
  $region35: #{mortality_pred_gru_forward.3} parent=0 // pred_check_branch
    %34 = sbr.rel (0) target = $region37
  $region36: #{mortality_pred_gru_forward.3} parent=0 // pred_region
    _
  $region37: #{mortality_pred_gru_forward.3} parent=0 // pred_fallthru
    _
  // Predicated region
  $region38: #{mortality_pred_gru_forward.3} parent=0 // pred_check
    _
  $region39: #{mortality_pred_gru_forward.3} parent=0 // pred_check_branch
    %36 = sbr.rel (0) target = $region41
  $region40: #{mortality_pred_gru_forward.3} parent=0 // pred_region
    _
  $region41: #{mortality_pred_gru_forward.3} parent=0 // pred_fallthru
    _
  %v38 = vld [vmem:[%s0] sm:$0x1]
  %v39 = vld [vmem:[%s0 + $0x1] sm:$0x1]
  %v40 = vld [vmem:[%s0 + $0x2] sm:$0x1]
  %v41 = vld [vmem:[%s0 + $0x3] sm:$0x1]
  %v42 = vld [vmem:[%s0 + $0x4] sm:$0x1]
  %v43 = vld [vmem:[%s0 + $0x5] sm:$0x1]
  %v44 = vld [vmem:[%s0 + $0x6] sm:$0x1]
  %v45 = vld [vmem:[%s0 + $0x7] sm:$0x1]
  %v46 = vld [vmem:[%s1] sm:$0xf]
  %v47 = vld [vmem:[%s1 + $0x4] sm:$0xf]
  %v48 = vld [vmem:[%s1 + $0x8] sm:$0xf]
  %v49 = vld [vmem:[%s1 + $0xc] sm:$0xf]
  %v50 = vld [vmem:[%s3] sm:$0x1]
  %v52 = vperm.slane %v50, 0
  %55 = vst [vmem:[#allocation1] ss:$9 sm:$0xff] %v38
  %s57 = scalar_lea.vmem [#allocation1], 1
  %58 = vst [vmem:[%s57] ss:$9 sm:$0xff] %v39
  %s60 = scalar_lea.vmem [#allocation1], 2
  %61 = vst [vmem:[%s60] ss:$9 sm:$0xff] %v40
  %s63 = scalar_lea.vmem [#allocation1], 3
  %64 = vst [vmem:[%s63] ss:$9 sm:$0xff] %v41
  %s66 = scalar_lea.vmem [#allocation1], 4
  %67 = vst [vmem:[%s66] ss:$9 sm:$0xff] %v42
  %s69 = scalar_lea.vmem [#allocation1], 5
  %70 = vst [vmem:[%s69] ss:$9 sm:$0xff] %v43
  %s72 = scalar_lea.vmem [#allocation1], 6
  %73 = vst [vmem:[%s72] ss:$9 sm:$0xff] %v44
  %s75 = scalar_lea.vmem [#allocation1], 7
  %76 = vst [vmem:[%s75] ss:$9 sm:$0xff] %v45
  %v77 = vld [vmem:[#allocation1] sm:$0xff]
  %v82 = vunpack.c.l.b16 %v46
  %v83 = vunpack.c.l.b16 %v47
  %v84 = vunpack.c.l.b16 %v48
  %v85 = vunpack.c.l.b16 %v49
  %v86 = vpack.c.b16 %v83, %v82
  %v87 = vpack.c.b16 %v85, %v84
  %vm90 = vcmask 261120
  %v91 = vsel %vm90, %v77, 0
  %93 = vmatpush.bf16.msra.mxu0 0
  %94 = vmatpush.bf16.msra.mxu0 0
  %95 = vmatpush.bf16.msra.mxu0 0
  %96 = vmatpush.bf16.msra.mxu0 0
  %97 = vmatpush.bf16.msra.mxu0 0
  %98 = vmatpush.bf16.msra.mxu0 0
  %99 = vmatpush.bf16.msra.mxu0 %v87
  %100 = vmatpush.bf16.msra.mxu0 %v86
  %101 = vmatmul.bf16.gmra.mxu0 %v91
  %v102 = vpop.f32.mrf.mxu0
  %v103 = vadd.f32 %v52, %v102
  %v104 = vpop.f32.mrf.mxu0
  %v105 = vadd.f32 %v52, %v104
  %106 = vdwg.mxu0
  %v107 = vpack.c.bf16 %v103, %v103
  %v108 = vpack.c.bf16 %v105, %v105
  %v111 = vrot.slane %v107, 3
  %v112 = vrot.slane %v108, 3
  %vm113 = vcmask 1040384
  %v116 = vsel %vm113, %v107, %v111
  %vm117 = vcmask 1041409
  %v118 = vsel %vm117, %v107, %v111
  %v120 = vrot.slane %v118, 1
  %vm121 = vcmask 1042434
  %v122 = vsel %vm121, %v107, %v111
  %v124 = vrot.slane %v122, 2
  %vm125 = vcmask 1043459
  %v126 = vsel %vm125, %v107, %v111
  %v128 = vrot.slane %v126, 3
  %v131 = vsel %vm113, %v108, %v112
  %v132 = vsel %vm117, %v108, %v112
  %v134 = vrot.slane %v132, 1
  %v135 = vsel %vm121, %v108, %v112
  %v137 = vrot.slane %v135, 2
  %v138 = vsel %vm125, %v108, %v112
  %v140 = vrot.slane %v138, 3
  %vm149 = vcmask 122880
  %150 = vst.msk [vmem:[#allocation3] sm:$0x1] %vm149, %v116
  %151 = vst.msk [vmem:[#allocation3 + $0x1] sm:$0x1] %vm149, %v120
  %152 = vst.msk [vmem:[#allocation3 + $0x2] sm:$0x1] %vm149, %v124
  %153 = vst.msk [vmem:[#allocation3 + $0x3] sm:$0x1] %vm149, %v128
  %154 = vst.msk [vmem:[#allocation3 + $0x4] sm:$0x1] %vm149, %v131
  %155 = vst.msk [vmem:[#allocation3 + $0x5] sm:$0x1] %vm149, %v134
  %156 = vst.msk [vmem:[#allocation3 + $0x6] sm:$0x1] %vm149, %v137
  %157 = vst.msk [vmem:[#allocation3 + $0x7] sm:$0x1] %vm149, %v140
  %s158 = scalar_lea.vmem %s1, 16
  %v159 = vld [vmem:[%s158] sm:$0xf]
  %v160 = vld [vmem:[%s158 + $0x4] sm:$0xf]
  %v161 = vld [vmem:[%s158 + $0x8] sm:$0xf]
  %v162 = vld [vmem:[%s158 + $0xc] sm:$0xf]
  %s163 = scalar_lea.vmem %s3, 1
  %v164 = vld [vmem:[%s163] sm:$0x1]
  %v166 = vperm.slane %v164, 0
  %168 = vst [vmem:[#allocation1] ss:$9 sm:$0xff] %v38
  %s169 = scalar_lea.vmem [#allocation1], 1
  %170 = vst [vmem:[%s169] ss:$9 sm:$0xff] %v39
  %s171 = scalar_lea.vmem [#allocation1], 2
  %172 = vst [vmem:[%s171] ss:$9 sm:$0xff] %v40
  %s173 = scalar_lea.vmem [#allocation1], 3
  %174 = vst [vmem:[%s173] ss:$9 sm:$0xff] %v41
  %s175 = scalar_lea.vmem [#allocation1], 4
  %176 = vst [vmem:[%s175] ss:$9 sm:$0xff] %v42
  %s177 = scalar_lea.vmem [#allocation1], 5
  %178 = vst [vmem:[%s177] ss:$9 sm:$0xff] %v43
  %s179 = scalar_lea.vmem [#allocation1], 6
  %180 = vst [vmem:[%s179] ss:$9 sm:$0xff] %v44
  %s181 = scalar_lea.vmem [#allocation1], 7
  %182 = vst [vmem:[%s181] ss:$9 sm:$0xff] %v45
  %v183 = vld [vmem:[#allocation1] sm:$0xff]
  %v188 = vunpack.c.l.b16 %v159
  %v189 = vunpack.c.l.b16 %v160
  %v190 = vunpack.c.l.b16 %v161
  %v191 = vunpack.c.l.b16 %v162
  %v192 = vpack.c.b16 %v189, %v188
  %v193 = vpack.c.b16 %v191, %v190
  %v196 = vsel %vm90, %v183, 0
  %198 = vmatpush.bf16.msra.mxu0 0
  %199 = vmatpush.bf16.msra.mxu0 0
  %200 = vmatpush.bf16.msra.mxu0 0
  %201 = vmatpush.bf16.msra.mxu0 0
  %202 = vmatpush.bf16.msra.mxu0 0
  %203 = vmatpush.bf16.msra.mxu0 0
  %204 = vmatpush.bf16.msra.mxu0 %v193
  %205 = vmatpush.bf16.msra.mxu0 %v192
  %206 = vmatmul.bf16.gmra.mxu0 %v196
  %v207 = vpop.f32.mrf.mxu0
  %v208 = vadd.f32 %v166, %v207
  %v209 = vpop.f32.mrf.mxu0
  %v210 = vadd.f32 %v166, %v209
  %211 = vdwg.mxu0
  %v212 = vpack.c.bf16 %v208, %v208
  %v213 = vpack.c.bf16 %v210, %v210
  %v216 = vrot.slane %v212, 3
  %v217 = vrot.slane %v213, 3
  %v220 = vsel %vm113, %v212, %v216
  %v221 = vsel %vm117, %v212, %v216
  %v223 = vrot.slane %v221, 1
  %v224 = vsel %vm121, %v212, %v216
  %v226 = vrot.slane %v224, 2
  %v227 = vsel %vm125, %v212, %v216
  %v229 = vrot.slane %v227, 3
  %v232 = vsel %vm113, %v213, %v217
  %v233 = vsel %vm117, %v213, %v217
  %v235 = vrot.slane %v233, 1
  %v236 = vsel %vm121, %v213, %v217
  %v238 = vrot.slane %v236, 2
  %v239 = vsel %vm125, %v213, %v217
  %v241 = vrot.slane %v239, 3
  %s250 = scalar_lea.vmem [#allocation3], 8
  %251 = vst.msk [vmem:[%s250] sm:$0x1] %vm149, %v220
  %252 = vst.msk [vmem:[%s250 + $0x1] sm:$0x1] %vm149, %v223
  %253 = vst.msk [vmem:[%s250 + $0x2] sm:$0x1] %vm149, %v226
  %254 = vst.msk [vmem:[%s250 + $0x3] sm:$0x1] %vm149, %v229
  %255 = vst.msk [vmem:[%s250 + $0x4] sm:$0x1] %vm149, %v232
  %256 = vst.msk [vmem:[%s250 + $0x5] sm:$0x1] %vm149, %v235
  %257 = vst.msk [vmem:[%s250 + $0x6] sm:$0x1] %vm149, %v238
  %258 = vst.msk [vmem:[%s250 + $0x7] sm:$0x1] %vm149, %v241
  %s259 = scalar_lea.vmem %s1, 32
  %v260 = vld [vmem:[%s259] sm:$0xf]
  %v261 = vld [vmem:[%s259 + $0x4] sm:$0xf]
  %v262 = vld [vmem:[%s259 + $0x8] sm:$0xf]
  %v263 = vld [vmem:[%s259 + $0xc] sm:$0xf]
  %s264 = scalar_lea.vmem %s3, 2
  %v265 = vld [vmem:[%s264] sm:$0x1]
  %v267 = vperm.slane %v265, 0
  %269 = vst [vmem:[#allocation1] ss:$9 sm:$0xff] %v38
  %s270 = scalar_lea.vmem [#allocation1], 1
  %271 = vst [vmem:[%s270] ss:$9 sm:$0xff] %v39
  %s272 = scalar_lea.vmem [#allocation1], 2
  %273 = vst [vmem:[%s272] ss:$9 sm:$0xff] %v40
  %s274 = scalar_lea.vmem [#allocation1], 3
  %275 = vst [vmem:[%s274] ss:$9 sm:$0xff] %v41
  %s276 = scalar_lea.vmem [#allocation1], 4
  %277 = vst [vmem:[%s276] ss:$9 sm:$0xff] %v42
  %s278 = scalar_lea.vmem [#allocation1], 5
  %279 = vst [vmem:[%s278] ss:$9 sm:$0xff] %v43
  %s280 = scalar_lea.vmem [#allocation1], 6
  %281 = vst [vmem:[%s280] ss:$9 sm:$0xff] %v44
  %s282 = scalar_lea.vmem [#allocation1], 7
  %283 = vst [vmem:[%s282] ss:$9 sm:$0xff] %v45
  %v284 = vld [vmem:[#allocation1] sm:$0xff]
  %v289 = vunpack.c.l.b16 %v260
  %v290 = vunpack.c.l.b16 %v261
  %v291 = vunpack.c.l.b16 %v262
  %v292 = vunpack.c.l.b16 %v263
  %v293 = vpack.c.b16 %v290, %v289
  %v294 = vpack.c.b16 %v292, %v291
  %v297 = vsel %vm90, %v284, 0
  %299 = vmatpush.bf16.msra.mxu0 0
  %300 = vmatpush.bf16.msra.mxu0 0
  %301 = vmatpush.bf16.msra.mxu0 0
  %302 = vmatpush.bf16.msra.mxu0 0
  %303 = vmatpush.bf16.msra.mxu0 0
  %304 = vmatpush.bf16.msra.mxu0 0
  %305 = vmatpush.bf16.msra.mxu0 %v294
  %306 = vmatpush.bf16.msra.mxu0 %v293
  %307 = vmatmul.bf16.gmra.mxu0 %v297
  %v308 = vpop.f32.mrf.mxu0
  %v309 = vadd.f32 %v267, %v308
  %v310 = vpop.f32.mrf.mxu0
  %v311 = vadd.f32 %v267, %v310
  %312 = vdwg.mxu0
  %v313 = vpack.c.bf16 %v309, %v309
  %v314 = vpack.c.bf16 %v311, %v311
  %v317 = vrot.slane %v313, 3
  %v318 = vrot.slane %v314, 3
  %v321 = vsel %vm113, %v313, %v317
  %v322 = vsel %vm117, %v313, %v317
  %v324 = vrot.slane %v322, 1
  %v325 = vsel %vm121, %v313, %v317
  %v327 = vrot.slane %v325, 2
  %v328 = vsel %vm125, %v313, %v317
  %v330 = vrot.slane %v328, 3
  %v333 = vsel %vm113, %v314, %v318
  %v334 = vsel %vm117, %v314, %v318
  %v336 = vrot.slane %v334, 1
  %v337 = vsel %vm121, %v314, %v318
  %v339 = vrot.slane %v337, 2
  %v340 = vsel %vm125, %v314, %v318
  %v342 = vrot.slane %v340, 3
  %s351 = scalar_lea.vmem [#allocation3], 16
  %352 = vst.msk [vmem:[%s351] sm:$0x1] %vm149, %v321
  %353 = vst.msk [vmem:[%s351 + $0x1] sm:$0x1] %vm149, %v324
  %354 = vst.msk [vmem:[%s351 + $0x2] sm:$0x1] %vm149, %v327
  %355 = vst.msk [vmem:[%s351 + $0x3] sm:$0x1] %vm149, %v330
  %356 = vst.msk [vmem:[%s351 + $0x4] sm:$0x1] %vm149, %v333
  %357 = vst.msk [vmem:[%s351 + $0x5] sm:$0x1] %vm149, %v336
  %358 = vst.msk [vmem:[%s351 + $0x6] sm:$0x1] %vm149, %v339
  %359 = vst.msk [vmem:[%s351 + $0x7] sm:$0x1] %vm149, %v342
  %s360 = scalar_lea.vmem %s1, 48
  %v361 = vld [vmem:[%s360] sm:$0xf]
  %v362 = vld [vmem:[%s360 + $0x4] sm:$0xf]
  %v363 = vld [vmem:[%s360 + $0x8] sm:$0xf]
  %v364 = vld [vmem:[%s360 + $0xc] sm:$0xf]
  %s365 = scalar_lea.vmem %s3, 3
  %v366 = vld [vmem:[%s365] sm:$0x1]
  %v368 = vperm.slane %v366, 0
  %370 = vst [vmem:[#allocation1] ss:$9 sm:$0xff] %v38
  %s371 = scalar_lea.vmem [#allocation1], 1
  %372 = vst [vmem:[%s371] ss:$9 sm:$0xff] %v39
  %s373 = scalar_lea.vmem [#allocation1], 2
  %374 = vst [vmem:[%s373] ss:$9 sm:$0xff] %v40
  %s375 = scalar_lea.vmem [#allocation1], 3
  %376 = vst [vmem:[%s375] ss:$9 sm:$0xff] %v41
  %s377 = scalar_lea.vmem [#allocation1], 4
  %378 = vst [vmem:[%s377] ss:$9 sm:$0xff] %v42
  %s379 = scalar_lea.vmem [#allocation1], 5
  %380 = vst [vmem:[%s379] ss:$9 sm:$0xff] %v43
  %s381 = scalar_lea.vmem [#allocation1], 6
  %382 = vst [vmem:[%s381] ss:$9 sm:$0xff] %v44
  %s383 = scalar_lea.vmem [#allocation1], 7
  %384 = vst [vmem:[%s383] ss:$9 sm:$0xff] %v45
  %v385 = vld [vmem:[#allocation1] sm:$0xff]
  %v390 = vunpack.c.l.b16 %v361
  %v391 = vunpack.c.l.b16 %v362
  %v392 = vunpack.c.l.b16 %v363
  %v393 = vunpack.c.l.b16 %v364
  %v394 = vpack.c.b16 %v391, %v390
  %v395 = vpack.c.b16 %v393, %v392
  %v398 = vsel %vm90, %v385, 0
  %400 = vmatpush.bf16.msra.mxu0 0
  %401 = vmatpush.bf16.msra.mxu0 0
  %402 = vmatpush.bf16.msra.mxu0 0
  %403 = vmatpush.bf16.msra.mxu0 0
  %404 = vmatpush.bf16.msra.mxu0 0
  %405 = vmatpush.bf16.msra.mxu0 0
  %406 = vmatpush.bf16.msra.mxu0 %v395
  %407 = vmatpush.bf16.msra.mxu0 %v394
  %408 = vmatmul.bf16.gmra.mxu0 %v398
  %v409 = vpop.f32.mrf.mxu0
  %v410 = vadd.f32 %v368, %v409
  %v411 = vpop.f32.mrf.mxu0
  %v412 = vadd.f32 %v368, %v411
  %413 = vdwg.mxu0
  %v414 = vpack.c.bf16 %v410, %v410
  %v415 = vpack.c.bf16 %v412, %v412
  %v418 = vrot.slane %v414, 3
  %v419 = vrot.slane %v415, 3
  %v422 = vsel %vm113, %v414, %v418
  %v423 = vsel %vm117, %v414, %v418
  %v425 = vrot.slane %v423, 1
  %v426 = vsel %vm121, %v414, %v418
  %v428 = vrot.slane %v426, 2
  %v429 = vsel %vm125, %v414, %v418
  %v431 = vrot.slane %v429, 3
  %v434 = vsel %vm113, %v415, %v419
  %v435 = vsel %vm117, %v415, %v419
  %v437 = vrot.slane %v435, 1
  %v438 = vsel %vm121, %v415, %v419
  %v440 = vrot.slane %v438, 2
  %v441 = vsel %vm125, %v415, %v419
  %v443 = vrot.slane %v441, 3
  %s452 = scalar_lea.vmem [#allocation3], 24
  %453 = vst.msk [vmem:[%s452] sm:$0x1] %vm149, %v422
  %454 = vst.msk [vmem:[%s452 + $0x1] sm:$0x1] %vm149, %v425
  %455 = vst.msk [vmem:[%s452 + $0x2] sm:$0x1] %vm149, %v428
  %456 = vst.msk [vmem:[%s452 + $0x3] sm:$0x1] %vm149, %v431
  %457 = vst.msk [vmem:[%s452 + $0x4] sm:$0x1] %vm149, %v434
  %458 = vst.msk [vmem:[%s452 + $0x5] sm:$0x1] %vm149, %v437
  %459 = vst.msk [vmem:[%s452 + $0x6] sm:$0x1] %vm149, %v440
  %460 = vst.msk [vmem:[%s452 + $0x7] sm:$0x1] %vm149, %v443
  %s461 = scalar_lea.vmem %s1, 64
  %v462 = vld [vmem:[%s461] sm:$0xf]
  %v463 = vld [vmem:[%s461 + $0x4] sm:$0xf]
  %v464 = vld [vmem:[%s461 + $0x8] sm:$0xf]
  %v465 = vld [vmem:[%s461 + $0xc] sm:$0xf]
  %s466 = scalar_lea.vmem %s3, 4
  %v467 = vld [vmem:[%s466] sm:$0x1]
  %v469 = vperm.slane %v467, 0
  %471 = vst [vmem:[#allocation1] ss:$9 sm:$0xff] %v38
  %s472 = scalar_lea.vmem [#allocation1], 1
  %473 = vst [vmem:[%s472] ss:$9 sm:$0xff] %v39
  %s474 = scalar_lea.vmem [#allocation1], 2
  %475 = vst [vmem:[%s474] ss:$9 sm:$0xff] %v40
  %s476 = scalar_lea.vmem [#allocation1], 3
  %477 = vst [vmem:[%s476] ss:$9 sm:$0xff] %v41
  %s478 = scalar_lea.vmem [#allocation1], 4
  %479 = vst [vmem:[%s478] ss:$9 sm:$0xff] %v42
  %s480 = scalar_lea.vmem [#allocation1], 5
  %481 = vst [vmem:[%s480] ss:$9 sm:$0xff] %v43
  %s482 = scalar_lea.vmem [#allocation1], 6
  %483 = vst [vmem:[%s482] ss:$9 sm:$0xff] %v44
  %s484 = scalar_lea.vmem [#allocation1], 7
  %485 = vst [vmem:[%s484] ss:$9 sm:$0xff] %v45
  %v486 = vld [vmem:[#allocation1] sm:$0xff]
  %v491 = vunpack.c.l.b16 %v462
  %v492 = vunpack.c.l.b16 %v463
  %v493 = vunpack.c.l.b16 %v464
  %v494 = vunpack.c.l.b16 %v465
  %v495 = vpack.c.b16 %v492, %v491
  %v496 = vpack.c.b16 %v494, %v493
  %v499 = vsel %vm90, %v486, 0
  %501 = vmatpush.bf16.msra.mxu0 0
  %502 = vmatpush.bf16.msra.mxu0 0
  %503 = vmatpush.bf16.msra.mxu0 0
  %504 = vmatpush.bf16.msra.mxu0 0
  %505 = vmatpush.bf16.msra.mxu0 0
  %506 = vmatpush.bf16.msra.mxu0 0
  %507 = vmatpush.bf16.msra.mxu0 %v496
  %508 = vmatpush.bf16.msra.mxu0 %v495
  %509 = vmatmul.bf16.gmra.mxu0 %v499
  %v510 = vpop.f32.mrf.mxu0
  %v511 = vadd.f32 %v469, %v510
  %v512 = vpop.f32.mrf.mxu0
  %v513 = vadd.f32 %v469, %v512
  %514 = vdwg.mxu0
  %v515 = vpack.c.bf16 %v511, %v511
  %v516 = vpack.c.bf16 %v513, %v513
  %v519 = vrot.slane %v515, 3
  %v520 = vrot.slane %v516, 3
  %v523 = vsel %vm113, %v515, %v519
  %v524 = vsel %vm117, %v515, %v519
  %v526 = vrot.slane %v524, 1
  %v527 = vsel %vm121, %v515, %v519
  %v529 = vrot.slane %v527, 2
  %v530 = vsel %vm125, %v515, %v519
  %v532 = vrot.slane %v530, 3
  %v535 = vsel %vm113, %v516, %v520
  %v536 = vsel %vm117, %v516, %v520
  %v538 = vrot.slane %v536, 1
  %v539 = vsel %vm121, %v516, %v520
  %v541 = vrot.slane %v539, 2
  %v542 = vsel %vm125, %v516, %v520
  %v544 = vrot.slane %v542, 3
  %s553 = scalar_lea.vmem [#allocation3], 32
  %554 = vst.msk [vmem:[%s553] sm:$0x1] %vm149, %v523
  %555 = vst.msk [vmem:[%s553 + $0x1] sm:$0x1] %vm149, %v526
  %556 = vst.msk [vmem:[%s553 + $0x2] sm:$0x1] %vm149, %v529
  %557 = vst.msk [vmem:[%s553 + $0x3] sm:$0x1] %vm149, %v532
  %558 = vst.msk [vmem:[%s553 + $0x4] sm:$0x1] %vm149, %v535
  %559 = vst.msk [vmem:[%s553 + $0x5] sm:$0x1] %vm149, %v538
  %560 = vst.msk [vmem:[%s553 + $0x6] sm:$0x1] %vm149, %v541
  %561 = vst.msk [vmem:[%s553 + $0x7] sm:$0x1] %vm149, %v544
  %s562 = scalar_lea.vmem %s1, 80
  %v563 = vld [vmem:[%s562] sm:$0xf]
  %v564 = vld [vmem:[%s562 + $0x4] sm:$0xf]
  %v565 = vld [vmem:[%s562 + $0x8] sm:$0xf]
  %v566 = vld [vmem:[%s562 + $0xc] sm:$0xf]
  %s567 = scalar_lea.vmem %s3, 5
  %v568 = vld [vmem:[%s567] sm:$0x1]
  %v570 = vperm.slane %v568, 0
  %572 = vst [vmem:[#allocation1] ss:$9 sm:$0xff] %v38
  %s573 = scalar_lea.vmem [#allocation1], 1
  %574 = vst [vmem:[%s573] ss:$9 sm:$0xff] %v39
  %s575 = scalar_lea.vmem [#allocation1], 2
  %576 = vst [vmem:[%s575] ss:$9 sm:$0xff] %v40
  %s577 = scalar_lea.vmem [#allocation1], 3
  %578 = vst [vmem:[%s577] ss:$9 sm:$0xff] %v41
  %s579 = scalar_lea.vmem [#allocation1], 4
  %580 = vst [vmem:[%s579] ss:$9 sm:$0xff] %v42
  %s581 = scalar_lea.vmem [#allocation1], 5
  %582 = vst [vmem:[%s581] ss:$9 sm:$0xff] %v43
  %s583 = scalar_lea.vmem [#allocation1], 6
  %584 = vst [vmem:[%s583] ss:$9 sm:$0xff] %v44
  %s585 = scalar_lea.vmem [#allocation1], 7
  %586 = vst [vmem:[%s585] ss:$9 sm:$0xff] %v45
  %v587 = vld [vmem:[#allocation1] sm:$0xff]
  %v592 = vunpack.c.l.b16 %v563
  %v593 = vunpack.c.l.b16 %v564
  %v594 = vunpack.c.l.b16 %v565
  %v595 = vunpack.c.l.b16 %v566
  %v596 = vpack.c.b16 %v593, %v592
  %v597 = vpack.c.b16 %v595, %v594
  %v600 = vsel %vm90, %v587, 0
  %602 = vmatpush.bf16.msra.mxu0 0
  %603 = vmatpush.bf16.msra.mxu0 0
  %604 = vmatpush.bf16.msra.mxu0 0
  %605 = vmatpush.bf16.msra.mxu0 0
  %606 = vmatpush.bf16.msra.mxu0 0
  %607 = vmatpush.bf16.msra.mxu0 0
  %608 = vmatpush.bf16.msra.mxu0 %v597
  %609 = vmatpush.bf16.msra.mxu0 %v596
  %610 = vmatmul.bf16.gmra.mxu0 %v600
  %v611 = vpop.f32.mrf.mxu0
  %v612 = vadd.f32 %v570, %v611
  %v613 = vpop.f32.mrf.mxu0
  %v614 = vadd.f32 %v570, %v613
  %615 = vdwg.mxu0
  %v616 = vpack.c.bf16 %v612, %v612
  %v617 = vpack.c.bf16 %v614, %v614
  %v620 = vrot.slane %v616, 3
  %v621 = vrot.slane %v617, 3
  %v624 = vsel %vm113, %v616, %v620
  %v625 = vsel %vm117, %v616, %v620
  %v627 = vrot.slane %v625, 1
  %v628 = vsel %vm121, %v616, %v620
  %v630 = vrot.slane %v628, 2
  %v631 = vsel %vm125, %v616, %v620
  %v633 = vrot.slane %v631, 3
  %v636 = vsel %vm113, %v617, %v621
  %v637 = vsel %vm117, %v617, %v621
  %v639 = vrot.slane %v637, 1
  %v640 = vsel %vm121, %v617, %v621
  %v642 = vrot.slane %v640, 2
  %v643 = vsel %vm125, %v617, %v621
  %v645 = vrot.slane %v643, 3
  %s654 = scalar_lea.vmem [#allocation3], 40
  %655 = vst.msk [vmem:[%s654] sm:$0x1] %vm149, %v624
  %656 = vst.msk [vmem:[%s654 + $0x1] sm:$0x1] %vm149, %v627
  %657 = vst.msk [vmem:[%s654 + $0x2] sm:$0x1] %vm149, %v630
  %658 = vst.msk [vmem:[%s654 + $0x3] sm:$0x1] %vm149, %v633
  %659 = vst.msk [vmem:[%s654 + $0x4] sm:$0x1] %vm149, %v636
  %660 = vst.msk [vmem:[%s654 + $0x5] sm:$0x1] %vm149, %v639
  %661 = vst.msk [vmem:[%s654 + $0x6] sm:$0x1] %vm149, %v642
  %662 = vst.msk [vmem:[%s654 + $0x7] sm:$0x1] %vm149, %v645
  %v663 = vld [vmem:[%s4] sm:$0x1]
  %s664 = scalar_lea.vmem %s4, 1
  %v665 = vld [vmem:[%s664] sm:$0x1]
  %v666 = vld [vmem:[%s2] sm:$0xf]
  %v667 = vld [vmem:[%s2 + $0x4] sm:$0xf]
  %v670 = vunpack.c.l.b16 %v666
  %v671 = vunpack.c.l.b16 %v667
  %v672 = vpack.c.b16 %v671, %v670
  %vm674 = vcmask 130048
  %v676 = vsel %vm674, 0, 0
  %678 = vmatpush.bf16.msra.mxu0 0
  %679 = vmatpush.bf16.msra.mxu0 0
  %680 = vmatpush.bf16.msra.mxu0 0
  %681 = vmatpush.bf16.msra.mxu0 0
  %682 = vmatpush.bf16.msra.mxu0 0
  %683 = vmatpush.bf16.msra.mxu0 0
  %684 = vmatpush.bf16.msra.mxu0 0
  %685 = vmatpush.bf16.msra.mxu0 %v672
  %686 = vmatmul.bf16.gmra.mxu0 %v676
  %v687 = vpop.f32.mrf.mxu0
  %v688 = vadd.f32 0.0, %v687
  %v689 = vpop.f32.mrf.mxu0
  %690 = vdwg.mxu0
  %s691 = scalar_lea.vmem %s2, 8
  %v692 = vld [vmem:[%s691] sm:$0xf]
  %v693 = vld [vmem:[%s691 + $0x4] sm:$0xf]
  %v696 = vunpack.c.l.b16 %v692
  %v697 = vunpack.c.l.b16 %v693
  %v698 = vpack.c.b16 %v697, %v696
  %700 = vmatpush.bf16.msra.mxu0 0
  %701 = vmatpush.bf16.msra.mxu0 0
  %702 = vmatpush.bf16.msra.mxu0 0
  %703 = vmatpush.bf16.msra.mxu0 0
  %704 = vmatpush.bf16.msra.mxu0 0
  %705 = vmatpush.bf16.msra.mxu0 0
  %706 = vmatpush.bf16.msra.mxu0 0
  %707 = vmatpush.bf16.msra.mxu0 %v698
  %708 = vmatmul.bf16.gmra.mxu0 %v676
  %v709 = vpop.f32.mrf.mxu0
  %v710 = vadd.f32 0.0, %v709
  %v711 = vpop.f32.mrf.mxu0
  %712 = vdwg.mxu0
  %s713 = scalar_lea.vmem %s2, 16
  %v714 = vld [vmem:[%s713] sm:$0xf]
  %v715 = vld [vmem:[%s713 + $0x4] sm:$0xf]
  %v717 = vperm.slane %v663, 0
  %v721 = vunpack.c.l.b16 %v714
  %v722 = vunpack.c.l.b16 %v715
  %v723 = vpack.c.b16 %v722, %v721
  %725 = vmatpush.bf16.msra.mxu0 0
  %726 = vmatpush.bf16.msra.mxu0 0
  %727 = vmatpush.bf16.msra.mxu0 0
  %728 = vmatpush.bf16.msra.mxu0 0
  %729 = vmatpush.bf16.msra.mxu0 0
  %730 = vmatpush.bf16.msra.mxu0 0
  %731 = vmatpush.bf16.msra.mxu0 0
  %732 = vmatpush.bf16.msra.mxu0 %v723
  %733 = vmatmul.bf16.gmra.mxu0 %v676
  %v734 = vpop.f32.mrf.mxu0
  %v735 = vadd.f32 %v717, %v734
  %v736 = vpop.f32.mrf.mxu0
  %737 = vdwg.mxu0
  %v738 = vld [vmem:[#allocation3] sm:$0x1]
  %v739 = vunpack.c.l.bf16 %v738
  %v740 = vld [vmem:[%s250] sm:$0x1]
  %v741 = vunpack.c.l.bf16 %v740
  %v742 = vld [vmem:[%s351] sm:$0x1]
  %v743 = vunpack.c.l.bf16 %v742
  %v744 = vadd.f32 %v739, %v688
  %v745 = vmul.f32 %v744, 0.5
  %v746 = vtanh.pop %v745
  %v747 = vmul.f32 %v746, 0.5
  %v748 = vadd.f32 %v747, 0.5
  %v749 = vadd.f32 %v741, %v710
  %v750 = vmul.f32 %v749, 0.5
  %v751 = vtanh.pop %v750
  %v752 = vmul.f32 %v751, 0.5
  %v753 = vadd.f32 %v752, 0.5
  %v754 = vmul.f32 %v748, %v735
  %v755 = vadd.f32 %v743, %v754
  %v756 = vtanh.pop %v755
  %v757 = vsub.f32 0.0, %v756
  %v758 = vmul.f32 %v753, %v757
  %v759 = vadd.f32 %v756, %v758
  %s760 = scalar_lea.vmem %s2, 24
  %v761 = vld [vmem:[%s760] sm:$0xf]
  %v762 = vld [vmem:[%s760 + $0x4] sm:$0xf]
  %v765 = vunpack.c.l.b16 %v761
  %v766 = vunpack.c.l.b16 %v762
  %v767 = vpack.c.b16 %v766, %v765
  %769 = vmatpush.bf16.msra.mxu0 0
  %770 = vmatpush.bf16.msra.mxu0 0
  %771 = vmatpush.bf16.msra.mxu0 0
  %772 = vmatpush.bf16.msra.mxu0 0
  %773 = vmatpush.bf16.msra.mxu0 0
  %774 = vmatpush.bf16.msra.mxu0 0
  %775 = vmatpush.bf16.msra.mxu0 0
  %776 = vmatpush.bf16.msra.mxu0 %v767
  %777 = vmatmul.bf16.gmra.mxu0 %v676
  %v778 = vpop.f32.mrf.mxu0
  %v779 = vadd.f32 0.0, %v778
  %v780 = vpop.f32.mrf.mxu0
  %781 = vdwg.mxu0
  %s782 = scalar_lea.vmem %s2, 32
  %v783 = vld [vmem:[%s782] sm:$0xf]
  %v784 = vld [vmem:[%s782 + $0x4] sm:$0xf]
  %v787 = vunpack.c.l.b16 %v783
  %v788 = vunpack.c.l.b16 %v784
  %v789 = vpack.c.b16 %v788, %v787
  %791 = vmatpush.bf16.msra.mxu0 0
  %792 = vmatpush.bf16.msra.mxu0 0
  %793 = vmatpush.bf16.msra.mxu0 0
  %794 = vmatpush.bf16.msra.mxu0 0
  %795 = vmatpush.bf16.msra.mxu0 0
  %796 = vmatpush.bf16.msra.mxu0 0
  %797 = vmatpush.bf16.msra.mxu0 0
  %798 = vmatpush.bf16.msra.mxu0 %v789
  %799 = vmatmul.bf16.gmra.mxu0 %v676
  %v800 = vpop.f32.mrf.mxu0
  %v801 = vadd.f32 0.0, %v800
  %v802 = vpop.f32.mrf.mxu0
  %803 = vdwg.mxu0
  %s804 = scalar_lea.vmem %s2, 40
  %v805 = vld [vmem:[%s804] sm:$0xf]
  %v806 = vld [vmem:[%s804 + $0x4] sm:$0xf]
  %v808 = vperm.slane %v665, 0
  %v812 = vunpack.c.l.b16 %v805
  %v813 = vunpack.c.l.b16 %v806
  %v814 = vpack.c.b16 %v813, %v812
  %816 = vmatpush.bf16.msra.mxu0 0
  %817 = vmatpush.bf16.msra.mxu0 0
  %818 = vmatpush.bf16.msra.mxu0 0
  %819 = vmatpush.bf16.msra.mxu0 0
  %820 = vmatpush.bf16.msra.mxu0 0
  %821 = vmatpush.bf16.msra.mxu0 0
  %822 = vmatpush.bf16.msra.mxu0 0
  %823 = vmatpush.bf16.msra.mxu0 %v814
  %824 = vmatmul.bf16.gmra.mxu0 %v676
  %v825 = vpop.f32.mrf.mxu0
  %v826 = vadd.f32 %v808, %v825
  %v827 = vpop.f32.mrf.mxu0
  %828 = vdwg.mxu0
  %s829 = scalar_lea.vmem [#allocation3], 31
  %v830 = vld [vmem:[%s829] sm:$0x1]
  %v831 = vunpack.c.l.bf16 %v830
  %s832 = scalar_lea.vmem [#allocation3], 39
  %v833 = vld [vmem:[%s832] sm:$0x1]
  %v834 = vunpack.c.l.bf16 %v833
  %s835 = scalar_lea.vmem [#allocation3], 47
  %v836 = vld [vmem:[%s835] sm:$0x1]
  %v837 = vunpack.c.l.bf16 %v836
  %v838 = vadd.f32 %v831, %v779
  %v839 = vmul.f32 %v838, 0.5
  %v840 = vtanh.pop %v839
  %v841 = vmul.f32 %v840, 0.5
  %v842 = vadd.f32 %v841, 0.5
  %v843 = vadd.f32 %v834, %v801
  %v844 = vmul.f32 %v843, 0.5
  %v845 = vtanh.pop %v844
  %v846 = vmul.f32 %v845, 0.5
  %v847 = vadd.f32 %v846, 0.5
  %v848 = vmul.f32 %v842, %v826
  %v849 = vadd.f32 %v837, %v848
  %v850 = vtanh.pop %v849
  %v851 = vsub.f32 0.0, %v850
  %v852 = vmul.f32 %v847, %v851
  %v853 = vadd.f32 %v850, %v852
  %vm854 = vcmask 123904
  %855 = vst.msk [vmem:[#allocation2] sm:$0x3] %vm854, %v759
  %857 = vst [vmem:[#allocation1] ss:$4 sm:$0xff] %v853
  %v858 = vld.sshfl [vmem:[#allocation1] sm:$0xff pattern:$0x73625140]
  %859 = vrot.lane.b32.xlu0 %v858, 16
  %v860 = vpop.permute.xlu0 %859
  %s862 = scalar_lea.vmem [#allocation2], 14
  %vm863 = vcmask 255104
  %864 = vst.msk [vmem:[%s862] sm:$0x3] %vm863, %v860
  %v865 = vpack.c.bf16 %v759, %v759
  %v866 = vld [vmem:[%s2] sm:$0xf]
  %v867 = vld [vmem:[%s2 + $0x4] sm:$0xf]
  %v870 = vunpack.c.l.b16 %v866
  %v871 = vunpack.c.l.b16 %v867
  %v872 = vpack.c.b16 %v871, %v870
  %v875 = vsel %vm674, %v865, 0
  %877 = vmatpush.bf16.msra.mxu0 0
  %878 = vmatpush.bf16.msra.mxu0 0
  %879 = vmatpush.bf16.msra.mxu0 0
  %880 = vmatpush.bf16.msra.mxu0 0
  %881 = vmatpush.bf16.msra.mxu0 0
  %882 = vmatpush.bf16.msra.mxu0 0
  %883 = vmatpush.bf16.msra.mxu0 0
  %884 = vmatpush.bf16.msra.mxu0 %v872
  %885 = vmatmul.bf16.gmra.mxu0 %v875
  %v886 = vpop.f32.mrf.mxu0
  %v887 = vadd.f32 0.0, %v886
  %v888 = vpop.f32.mrf.mxu0
  %889 = vdwg.mxu0
  %v890 = vld [vmem:[%s691] sm:$0xf]
  %v891 = vld [vmem:[%s691 + $0x4] sm:$0xf]
  %v894 = vunpack.c.l.b16 %v890
  %v895 = vunpack.c.l.b16 %v891
  %v896 = vpack.c.b16 %v895, %v894
  %898 = vmatpush.bf16.msra.mxu0 0
  %899 = vmatpush.bf16.msra.mxu0 0
  %900 = vmatpush.bf16.msra.mxu0 0
  %901 = vmatpush.bf16.msra.mxu0 0
  %902 = vmatpush.bf16.msra.mxu0 0
  %903 = vmatpush.bf16.msra.mxu0 0
  %904 = vmatpush.bf16.msra.mxu0 0
  %905 = vmatpush.bf16.msra.mxu0 %v896
  %906 = vmatmul.bf16.gmra.mxu0 %v875
  %v907 = vpop.f32.mrf.mxu0
  %v908 = vadd.f32 0.0, %v907
  %v909 = vpop.f32.mrf.mxu0
  %910 = vdwg.mxu0
  %v911 = vld [vmem:[%s713] sm:$0xf]
  %v912 = vld [vmem:[%s713 + $0x4] sm:$0xf]
  %v915 = vunpack.c.l.b16 %v911
  %v916 = vunpack.c.l.b16 %v912
  %v917 = vpack.c.b16 %v916, %v915
  %919 = vmatpush.bf16.msra.mxu0 0
  %920 = vmatpush.bf16.msra.mxu0 0
  %921 = vmatpush.bf16.msra.mxu0 0
  %922 = vmatpush.bf16.msra.mxu0 0
  %923 = vmatpush.bf16.msra.mxu0 0
  %924 = vmatpush.bf16.msra.mxu0 0
  %925 = vmatpush.bf16.msra.mxu0 0
  %926 = vmatpush.bf16.msra.mxu0 %v917
  %927 = vmatmul.bf16.gmra.mxu0 %v875
  %v928 = vpop.f32.mrf.mxu0
  %v929 = vadd.f32 %v717, %v928
  %v930 = vpop.f32.mrf.mxu0
  %931 = vdwg.mxu0
  %s932 = scalar_lea.vmem [#allocation3], 1
  %v933 = vld [vmem:[%s932] sm:$0x1]
  %v934 = vunpack.c.l.bf16 %v933
  %s935 = scalar_lea.vmem [#allocation3], 9
  %v936 = vld [vmem:[%s935] sm:$0x1]
  %v937 = vunpack.c.l.bf16 %v936
  %s938 = scalar_lea.vmem [#allocation3], 17
  %v939 = vld [vmem:[%s938] sm:$0x1]
  %v940 = vunpack.c.l.bf16 %v939
  %v941 = vadd.f32 %v934, %v887
  %v942 = vmul.f32 %v941, 0.5
  %v943 = vtanh.pop %v942
  %v944 = vmul.f32 %v943, 0.5
  %v945 = vadd.f32 %v944, 0.5
  %v946 = vadd.f32 %v937, %v908
  %v947 = vmul.f32 %v946, 0.5
  %v948 = vtanh.pop %v947
  %v949 = vmul.f32 %v948, 0.5
  %v950 = vadd.f32 %v949, 0.5
  %v951 = vmul.f32 %v945, %v929
  %v952 = vadd.f32 %v940, %v951
  %v953 = vtanh.pop %v952
  %v954 = vsub.f32 %v759, %v953
  %v955 = vmul.f32 %v950, %v954
  %v956 = vadd.f32 %v953, %v955
  %v957 = vpack.c.bf16 %v853, %v853
  %v958 = vld [vmem:[%s760] sm:$0xf]
  %v959 = vld [vmem:[%s760 + $0x4] sm:$0xf]
  %v962 = vunpack.c.l.b16 %v958
  %v963 = vunpack.c.l.b16 %v959
  %v964 = vpack.c.b16 %v963, %v962
  %v967 = vsel %vm674, %v957, 0
  %969 = vmatpush.bf16.msra.mxu0 0
  %970 = vmatpush.bf16.msra.mxu0 0
  %971 = vmatpush.bf16.msra.mxu0 0
  %972 = vmatpush.bf16.msra.mxu0 0
  %973 = vmatpush.bf16.msra.mxu0 0
  %974 = vmatpush.bf16.msra.mxu0 0
  %975 = vmatpush.bf16.msra.mxu0 0
  %976 = vmatpush.bf16.msra.mxu0 %v964
  %977 = vmatmul.bf16.gmra.mxu0 %v967
  %v978 = vpop.f32.mrf.mxu0
  %v979 = vadd.f32 0.0, %v978
  %v980 = vpop.f32.mrf.mxu0
  %981 = vdwg.mxu0
  %v982 = vld [vmem:[%s782] sm:$0xf]
  %v983 = vld [vmem:[%s782 + $0x4] sm:$0xf]
  %v986 = vunpack.c.l.b16 %v982
  %v987 = vunpack.c.l.b16 %v983
  %v988 = vpack.c.b16 %v987, %v986
  %990 = vmatpush.bf16.msra.mxu0 0
  %991 = vmatpush.bf16.msra.mxu0 0
  %992 = vmatpush.bf16.msra.mxu0 0
  %993 = vmatpush.bf16.msra.mxu0 0
  %994 = vmatpush.bf16.msra.mxu0 0
  %995 = vmatpush.bf16.msra.mxu0 0
  %996 = vmatpush.bf16.msra.mxu0 0
  %997 = vmatpush.bf16.msra.mxu0 %v988
  %998 = vmatmul.bf16.gmra.mxu0 %v967
  %v999 = vpop.f32.mrf.mxu0
  %v1000 = vadd.f32 0.0, %v999
  %v1001 = vpop.f32.mrf.mxu0
  %1002 = vdwg.mxu0
  %v1003 = vld [vmem:[%s804] sm:$0xf]
  %v1004 = vld [vmem:[%s804 + $0x4] sm:$0xf]
  %v1007 = vunpack.c.l.b16 %v1003
  %v1008 = vunpack.c.l.b16 %v1004
  %v1009 = vpack.c.b16 %v1008, %v1007
  %1011 = vmatpush.bf16.msra.mxu0 0
  %1012 = vmatpush.bf16.msra.mxu0 0
  %1013 = vmatpush.bf16.msra.mxu0 0
  %1014 = vmatpush.bf16.msra.mxu0 0
  %1015 = vmatpush.bf16.msra.mxu0 0
  %1016 = vmatpush.bf16.msra.mxu0 0
  %1017 = vmatpush.bf16.msra.mxu0 0
  %1018 = vmatpush.bf16.msra.mxu0 %v1009
  %1019 = vmatmul.bf16.gmra.mxu0 %v967
  %v1020 = vpop.f32.mrf.mxu0
  %v1021 = vadd.f32 %v808, %v1020
  %v1022 = vpop.f32.mrf.mxu0
  %1023 = vdwg.mxu0
  %s1024 = scalar_lea.vmem [#allocation3], 30
  %v1025 = vld [vmem:[%s1024] sm:$0x1]
  %v1026 = vunpack.c.l.bf16 %v1025
  %s1027 = scalar_lea.vmem [#allocation3], 38
  %v1028 = vld [vmem:[%s1027] sm:$0x1]
  %v1029 = vunpack.c.l.bf16 %v1028
  %s1030 = scalar_lea.vmem [#allocation3], 46
  %v1031 = vld [vmem:[%s1030] sm:$0x1]
  %v1032 = vunpack.c.l.bf16 %v1031
  %v1033 = vadd.f32 %v1026, %v979
  %v1034 = vmul.f32 %v1033, 0.5
  %v1035 = vtanh.pop %v1034
  %v1036 = vmul.f32 %v1035, 0.5
  %v1037 = vadd.f32 %v1036, 0.5
  %v1038 = vadd.f32 %v1029, %v1000
  %v1039 = vmul.f32 %v1038, 0.5
  %v1040 = vtanh.pop %v1039
  %v1041 = vmul.f32 %v1040, 0.5
  %v1042 = vadd.f32 %v1041, 0.5
  %v1043 = vmul.f32 %v1037, %v1021
  %v1044 = vadd.f32 %v1032, %v1043
  %v1045 = vtanh.pop %v1044
  %v1046 = vsub.f32 %v853, %v1045
  %v1047 = vmul.f32 %v1042, %v1046
  %v1048 = vadd.f32 %v1045, %v1047
  %s1049 = scalar_lea.vmem [#allocation2], 2
  %1050 = vst.msk [vmem:[%s1049] sm:$0x3] %vm854, %v956
  %1052 = vst [vmem:[#allocation1] ss:$4 sm:$0xff] %v1048
  %v1053 = vld.sshfl [vmem:[#allocation1] sm:$0xff pattern:$0x73625140]
  %1054 = vrot.lane.b32.xlu0 %v1053, 16
  %v1055 = vpop.permute.xlu0 %1054
  %s1057 = scalar_lea.vmem [#allocation2], 12
  %1058 = vst.msk [vmem:[%s1057] sm:$0x3] %vm863, %v1055
  %v1059 = vpack.c.bf16 %v956, %v956
  %v1060 = vld [vmem:[%s2] sm:$0xf]
  %v1061 = vld [vmem:[%s2 + $0x4] sm:$0xf]
  %v1064 = vunpack.c.l.b16 %v1060
  %v1065 = vunpack.c.l.b16 %v1061
  %v1066 = vpack.c.b16 %v1065, %v1064
  %v1069 = vsel %vm674, %v1059, 0
  %1071 = vmatpush.bf16.msra.mxu0 0
  %1072 = vmatpush.bf16.msra.mxu0 0
  %1073 = vmatpush.bf16.msra.mxu0 0
  %1074 = vmatpush.bf16.msra.mxu0 0
  %1075 = vmatpush.bf16.msra.mxu0 0
  %1076 = vmatpush.bf16.msra.mxu0 0
  %1077 = vmatpush.bf16.msra.mxu0 0
  %1078 = vmatpush.bf16.msra.mxu0 %v1066
  %1079 = vmatmul.bf16.gmra.mxu0 %v1069
  %v1080 = vpop.f32.mrf.mxu0
  %v1081 = vadd.f32 0.0, %v1080
  %v1082 = vpop.f32.mrf.mxu0
  %1083 = vdwg.mxu0
  %v1084 = vld [vmem:[%s691] sm:$0xf]
  %v1085 = vld [vmem:[%s691 + $0x4] sm:$0xf]
  %v1088 = vunpack.c.l.b16 %v1084
  %v1089 = vunpack.c.l.b16 %v1085
  %v1090 = vpack.c.b16 %v1089, %v1088
  %1092 = vmatpush.bf16.msra.mxu0 0
  %1093 = vmatpush.bf16.msra.mxu0 0
  %1094 = vmatpush.bf16.msra.mxu0 0
  %1095 = vmatpush.bf16.msra.mxu0 0
  %1096 = vmatpush.bf16.msra.mxu0 0
  %1097 = vmatpush.bf16.msra.mxu0 0
  %1098 = vmatpush.bf16.msra.mxu0 0
  %1099 = vmatpush.bf16.msra.mxu0 %v1090
  %1100 = vmatmul.bf16.gmra.mxu0 %v1069
  %v1101 = vpop.f32.mrf.mxu0
  %v1102 = vadd.f32 0.0, %v1101
  %v1103 = vpop.f32.mrf.mxu0
  %1104 = vdwg.mxu0
  %v1105 = vld [vmem:[%s713] sm:$0xf]
  %v1106 = vld [vmem:[%s713 + $0x4] sm:$0xf]
  %v1109 = vunpack.c.l.b16 %v1105
  %v1110 = vunpack.c.l.b16 %v1106
  %v1111 = vpack.c.b16 %v1110, %v1109
  %1113 = vmatpush.bf16.msra.mxu0 0
  %1114 = vmatpush.bf16.msra.mxu0 0
  %1115 = vmatpush.bf16.msra.mxu0 0
  %1116 = vmatpush.bf16.msra.mxu0 0
  %1117 = vmatpush.bf16.msra.mxu0 0
  %1118 = vmatpush.bf16.msra.mxu0 0
  %1119 = vmatpush.bf16.msra.mxu0 0
  %1120 = vmatpush.bf16.msra.mxu0 %v1111
  %1121 = vmatmul.bf16.gmra.mxu0 %v1069
  %v1122 = vpop.f32.mrf.mxu0
  %v1123 = vadd.f32 %v717, %v1122
  %v1124 = vpop.f32.mrf.mxu0
  %1125 = vdwg.mxu0
  %s1126 = scalar_lea.vmem [#allocation3], 2
  %v1127 = vld [vmem:[%s1126] sm:$0x1]
  %v1128 = vunpack.c.l.bf16 %v1127
  %s1129 = scalar_lea.vmem [#allocation3], 10
  %v1130 = vld [vmem:[%s1129] sm:$0x1]
  %v1131 = vunpack.c.l.bf16 %v1130
  %s1132 = scalar_lea.vmem [#allocation3], 18
  %v1133 = vld [vmem:[%s1132] sm:$0x1]
  %v1134 = vunpack.c.l.bf16 %v1133
  %v1135 = vadd.f32 %v1128, %v1081
  %v1136 = vmul.f32 %v1135, 0.5
  %v1137 = vtanh.pop %v1136
  %v1138 = vmul.f32 %v1137, 0.5
  %v1139 = vadd.f32 %v1138, 0.5
  %v1140 = vadd.f32 %v1131, %v1102
  %v1141 = vmul.f32 %v1140, 0.5
  %v1142 = vtanh.pop %v1141
  %v1143 = vmul.f32 %v1142, 0.5
  %v1144 = vadd.f32 %v1143, 0.5
  %v1145 = vmul.f32 %v1139, %v1123
  %v1146 = vadd.f32 %v1134, %v1145
  %v1147 = vtanh.pop %v1146
  %v1148 = vsub.f32 %v956, %v1147
  %v1149 = vmul.f32 %v1144, %v1148
  %v1150 = vadd.f32 %v1147, %v1149
  %v1151 = vpack.c.bf16 %v1048, %v1048
  %v1152 = vld [vmem:[%s760] sm:$0xf]
  %v1153 = vld [vmem:[%s760 + $0x4] sm:$0xf]
  %v1156 = vunpack.c.l.b16 %v1152
  %v1157 = vunpack.c.l.b16 %v1153
  %v1158 = vpack.c.b16 %v1157, %v1156
  %v1161 = vsel %vm674, %v1151, 0
  %1163 = vmatpush.bf16.msra.mxu0 0
  %1164 = vmatpush.bf16.msra.mxu0 0
  %1165 = vmatpush.bf16.msra.mxu0 0
  %1166 = vmatpush.bf16.msra.mxu0 0
  %1167 = vmatpush.bf16.msra.mxu0 0
  %1168 = vmatpush.bf16.msra.mxu0 0
  %1169 = vmatpush.bf16.msra.mxu0 0
  %1170 = vmatpush.bf16.msra.mxu0 %v1158
  %1171 = vmatmul.bf16.gmra.mxu0 %v1161
  %v1172 = vpop.f32.mrf.mxu0
  %v1173 = vadd.f32 0.0, %v1172
  %v1174 = vpop.f32.mrf.mxu0
  %1175 = vdwg.mxu0
  %v1176 = vld [vmem:[%s782] sm:$0xf]
  %v1177 = vld [vmem:[%s782 + $0x4] sm:$0xf]
  %v1180 = vunpack.c.l.b16 %v1176
  %v1181 = vunpack.c.l.b16 %v1177
  %v1182 = vpack.c.b16 %v1181, %v1180
  %1184 = vmatpush.bf16.msra.mxu0 0
  %1185 = vmatpush.bf16.msra.mxu0 0
  %1186 = vmatpush.bf16.msra.mxu0 0
  %1187 = vmatpush.bf16.msra.mxu0 0
  %1188 = vmatpush.bf16.msra.mxu0 0
  %1189 = vmatpush.bf16.msra.mxu0 0
  %1190 = vmatpush.bf16.msra.mxu0 0
  %1191 = vmatpush.bf16.msra.mxu0 %v1182
  %1192 = vmatmul.bf16.gmra.mxu0 %v1161
  %v1193 = vpop.f32.mrf.mxu0
  %v1194 = vadd.f32 0.0, %v1193
  %v1195 = vpop.f32.mrf.mxu0
  %1196 = vdwg.mxu0
  %v1197 = vld [vmem:[%s804] sm:$0xf]
  %v1198 = vld [vmem:[%s804 + $0x4] sm:$0xf]
  %v1201 = vunpack.c.l.b16 %v1197
  %v1202 = vunpack.c.l.b16 %v1198
  %v1203 = vpack.c.b16 %v1202, %v1201
  %1205 = vmatpush.bf16.msra.mxu0 0
  %1206 = vmatpush.bf16.msra.mxu0 0
  %1207 = vmatpush.bf16.msra.mxu0 0
  %1208 = vmatpush.bf16.msra.mxu0 0
  %1209 = vmatpush.bf16.msra.mxu0 0
  %1210 = vmatpush.bf16.msra.mxu0 0
  %1211 = vmatpush.bf16.msra.mxu0 0
  %1212 = vmatpush.bf16.msra.mxu0 %v1203
  %1213 = vmatmul.bf16.gmra.mxu0 %v1161
  %v1214 = vpop.f32.mrf.mxu0
  %v1215 = vadd.f32 %v808, %v1214
  %v1216 = vpop.f32.mrf.mxu0
  %1217 = vdwg.mxu0
  %s1218 = scalar_lea.vmem [#allocation3], 29
  %v1219 = vld [vmem:[%s1218] sm:$0x1]
  %v1220 = vunpack.c.l.bf16 %v1219
  %s1221 = scalar_lea.vmem [#allocation3], 37
  %v1222 = vld [vmem:[%s1221] sm:$0x1]
  %v1223 = vunpack.c.l.bf16 %v1222
  %s1224 = scalar_lea.vmem [#allocation3], 45
  %v1225 = vld [vmem:[%s1224] sm:$0x1]
  %v1226 = vunpack.c.l.bf16 %v1225
  %v1227 = vadd.f32 %v1220, %v1173
  %v1228 = vmul.f32 %v1227, 0.5
  %v1229 = vtanh.pop %v1228
  %v1230 = vmul.f32 %v1229, 0.5
  %v1231 = vadd.f32 %v1230, 0.5
  %v1232 = vadd.f32 %v1223, %v1194
  %v1233 = vmul.f32 %v1232, 0.5
  %v1234 = vtanh.pop %v1233
  %v1235 = vmul.f32 %v1234, 0.5
  %v1236 = vadd.f32 %v1235, 0.5
  %v1237 = vmul.f32 %v1231, %v1215
  %v1238 = vadd.f32 %v1226, %v1237
  %v1239 = vtanh.pop %v1238
  %v1240 = vsub.f32 %v1048, %v1239
  %v1241 = vmul.f32 %v1236, %v1240
  %v1242 = vadd.f32 %v1239, %v1241
  %s1243 = scalar_lea.vmem [#allocation2], 4
  %1244 = vst.msk [vmem:[%s1243] sm:$0x3] %vm854, %v1150
  %1246 = vst [vmem:[#allocation1] ss:$4 sm:$0xff] %v1242
  %v1247 = vld.sshfl [vmem:[#allocation1] sm:$0xff pattern:$0x73625140]
  %1248 = vrot.lane.b32.xlu0 %v1247, 16
  %v1249 = vpop.permute.xlu0 %1248
  %s1251 = scalar_lea.vmem [#allocation2], 10
  %1252 = vst.msk [vmem:[%s1251] sm:$0x3] %vm863, %v1249
  %v1253 = vpack.c.bf16 %v1150, %v1150
  %v1254 = vld [vmem:[%s2] sm:$0xf]
  %v1255 = vld [vmem:[%s2 + $0x4] sm:$0xf]
  %v1258 = vunpack.c.l.b16 %v1254
  %v1259 = vunpack.c.l.b16 %v1255
  %v1260 = vpack.c.b16 %v1259, %v1258
  %v1263 = vsel %vm674, %v1253, 0
  %1265 = vmatpush.bf16.msra.mxu0 0
  %1266 = vmatpush.bf16.msra.mxu0 0
  %1267 = vmatpush.bf16.msra.mxu0 0
  %1268 = vmatpush.bf16.msra.mxu0 0
  %1269 = vmatpush.bf16.msra.mxu0 0
  %1270 = vmatpush.bf16.msra.mxu0 0
  %1271 = vmatpush.bf16.msra.mxu0 0
  %1272 = vmatpush.bf16.msra.mxu0 %v1260
  %1273 = vmatmul.bf16.gmra.mxu0 %v1263
  %v1274 = vpop.f32.mrf.mxu0
  %v1275 = vadd.f32 0.0, %v1274
  %v1276 = vpop.f32.mrf.mxu0
  %1277 = vdwg.mxu0
  %v1278 = vld [vmem:[%s691] sm:$0xf]
  %v1279 = vld [vmem:[%s691 + $0x4] sm:$0xf]
  %v1282 = vunpack.c.l.b16 %v1278
  %v1283 = vunpack.c.l.b16 %v1279
  %v1284 = vpack.c.b16 %v1283, %v1282
  %1286 = vmatpush.bf16.msra.mxu0 0
  %1287 = vmatpush.bf16.msra.mxu0 0
  %1288 = vmatpush.bf16.msra.mxu0 0
  %1289 = vmatpush.bf16.msra.mxu0 0
  %1290 = vmatpush.bf16.msra.mxu0 0
  %1291 = vmatpush.bf16.msra.mxu0 0
  %1292 = vmatpush.bf16.msra.mxu0 0
  %1293 = vmatpush.bf16.msra.mxu0 %v1284
  %1294 = vmatmul.bf16.gmra.mxu0 %v1263
  %v1295 = vpop.f32.mrf.mxu0
  %v1296 = vadd.f32 0.0, %v1295
  %v1297 = vpop.f32.mrf.mxu0
  %1298 = vdwg.mxu0
  %v1299 = vld [vmem:[%s713] sm:$0xf]
  %v1300 = vld [vmem:[%s713 + $0x4] sm:$0xf]
  %v1303 = vunpack.c.l.b16 %v1299
  %v1304 = vunpack.c.l.b16 %v1300
  %v1305 = vpack.c.b16 %v1304, %v1303
  %1307 = vmatpush.bf16.msra.mxu0 0
  %1308 = vmatpush.bf16.msra.mxu0 0
  %1309 = vmatpush.bf16.msra.mxu0 0
  %1310 = vmatpush.bf16.msra.mxu0 0
  %1311 = vmatpush.bf16.msra.mxu0 0
  %1312 = vmatpush.bf16.msra.mxu0 0
  %1313 = vmatpush.bf16.msra.mxu0 0
  %1314 = vmatpush.bf16.msra.mxu0 %v1305
  %1315 = vmatmul.bf16.gmra.mxu0 %v1263
  %v1316 = vpop.f32.mrf.mxu0
  %v1317 = vadd.f32 %v717, %v1316
  %v1318 = vpop.f32.mrf.mxu0
  %1319 = vdwg.mxu0
  %s1320 = scalar_lea.vmem [#allocation3], 3
  %v1321 = vld [vmem:[%s1320] sm:$0x1]
  %v1322 = vunpack.c.l.bf16 %v1321
  %s1323 = scalar_lea.vmem [#allocation3], 11
  %v1324 = vld [vmem:[%s1323] sm:$0x1]
  %v1325 = vunpack.c.l.bf16 %v1324
  %s1326 = scalar_lea.vmem [#allocation3], 19
  %v1327 = vld [vmem:[%s1326] sm:$0x1]
  %v1328 = vunpack.c.l.bf16 %v1327
  %v1329 = vadd.f32 %v1322, %v1275
  %v1330 = vmul.f32 %v1329, 0.5
  %v1331 = vtanh.pop %v1330
  %v1332 = vmul.f32 %v1331, 0.5
  %v1333 = vadd.f32 %v1332, 0.5
  %v1334 = vadd.f32 %v1325, %v1296
  %v1335 = vmul.f32 %v1334, 0.5
  %v1336 = vtanh.pop %v1335
  %v1337 = vmul.f32 %v1336, 0.5
  %v1338 = vadd.f32 %v1337, 0.5
  %v1339 = vmul.f32 %v1333, %v1317
  %v1340 = vadd.f32 %v1328, %v1339
  %v1341 = vtanh.pop %v1340
  %v1342 = vsub.f32 %v1150, %v1341
  %v1343 = vmul.f32 %v1338, %v1342
  %v1344 = vadd.f32 %v1341, %v1343
  %v1345 = vpack.c.bf16 %v1242, %v1242
  %v1346 = vld [vmem:[%s760] sm:$0xf]
  %v1347 = vld [vmem:[%s760 + $0x4] sm:$0xf]
  %v1350 = vunpack.c.l.b16 %v1346
  %v1351 = vunpack.c.l.b16 %v1347
  %v1352 = vpack.c.b16 %v1351, %v1350
  %v1355 = vsel %vm674, %v1345, 0
  %1357 = vmatpush.bf16.msra.mxu0 0
  %1358 = vmatpush.bf16.msra.mxu0 0
  %1359 = vmatpush.bf16.msra.mxu0 0
  %1360 = vmatpush.bf16.msra.mxu0 0
  %1361 = vmatpush.bf16.msra.mxu0 0
  %1362 = vmatpush.bf16.msra.mxu0 0
  %1363 = vmatpush.bf16.msra.mxu0 0
  %1364 = vmatpush.bf16.msra.mxu0 %v1352
  %1365 = vmatmul.bf16.gmra.mxu0 %v1355
  %v1366 = vpop.f32.mrf.mxu0
  %v1367 = vadd.f32 0.0, %v1366
  %v1368 = vpop.f32.mrf.mxu0
  %1369 = vdwg.mxu0
  %v1370 = vld [vmem:[%s782] sm:$0xf]
  %v1371 = vld [vmem:[%s782 + $0x4] sm:$0xf]
  %v1374 = vunpack.c.l.b16 %v1370
  %v1375 = vunpack.c.l.b16 %v1371
  %v1376 = vpack.c.b16 %v1375, %v1374
  %1378 = vmatpush.bf16.msra.mxu0 0
  %1379 = vmatpush.bf16.msra.mxu0 0
  %1380 = vmatpush.bf16.msra.mxu0 0
  %1381 = vmatpush.bf16.msra.mxu0 0
  %1382 = vmatpush.bf16.msra.mxu0 0
  %1383 = vmatpush.bf16.msra.mxu0 0
  %1384 = vmatpush.bf16.msra.mxu0 0
  %1385 = vmatpush.bf16.msra.mxu0 %v1376
  %1386 = vmatmul.bf16.gmra.mxu0 %v1355
  %v1387 = vpop.f32.mrf.mxu0
  %v1388 = vadd.f32 0.0, %v1387
  %v1389 = vpop.f32.mrf.mxu0
  %1390 = vdwg.mxu0
  %v1391 = vld [vmem:[%s804] sm:$0xf]
  %v1392 = vld [vmem:[%s804 + $0x4] sm:$0xf]
  %v1395 = vunpack.c.l.b16 %v1391
  %v1396 = vunpack.c.l.b16 %v1392
  %v1397 = vpack.c.b16 %v1396, %v1395
  %1399 = vmatpush.bf16.msra.mxu0 0
  %1400 = vmatpush.bf16.msra.mxu0 0
  %1401 = vmatpush.bf16.msra.mxu0 0
  %1402 = vmatpush.bf16.msra.mxu0 0
  %1403 = vmatpush.bf16.msra.mxu0 0
  %1404 = vmatpush.bf16.msra.mxu0 0
  %1405 = vmatpush.bf16.msra.mxu0 0
  %1406 = vmatpush.bf16.msra.mxu0 %v1397
  %1407 = vmatmul.bf16.gmra.mxu0 %v1355
  %v1408 = vpop.f32.mrf.mxu0
  %v1409 = vadd.f32 %v808, %v1408
  %v1410 = vpop.f32.mrf.mxu0
  %1411 = vdwg.mxu0
  %s1412 = scalar_lea.vmem [#allocation3], 28
  %v1413 = vld [vmem:[%s1412] sm:$0x1]
  %v1414 = vunpack.c.l.bf16 %v1413
  %s1415 = scalar_lea.vmem [#allocation3], 36
  %v1416 = vld [vmem:[%s1415] sm:$0x1]
  %v1417 = vunpack.c.l.bf16 %v1416
  %s1418 = scalar_lea.vmem [#allocation3], 44
  %v1419 = vld [vmem:[%s1418] sm:$0x1]
  %v1420 = vunpack.c.l.bf16 %v1419
  %v1421 = vadd.f32 %v1414, %v1367
  %v1422 = vmul.f32 %v1421, 0.5
  %v1423 = vtanh.pop %v1422
  %v1424 = vmul.f32 %v1423, 0.5
  %v1425 = vadd.f32 %v1424, 0.5
  %v1426 = vadd.f32 %v1417, %v1388
  %v1427 = vmul.f32 %v1426, 0.5
  %v1428 = vtanh.pop %v1427
  %v1429 = vmul.f32 %v1428, 0.5
  %v1430 = vadd.f32 %v1429, 0.5
  %v1431 = vmul.f32 %v1425, %v1409
  %v1432 = vadd.f32 %v1420, %v1431
  %v1433 = vtanh.pop %v1432
  %v1434 = vsub.f32 %v1242, %v1433
  %v1435 = vmul.f32 %v1430, %v1434
  %v1436 = vadd.f32 %v1433, %v1435
  %s1437 = scalar_lea.vmem [#allocation2], 6
  %1438 = vst.msk [vmem:[%s1437] sm:$0x3] %vm854, %v1344
  %1440 = vst [vmem:[#allocation1] ss:$4 sm:$0xff] %v1436
  %v1441 = vld.sshfl [vmem:[#allocation1] sm:$0xff pattern:$0x73625140]
  %1442 = vrot.lane.b32.xlu0 %v1441, 16
  %v1443 = vpop.permute.xlu0 %1442
  %s1445 = scalar_lea.vmem [#allocation2], 8
  %1446 = vst.msk [vmem:[%s1445] sm:$0x3] %vm863, %v1443
  %v1447 = vpack.c.bf16 %v1344, %v1344
  %v1448 = vld [vmem:[%s2] sm:$0xf]
  %v1449 = vld [vmem:[%s2 + $0x4] sm:$0xf]
  %v1452 = vunpack.c.l.b16 %v1448
  %v1453 = vunpack.c.l.b16 %v1449
  %v1454 = vpack.c.b16 %v1453, %v1452
  %v1457 = vsel %vm674, %v1447, 0
  %1459 = vmatpush.bf16.msra.mxu0 0
  %1460 = vmatpush.bf16.msra.mxu0 0
  %1461 = vmatpush.bf16.msra.mxu0 0
  %1462 = vmatpush.bf16.msra.mxu0 0
  %1463 = vmatpush.bf16.msra.mxu0 0
  %1464 = vmatpush.bf16.msra.mxu0 0
  %1465 = vmatpush.bf16.msra.mxu0 0
  %1466 = vmatpush.bf16.msra.mxu0 %v1454
  %1467 = vmatmul.bf16.gmra.mxu0 %v1457
  %v1468 = vpop.f32.mrf.mxu0
  %v1469 = vadd.f32 0.0, %v1468
  %v1470 = vpop.f32.mrf.mxu0
  %1471 = vdwg.mxu0
  %v1472 = vld [vmem:[%s691] sm:$0xf]
  %v1473 = vld [vmem:[%s691 + $0x4] sm:$0xf]
  %v1476 = vunpack.c.l.b16 %v1472
  %v1477 = vunpack.c.l.b16 %v1473
  %v1478 = vpack.c.b16 %v1477, %v1476
  %1480 = vmatpush.bf16.msra.mxu0 0
  %1481 = vmatpush.bf16.msra.mxu0 0
  %1482 = vmatpush.bf16.msra.mxu0 0
  %1483 = vmatpush.bf16.msra.mxu0 0
  %1484 = vmatpush.bf16.msra.mxu0 0
  %1485 = vmatpush.bf16.msra.mxu0 0
  %1486 = vmatpush.bf16.msra.mxu0 0
  %1487 = vmatpush.bf16.msra.mxu0 %v1478
  %1488 = vmatmul.bf16.gmra.mxu0 %v1457
  %v1489 = vpop.f32.mrf.mxu0
  %v1490 = vadd.f32 0.0, %v1489
  %v1491 = vpop.f32.mrf.mxu0
  %1492 = vdwg.mxu0
  %v1493 = vld [vmem:[%s713] sm:$0xf]
  %v1494 = vld [vmem:[%s713 + $0x4] sm:$0xf]
  %v1497 = vunpack.c.l.b16 %v1493
  %v1498 = vunpack.c.l.b16 %v1494
  %v1499 = vpack.c.b16 %v1498, %v1497
  %1501 = vmatpush.bf16.msra.mxu0 0
  %1502 = vmatpush.bf16.msra.mxu0 0
  %1503 = vmatpush.bf16.msra.mxu0 0
  %1504 = vmatpush.bf16.msra.mxu0 0
  %1505 = vmatpush.bf16.msra.mxu0 0
  %1506 = vmatpush.bf16.msra.mxu0 0
  %1507 = vmatpush.bf16.msra.mxu0 0
  %1508 = vmatpush.bf16.msra.mxu0 %v1499
  %1509 = vmatmul.bf16.gmra.mxu0 %v1457
  %v1510 = vpop.f32.mrf.mxu0
  %v1511 = vadd.f32 %v717, %v1510
  %v1512 = vpop.f32.mrf.mxu0
  %1513 = vdwg.mxu0
  %s1514 = scalar_lea.vmem [#allocation3], 4
  %v1515 = vld [vmem:[%s1514] sm:$0x1]
  %v1516 = vunpack.c.l.bf16 %v1515
  %s1517 = scalar_lea.vmem [#allocation3], 12
  %v1518 = vld [vmem:[%s1517] sm:$0x1]
  %v1519 = vunpack.c.l.bf16 %v1518
  %s1520 = scalar_lea.vmem [#allocation3], 20
  %v1521 = vld [vmem:[%s1520] sm:$0x1]
  %v1522 = vunpack.c.l.bf16 %v1521
  %v1523 = vadd.f32 %v1516, %v1469
  %v1524 = vmul.f32 %v1523, 0.5
  %v1525 = vtanh.pop %v1524
  %v1526 = vmul.f32 %v1525, 0.5
  %v1527 = vadd.f32 %v1526, 0.5
  %v1528 = vadd.f32 %v1519, %v1490
  %v1529 = vmul.f32 %v1528, 0.5
  %v1530 = vtanh.pop %v1529
  %v1531 = vmul.f32 %v1530, 0.5
  %v1532 = vadd.f32 %v1531, 0.5
  %v1533 = vmul.f32 %v1527, %v1511
  %v1534 = vadd.f32 %v1522, %v1533
  %v1535 = vtanh.pop %v1534
  %v1536 = vsub.f32 %v1344, %v1535
  %v1537 = vmul.f32 %v1532, %v1536
  %v1538 = vadd.f32 %v1535, %v1537
  %v1539 = vpack.c.bf16 %v1436, %v1436
  %v1540 = vld [vmem:[%s760] sm:$0xf]
  %v1541 = vld [vmem:[%s760 + $0x4] sm:$0xf]
  %v1544 = vunpack.c.l.b16 %v1540
  %v1545 = vunpack.c.l.b16 %v1541
  %v1546 = vpack.c.b16 %v1545, %v1544
  %v1549 = vsel %vm674, %v1539, 0
  %1551 = vmatpush.bf16.msra.mxu0 0
  %1552 = vmatpush.bf16.msra.mxu0 0
  %1553 = vmatpush.bf16.msra.mxu0 0
  %1554 = vmatpush.bf16.msra.mxu0 0
  %1555 = vmatpush.bf16.msra.mxu0 0
  %1556 = vmatpush.bf16.msra.mxu0 0
  %1557 = vmatpush.bf16.msra.mxu0 0
  %1558 = vmatpush.bf16.msra.mxu0 %v1546
  %1559 = vmatmul.bf16.gmra.mxu0 %v1549
  %v1560 = vpop.f32.mrf.mxu0
  %v1561 = vadd.f32 0.0, %v1560
  %v1562 = vpop.f32.mrf.mxu0
  %1563 = vdwg.mxu0
  %v1564 = vld [vmem:[%s782] sm:$0xf]
  %v1565 = vld [vmem:[%s782 + $0x4] sm:$0xf]
  %v1568 = vunpack.c.l.b16 %v1564
  %v1569 = vunpack.c.l.b16 %v1565
  %v1570 = vpack.c.b16 %v1569, %v1568
  %1572 = vmatpush.bf16.msra.mxu0 0
  %1573 = vmatpush.bf16.msra.mxu0 0
  %1574 = vmatpush.bf16.msra.mxu0 0
  %1575 = vmatpush.bf16.msra.mxu0 0
  %1576 = vmatpush.bf16.msra.mxu0 0
  %1577 = vmatpush.bf16.msra.mxu0 0
  %1578 = vmatpush.bf16.msra.mxu0 0
  %1579 = vmatpush.bf16.msra.mxu0 %v1570
  %1580 = vmatmul.bf16.gmra.mxu0 %v1549
  %v1581 = vpop.f32.mrf.mxu0
  %v1582 = vadd.f32 0.0, %v1581
  %v1583 = vpop.f32.mrf.mxu0
  %1584 = vdwg.mxu0
  %v1585 = vld [vmem:[%s804] sm:$0xf]
  %v1586 = vld [vmem:[%s804 + $0x4] sm:$0xf]
  %v1589 = vunpack.c.l.b16 %v1585
  %v1590 = vunpack.c.l.b16 %v1586
  %v1591 = vpack.c.b16 %v1590, %v1589
  %1593 = vmatpush.bf16.msra.mxu0 0
  %1594 = vmatpush.bf16.msra.mxu0 0
  %1595 = vmatpush.bf16.msra.mxu0 0
  %1596 = vmatpush.bf16.msra.mxu0 0
  %1597 = vmatpush.bf16.msra.mxu0 0
  %1598 = vmatpush.bf16.msra.mxu0 0
  %1599 = vmatpush.bf16.msra.mxu0 0
  %1600 = vmatpush.bf16.msra.mxu0 %v1591
  %1601 = vmatmul.bf16.gmra.mxu0 %v1549
  %v1602 = vpop.f32.mrf.mxu0
  %v1603 = vadd.f32 %v808, %v1602
  %v1604 = vpop.f32.mrf.mxu0
  %1605 = vdwg.mxu0
  %s1606 = scalar_lea.vmem [#allocation3], 27
  %v1607 = vld [vmem:[%s1606] sm:$0x1]
  %v1608 = vunpack.c.l.bf16 %v1607
  %s1609 = scalar_lea.vmem [#allocation3], 35
  %v1610 = vld [vmem:[%s1609] sm:$0x1]
  %v1611 = vunpack.c.l.bf16 %v1610
  %s1612 = scalar_lea.vmem [#allocation3], 43
  %v1613 = vld [vmem:[%s1612] sm:$0x1]
  %v1614 = vunpack.c.l.bf16 %v1613
  %v1615 = vadd.f32 %v1608, %v1561
  %v1616 = vmul.f32 %v1615, 0.5
  %v1617 = vtanh.pop %v1616
  %v1618 = vmul.f32 %v1617, 0.5
  %v1619 = vadd.f32 %v1618, 0.5
  %v1620 = vadd.f32 %v1611, %v1582
  %v1621 = vmul.f32 %v1620, 0.5
  %v1622 = vtanh.pop %v1621
  %v1623 = vmul.f32 %v1622, 0.5
  %v1624 = vadd.f32 %v1623, 0.5
  %v1625 = vmul.f32 %v1619, %v1603
  %v1626 = vadd.f32 %v1614, %v1625
  %v1627 = vtanh.pop %v1626
  %v1628 = vsub.f32 %v1436, %v1627
  %v1629 = vmul.f32 %v1624, %v1628
  %v1630 = vadd.f32 %v1627, %v1629
  %1631 = vst.msk [vmem:[%s1445] sm:$0x3] %vm854, %v1538
  %1633 = vst [vmem:[#allocation1] ss:$4 sm:$0xff] %v1630
  %v1634 = vld.sshfl [vmem:[#allocation1] sm:$0xff pattern:$0x73625140]
  %1635 = vrot.lane.b32.xlu0 %v1634, 16
  %v1636 = vpop.permute.xlu0 %1635
  %1638 = vst.msk [vmem:[%s1437] sm:$0x3] %vm863, %v1636
  %v1639 = vpack.c.bf16 %v1538, %v1538
  %v1640 = vld [vmem:[%s2] sm:$0xf]
  %v1641 = vld [vmem:[%s2 + $0x4] sm:$0xf]
  %v1644 = vunpack.c.l.b16 %v1640
  %v1645 = vunpack.c.l.b16 %v1641
  %v1646 = vpack.c.b16 %v1645, %v1644
  %v1649 = vsel %vm674, %v1639, 0
  %1651 = vmatpush.bf16.msra.mxu0 0
  %1652 = vmatpush.bf16.msra.mxu0 0
  %1653 = vmatpush.bf16.msra.mxu0 0
  %1654 = vmatpush.bf16.msra.mxu0 0
  %1655 = vmatpush.bf16.msra.mxu0 0
  %1656 = vmatpush.bf16.msra.mxu0 0
  %1657 = vmatpush.bf16.msra.mxu0 0
  %1658 = vmatpush.bf16.msra.mxu0 %v1646
  %1659 = vmatmul.bf16.gmra.mxu0 %v1649
  %v1660 = vpop.f32.mrf.mxu0
  %v1661 = vadd.f32 0.0, %v1660
  %v1662 = vpop.f32.mrf.mxu0
  %1663 = vdwg.mxu0
  %v1664 = vld [vmem:[%s691] sm:$0xf]
  %v1665 = vld [vmem:[%s691 + $0x4] sm:$0xf]
  %v1668 = vunpack.c.l.b16 %v1664
  %v1669 = vunpack.c.l.b16 %v1665
  %v1670 = vpack.c.b16 %v1669, %v1668
  %1672 = vmatpush.bf16.msra.mxu0 0
  %1673 = vmatpush.bf16.msra.mxu0 0
  %1674 = vmatpush.bf16.msra.mxu0 0
  %1675 = vmatpush.bf16.msra.mxu0 0
  %1676 = vmatpush.bf16.msra.mxu0 0
  %1677 = vmatpush.bf16.msra.mxu0 0
  %1678 = vmatpush.bf16.msra.mxu0 0
  %1679 = vmatpush.bf16.msra.mxu0 %v1670
  %1680 = vmatmul.bf16.gmra.mxu0 %v1649
  %v1681 = vpop.f32.mrf.mxu0
  %v1682 = vadd.f32 0.0, %v1681
  %v1683 = vpop.f32.mrf.mxu0
  %1684 = vdwg.mxu0
  %v1685 = vld [vmem:[%s713] sm:$0xf]
  %v1686 = vld [vmem:[%s713 + $0x4] sm:$0xf]
  %v1689 = vunpack.c.l.b16 %v1685
  %v1690 = vunpack.c.l.b16 %v1686
  %v1691 = vpack.c.b16 %v1690, %v1689
  %1693 = vmatpush.bf16.msra.mxu0 0
  %1694 = vmatpush.bf16.msra.mxu0 0
  %1695 = vmatpush.bf16.msra.mxu0 0
  %1696 = vmatpush.bf16.msra.mxu0 0
  %1697 = vmatpush.bf16.msra.mxu0 0
  %1698 = vmatpush.bf16.msra.mxu0 0
  %1699 = vmatpush.bf16.msra.mxu0 0
  %1700 = vmatpush.bf16.msra.mxu0 %v1691
  %1701 = vmatmul.bf16.gmra.mxu0 %v1649
  %v1702 = vpop.f32.mrf.mxu0
  %v1703 = vadd.f32 %v717, %v1702
  %v1704 = vpop.f32.mrf.mxu0
  %1705 = vdwg.mxu0
  %s1706 = scalar_lea.vmem [#allocation3], 5
  %v1707 = vld [vmem:[%s1706] sm:$0x1]
  %v1708 = vunpack.c.l.bf16 %v1707
  %s1709 = scalar_lea.vmem [#allocation3], 13
  %v1710 = vld [vmem:[%s1709] sm:$0x1]
  %v1711 = vunpack.c.l.bf16 %v1710
  %s1712 = scalar_lea.vmem [#allocation3], 21
  %v1713 = vld [vmem:[%s1712] sm:$0x1]
  %v1714 = vunpack.c.l.bf16 %v1713
  %v1715 = vadd.f32 %v1708, %v1661
  %v1716 = vmul.f32 %v1715, 0.5
  %v1717 = vtanh.pop %v1716
  %v1718 = vmul.f32 %v1717, 0.5
  %v1719 = vadd.f32 %v1718, 0.5
  %v1720 = vadd.f32 %v1711, %v1682
  %v1721 = vmul.f32 %v1720, 0.5
  %v1722 = vtanh.pop %v1721
  %v1723 = vmul.f32 %v1722, 0.5
  %v1724 = vadd.f32 %v1723, 0.5
  %v1725 = vmul.f32 %v1719, %v1703
  %v1726 = vadd.f32 %v1714, %v1725
  %v1727 = vtanh.pop %v1726
  %v1728 = vsub.f32 %v1538, %v1727
  %v1729 = vmul.f32 %v1724, %v1728
  %v1730 = vadd.f32 %v1727, %v1729
  %v1731 = vpack.c.bf16 %v1630, %v1630
  %v1732 = vld [vmem:[%s760] sm:$0xf]
  %v1733 = vld [vmem:[%s760 + $0x4] sm:$0xf]
  %v1736 = vunpack.c.l.b16 %v1732
  %v1737 = vunpack.c.l.b16 %v1733
  %v1738 = vpack.c.b16 %v1737, %v1736
  %v1741 = vsel %vm674, %v1731, 0
  %1743 = vmatpush.bf16.msra.mxu0 0
  %1744 = vmatpush.bf16.msra.mxu0 0
  %1745 = vmatpush.bf16.msra.mxu0 0
  %1746 = vmatpush.bf16.msra.mxu0 0
  %1747 = vmatpush.bf16.msra.mxu0 0
  %1748 = vmatpush.bf16.msra.mxu0 0
  %1749 = vmatpush.bf16.msra.mxu0 0
  %1750 = vmatpush.bf16.msra.mxu0 %v1738
  %1751 = vmatmul.bf16.gmra.mxu0 %v1741
  %v1752 = vpop.f32.mrf.mxu0
  %v1753 = vadd.f32 0.0, %v1752
  %v1754 = vpop.f32.mrf.mxu0
  %1755 = vdwg.mxu0
  %v1756 = vld [vmem:[%s782] sm:$0xf]
  %v1757 = vld [vmem:[%s782 + $0x4] sm:$0xf]
  %v1760 = vunpack.c.l.b16 %v1756
  %v1761 = vunpack.c.l.b16 %v1757
  %v1762 = vpack.c.b16 %v1761, %v1760
  %1764 = vmatpush.bf16.msra.mxu0 0
  %1765 = vmatpush.bf16.msra.mxu0 0
  %1766 = vmatpush.bf16.msra.mxu0 0
  %1767 = vmatpush.bf16.msra.mxu0 0
  %1768 = vmatpush.bf16.msra.mxu0 0
  %1769 = vmatpush.bf16.msra.mxu0 0
  %1770 = vmatpush.bf16.msra.mxu0 0
  %1771 = vmatpush.bf16.msra.mxu0 %v1762
  %1772 = vmatmul.bf16.gmra.mxu0 %v1741
  %v1773 = vpop.f32.mrf.mxu0
  %v1774 = vadd.f32 0.0, %v1773
  %v1775 = vpop.f32.mrf.mxu0
  %1776 = vdwg.mxu0
  %v1777 = vld [vmem:[%s804] sm:$0xf]
  %v1778 = vld [vmem:[%s804 + $0x4] sm:$0xf]
  %v1781 = vunpack.c.l.b16 %v1777
  %v1782 = vunpack.c.l.b16 %v1778
  %v1783 = vpack.c.b16 %v1782, %v1781
  %1785 = vmatpush.bf16.msra.mxu0 0
  %1786 = vmatpush.bf16.msra.mxu0 0
  %1787 = vmatpush.bf16.msra.mxu0 0
  %1788 = vmatpush.bf16.msra.mxu0 0
  %1789 = vmatpush.bf16.msra.mxu0 0
  %1790 = vmatpush.bf16.msra.mxu0 0
  %1791 = vmatpush.bf16.msra.mxu0 0
  %1792 = vmatpush.bf16.msra.mxu0 %v1783
  %1793 = vmatmul.bf16.gmra.mxu0 %v1741
  %v1794 = vpop.f32.mrf.mxu0
  %v1795 = vadd.f32 %v808, %v1794
  %v1796 = vpop.f32.mrf.mxu0
  %1797 = vdwg.mxu0
  %s1798 = scalar_lea.vmem [#allocation3], 26
  %v1799 = vld [vmem:[%s1798] sm:$0x1]
  %v1800 = vunpack.c.l.bf16 %v1799
  %s1801 = scalar_lea.vmem [#allocation3], 34
  %v1802 = vld [vmem:[%s1801] sm:$0x1]
  %v1803 = vunpack.c.l.bf16 %v1802
  %s1804 = scalar_lea.vmem [#allocation3], 42
  %v1805 = vld [vmem:[%s1804] sm:$0x1]
  %v1806 = vunpack.c.l.bf16 %v1805
  %v1807 = vadd.f32 %v1800, %v1753
  %v1808 = vmul.f32 %v1807, 0.5
  %v1809 = vtanh.pop %v1808
  %v1810 = vmul.f32 %v1809, 0.5
  %v1811 = vadd.f32 %v1810, 0.5
  %v1812 = vadd.f32 %v1803, %v1774
  %v1813 = vmul.f32 %v1812, 0.5
  %v1814 = vtanh.pop %v1813
  %v1815 = vmul.f32 %v1814, 0.5
  %v1816 = vadd.f32 %v1815, 0.5
  %v1817 = vmul.f32 %v1811, %v1795
  %v1818 = vadd.f32 %v1806, %v1817
  %v1819 = vtanh.pop %v1818
  %v1820 = vsub.f32 %v1630, %v1819
  %v1821 = vmul.f32 %v1816, %v1820
  %v1822 = vadd.f32 %v1819, %v1821
  %1823 = vst.msk [vmem:[%s1251] sm:$0x3] %vm854, %v1730
  %1825 = vst [vmem:[#allocation1] ss:$4 sm:$0xff] %v1822
  %v1826 = vld.sshfl [vmem:[#allocation1] sm:$0xff pattern:$0x73625140]
  %1827 = vrot.lane.b32.xlu0 %v1826, 16
  %v1828 = vpop.permute.xlu0 %1827
  %1830 = vst.msk [vmem:[%s1243] sm:$0x3] %vm863, %v1828
  %v1831 = vpack.c.bf16 %v1730, %v1730
  %v1832 = vld [vmem:[%s2] sm:$0xf]
  %v1833 = vld [vmem:[%s2 + $0x4] sm:$0xf]
  %v1836 = vunpack.c.l.b16 %v1832
  %v1837 = vunpack.c.l.b16 %v1833
  %v1838 = vpack.c.b16 %v1837, %v1836
  %v1841 = vsel %vm674, %v1831, 0
  %1843 = vmatpush.bf16.msra.mxu0 0
  %1844 = vmatpush.bf16.msra.mxu0 0
  %1845 = vmatpush.bf16.msra.mxu0 0
  %1846 = vmatpush.bf16.msra.mxu0 0
  %1847 = vmatpush.bf16.msra.mxu0 0
  %1848 = vmatpush.bf16.msra.mxu0 0
  %1849 = vmatpush.bf16.msra.mxu0 0
  %1850 = vmatpush.bf16.msra.mxu0 %v1838
  %1851 = vmatmul.bf16.gmra.mxu0 %v1841
  %v1852 = vpop.f32.mrf.mxu0
  %v1853 = vadd.f32 0.0, %v1852
  %v1854 = vpop.f32.mrf.mxu0
  %1855 = vdwg.mxu0
  %v1856 = vld [vmem:[%s691] sm:$0xf]
  %v1857 = vld [vmem:[%s691 + $0x4] sm:$0xf]
  %v1860 = vunpack.c.l.b16 %v1856
  %v1861 = vunpack.c.l.b16 %v1857
  %v1862 = vpack.c.b16 %v1861, %v1860
  %1864 = vmatpush.bf16.msra.mxu0 0
  %1865 = vmatpush.bf16.msra.mxu0 0
  %1866 = vmatpush.bf16.msra.mxu0 0
  %1867 = vmatpush.bf16.msra.mxu0 0
  %1868 = vmatpush.bf16.msra.mxu0 0
  %1869 = vmatpush.bf16.msra.mxu0 0
  %1870 = vmatpush.bf16.msra.mxu0 0
  %1871 = vmatpush.bf16.msra.mxu0 %v1862
  %1872 = vmatmul.bf16.gmra.mxu0 %v1841
  %v1873 = vpop.f32.mrf.mxu0
  %v1874 = vadd.f32 0.0, %v1873
  %v1875 = vpop.f32.mrf.mxu0
  %1876 = vdwg.mxu0
  %v1877 = vld [vmem:[%s713] sm:$0xf]
  %v1878 = vld [vmem:[%s713 + $0x4] sm:$0xf]
  %v1881 = vunpack.c.l.b16 %v1877
  %v1882 = vunpack.c.l.b16 %v1878
  %v1883 = vpack.c.b16 %v1882, %v1881
  %1885 = vmatpush.bf16.msra.mxu0 0
  %1886 = vmatpush.bf16.msra.mxu0 0
  %1887 = vmatpush.bf16.msra.mxu0 0
  %1888 = vmatpush.bf16.msra.mxu0 0
  %1889 = vmatpush.bf16.msra.mxu0 0
  %1890 = vmatpush.bf16.msra.mxu0 0
  %1891 = vmatpush.bf16.msra.mxu0 0
  %1892 = vmatpush.bf16.msra.mxu0 %v1883
  %1893 = vmatmul.bf16.gmra.mxu0 %v1841
  %v1894 = vpop.f32.mrf.mxu0
  %v1895 = vadd.f32 %v717, %v1894
  %v1896 = vpop.f32.mrf.mxu0
  %1897 = vdwg.mxu0
  %s1898 = scalar_lea.vmem [#allocation3], 6
  %v1899 = vld [vmem:[%s1898] sm:$0x1]
  %v1900 = vunpack.c.l.bf16 %v1899
  %s1901 = scalar_lea.vmem [#allocation3], 14
  %v1902 = vld [vmem:[%s1901] sm:$0x1]
  %v1903 = vunpack.c.l.bf16 %v1902
  %s1904 = scalar_lea.vmem [#allocation3], 22
  %v1905 = vld [vmem:[%s1904] sm:$0x1]
  %v1906 = vunpack.c.l.bf16 %v1905
  %v1907 = vadd.f32 %v1900, %v1853
  %v1908 = vmul.f32 %v1907, 0.5
  %v1909 = vtanh.pop %v1908
  %v1910 = vmul.f32 %v1909, 0.5
  %v1911 = vadd.f32 %v1910, 0.5
  %v1912 = vadd.f32 %v1903, %v1874
  %v1913 = vmul.f32 %v1912, 0.5
  %v1914 = vtanh.pop %v1913
  %v1915 = vmul.f32 %v1914, 0.5
  %v1916 = vadd.f32 %v1915, 0.5
  %v1917 = vmul.f32 %v1911, %v1895
  %v1918 = vadd.f32 %v1906, %v1917
  %v1919 = vtanh.pop %v1918
  %v1920 = vsub.f32 %v1730, %v1919
  %v1921 = vmul.f32 %v1916, %v1920
  %v1922 = vadd.f32 %v1919, %v1921
  %v1923 = vpack.c.bf16 %v1822, %v1822
  %v1924 = vld [vmem:[%s760] sm:$0xf]
  %v1925 = vld [vmem:[%s760 + $0x4] sm:$0xf]
  %v1928 = vunpack.c.l.b16 %v1924
  %v1929 = vunpack.c.l.b16 %v1925
  %v1930 = vpack.c.b16 %v1929, %v1928
  %v1933 = vsel %vm674, %v1923, 0
  %1935 = vmatpush.bf16.msra.mxu0 0
  %1936 = vmatpush.bf16.msra.mxu0 0
  %1937 = vmatpush.bf16.msra.mxu0 0
  %1938 = vmatpush.bf16.msra.mxu0 0
  %1939 = vmatpush.bf16.msra.mxu0 0
  %1940 = vmatpush.bf16.msra.mxu0 0
  %1941 = vmatpush.bf16.msra.mxu0 0
  %1942 = vmatpush.bf16.msra.mxu0 %v1930
  %1943 = vmatmul.bf16.gmra.mxu0 %v1933
  %v1944 = vpop.f32.mrf.mxu0
  %v1945 = vadd.f32 0.0, %v1944
  %v1946 = vpop.f32.mrf.mxu0
  %1947 = vdwg.mxu0
  %v1948 = vld [vmem:[%s782] sm:$0xf]
  %v1949 = vld [vmem:[%s782 + $0x4] sm:$0xf]
  %v1952 = vunpack.c.l.b16 %v1948
  %v1953 = vunpack.c.l.b16 %v1949
  %v1954 = vpack.c.b16 %v1953, %v1952
  %1956 = vmatpush.bf16.msra.mxu0 0
  %1957 = vmatpush.bf16.msra.mxu0 0
  %1958 = vmatpush.bf16.msra.mxu0 0
  %1959 = vmatpush.bf16.msra.mxu0 0
  %1960 = vmatpush.bf16.msra.mxu0 0
  %1961 = vmatpush.bf16.msra.mxu0 0
  %1962 = vmatpush.bf16.msra.mxu0 0
  %1963 = vmatpush.bf16.msra.mxu0 %v1954
  %1964 = vmatmul.bf16.gmra.mxu0 %v1933
  %v1965 = vpop.f32.mrf.mxu0
  %v1966 = vadd.f32 0.0, %v1965
  %v1967 = vpop.f32.mrf.mxu0
  %1968 = vdwg.mxu0
  %v1969 = vld [vmem:[%s804] sm:$0xf]
  %v1970 = vld [vmem:[%s804 + $0x4] sm:$0xf]
  %v1973 = vunpack.c.l.b16 %v1969
  %v1974 = vunpack.c.l.b16 %v1970
  %v1975 = vpack.c.b16 %v1974, %v1973
  %1977 = vmatpush.bf16.msra.mxu0 0
  %1978 = vmatpush.bf16.msra.mxu0 0
  %1979 = vmatpush.bf16.msra.mxu0 0
  %1980 = vmatpush.bf16.msra.mxu0 0
  %1981 = vmatpush.bf16.msra.mxu0 0
  %1982 = vmatpush.bf16.msra.mxu0 0
  %1983 = vmatpush.bf16.msra.mxu0 0
  %1984 = vmatpush.bf16.msra.mxu0 %v1975
  %1985 = vmatmul.bf16.gmra.mxu0 %v1933
  %v1986 = vpop.f32.mrf.mxu0
  %v1987 = vadd.f32 %v808, %v1986
  %v1988 = vpop.f32.mrf.mxu0
  %1989 = vdwg.mxu0
  %s1990 = scalar_lea.vmem [#allocation3], 25
  %v1991 = vld [vmem:[%s1990] sm:$0x1]
  %v1992 = vunpack.c.l.bf16 %v1991
  %s1993 = scalar_lea.vmem [#allocation3], 33
  %v1994 = vld [vmem:[%s1993] sm:$0x1]
  %v1995 = vunpack.c.l.bf16 %v1994
  %s1996 = scalar_lea.vmem [#allocation3], 41
  %v1997 = vld [vmem:[%s1996] sm:$0x1]
  %v1998 = vunpack.c.l.bf16 %v1997
  %v1999 = vadd.f32 %v1992, %v1945
  %v2000 = vmul.f32 %v1999, 0.5
  %v2001 = vtanh.pop %v2000
  %v2002 = vmul.f32 %v2001, 0.5
  %v2003 = vadd.f32 %v2002, 0.5
  %v2004 = vadd.f32 %v1995, %v1966
  %v2005 = vmul.f32 %v2004, 0.5
  %v2006 = vtanh.pop %v2005
  %v2007 = vmul.f32 %v2006, 0.5
  %v2008 = vadd.f32 %v2007, 0.5
  %v2009 = vmul.f32 %v2003, %v1987
  %v2010 = vadd.f32 %v1998, %v2009
  %v2011 = vtanh.pop %v2010
  %v2012 = vsub.f32 %v1822, %v2011
  %v2013 = vmul.f32 %v2008, %v2012
  %v2014 = vadd.f32 %v2011, %v2013
  %2015 = vst.msk [vmem:[%s1057] sm:$0x3] %vm854, %v1922
  %2017 = vst [vmem:[#allocation1] ss:$4 sm:$0xff] %v2014
  %v2018 = vld.sshfl [vmem:[#allocation1] sm:$0xff pattern:$0x73625140]
  %2019 = vrot.lane.b32.xlu0 %v2018, 16
  %v2020 = vpop.permute.xlu0 %2019
  %2022 = vst.msk [vmem:[%s1049] sm:$0x3] %vm863, %v2020
  %v2023 = vpack.c.bf16 %v1922, %v1922
  %v2024 = vld [vmem:[%s2] sm:$0xf]
  %v2025 = vld [vmem:[%s2 + $0x4] sm:$0xf]
  %v2028 = vunpack.c.l.b16 %v2024
  %v2029 = vunpack.c.l.b16 %v2025
  %v2030 = vpack.c.b16 %v2029, %v2028
  %v2033 = vsel %vm674, %v2023, 0
  %2035 = vmatpush.bf16.msra.mxu0 0
  %2036 = vmatpush.bf16.msra.mxu0 0
  %2037 = vmatpush.bf16.msra.mxu0 0
  %2038 = vmatpush.bf16.msra.mxu0 0
  %2039 = vmatpush.bf16.msra.mxu0 0
  %2040 = vmatpush.bf16.msra.mxu0 0
  %2041 = vmatpush.bf16.msra.mxu0 0
  %2042 = vmatpush.bf16.msra.mxu0 %v2030
  %2043 = vmatmul.bf16.gmra.mxu0 %v2033
  %v2044 = vpop.f32.mrf.mxu0
  %v2045 = vadd.f32 0.0, %v2044
  %v2046 = vpop.f32.mrf.mxu0
  %2047 = vdwg.mxu0
  %v2048 = vld [vmem:[%s691] sm:$0xf]
  %v2049 = vld [vmem:[%s691 + $0x4] sm:$0xf]
  %v2052 = vunpack.c.l.b16 %v2048
  %v2053 = vunpack.c.l.b16 %v2049
  %v2054 = vpack.c.b16 %v2053, %v2052
  %2056 = vmatpush.bf16.msra.mxu0 0
  %2057 = vmatpush.bf16.msra.mxu0 0
  %2058 = vmatpush.bf16.msra.mxu0 0
  %2059 = vmatpush.bf16.msra.mxu0 0
  %2060 = vmatpush.bf16.msra.mxu0 0
  %2061 = vmatpush.bf16.msra.mxu0 0
  %2062 = vmatpush.bf16.msra.mxu0 0
  %2063 = vmatpush.bf16.msra.mxu0 %v2054
  %2064 = vmatmul.bf16.gmra.mxu0 %v2033
  %v2065 = vpop.f32.mrf.mxu0
  %v2066 = vadd.f32 0.0, %v2065
  %v2067 = vpop.f32.mrf.mxu0
  %2068 = vdwg.mxu0
  %v2069 = vld [vmem:[%s713] sm:$0xf]
  %v2070 = vld [vmem:[%s713 + $0x4] sm:$0xf]
  %v2073 = vunpack.c.l.b16 %v2069
  %v2074 = vunpack.c.l.b16 %v2070
  %v2075 = vpack.c.b16 %v2074, %v2073
  %2077 = vmatpush.bf16.msra.mxu0 0
  %2078 = vmatpush.bf16.msra.mxu0 0
  %2079 = vmatpush.bf16.msra.mxu0 0
  %2080 = vmatpush.bf16.msra.mxu0 0
  %2081 = vmatpush.bf16.msra.mxu0 0
  %2082 = vmatpush.bf16.msra.mxu0 0
  %2083 = vmatpush.bf16.msra.mxu0 0
  %2084 = vmatpush.bf16.msra.mxu0 %v2075
  %2085 = vmatmul.bf16.gmra.mxu0 %v2033
  %v2086 = vpop.f32.mrf.mxu0
  %v2087 = vadd.f32 %v717, %v2086
  %v2088 = vpop.f32.mrf.mxu0
  %2089 = vdwg.mxu0
  %s2090 = scalar_lea.vmem [#allocation3], 7
  %v2091 = vld [vmem:[%s2090] sm:$0x1]
  %v2092 = vunpack.c.l.bf16 %v2091
  %s2093 = scalar_lea.vmem [#allocation3], 15
  %v2094 = vld [vmem:[%s2093] sm:$0x1]
  %v2095 = vunpack.c.l.bf16 %v2094
  %s2096 = scalar_lea.vmem [#allocation3], 23
  %v2097 = vld [vmem:[%s2096] sm:$0x1]
  %v2098 = vunpack.c.l.bf16 %v2097
  %v2099 = vadd.f32 %v2092, %v2045
  %v2100 = vmul.f32 %v2099, 0.5
  %v2101 = vtanh.pop %v2100
  %v2102 = vmul.f32 %v2101, 0.5
  %v2103 = vadd.f32 %v2102, 0.5
  %v2104 = vadd.f32 %v2095, %v2066
  %v2105 = vmul.f32 %v2104, 0.5
  %v2106 = vtanh.pop %v2105
  %v2107 = vmul.f32 %v2106, 0.5
  %v2108 = vadd.f32 %v2107, 0.5
  %v2109 = vmul.f32 %v2103, %v2087
  %v2110 = vadd.f32 %v2098, %v2109
  %v2111 = vtanh.pop %v2110
  %v2112 = vsub.f32 %v1922, %v2111
  %v2113 = vmul.f32 %v2108, %v2112
  %v2114 = vadd.f32 %v2111, %v2113
  %v2115 = vpack.c.bf16 %v2014, %v2014
  %v2116 = vld [vmem:[%s760] sm:$0xf]
  %v2117 = vld [vmem:[%s760 + $0x4] sm:$0xf]
  %v2120 = vunpack.c.l.b16 %v2116
  %v2121 = vunpack.c.l.b16 %v2117
  %v2122 = vpack.c.b16 %v2121, %v2120
  %v2125 = vsel %vm674, %v2115, 0
  %2127 = vmatpush.bf16.msra.mxu0 0
  %2128 = vmatpush.bf16.msra.mxu0 0
  %2129 = vmatpush.bf16.msra.mxu0 0
  %2130 = vmatpush.bf16.msra.mxu0 0
  %2131 = vmatpush.bf16.msra.mxu0 0
  %2132 = vmatpush.bf16.msra.mxu0 0
  %2133 = vmatpush.bf16.msra.mxu0 0
  %2134 = vmatpush.bf16.msra.mxu0 %v2122
  %2135 = vmatmul.bf16.gmra.mxu0 %v2125
  %v2136 = vpop.f32.mrf.mxu0
  %v2137 = vadd.f32 0.0, %v2136
  %v2138 = vpop.f32.mrf.mxu0
  %2139 = vdwg.mxu0
  %v2140 = vld [vmem:[%s782] sm:$0xf]
  %v2141 = vld [vmem:[%s782 + $0x4] sm:$0xf]
  %v2144 = vunpack.c.l.b16 %v2140
  %v2145 = vunpack.c.l.b16 %v2141
  %v2146 = vpack.c.b16 %v2145, %v2144
  %2148 = vmatpush.bf16.msra.mxu0 0
  %2149 = vmatpush.bf16.msra.mxu0 0
  %2150 = vmatpush.bf16.msra.mxu0 0
  %2151 = vmatpush.bf16.msra.mxu0 0
  %2152 = vmatpush.bf16.msra.mxu0 0
  %2153 = vmatpush.bf16.msra.mxu0 0
  %2154 = vmatpush.bf16.msra.mxu0 0
  %2155 = vmatpush.bf16.msra.mxu0 %v2146
  %2156 = vmatmul.bf16.gmra.mxu0 %v2125
  %v2157 = vpop.f32.mrf.mxu0
  %v2158 = vadd.f32 0.0, %v2157
  %v2159 = vpop.f32.mrf.mxu0
  %2160 = vdwg.mxu0
  %v2161 = vld [vmem:[%s804] sm:$0xf]
  %v2162 = vld [vmem:[%s804 + $0x4] sm:$0xf]
  %v2165 = vunpack.c.l.b16 %v2161
  %v2166 = vunpack.c.l.b16 %v2162
  %v2167 = vpack.c.b16 %v2166, %v2165
  %2169 = vmatpush.bf16.msra.mxu0 0
  %2170 = vmatpush.bf16.msra.mxu0 0
  %2171 = vmatpush.bf16.msra.mxu0 0
  %2172 = vmatpush.bf16.msra.mxu0 0
  %2173 = vmatpush.bf16.msra.mxu0 0
  %2174 = vmatpush.bf16.msra.mxu0 0
  %2175 = vmatpush.bf16.msra.mxu0 0
  %2176 = vmatpush.bf16.msra.mxu0 %v2167
  %2177 = vmatmul.bf16.gmra.mxu0 %v2125
  %v2178 = vpop.f32.mrf.mxu0
  %v2179 = vadd.f32 %v808, %v2178
  %v2180 = vpop.f32.mrf.mxu0
  %2181 = vdwg.mxu0
  %v2182 = vld [vmem:[%s452] sm:$0x1]
  %v2183 = vunpack.c.l.bf16 %v2182
  %v2184 = vld [vmem:[%s553] sm:$0x1]
  %v2185 = vunpack.c.l.bf16 %v2184
  %v2186 = vld [vmem:[%s654] sm:$0x1]
  %v2187 = vunpack.c.l.bf16 %v2186
  %v2188 = vadd.f32 %v2183, %v2137
  %v2189 = vmul.f32 %v2188, 0.5
  %v2190 = vtanh.pop %v2189
  %v2191 = vmul.f32 %v2190, 0.5
  %v2192 = vadd.f32 %v2191, 0.5
  %v2193 = vadd.f32 %v2185, %v2158
  %v2194 = vmul.f32 %v2193, 0.5
  %v2195 = vtanh.pop %v2194
  %v2196 = vmul.f32 %v2195, 0.5
  %v2197 = vadd.f32 %v2196, 0.5
  %v2198 = vmul.f32 %v2192, %v2179
  %v2199 = vadd.f32 %v2187, %v2198
  %v2200 = vtanh.pop %v2199
  %v2201 = vsub.f32 %v2014, %v2200
  %v2202 = vmul.f32 %v2197, %v2201
  %v2203 = vadd.f32 %v2200, %v2202
  %2204 = vst.msk [vmem:[%s862] sm:$0x3] %vm854, %v2114
  %2206 = vst [vmem:[#allocation1] ss:$4 sm:$0xff] %v2203
  %v2207 = vld.sshfl [vmem:[#allocation1] sm:$0xff pattern:$0x73625140]
  %2208 = vrot.lane.b32.xlu0 %v2207, 16
  %v2209 = vpop.permute.xlu0 %2208
  %2211 = vst.msk [vmem:[#allocation2] sm:$0x3] %vm863, %v2209
  %v2212 = vld [vmem:[#allocation2] sm:$0x3]
  %v2213 = vld [vmem:[#allocation2 + $0x2] sm:$0x3]
  %v2214 = vld [vmem:[#allocation2 + $0x4] sm:$0x3]
  %v2215 = vld [vmem:[#allocation2 + $0x6] sm:$0x3]
  %v2216 = vld [vmem:[#allocation2 + $0x8] sm:$0x3]
  %v2217 = vld [vmem:[#allocation2 + $0xa] sm:$0x3]
  %v2218 = vld [vmem:[#allocation2 + $0xc] sm:$0x3]
  %v2219 = vld [vmem:[#allocation2 + $0xe] sm:$0x3]
  %v2220 = vmax.f32 %v2212, 0.0
  %v2221 = vmax.f32 %v2213, 0.0
  %v2222 = vmax.f32 %v2214, 0.0
  %v2223 = vmax.f32 %v2215, 0.0
  %v2224 = vmax.f32 %v2216, 0.0
  %v2225 = vmax.f32 %v2217, 0.0
  %v2226 = vmax.f32 %v2218, 0.0
  %v2227 = vmax.f32 %v2219, 0.0
  %2236 = vst [vmem:[#allocation1] ss:$4 sm:$0xff] %v2220
  %s2237 = scalar_lea.vmem [#allocation1], 1
  %2238 = vst [vmem:[%s2237] ss:$4 sm:$0xff] %v2221
  %s2239 = scalar_lea.vmem [#allocation1], 2
  %2240 = vst [vmem:[%s2239] ss:$4 sm:$0xff] %v2222
  %s2241 = scalar_lea.vmem [#allocation1], 3
  %2242 = vst [vmem:[%s2241] ss:$4 sm:$0xff] %v2223
  %s2243 = scalar_lea.vmem [#allocation1], 32
  %2244 = vst [vmem:[%s2243] ss:$4 sm:$0xff] %v2224
  %s2245 = scalar_lea.vmem [#allocation1], 33
  %2246 = vst [vmem:[%s2245] ss:$4 sm:$0xff] %v2225
  %s2247 = scalar_lea.vmem [#allocation1], 34
  %2248 = vst [vmem:[%s2247] ss:$4 sm:$0xff] %v2226
  %s2249 = scalar_lea.vmem [#allocation1], 35
  %2250 = vst [vmem:[%s2249] ss:$4 sm:$0xff] %v2227
  %v2251 = vld.sshfl [vmem:[#allocation1] sm:$0xff pattern:$0x73625140]
  %v2252 = vld.sshfl [vmem:[#allocation1 + $0x20] sm:$0xff pattern:$0x73625140]
  %v2255 = vpack.c.bf16 %v2252, %v2251
  %v2256 = vld [vmem:[%s5] sm:$0xf]
  %v2257 = vld [vmem:[%s5 + $0x4] sm:$0xf]
  %v2258 = vld [vmem:[%s5 + $0x8] sm:$0xf]
  %v2259 = vld [vmem:[%s5 + $0xc] sm:$0xf]
  %v2260 = vld [vmem:[%s6] sm:$0x1]
  %v2262 = vperm.slane %v2260, 0
  %v2268 = vunpack.c.l.b16 %v2256
  %v2269 = vunpack.c.l.b16 %v2257
  %v2270 = vunpack.c.l.b16 %v2258
  %v2271 = vunpack.c.l.b16 %v2259
  %v2272 = vpack.c.b16 %v2269, %v2268
  %v2273 = vpack.c.b16 %v2271, %v2270
  %v2277 = vsel %vm90, %v2255, 0
  %2279 = vmatpush.bf16.msra.mxu0 0
  %2280 = vmatpush.bf16.msra.mxu0 0
  %2281 = vmatpush.bf16.msra.mxu0 0
  %2282 = vmatpush.bf16.msra.mxu0 0
  %2283 = vmatpush.bf16.msra.mxu0 0
  %2284 = vmatpush.bf16.msra.mxu0 0
  %2285 = vmatpush.bf16.msra.mxu0 %v2273
  %2286 = vmatpush.bf16.msra.mxu0 %v2272
  %2287 = vmatmul.bf16.gmra.mxu0 %v2277
  %v2288 = vpop.f32.mrf.mxu0
  %v2289 = vadd.f32 %v2262, %v2288
  %v2290 = vpop.f32.mrf.mxu0
  %v2291 = vadd.f32 %v2262, %v2290
  %2292 = vdwg.mxu0
  %v2293 = vmax.f32 %v2289, 0.0
  %v2294 = vmax.f32 %v2291, 0.0
  %v2297 = vrot.slane %v2293, 2
  %v2298 = vrot.slane %v2293, 4
  %v2299 = vrot.slane %v2293, 6
  %v2300 = vrot.slane %v2294, 2
  %v2301 = vrot.slane %v2294, 4
  %v2302 = vrot.slane %v2294, 6
  %v2309 = vld [vmem:[%s7] sm:$0x1]
  %v2311 = vperm.slane %v2309, 0
  %v2313 = vmul.f32 %v2293, %v2311
  %v2314 = vmul.f32 %v2297, %v2311
  %v2315 = vmul.f32 %v2298, %v2311
  %v2316 = vmul.f32 %v2299, %v2311
  %v2317 = vmul.f32 %v2294, %v2311
  %v2318 = vmul.f32 %v2300, %v2311
  %v2319 = vmul.f32 %v2301, %v2311
  %v2320 = vmul.f32 %v2302, %v2311
  %v2321 = vsel %vm854, %v2313, 0.0
  %2322 = vadd.xlane.f32.xlu0 %v2321
  %v2323 = vpop.xlane.xlu0 %2322
  %v2324 = vsel %vm854, %v2314, 0.0
  %2325 = vadd.xlane.f32.xlu0 %v2324
  %v2326 = vpop.xlane.xlu0 %2325
  %v2327 = vsel %vm854, %v2315, 0.0
  %2328 = vadd.xlane.f32.xlu0 %v2327
  %v2329 = vpop.xlane.xlu0 %2328
  %v2330 = vsel %vm854, %v2316, 0.0
  %2331 = vadd.xlane.f32.xlu0 %v2330
  %v2332 = vpop.xlane.xlu0 %2331
  %v2333 = vsel %vm854, %v2317, 0.0
  %2334 = vadd.xlane.f32.xlu0 %v2333
  %v2335 = vpop.xlane.xlu0 %2334
  %v2336 = vsel %vm854, %v2318, 0.0
  %2337 = vadd.xlane.f32.xlu0 %v2336
  %v2338 = vpop.xlane.xlu0 %2337
  %v2339 = vsel %vm854, %v2319, 0.0
  %2340 = vadd.xlane.f32.xlu0 %v2339
  %v2341 = vpop.xlane.xlu0 %2340
  %v2342 = vsel %vm854, %v2320, 0.0
  %2343 = vadd.xlane.f32.xlu0 %v2342
  %v2344 = vpop.xlane.xlu0 %2343
  %vm2345 = vcmask 1041408
  %v2346 = vsel %vm2345, %v2323, -inf
  %v2347 = vsel %vm2345, %v2326, -inf
  %v2348 = vsel %vm2345, %v2329, -inf
  %v2349 = vsel %vm2345, %v2332, -inf
  %v2350 = vsel %vm2345, %v2335, -inf
  %v2351 = vmax.f32 %v2346, %v2350
  %v2352 = vsel %vm2345, %v2338, -inf
  %v2353 = vmax.f32 %v2347, %v2352
  %v2354 = vsel %vm2345, %v2341, -inf
  %v2355 = vmax.f32 %v2348, %v2354
  %v2356 = vsel %vm2345, %v2344, -inf
  %v2357 = vmax.f32 %v2349, %v2356
  %v2358 = vmax.f32 %v2351, %v2353
  %v2359 = vmax.f32 %v2355, %v2357
  %v2360 = vmax.f32 %v2358, %v2359
  %v2361 = vsub.f32 %v2323, %v2360
  %v2362 = vsub.f32 %v2326, %v2360
  %v2363 = vsub.f32 %v2329, %v2360
  %v2364 = vsub.f32 %v2332, %v2360
  %v2365 = vsub.f32 %v2335, %v2360
  %v2366 = vsub.f32 %v2338, %v2360
  %v2367 = vsub.f32 %v2341, %v2360
  %v2368 = vsub.f32 %v2344, %v2360
  %v2369 = vmul.f32 %v2361, 1.442695
  %v2370 = vpow.pop %v2369
  %v2371 = vmul.f32 %v2362, 1.442695
  %v2372 = vpow.pop %v2371
  %v2373 = vmul.f32 %v2363, 1.442695
  %v2374 = vpow.pop %v2373
  %v2375 = vmul.f32 %v2364, 1.442695
  %v2376 = vpow.pop %v2375
  %v2377 = vmul.f32 %v2365, 1.442695
  %v2378 = vpow.pop %v2377
  %v2379 = vmul.f32 %v2366, 1.442695
  %v2380 = vpow.pop %v2379
  %v2381 = vmul.f32 %v2367, 1.442695
  %v2382 = vpow.pop %v2381
  %v2383 = vmul.f32 %v2368, 1.442695
  %v2384 = vpow.pop %v2383
  %v2385 = vsel %vm2345, %v2370, 0.0
  %v2386 = vsel %vm2345, %v2372, 0.0
  %v2387 = vadd.f32 %v2385, %v2386
  %v2388 = vsel %vm2345, %v2374, 0.0
  %v2389 = vadd.f32 %v2387, %v2388
  %v2390 = vsel %vm2345, %v2376, 0.0
  %v2391 = vadd.f32 %v2389, %v2390
  %v2392 = vsel %vm2345, %v2378, 0.0
  %v2393 = vadd.f32 %v2391, %v2392
  %v2394 = vsel %vm2345, %v2380, 0.0
  %v2395 = vadd.f32 %v2393, %v2394
  %v2396 = vsel %vm2345, %v2382, 0.0
  %v2397 = vadd.f32 %v2395, %v2396
  %v2398 = vsel %vm2345, %v2384, 0.0
  %v2399 = vadd.f32 %v2397, %v2398
  %v2400 = vrcp.pop %v2399
  %v2401 = vmul.f32 %v2399, %v2400
  %v2402 = vsub.f32 1.0, %v2401
  %v2403 = vmul.f32 %v2400, %v2402
  %v2404 = vadd.f32 %v2400, %v2403
  %vm2405 = vweird.f32 %v2399
  %vm2406 = vweird.f32 %v2400
  %vm2407 = vmor %vm2405, %vm2406
  %v2408 = vsel %vm2407, %v2400, %v2404
  %v2409 = vand.u32 2147483647, %v2399
  %vm2410 = vcmp.eq.f32.partialorder %v2409, 8.507059e+37
  %v2411 = vand.u32 %v2399, 2147483648
  %v2412 = vor.u32 1.1754944e-38, %v2411
  %v2413 = vsel %vm2410, %v2412, %v2408
  %v2414 = vmul.f32 %v2370, %v2413
  %v2415 = vmul.f32 %v2372, %v2413
  %v2416 = vmul.f32 %v2374, %v2413
  %v2417 = vmul.f32 %v2376, %v2413
  %v2418 = vmul.f32 %v2378, %v2413
  %v2419 = vmul.f32 %v2380, %v2413
  %v2420 = vmul.f32 %v2382, %v2413
  %v2421 = vmul.f32 %v2384, %v2413
  %v2422 = vmul.f32 %v2212, %v2414
  %v2423 = vmul.f32 %v2213, %v2415
  %v2424 = vmul.f32 %v2214, %v2416
  %v2425 = vmul.f32 %v2215, %v2417
  %v2426 = vmul.f32 %v2216, %v2418
  %v2427 = vmul.f32 %v2217, %v2419
  %v2428 = vmul.f32 %v2218, %v2420
  %v2429 = vmul.f32 %v2219, %v2421
  %vm2430 = vcmask 254976
  %v2431 = vsel %vm2430, %v2422, 0.0
  %v2432 = vsel %vm2430, %v2423, 0.0
  %v2433 = vadd.f32 %v2431, %v2432
  %v2434 = vsel %vm2430, %v2424, 0.0
  %v2435 = vadd.f32 %v2433, %v2434
  %v2436 = vsel %vm2430, %v2425, 0.0
  %v2437 = vadd.f32 %v2435, %v2436
  %v2438 = vsel %vm2430, %v2426, 0.0
  %v2439 = vadd.f32 %v2437, %v2438
  %v2440 = vsel %vm2430, %v2427, 0.0
  %v2441 = vadd.f32 %v2439, %v2440
  %v2442 = vsel %vm2430, %v2428, 0.0
  %v2443 = vadd.f32 %v2441, %v2442
  %v2444 = vsel %vm2430, %v2429, 0.0
  %v2445 = vadd.f32 %v2443, %v2444
  %v2446 = vld [vmem:[%s8] sm:$0x1]
  %v2448 = vperm.slane %v2446, 0
  %v2450 = vmul.f32 %v2445, %v2448
  %v2451 = vsel %vm2430, %v2450, 0.0
  %2452 = vadd.xlane.f32.xlu0 %v2451
  %v2453 = vpop.xlane.xlu0 %2452
  %v2454 = vld [vmem:[#allocation4] sm:$0x1]
  %v2456 = vperm.slane %v2454, 0
  %v2458 = vadd.f32 %v2453, %v2456
  %v2459 = vsub.f32 0.0, %v2458
  %v2460 = vmul.f32 %v2459, 1.442695
  %v2461 = vpow.pop %v2460
  %v2462 = vadd.f32 %v2461, 1.0
  %v2463 = vrcp.pop %v2462
  %v2464 = vmul.f32 %v2462, %v2463
  %v2465 = vsub.f32 1.0, %v2464
  %v2466 = vmul.f32 %v2463, %v2465
  %v2467 = vadd.f32 %v2463, %v2466
  %vm2468 = vweird.f32 %v2462
  %vm2469 = vweird.f32 %v2463
  %vm2470 = vmor %vm2468, %vm2469
  %v2471 = vsel %vm2470, %v2463, %v2467
  %v2472 = vand.u32 2147483647, %v2462
  %vm2473 = vcmp.eq.f32.partialorder %v2472, 8.507059e+37
  %v2474 = vand.u32 %v2462, 2147483648
  %v2475 = vor.u32 1.1754944e-38, %v2474
  %v2476 = vsel %vm2473, %v2475, %v2471
  %v2477 = vmul.f32 1.0, %v2476
  %vm2478 = vcmask 1024
  %2479 = vst.msk [vmem:[%s10] sm:$0x3] %vm2478, %v2477
  // Predicated region
  $region42: #{mortality_pred_gru_forward.3} parent=0 // pred_check
    _
  $region43: #{mortality_pred_gru_forward.3} parent=0 // pred_check_branch
    %2481 = sbr.rel (0) target = $region45
  $region44: #{mortality_pred_gru_forward.3} parent=0 // pred_region
    _
  $region45: #{mortality_pred_gru_forward.3} parent=0 // pred_fallthru
    _
  // Predicated region
  $region46: #{mortality_pred_gru_forward.3} parent=0 // pred_check
    _
  $region47: #{mortality_pred_gru_forward.3} parent=0 // pred_check_branch
    %2483 = sbr.rel (0) target = $region49
  $region48: #{mortality_pred_gru_forward.3} parent=0 // pred_region
    _
  $region49: #{mortality_pred_gru_forward.3} parent=0 // pred_fallthru
    _

</llo_original>
